<compile_context>
chip_gen: v7x
topology: tpu7x:2x2x1
jax: 0.10.0
libtpu: 0.0.40
codegen_flags: <defaults>
</compile_context>

<pallas_src>
import jax
import jax.numpy as jnp
from jax import lax
from jax.experimental import pallas as pl
from jax.experimental.pallas import tpu as pltpu


# ---------------------------------------------------------------------------
# Fused conv0 (1x1) + conv1 (3x3, padding 1) kernel
# ---------------------------------------------------------------------------
def _conv3x3_masks(H, W):
    """(9, 1, H*W) f32 validity masks, one per 3x3 tap (output-position indexed)."""
    L = H * W
    l = jnp.arange(L)
    hh = l // W
    ww = l % W
    rows = []
    for ky in range(3):
        for kx in range(3):
            dy, dx = ky - 1, kx - 1
            valid = ((hh + dy >= 0) & (hh + dy < H) &
                     (ww + dx >= 0) & (ww + dx < W))
            rows.append(valid.astype(jnp.float32))
    return jnp.stack(rows, axis=0).reshape(9, 1, L)


def _fused_conv0_conv1(x_flat, w0, w1_taps, masks, H, W):
    """x_flat: (B, Cin, L) f32; w0: (Cout, Cin) bf16; w1_taps: (9, Cout, Cout) bf16;
    masks: (9, 1, L) f32.  Returns conv1(conv0(x)) as (B, Cout, L) f32."""
    B, Cin, L = x_flat.shape
    Cout = w0.shape[0]

    def kernel(x_ref, w0_ref, w1_ref, m_ref, o_ref):
        # 1x1 conv: y0 = w0 @ x   (bf16 MXU operands, f32 accumulation)
        xb = x_ref[0].astype(jnp.bfloat16)                       # (Cin, L)
        y0 = jnp.dot(w0_ref[...], xb,
                     preferred_element_type=jnp.float32)         # (Cout, L) f32
        # 3x3 conv, pad 1: accumulate 9 shifted matmuls; the spatial shift is a
        # lane roll of the flat (C, H*W) tile, wrap/border handled by the mask.
        acc = jnp.zeros((Cout, L), jnp.float32)
        for ky in range(3):
            for kx in range(3):
                tap = ky * 3 + kx
                dy, dx = ky - 1, kx - 1
                shift = (-(dy * W + dx)) % L
                shifted = pltpu.roll(y0, shift, axis=1) if shift else y0
                tap_in = (shifted * m_ref[tap]).astype(jnp.bfloat16)
                acc = acc + jnp.dot(w1_ref[tap], tap_in,
                                    preferred_element_type=jnp.float32)
        o_ref[0] = acc

    return pl.pallas_call(
        kernel,
        out_shape=jax.ShapeDtypeStruct((B, Cout, L), jnp.float32),
        grid_spec=pltpu.PrefetchScalarGridSpec(
            num_scalar_prefetch=0,
            grid=(B,),
            in_specs=[
                pl.BlockSpec((1, Cin, L), lambda b: (b, 0, 0)),
                pl.BlockSpec((Cout, Cin), lambda b: (0, 0)),
                pl.BlockSpec((9, Cout, Cout), lambda b: (0, 0, 0)),
                pl.BlockSpec((9, 1, L), lambda b: (0, 0, 0)),
            ],
            out_specs=pl.BlockSpec((1, Cout, L), lambda b: (b, 0, 0)),
        ),
        compiler_params=pltpu.CompilerParams(
            dimension_semantics=("parallel",),
            vmem_limit_bytes=32 * 1024 * 1024,
        ),
    )(x_flat, w0, w1_taps, masks)


# ---------------------------------------------------------------------------
# Fused self_attn kernel (q/k/v 1x1 convs + sigmoid attention + residual)
# ---------------------------------------------------------------------------
def _fused_self_attn(x_flat, wq, wk, wv, gamma, axis):
    """x_flat: (B, C, L) f32; wq/wk: (C//8, C) bf16; wv: (C, C) bf16;
    gamma: (1,) f32 (SMEM).  `axis` = attention axis size (H or W)."""
    B, C, L = x_flat.shape
    C8 = wq.shape[0]
    A = int(axis)
    assert L % A == 0, (L, A)
    G = L // A  # groups of A consecutive flat positions; never straddle channels

    def kernel(x_ref, wq_ref, wk_ref, wv_ref, gamma_ref, o_ref):
        x = x_ref[0]                                             # (C, L) f32
        xb = x.astype(jnp.bfloat16)
        q = jnp.dot(wq_ref[...], xb, preferred_element_type=jnp.float32)  # (C8, L)
        k = jnp.dot(wk_ref[...], xb, preferred_element_type=jnp.float32)  # (C8, L)
        v = jnp.dot(wv_ref[...], xb, preferred_element_type=jnp.float32)  # (C, L)

        # attention_map[a1, a2] = sum_m q_view[m, a1] * k_view[m, a2]
        # (torch bmm(q_view^T, k_view)), decomposed into per-group lane slabs:
        # the transposed-lhs contraction is expressed via dot_general dims.
        s = jnp.zeros((A, A), jnp.float32)
        for g in range(G):
            qg = q[:, g * A:(g + 1) * A]                         # (C8, A)
            kg = k[:, g * A:(g + 1) * A]                         # (C8, A)
            s = s + lax.dot_general(qg, kg, (((0,), (0,)), ((), ())),
                                    preferred_element_type=jnp.float32)
        # sigmoid: exp on the EUP + approximate reciprocal (EUP slot).
        p = pl.reciprocal(1.0 + jnp.exp(-s), approx=True)        # (A, A) f32
        pb = p.astype(jnp.bfloat16)

        # out_view = bmm(v_view, attention^T); per-group: out_g = v_g @ p^T.
        vb = v.astype(jnp.bfloat16)
        outs = []
        for g in range(G):
            vg = vb[:, g * A:(g + 1) * A]                        # (C, A)
            outs.append(lax.dot_general(vg, pb, (((1,), (1,)), ((), ())),
                                        preferred_element_type=jnp.float32))
        out = jnp.concatenate(outs, axis=1)                      # (C, L) lane-dense

        o_ref[0] = gamma_ref[0] * out + x

    return pl.pallas_call(
        kernel,
        out_shape=jax.ShapeDtypeStruct((B, C, L), jnp.float32),
        grid_spec=pltpu.PrefetchScalarGridSpec(
            num_scalar_prefetch=0,
            grid=(B,),
            in_specs=[
                pl.BlockSpec((1, C, L), lambda b: (b, 0, 0)),
                pl.BlockSpec((C8, C), lambda b: (0, 0)),
                pl.BlockSpec((C8, C), lambda b: (0, 0)),
                pl.BlockSpec((C, C), lambda b: (0, 0)),
                pl.BlockSpec(memory_space=pltpu.MemorySpace.SMEM),   # gamma scalar
            ],
            out_specs=pl.BlockSpec((1, C, L), lambda b: (b, 0, 0)),
        ),
        compiler_params=pltpu.CompilerParams(
            dimension_semantics=("parallel",),
            vmem_limit_bytes=32 * 1024 * 1024,
        ),
    )(x_flat, wq, wk, wv, gamma)


# ---------------------------------------------------------------------------
# Module forward (wrapper glue: weight reshapes/casts, flat views)
# ---------------------------------------------------------------------------
def aa_kernel_forward(x, params):
    B, Cin, H, W = x.shape
    L = H * W
    Cout = params['w0'].shape[0]

    # tiny, one-time weight prep (bf16 MXU operands, tap-major 3x3 weights)
    w0_b = params['w0'].astype(jnp.bfloat16)
    w1_taps = (jnp.transpose(params['w1'], (2, 3, 0, 1))
               .reshape(9, Cout, Cout).astype(jnp.bfloat16))
    masks = _conv3x3_masks(H, W)

    y1 = _fused_conv0_conv1(x.reshape(B, Cin, L), w0_b, w1_taps, masks, H, W)

    def attn(t, wq, wk, wv, gamma, axis):
        return _fused_self_attn(t,
                                wq.astype(jnp.bfloat16),
                                wk.astype(jnp.bfloat16),
                                wv.astype(jnp.bfloat16),
                                gamma, axis)

    hx = attn(y1, params['wq_h'], params['wk_h'], params['wv_h'],
              params['gamma_h'], H)                 # mode='h' -> axis = H
    wx = attn(hx, params['wq_w'], params['wk_w'], params['wv_w'],
              params['gamma_w'], W)                 # mode='w' -> axis = W
    return wx.reshape(B, Cout, H, W)


# ---------------------------------------------------------------------------
# Deterministic parameter init (shapes from the module's __init__)
# ---------------------------------------------------------------------------
def init_params(key, in_channel, out_channel):
    c8 = out_channel // 8
    ks = jax.random.split(key, 8)

    def w(k, shape):
        fan_in = 1
        for d in shape[1:]:
            fan_in *= d
        return jax.random.normal(k, shape, jnp.float32) * (0.5 / jnp.sqrt(fan_in))

    return dict(
        w0=w(ks[0], (out_channel, in_channel)),            # conv0: 1x1
        w1=w(ks[1], (out_channel, out_channel, 3, 3)),     # conv1: 3x3
        wq_h=w(ks[2], (c8, out_channel)),
        wk_h=w(ks[3], (c8, out_channel)),
        wv_h=w(ks[4], (out_channel, out_channel)),
        wq_w=w(ks[5], (c8, out_channel)),
        wk_w=w(ks[6], (c8, out_channel)),
        wv_w=w(ks[7], (out_channel, out_channel)),
        # PyTorch initializes gamma to torch.zeros(1); use a nonzero value here
        # so the attention branch is actually exercised by the synthetic test.
        gamma_h=jnp.full((1,), 0.1, jnp.float32),
        gamma_w=jnp.full((1,), 0.1, jnp.float32),
    )


# ---------------------------------------------------------------------------
# Pure-JAX high-precision reference (mirrors the torch ops) for correctness
# ---------------------------------------------------------------------------
def reference_forward(x, params):
    hp = jax.lax.Precision.HIGHEST

    def conv1x1(w, t):
        return jnp.einsum('oc,bchw->bohw', w, t, precision=hp)

    B, Cin, H, W = x.shape
    Cout = params['w0'].shape[0]
    y0 = conv1x1(params['w0'], x)
    xpad = jnp.pad(y0, ((0, 0), (0, 0), (1, 1), (1, 1)))
    y1 = jnp.zeros((B, Cout, H, W), jnp.float32)
    for ky in range(3):
        for kx in range(3):
            y1 = y1 + conv1x1(params['w1'][:, :, ky, kx],
                              xpad[:, :, ky:ky + H, kx:kx + W])

    def attn(t, wq, wk, wv, gamma, axis):
        B, C, H, W = t.shape
        q = conv1x1(wq, t).reshape(B, -1, axis)
        k = conv1x1(wk, t).reshape(B, -1, axis)
        v = conv1x1(wv, t).reshape(B, -1, axis)
        s = jnp.einsum('bma,bmc->bac', q, k, precision=hp)   # bmm(q^T, k)
        a = jax.nn.sigmoid(s)
        o = jnp.einsum('bna,bca->bnc', v, a, precision=hp)   # bmm(v, a^T)
        return gamma[0] * o.reshape(B, C, H, W) + t

    hx = attn(y1, params['wq_h'], params['wk_h'], params['wv_h'],
              params['gamma_h'], H)
    wx = attn(hx, params['wq_w'], params['wk_w'], params['wv_w'],
              params['gamma_w'], W)
    return wx


if __name__ == "__main__":
    key = jax.random.PRNGKey(0)
    kx, kp = jax.random.split(key)
    # Non-square spatial shape to exercise the 'h' vs 'w' attention views.
    B, Cin, H, W = 2, 16, 16, 8
    Cout = 32
    x = jax.random.normal(kx, (B, Cin, H, W), jnp.float32)
    params = init_params(kp, Cin, Cout)

    fwd = jax.jit(aa_kernel_forward)
    out = jax.block_until_ready(fwd(x, params))
    assert out.shape == (B, Cout, H, W), out.shape

    ref = jax.block_until_ready(jax.jit(reference_forward)(x, params))
    err = float(jnp.max(jnp.abs(out - ref)))
    scale = float(jnp.max(jnp.abs(ref))) + 1.0
    # tolerance accounts for bf16 MXU operands (f32 accumulation) vs the
    # Precision.HIGHEST f32 reference.
    assert err <= 2e-2 * scale, f"mismatch: max abs err {err} (scale {scale})"

    print("KERNEL_OK")
</pallas_src>

<mosaic_0001>
module attributes {stable_mosaic.version = 11 : i64} {
  func.func @kernel(%arg0: i32, %arg1: memref<1x16x128xf32, #tpu.memory_space<vmem>>, %arg2: memref<32x16xbf16, #tpu.memory_space<vmem>>, %arg3: memref<9x32x32xbf16, #tpu.memory_space<vmem>>, %arg4: memref<9x1x128xf32, #tpu.memory_space<vmem>>, %arg5: memref<1x32x128xf32, #tpu.memory_space<vmem>>) attributes {dimension_semantics = [#tpu.dimension_semantics<parallel>], iteration_bounds = array<i64: 2>, scalar_prefetch = 0 : i64, scratch_operands = 0 : i64, tpu.core_type = #tpu.core_type<tc>, window_params = [{transform_indices = @transform_0, window_bounds = array<i64: 1, 16, 128>}, {pipeline_mode = #tpu.pipeline_mode<synchronous>, transform_indices = @transform_1, window_bounds = array<i64: 32, 16>}, {pipeline_mode = #tpu.pipeline_mode<synchronous>, transform_indices = @transform_2, window_bounds = array<i64: 9, 32, 32>}, {pipeline_mode = #tpu.pipeline_mode<synchronous>, transform_indices = @transform_3, window_bounds = array<i64: 9, 1, 128>}, {transform_indices = @transform_4, window_bounds = array<i64: 1, 32, 128>}]} {
    %c0 = arith.constant 0 : index
    %c0_0 = arith.constant 0 : index
    %c0_1 = arith.constant 0 : index
    %0 = vector.load %arg1[%c0, %c0_0, %c0_1] : memref<1x16x128xf32, #tpu.memory_space<vmem>>, vector<1x16x128xf32>
    %1 = vector.shape_cast %0 : vector<1x16x128xf32> to vector<16x128xf32>
    %2 = arith.truncf %1 : vector<16x128xf32> to vector<16x128xbf16>
    %c0_2 = arith.constant 0 : index
    %c0_3 = arith.constant 0 : index
    %3 = vector.load %arg2[%c0_2, %c0_3] : memref<32x16xbf16, #tpu.memory_space<vmem>>, vector<32x16xbf16>
    %cst = arith.constant dense<0.000000e+00> : vector<32x128xf32>
    %4 = tpu.matmul %3, %2, %cst {dimension_numbers = #tpu.dot_dimension_numbers<[1], [0], [0], [1], [0, 0, 1, 1], [], []>} : vector<32x16xbf16>, vector<16x128xbf16>, vector<32x128xf32> -> vector<32x128xf32>
    %cst_4 = arith.constant 0.000000e+00 : f32
    %5 = vector.broadcast %cst_4 : f32 to vector<32x128xf32>
    %c9_i32 = arith.constant 9 : i32
    %6 = tpu.dynamic_rotate %4 by %c9_i32 dim 1 : vector<32x128xf32>, i32 -> vector<32x128xf32>
    %c0_5 = arith.constant 0 : index
    %c0_6 = arith.constant 0 : index
    %c0_7 = arith.constant 0 : index
    %7 = vector.load %arg4[%c0_5, %c0_6, %c0_7] : memref<9x1x128xf32, #tpu.memory_space<vmem>>, vector<1x1x128xf32>
    %8 = vector.shape_cast %7 : vector<1x1x128xf32> to vector<1x128xf32>
    %9 = vector.broadcast %8 : vector<1x128xf32> to vector<32x128xf32>
    %10 = arith.mulf %6, %9 : vector<32x128xf32>
    %11 = arith.truncf %10 : vector<32x128xf32> to vector<32x128xbf16>
    %c0_8 = arith.constant 0 : index
    %c0_9 = arith.constant 0 : index
    %c0_10 = arith.constant 0 : index
    %12 = vector.load %arg3[%c0_8, %c0_9, %c0_10] : memref<9x32x32xbf16, #tpu.memory_space<vmem>>, vector<1x32x32xbf16>
    %13 = vector.shape_cast %12 : vector<1x32x32xbf16> to vector<32x32xbf16>
    %cst_11 = arith.constant dense<0.000000e+00> : vector<32x128xf32>
    %14 = tpu.matmul %13, %11, %cst_11 {dimension_numbers = #tpu.dot_dimension_numbers<[1], [0], [0], [1], [0, 0, 1, 1], [], []>} : vector<32x32xbf16>, vector<32x128xbf16>, vector<32x128xf32> -> vector<32x128xf32>
    %15 = arith.addf %5, %14 : vector<32x128xf32>
    %c8_i32 = arith.constant 8 : i32
    %16 = tpu.dynamic_rotate %4 by %c8_i32 dim 1 : vector<32x128xf32>, i32 -> vector<32x128xf32>
    %c1 = arith.constant 1 : index
    %c0_12 = arith.constant 0 : index
    %c0_13 = arith.constant 0 : index
    %17 = vector.load %arg4[%c1, %c0_12, %c0_13] : memref<9x1x128xf32, #tpu.memory_space<vmem>>, vector<1x1x128xf32>
    %18 = vector.shape_cast %17 : vector<1x1x128xf32> to vector<1x128xf32>
    %19 = vector.broadcast %18 : vector<1x128xf32> to vector<32x128xf32>
    %20 = arith.mulf %16, %19 : vector<32x128xf32>
    %21 = arith.truncf %20 : vector<32x128xf32> to vector<32x128xbf16>
    %c1_14 = arith.constant 1 : index
    %c0_15 = arith.constant 0 : index
    %c0_16 = arith.constant 0 : index
    %22 = vector.load %arg3[%c1_14, %c0_15, %c0_16] : memref<9x32x32xbf16, #tpu.memory_space<vmem>>, vector<1x32x32xbf16>
    %23 = vector.shape_cast %22 : vector<1x32x32xbf16> to vector<32x32xbf16>
    %cst_17 = arith.constant dense<0.000000e+00> : vector<32x128xf32>
    %24 = tpu.matmul %23, %21, %cst_17 {dimension_numbers = #tpu.dot_dimension_numbers<[1], [0], [0], [1], [0, 0, 1, 1], [], []>} : vector<32x32xbf16>, vector<32x128xbf16>, vector<32x128xf32> -> vector<32x128xf32>
    %25 = arith.addf %15, %24 : vector<32x128xf32>
    %c7_i32 = arith.constant 7 : i32
    %26 = tpu.dynamic_rotate %4 by %c7_i32 dim 1 : vector<32x128xf32>, i32 -> vector<32x128xf32>
    %c2 = arith.constant 2 : index
    %c0_18 = arith.constant 0 : index
    %c0_19 = arith.constant 0 : index
    %27 = vector.load %arg4[%c2, %c0_18, %c0_19] : memref<9x1x128xf32, #tpu.memory_space<vmem>>, vector<1x1x128xf32>
    %28 = vector.shape_cast %27 : vector<1x1x128xf32> to vector<1x128xf32>
    %29 = vector.broadcast %28 : vector<1x128xf32> to vector<32x128xf32>
    %30 = arith.mulf %26, %29 : vector<32x128xf32>
    %31 = arith.truncf %30 : vector<32x128xf32> to vector<32x128xbf16>
    %c2_20 = arith.constant 2 : index
    %c0_21 = arith.constant 0 : index
    %c0_22 = arith.constant 0 : index
    %32 = vector.load %arg3[%c2_20, %c0_21, %c0_22] : memref<9x32x32xbf16, #tpu.memory_space<vmem>>, vector<1x32x32xbf16>
    %33 = vector.shape_cast %32 : vector<1x32x32xbf16> to vector<32x32xbf16>
    %cst_23 = arith.constant dense<0.000000e+00> : vector<32x128xf32>
    %34 = tpu.matmul %33, %31, %cst_23 {dimension_numbers = #tpu.dot_dimension_numbers<[1], [0], [0], [1], [0, 0, 1, 1], [], []>} : vector<32x32xbf16>, vector<32x128xbf16>, vector<32x128xf32> -> vector<32x128xf32>
    %35 = arith.addf %25, %34 : vector<32x128xf32>
    %c1_i32 = arith.constant 1 : i32
    %36 = tpu.dynamic_rotate %4 by %c1_i32 dim 1 : vector<32x128xf32>, i32 -> vector<32x128xf32>
    %c3 = arith.constant 3 : index
    %c0_24 = arith.constant 0 : index
    %c0_25 = arith.constant 0 : index
    %37 = vector.load %arg4[%c3, %c0_24, %c0_25] : memref<9x1x128xf32, #tpu.memory_space<vmem>>, vector<1x1x128xf32>
    %38 = vector.shape_cast %37 : vector<1x1x128xf32> to vector<1x128xf32>
    %39 = vector.broadcast %38 : vector<1x128xf32> to vector<32x128xf32>
    %40 = arith.mulf %36, %39 : vector<32x128xf32>
    %41 = arith.truncf %40 : vector<32x128xf32> to vector<32x128xbf16>
    %c3_26 = arith.constant 3 : index
    %c0_27 = arith.constant 0 : index
    %c0_28 = arith.constant 0 : index
    %42 = vector.load %arg3[%c3_26, %c0_27, %c0_28] : memref<9x32x32xbf16, #tpu.memory_space<vmem>>, vector<1x32x32xbf16>
    %43 = vector.shape_cast %42 : vector<1x32x32xbf16> to vector<32x32xbf16>
    %cst_29 = arith.constant dense<0.000000e+00> : vector<32x128xf32>
    %44 = tpu.matmul %43, %41, %cst_29 {dimension_numbers = #tpu.dot_dimension_numbers<[1], [0], [0], [1], [0, 0, 1, 1], [], []>} : vector<32x32xbf16>, vector<32x128xbf16>, vector<32x128xf32> -> vector<32x128xf32>
    %45 = arith.addf %35, %44 : vector<32x128xf32>
    %c4 = arith.constant 4 : index
    %c0_30 = arith.constant 0 : index
    %c0_31 = arith.constant 0 : index
    %46 = vector.load %arg4[%c4, %c0_30, %c0_31] : memref<9x1x128xf32, #tpu.memory_space<vmem>>, vector<1x1x128xf32>
    %47 = vector.shape_cast %46 : vector<1x1x128xf32> to vector<1x128xf32>
    %48 = vector.broadcast %47 : vector<1x128xf32> to vector<32x128xf32>
    %49 = arith.mulf %4, %48 : vector<32x128xf32>
    %50 = arith.truncf %49 : vector<32x128xf32> to vector<32x128xbf16>
    %c4_32 = arith.constant 4 : index
    %c0_33 = arith.constant 0 : index
    %c0_34 = arith.constant 0 : index
    %51 = vector.load %arg3[%c4_32, %c0_33, %c0_34] : memref<9x32x32xbf16, #tpu.memory_space<vmem>>, vector<1x32x32xbf16>
    %52 = vector.shape_cast %51 : vector<1x32x32xbf16> to vector<32x32xbf16>
    %cst_35 = arith.constant dense<0.000000e+00> : vector<32x128xf32>
    %53 = tpu.matmul %52, %50, %cst_35 {dimension_numbers = #tpu.dot_dimension_numbers<[1], [0], [0], [1], [0, 0, 1, 1], [], []>} : vector<32x32xbf16>, vector<32x128xbf16>, vector<32x128xf32> -> vector<32x128xf32>
    %54 = arith.addf %45, %53 : vector<32x128xf32>
    %c127_i32 = arith.constant 127 : i32
    %55 = tpu.dynamic_rotate %4 by %c127_i32 dim 1 : vector<32x128xf32>, i32 -> vector<32x128xf32>
    %c5 = arith.constant 5 : index
    %c0_36 = arith.constant 0 : index
    %c0_37 = arith.constant 0 : index
    %56 = vector.load %arg4[%c5, %c0_36, %c0_37] : memref<9x1x128xf32, #tpu.memory_space<vmem>>, vector<1x1x128xf32>
    %57 = vector.shape_cast %56 : vector<1x1x128xf32> to vector<1x128xf32>
    %58 = vector.broadcast %57 : vector<1x128xf32> to vector<32x128xf32>
    %59 = arith.mulf %55, %58 : vector<32x128xf32>
    %60 = arith.truncf %59 : vector<32x128xf32> to vector<32x128xbf16>
    %c5_38 = arith.constant 5 : index
    %c0_39 = arith.constant 0 : index
    %c0_40 = arith.constant 0 : index
    %61 = vector.load %arg3[%c5_38, %c0_39, %c0_40] : memref<9x32x32xbf16, #tpu.memory_space<vmem>>, vector<1x32x32xbf16>
    %62 = vector.shape_cast %61 : vector<1x32x32xbf16> to vector<32x32xbf16>
    %cst_41 = arith.constant dense<0.000000e+00> : vector<32x128xf32>
    %63 = tpu.matmul %62, %60, %cst_41 {dimension_numbers = #tpu.dot_dimension_numbers<[1], [0], [0], [1], [0, 0, 1, 1], [], []>} : vector<32x32xbf16>, vector<32x128xbf16>, vector<32x128xf32> -> vector<32x128xf32>
    %64 = arith.addf %54, %63 : vector<32x128xf32>
    %c121_i32 = arith.constant 121 : i32
    %65 = tpu.dynamic_rotate %4 by %c121_i32 dim 1 : vector<32x128xf32>, i32 -> vector<32x128xf32>
    %c6 = arith.constant 6 : index
    %c0_42 = arith.constant 0 : index
    %c0_43 = arith.constant 0 : index
    %66 = vector.load %arg4[%c6, %c0_42, %c0_43] : memref<9x1x128xf32, #tpu.memory_space<vmem>>, vector<1x1x128xf32>
    %67 = vector.shape_cast %66 : vector<1x1x128xf32> to vector<1x128xf32>
    %68 = vector.broadcast %67 : vector<1x128xf32> to vector<32x128xf32>
    %69 = arith.mulf %65, %68 : vector<32x128xf32>
    %70 = arith.truncf %69 : vector<32x128xf32> to vector<32x128xbf16>
    %c6_44 = arith.constant 6 : index
    %c0_45 = arith.constant 0 : index
    %c0_46 = arith.constant 0 : index
    %71 = vector.load %arg3[%c6_44, %c0_45, %c0_46] : memref<9x32x32xbf16, #tpu.memory_space<vmem>>, vector<1x32x32xbf16>
    %72 = vector.shape_cast %71 : vector<1x32x32xbf16> to vector<32x32xbf16>
    %cst_47 = arith.constant dense<0.000000e+00> : vector<32x128xf32>
    %73 = tpu.matmul %72, %70, %cst_47 {dimension_numbers = #tpu.dot_dimension_numbers<[1], [0], [0], [1], [0, 0, 1, 1], [], []>} : vector<32x32xbf16>, vector<32x128xbf16>, vector<32x128xf32> -> vector<32x128xf32>
    %74 = arith.addf %64, %73 : vector<32x128xf32>
    %c120_i32 = arith.constant 120 : i32
    %75 = tpu.dynamic_rotate %4 by %c120_i32 dim 1 : vector<32x128xf32>, i32 -> vector<32x128xf32>
    %c7 = arith.constant 7 : index
    %c0_48 = arith.constant 0 : index
    %c0_49 = arith.constant 0 : index
    %76 = vector.load %arg4[%c7, %c0_48, %c0_49] : memref<9x1x128xf32, #tpu.memory_space<vmem>>, vector<1x1x128xf32>
    %77 = vector.shape_cast %76 : vector<1x1x128xf32> to vector<1x128xf32>
    %78 = vector.broadcast %77 : vector<1x128xf32> to vector<32x128xf32>
    %79 = arith.mulf %75, %78 : vector<32x128xf32>
    %80 = arith.truncf %79 : vector<32x128xf32> to vector<32x128xbf16>
    %c7_50 = arith.constant 7 : index
    %c0_51 = arith.constant 0 : index
    %c0_52 = arith.constant 0 : index
    %81 = vector.load %arg3[%c7_50, %c0_51, %c0_52] : memref<9x32x32xbf16, #tpu.memory_space<vmem>>, vector<1x32x32xbf16>
    %82 = vector.shape_cast %81 : vector<1x32x32xbf16> to vector<32x32xbf16>
    %cst_53 = arith.constant dense<0.000000e+00> : vector<32x128xf32>
    %83 = tpu.matmul %82, %80, %cst_53 {dimension_numbers = #tpu.dot_dimension_numbers<[1], [0], [0], [1], [0, 0, 1, 1], [], []>} : vector<32x32xbf16>, vector<32x128xbf16>, vector<32x128xf32> -> vector<32x128xf32>
    %84 = arith.addf %74, %83 : vector<32x128xf32>
    %c119_i32 = arith.constant 119 : i32
    %85 = tpu.dynamic_rotate %4 by %c119_i32 dim 1 : vector<32x128xf32>, i32 -> vector<32x128xf32>
    %c8 = arith.constant 8 : index
    %c0_54 = arith.constant 0 : index
    %c0_55 = arith.constant 0 : index
    %86 = vector.load %arg4[%c8, %c0_54, %c0_55] : memref<9x1x128xf32, #tpu.memory_space<vmem>>, vector<1x1x128xf32>
    %87 = vector.shape_cast %86 : vector<1x1x128xf32> to vector<1x128xf32>
    %88 = vector.broadcast %87 : vector<1x128xf32> to vector<32x128xf32>
    %89 = arith.mulf %85, %88 : vector<32x128xf32>
    %90 = arith.truncf %89 : vector<32x128xf32> to vector<32x128xbf16>
    %c8_56 = arith.constant 8 : index
    %c0_57 = arith.constant 0 : index
    %c0_58 = arith.constant 0 : index
    %91 = vector.load %arg3[%c8_56, %c0_57, %c0_58] : memref<9x32x32xbf16, #tpu.memory_space<vmem>>, vector<1x32x32xbf16>
    %92 = vector.shape_cast %91 : vector<1x32x32xbf16> to vector<32x32xbf16>
    %cst_59 = arith.constant dense<0.000000e+00> : vector<32x128xf32>
    %93 = tpu.matmul %92, %90, %cst_59 {dimension_numbers = #tpu.dot_dimension_numbers<[1], [0], [0], [1], [0, 0, 1, 1], [], []>} : vector<32x32xbf16>, vector<32x128xbf16>, vector<32x128xf32> -> vector<32x128xf32>
    %94 = arith.addf %84, %93 : vector<32x128xf32>
    %c0_60 = arith.constant 0 : index
    %c0_61 = arith.constant 0 : index
    %c0_62 = arith.constant 0 : index
    %95 = vector.load %arg5[%c0_60, %c0_61, %c0_62] : memref<1x32x128xf32, #tpu.memory_space<vmem>>, vector<1x32x128xf32>
    %96 = vector.shape_cast %95 : vector<1x32x128xf32> to vector<32x128xf32>
    %97 = vector.shape_cast %94 : vector<32x128xf32> to vector<1x32x128xf32>
    tpu.vector_store %arg5[%c0_60, %c0_61, %c0_62], %97 {strides = array<i32>} : memref<1x32x128xf32, #tpu.memory_space<vmem>>, vector<1x32x128xf32>,
    return
  }
  func.func @transform_0(%arg0: i32) -> (i32, i32, i32) {
    %c0_i32 = arith.constant 0 : i32
    %c0_i32_0 = arith.constant 0 : i32
    %c0_i32_1 = arith.constant 0 : i32
    return %arg0, %c0_i32, %c0_i32_0 : i32, i32, i32
  }
  func.func @transform_1(%arg0: i32) -> (i32, i32) {
    %c0_i32 = arith.constant 0 : i32
    %c0_i32_0 = arith.constant 0 : i32
    %c0_i32_1 = arith.constant 0 : i32
    return %c0_i32, %c0_i32_0 : i32, i32
  }
  func.func @transform_2(%arg0: i32) -> (i32, i32, i32) {
    %c0_i32 = arith.constant 0 : i32
    %c0_i32_0 = arith.constant 0 : i32
    %c0_i32_1 = arith.constant 0 : i32
    %c0_i32_2 = arith.constant 0 : i32
    return %c0_i32, %c0_i32_0, %c0_i32_1 : i32, i32, i32
  }
  func.func @transform_3(%arg0: i32) -> (i32, i32, i32) {
    %c0_i32 = arith.constant 0 : i32
    %c0_i32_0 = arith.constant 0 : i32
    %c0_i32_1 = arith.constant 0 : i32
    %c0_i32_2 = arith.constant 0 : i32
    return %c0_i32, %c0_i32_0, %c0_i32_1 : i32, i32, i32
  }
  func.func @transform_4(%arg0: i32) -> (i32, i32, i32) {
    %c0_i32 = arith.constant 0 : i32
    %c0_i32_0 = arith.constant 0 : i32
    %c0_i32_1 = arith.constant 0 : i32
    return %arg0, %c0_i32, %c0_i32_0 : i32, i32, i32
  }
}

module attributes {stable_mosaic.version = 11 : i64} {
  func.func @kernel(%arg0: i32, %arg1: memref<1x32x128xf32, #tpu.memory_space<vmem>>, %arg2: memref<4x32xbf16, #tpu.memory_space<vmem>>, %arg3: memref<4x32xbf16, #tpu.memory_space<vmem>>, %arg4: memref<32x32xbf16, #tpu.memory_space<vmem>>, %arg5: memref<1xf32, #tpu.memory_space<smem>>, %arg6: memref<1x32x128xf32, #tpu.memory_space<vmem>>) attributes {dimension_semantics = [#tpu.dimension_semantics<parallel>], iteration_bounds = array<i64: 2>, scalar_prefetch = 0 : i64, scratch_operands = 0 : i64, tpu.core_type = #tpu.core_type<tc>, window_params = [{transform_indices = @transform_0, window_bounds = array<i64: 1, 32, 128>}, {pipeline_mode = #tpu.pipeline_mode<synchronous>, transform_indices = @transform_1, window_bounds = array<i64: 4, 32>}, {pipeline_mode = #tpu.pipeline_mode<synchronous>, transform_indices = @transform_2, window_bounds = array<i64: 4, 32>}, {pipeline_mode = #tpu.pipeline_mode<synchronous>, transform_indices = @transform_3, window_bounds = array<i64: 32, 32>}, {transform_indices = @transform_4, window_bounds = array<i64: 1>}, {transform_indices = @transform_5, window_bounds = array<i64: 1, 32, 128>}]} {
    %c0 = arith.constant 0 : index
    %c0_0 = arith.constant 0 : index
    %c0_1 = arith.constant 0 : index
    %0 = vector.load %arg1[%c0, %c0_0, %c0_1] : memref<1x32x128xf32, #tpu.memory_space<vmem>>, vector<1x32x128xf32>
    %1 = vector.shape_cast %0 : vector<1x32x128xf32> to vector<32x128xf32>
    %2 = arith.truncf %1 : vector<32x128xf32> to vector<32x128xbf16>
    %c0_2 = arith.constant 0 : index
    %c0_3 = arith.constant 0 : index
    %3 = vector.load %arg2[%c0_2, %c0_3] : memref<4x32xbf16, #tpu.memory_space<vmem>>, vector<4x32xbf16>
    %cst = arith.constant dense<0.000000e+00> : vector<4x128xf32>
    %4 = tpu.matmul %3, %2, %cst {dimension_numbers = #tpu.dot_dimension_numbers<[1], [0], [0], [1], [0, 0, 1, 1], [], []>} : vector<4x32xbf16>, vector<32x128xbf16>, vector<4x128xf32> -> vector<4x128xf32>
    %c0_4 = arith.constant 0 : index
    %c0_5 = arith.constant 0 : index
    %5 = vector.load %arg3[%c0_4, %c0_5] : memref<4x32xbf16, #tpu.memory_space<vmem>>, vector<4x32xbf16>
    %cst_6 = arith.constant dense<0.000000e+00> : vector<4x128xf32>
    %6 = tpu.matmul %5, %2, %cst_6 {dimension_numbers = #tpu.dot_dimension_numbers<[1], [0], [0], [1], [0, 0, 1, 1], [], []>} : vector<4x32xbf16>, vector<32x128xbf16>, vector<4x128xf32> -> vector<4x128xf32>
    %c0_7 = arith.constant 0 : index
    %c0_8 = arith.constant 0 : index
    %7 = vector.load %arg4[%c0_7, %c0_8] : memref<32x32xbf16, #tpu.memory_space<vmem>>, vector<32x32xbf16>
    %cst_9 = arith.constant dense<0.000000e+00> : vector<32x128xf32>
    %8 = tpu.matmul %7, %2, %cst_9 {dimension_numbers = #tpu.dot_dimension_numbers<[1], [0], [0], [1], [0, 0, 1, 1], [], []>} : vector<32x32xbf16>, vector<32x128xbf16>, vector<32x128xf32> -> vector<32x128xf32>
    %cst_10 = arith.constant 0.000000e+00 : f32
    %9 = vector.broadcast %cst_10 : f32 to vector<16x16xf32>
    %10 = vector.extract_strided_slice %4 {offsets = [0, 0], sizes = [4, 16], strides = [1, 1]} : vector<4x128xf32> to vector<4x16xf32>
    %11 = vector.extract_strided_slice %6 {offsets = [0, 0], sizes = [4, 16], strides = [1, 1]} : vector<4x128xf32> to vector<4x16xf32>
    %cst_11 = arith.constant dense<0.000000e+00> : vector<16x16xf32>
    %12 = tpu.matmul %10, %11, %cst_11 {dimension_numbers = #tpu.dot_dimension_numbers<[0], [0], [1], [1], [0, 1, 1, 1], [], []>} : vector<4x16xf32>, vector<4x16xf32>, vector<16x16xf32> -> vector<16x16xf32>
    %13 = arith.addf %9, %12 : vector<16x16xf32>
    %14 = vector.extract_strided_slice %4 {offsets = [0, 16], sizes = [4, 16], strides = [1, 1]} : vector<4x128xf32> to vector<4x16xf32>
    %15 = vector.extract_strided_slice %6 {offsets = [0, 16], sizes = [4, 16], strides = [1, 1]} : vector<4x128xf32> to vector<4x16xf32>
    %cst_12 = arith.constant dense<0.000000e+00> : vector<16x16xf32>
    %16 = tpu.matmul %14, %15, %cst_12 {dimension_numbers = #tpu.dot_dimension_numbers<[0], [0], [1], [1], [0, 1, 1, 1], [], []>} : vector<4x16xf32>, vector<4x16xf32>, vector<16x16xf32> -> vector<16x16xf32>
    %17 = arith.addf %13, %16 : vector<16x16xf32>
    %18 = vector.extract_strided_slice %4 {offsets = [0, 32], sizes = [4, 16], strides = [1, 1]} : vector<4x128xf32> to vector<4x16xf32>
    %19 = vector.extract_strided_slice %6 {offsets = [0, 32], sizes = [4, 16], strides = [1, 1]} : vector<4x128xf32> to vector<4x16xf32>
    %cst_13 = arith.constant dense<0.000000e+00> : vector<16x16xf32>
    %20 = tpu.matmul %18, %19, %cst_13 {dimension_numbers = #tpu.dot_dimension_numbers<[0], [0], [1], [1], [0, 1, 1, 1], [], []>} : vector<4x16xf32>, vector<4x16xf32>, vector<16x16xf32> -> vector<16x16xf32>
    %21 = arith.addf %17, %20 : vector<16x16xf32>
    %22 = vector.extract_strided_slice %4 {offsets = [0, 48], sizes = [4, 16], strides = [1, 1]} : vector<4x128xf32> to vector<4x16xf32>
    %23 = vector.extract_strided_slice %6 {offsets = [0, 48], sizes = [4, 16], strides = [1, 1]} : vector<4x128xf32> to vector<4x16xf32>
    %cst_14 = arith.constant dense<0.000000e+00> : vector<16x16xf32>
    %24 = tpu.matmul %22, %23, %cst_14 {dimension_numbers = #tpu.dot_dimension_numbers<[0], [0], [1], [1], [0, 1, 1, 1], [], []>} : vector<4x16xf32>, vector<4x16xf32>, vector<16x16xf32> -> vector<16x16xf32>
    %25 = arith.addf %21, %24 : vector<16x16xf32>
    %26 = vector.extract_strided_slice %4 {offsets = [0, 64], sizes = [4, 16], strides = [1, 1]} : vector<4x128xf32> to vector<4x16xf32>
    %27 = vector.extract_strided_slice %6 {offsets = [0, 64], sizes = [4, 16], strides = [1, 1]} : vector<4x128xf32> to vector<4x16xf32>
    %cst_15 = arith.constant dense<0.000000e+00> : vector<16x16xf32>
    %28 = tpu.matmul %26, %27, %cst_15 {dimension_numbers = #tpu.dot_dimension_numbers<[0], [0], [1], [1], [0, 1, 1, 1], [], []>} : vector<4x16xf32>, vector<4x16xf32>, vector<16x16xf32> -> vector<16x16xf32>
    %29 = arith.addf %25, %28 : vector<16x16xf32>
    %30 = vector.extract_strided_slice %4 {offsets = [0, 80], sizes = [4, 16], strides = [1, 1]} : vector<4x128xf32> to vector<4x16xf32>
    %31 = vector.extract_strided_slice %6 {offsets = [0, 80], sizes = [4, 16], strides = [1, 1]} : vector<4x128xf32> to vector<4x16xf32>
    %cst_16 = arith.constant dense<0.000000e+00> : vector<16x16xf32>
    %32 = tpu.matmul %30, %31, %cst_16 {dimension_numbers = #tpu.dot_dimension_numbers<[0], [0], [1], [1], [0, 1, 1, 1], [], []>} : vector<4x16xf32>, vector<4x16xf32>, vector<16x16xf32> -> vector<16x16xf32>
    %33 = arith.addf %29, %32 : vector<16x16xf32>
    %34 = vector.extract_strided_slice %4 {offsets = [0, 96], sizes = [4, 16], strides = [1, 1]} : vector<4x128xf32> to vector<4x16xf32>
    %35 = vector.extract_strided_slice %6 {offsets = [0, 96], sizes = [4, 16], strides = [1, 1]} : vector<4x128xf32> to vector<4x16xf32>
    %cst_17 = arith.constant dense<0.000000e+00> : vector<16x16xf32>
    %36 = tpu.matmul %34, %35, %cst_17 {dimension_numbers = #tpu.dot_dimension_numbers<[0], [0], [1], [1], [0, 1, 1, 1], [], []>} : vector<4x16xf32>, vector<4x16xf32>, vector<16x16xf32> -> vector<16x16xf32>
    %37 = arith.addf %33, %36 : vector<16x16xf32>
    %38 = vector.extract_strided_slice %4 {offsets = [0, 112], sizes = [4, 16], strides = [1, 1]} : vector<4x128xf32> to vector<4x16xf32>
    %39 = vector.extract_strided_slice %6 {offsets = [0, 112], sizes = [4, 16], strides = [1, 1]} : vector<4x128xf32> to vector<4x16xf32>
    %cst_18 = arith.constant dense<0.000000e+00> : vector<16x16xf32>
    %40 = tpu.matmul %38, %39, %cst_18 {dimension_numbers = #tpu.dot_dimension_numbers<[0], [0], [1], [1], [0, 1, 1, 1], [], []>} : vector<4x16xf32>, vector<4x16xf32>, vector<16x16xf32> -> vector<16x16xf32>
    %41 = arith.addf %37, %40 : vector<16x16xf32>
    %cst_19 = arith.constant 0.000000e+00 : f32
    %42 = vector.broadcast %cst_19 : f32 to vector<16x16xf32>
    %43 = arith.subf %42, %41 : vector<16x16xf32>
    %44 = math.exp %43 : vector<16x16xf32>
    %cst_20 = arith.constant 1.000000e+00 : f32
    %45 = vector.broadcast %cst_20 : f32 to vector<16x16xf32>
    %46 = arith.addf %45, %44 : vector<16x16xf32>
    %47 = tpu.reciprocal %46 {approx = true} : vector<16x16xf32> -> vector<16x16xf32>
    %48 = arith.truncf %47 : vector<16x16xf32> to vector<16x16xbf16>
    %49 = arith.truncf %8 : vector<32x128xf32> to vector<32x128xbf16>
    %50 = vector.extract_strided_slice %49 {offsets = [0, 0], sizes = [32, 16], strides = [1, 1]} : vector<32x128xbf16> to vector<32x16xbf16>
    %cst_21 = arith.constant dense<0.000000e+00> : vector<32x16xf32>
    %51 = tpu.matmul %50, %48, %cst_21 {dimension_numbers = #tpu.dot_dimension_numbers<[1], [1], [0], [0], [0, 0, 1, 0], [], []>} : vector<32x16xbf16>, vector<16x16xbf16>, vector<32x16xf32> -> vector<32x16xf32>
    %52 = vector.extract_strided_slice %49 {offsets = [0, 16], sizes = [32, 16], strides = [1, 1]} : vector<32x128xbf16> to vector<32x16xbf16>
    %cst_22 = arith.constant dense<0.000000e+00> : vector<32x16xf32>
    %53 = tpu.matmul %52, %48, %cst_22 {dimension_numbers = #tpu.dot_dimension_numbers<[1], [1], [0], [0], [0, 0, 1, 0], [], []>} : vector<32x16xbf16>, vector<16x16xbf16>, vector<32x16xf32> -> vector<32x16xf32>
    %54 = vector.extract_strided_slice %49 {offsets = [0, 32], sizes = [32, 16], strides = [1, 1]} : vector<32x128xbf16> to vector<32x16xbf16>
    %cst_23 = arith.constant dense<0.000000e+00> : vector<32x16xf32>
    %55 = tpu.matmul %54, %48, %cst_23 {dimension_numbers = #tpu.dot_dimension_numbers<[1], [1], [0], [0], [0, 0, 1, 0], [], []>} : vector<32x16xbf16>, vector<16x16xbf16>, vector<32x16xf32> -> vector<32x16xf32>
    %56 = vector.extract_strided_slice %49 {offsets = [0, 48], sizes = [32, 16], strides = [1, 1]} : vector<32x128xbf16> to vector<32x16xbf16>
    %cst_24 = arith.constant dense<0.000000e+00> : vector<32x16xf32>
    %57 = tpu.matmul %56, %48, %cst_24 {dimension_numbers = #tpu.dot_dimension_numbers<[1], [1], [0], [0], [0, 0, 1, 0], [], []>} : vector<32x16xbf16>, vector<16x16xbf16>, vector<32x16xf32> -> vector<32x16xf32>
    %58 = vector.extract_strided_slice %49 {offsets = [0, 64], sizes = [32, 16], strides = [1, 1]} : vector<32x128xbf16> to vector<32x16xbf16>
    %cst_25 = arith.constant dense<0.000000e+00> : vector<32x16xf32>
    %59 = tpu.matmul %58, %48, %cst_25 {dimension_numbers = #tpu.dot_dimension_numbers<[1], [1], [0], [0], [0, 0, 1, 0], [], []>} : vector<32x16xbf16>, vector<16x16xbf16>, vector<32x16xf32> -> vector<32x16xf32>
    %60 = vector.extract_strided_slice %49 {offsets = [0, 80], sizes = [32, 16], strides = [1, 1]} : vector<32x128xbf16> to vector<32x16xbf16>
    %cst_26 = arith.constant dense<0.000000e+00> : vector<32x16xf32>
    %61 = tpu.matmul %60, %48, %cst_26 {dimension_numbers = #tpu.dot_dimension_numbers<[1], [1], [0], [0], [0, 0, 1, 0], [], []>} : vector<32x16xbf16>, vector<16x16xbf16>, vector<32x16xf32> -> vector<32x16xf32>
    %62 = vector.extract_strided_slice %49 {offsets = [0, 96], sizes = [32, 16], strides = [1, 1]} : vector<32x128xbf16> to vector<32x16xbf16>
    %cst_27 = arith.constant dense<0.000000e+00> : vector<32x16xf32>
    %63 = tpu.matmul %62, %48, %cst_27 {dimension_numbers = #tpu.dot_dimension_numbers<[1], [1], [0], [0], [0, 0, 1, 0], [], []>} : vector<32x16xbf16>, vector<16x16xbf16>, vector<32x16xf32> -> vector<32x16xf32>
    %64 = vector.extract_strided_slice %49 {offsets = [0, 112], sizes = [32, 16], strides = [1, 1]} : vector<32x128xbf16> to vector<32x16xbf16>
    %cst_28 = arith.constant dense<0.000000e+00> : vector<32x16xf32>
    %65 = tpu.matmul %64, %48, %cst_28 {dimension_numbers = #tpu.dot_dimension_numbers<[1], [1], [0], [0], [0, 0, 1, 0], [], []>} : vector<32x16xbf16>, vector<16x16xbf16>, vector<32x16xf32> -> vector<32x16xf32>
    %66 = tpu.concatenate %51, %53, %55, %57, %59, %61, %63, %65 in 1 : vector<32x16xf32>, vector<32x16xf32>, vector<32x16xf32>, vector<32x16xf32>, vector<32x16xf32>, vector<32x16xf32>, vector<32x16xf32>, vector<32x16xf32> -> vector<32x128xf32>
    %c0_29 = arith.constant 0 : index
    %67 = memref.load %arg5[%c0_29] : memref<1xf32, #tpu.memory_space<smem>>
    %68 = vector.broadcast %67 : f32 to vector<32x128xf32>
    %69 = arith.mulf %68, %66 : vector<32x128xf32>
    %70 = arith.addf %69, %1 : vector<32x128xf32>
    %c0_30 = arith.constant 0 : index
    %c0_31 = arith.constant 0 : index
    %c0_32 = arith.constant 0 : index
    %71 = vector.load %arg6[%c0_30, %c0_31, %c0_32] : memref<1x32x128xf32, #tpu.memory_space<vmem>>, vector<1x32x128xf32>
    %72 = vector.shape_cast %71 : vector<1x32x128xf32> to vector<32x128xf32>
    %73 = vector.shape_cast %70 : vector<32x128xf32> to vector<1x32x128xf32>
    tpu.vector_store %arg6[%c0_30, %c0_31, %c0_32], %73 {strides = array<i32>} : memref<1x32x128xf32, #tpu.memory_space<vmem>>, vector<1x32x128xf32>,
    return
  }
  func.func @transform_0(%arg0: i32) -> (i32, i32, i32) {
    %c0_i32 = arith.constant 0 : i32
    %c0_i32_0 = arith.constant 0 : i32
    %c0_i32_1 = arith.constant 0 : i32
    return %arg0, %c0_i32, %c0_i32_0 : i32, i32, i32
  }
  func.func @transform_1(%arg0: i32) -> (i32, i32) {
    %c0_i32 = arith.constant 0 : i32
    %c0_i32_0 = arith.constant 0 : i32
    %c0_i32_1 = arith.constant 0 : i32
    return %c0_i32, %c0_i32_0 : i32, i32
  }
  func.func @transform_2(%arg0: i32) -> (i32, i32) {
    %c0_i32 = arith.constant 0 : i32
    %c0_i32_0 = arith.constant 0 : i32
    %c0_i32_1 = arith.constant 0 : i32
    return %c0_i32, %c0_i32_0 : i32, i32
  }
  func.func @transform_3(%arg0: i32) -> (i32, i32) {
    %c0_i32 = arith.constant 0 : i32
    %c0_i32_0 = arith.constant 0 : i32
    %c0_i32_1 = arith.constant 0 : i32
    return %c0_i32, %c0_i32_0 : i32, i32
  }
  func.func @transform_4(%arg0: i32) -> i32 {
    %c0_i32 = arith.constant 0 : i32
    %c0_i32_0 = arith.constant 0 : i32
    return %c0_i32 : i32
  }
  func.func @transform_5(%arg0: i32) -> (i32, i32, i32) {
    %c0_i32 = arith.constant 0 : i32
    %c0_i32_0 = arith.constant 0 : i32
    %c0_i32_1 = arith.constant 0 : i32
    return %arg0, %c0_i32, %c0_i32_0 : i32, i32, i32
  }
}

module attributes {stable_mosaic.version = 11 : i64} {
  func.func @kernel(%arg0: i32, %arg1: memref<1x32x128xf32, #tpu.memory_space<vmem>>, %arg2: memref<4x32xbf16, #tpu.memory_space<vmem>>, %arg3: memref<4x32xbf16, #tpu.memory_space<vmem>>, %arg4: memref<32x32xbf16, #tpu.memory_space<vmem>>, %arg5: memref<1xf32, #tpu.memory_space<smem>>, %arg6: memref<1x32x128xf32, #tpu.memory_space<vmem>>) attributes {dimension_semantics = [#tpu.dimension_semantics<parallel>], iteration_bounds = array<i64: 2>, scalar_prefetch = 0 : i64, scratch_operands = 0 : i64, tpu.core_type = #tpu.core_type<tc>, window_params = [{transform_indices = @transform_0, window_bounds = array<i64: 1, 32, 128>}, {pipeline_mode = #tpu.pipeline_mode<synchronous>, transform_indices = @transform_1, window_bounds = array<i64: 4, 32>}, {pipeline_mode = #tpu.pipeline_mode<synchronous>, transform_indices = @transform_2, window_bounds = array<i64: 4, 32>}, {pipeline_mode = #tpu.pipeline_mode<synchronous>, transform_indices = @transform_3, window_bounds = array<i64: 32, 32>}, {transform_indices = @transform_4, window_bounds = array<i64: 1>}, {transform_indices = @transform_5, window_bounds = array<i64: 1, 32, 128>}]} {
    %c0 = arith.constant 0 : index
    %c0_0 = arith.constant 0 : index
    %c0_1 = arith.constant 0 : index
    %0 = vector.load %arg1[%c0, %c0_0, %c0_1] : memref<1x32x128xf32, #tpu.memory_space<vmem>>, vector<1x32x128xf32>
    %1 = vector.shape_cast %0 : vector<1x32x128xf32> to vector<32x128xf32>
    %2 = arith.truncf %1 : vector<32x128xf32> to vector<32x128xbf16>
    %c0_2 = arith.constant 0 : index
    %c0_3 = arith.constant 0 : index
    %3 = vector.load %arg2[%c0_2, %c0_3] : memref<4x32xbf16, #tpu.memory_space<vmem>>, vector<4x32xbf16>
    %cst = arith.constant dense<0.000000e+00> : vector<4x128xf32>
    %4 = tpu.matmul %3, %2, %cst {dimension_numbers = #tpu.dot_dimension_numbers<[1], [0], [0], [1], [0, 0, 1, 1], [], []>} : vector<4x32xbf16>, vector<32x128xbf16>, vector<4x128xf32> -> vector<4x128xf32>
    %c0_4 = arith.constant 0 : index
    %c0_5 = arith.constant 0 : index
    %5 = vector.load %arg3[%c0_4, %c0_5] : memref<4x32xbf16, #tpu.memory_space<vmem>>, vector<4x32xbf16>
    %cst_6 = arith.constant dense<0.000000e+00> : vector<4x128xf32>
    %6 = tpu.matmul %5, %2, %cst_6 {dimension_numbers = #tpu.dot_dimension_numbers<[1], [0], [0], [1], [0, 0, 1, 1], [], []>} : vector<4x32xbf16>, vector<32x128xbf16>, vector<4x128xf32> -> vector<4x128xf32>
    %c0_7 = arith.constant 0 : index
    %c0_8 = arith.constant 0 : index
    %7 = vector.load %arg4[%c0_7, %c0_8] : memref<32x32xbf16, #tpu.memory_space<vmem>>, vector<32x32xbf16>
    %cst_9 = arith.constant dense<0.000000e+00> : vector<32x128xf32>
    %8 = tpu.matmul %7, %2, %cst_9 {dimension_numbers = #tpu.dot_dimension_numbers<[1], [0], [0], [1], [0, 0, 1, 1], [], []>} : vector<32x32xbf16>, vector<32x128xbf16>, vector<32x128xf32> -> vector<32x128xf32>
    %cst_10 = arith.constant 0.000000e+00 : f32
    %9 = vector.broadcast %cst_10 : f32 to vector<8x8xf32>
    %10 = vector.extract_strided_slice %4 {offsets = [0, 0], sizes = [4, 8], strides = [1, 1]} : vector<4x128xf32> to vector<4x8xf32>
    %11 = vector.extract_strided_slice %6 {offsets = [0, 0], sizes = [4, 8], strides = [1, 1]} : vector<4x128xf32> to vector<4x8xf32>
    %cst_11 = arith.constant dense<0.000000e+00> : vector<8x8xf32>
    %12 = tpu.matmul %10, %11, %cst_11 {dimension_numbers = #tpu.dot_dimension_numbers<[0], [0], [1], [1], [0, 1, 1, 1], [], []>} : vector<4x8xf32>, vector<4x8xf32>, vector<8x8xf32> -> vector<8x8xf32>
    %13 = arith.addf %9, %12 : vector<8x8xf32>
    %14 = vector.extract_strided_slice %4 {offsets = [0, 8], sizes = [4, 8], strides = [1, 1]} : vector<4x128xf32> to vector<4x8xf32>
    %15 = vector.extract_strided_slice %6 {offsets = [0, 8], sizes = [4, 8], strides = [1, 1]} : vector<4x128xf32> to vector<4x8xf32>
    %cst_12 = arith.constant dense<0.000000e+00> : vector<8x8xf32>
    %16 = tpu.matmul %14, %15, %cst_12 {dimension_numbers = #tpu.dot_dimension_numbers<[0], [0], [1], [1], [0, 1, 1, 1], [], []>} : vector<4x8xf32>, vector<4x8xf32>, vector<8x8xf32> -> vector<8x8xf32>
    %17 = arith.addf %13, %16 : vector<8x8xf32>
    %18 = vector.extract_strided_slice %4 {offsets = [0, 16], sizes = [4, 8], strides = [1, 1]} : vector<4x128xf32> to vector<4x8xf32>
    %19 = vector.extract_strided_slice %6 {offsets = [0, 16], sizes = [4, 8], strides = [1, 1]} : vector<4x128xf32> to vector<4x8xf32>
    %cst_13 = arith.constant dense<0.000000e+00> : vector<8x8xf32>
    %20 = tpu.matmul %18, %19, %cst_13 {dimension_numbers = #tpu.dot_dimension_numbers<[0], [0], [1], [1], [0, 1, 1, 1], [], []>} : vector<4x8xf32>, vector<4x8xf32>, vector<8x8xf32> -> vector<8x8xf32>
    %21 = arith.addf %17, %20 : vector<8x8xf32>
    %22 = vector.extract_strided_slice %4 {offsets = [0, 24], sizes = [4, 8], strides = [1, 1]} : vector<4x128xf32> to vector<4x8xf32>
    %23 = vector.extract_strided_slice %6 {offsets = [0, 24], sizes = [4, 8], strides = [1, 1]} : vector<4x128xf32> to vector<4x8xf32>
    %cst_14 = arith.constant dense<0.000000e+00> : vector<8x8xf32>
    %24 = tpu.matmul %22, %23, %cst_14 {dimension_numbers = #tpu.dot_dimension_numbers<[0], [0], [1], [1], [0, 1, 1, 1], [], []>} : vector<4x8xf32>, vector<4x8xf32>, vector<8x8xf32> -> vector<8x8xf32>
    %25 = arith.addf %21, %24 : vector<8x8xf32>
    %26 = vector.extract_strided_slice %4 {offsets = [0, 32], sizes = [4, 8], strides = [1, 1]} : vector<4x128xf32> to vector<4x8xf32>
    %27 = vector.extract_strided_slice %6 {offsets = [0, 32], sizes = [4, 8], strides = [1, 1]} : vector<4x128xf32> to vector<4x8xf32>
    %cst_15 = arith.constant dense<0.000000e+00> : vector<8x8xf32>
    %28 = tpu.matmul %26, %27, %cst_15 {dimension_numbers = #tpu.dot_dimension_numbers<[0], [0], [1], [1], [0, 1, 1, 1], [], []>} : vector<4x8xf32>, vector<4x8xf32>, vector<8x8xf32> -> vector<8x8xf32>
    %29 = arith.addf %25, %28 : vector<8x8xf32>
    %30 = vector.extract_strided_slice %4 {offsets = [0, 40], sizes = [4, 8], strides = [1, 1]} : vector<4x128xf32> to vector<4x8xf32>
    %31 = vector.extract_strided_slice %6 {offsets = [0, 40], sizes = [4, 8], strides = [1, 1]} : vector<4x128xf32> to vector<4x8xf32>
    %cst_16 = arith.constant dense<0.000000e+00> : vector<8x8xf32>
    %32 = tpu.matmul %30, %31, %cst_16 {dimension_numbers = #tpu.dot_dimension_numbers<[0], [0], [1], [1], [0, 1, 1, 1], [], []>} : vector<4x8xf32>, vector<4x8xf32>, vector<8x8xf32> -> vector<8x8xf32>
    %33 = arith.addf %29, %32 : vector<8x8xf32>
    %34 = vector.extract_strided_slice %4 {offsets = [0, 48], sizes = [4, 8], strides = [1, 1]} : vector<4x128xf32> to vector<4x8xf32>
    %35 = vector.extract_strided_slice %6 {offsets = [0, 48], sizes = [4, 8], strides = [1, 1]} : vector<4x128xf32> to vector<4x8xf32>
    %cst_17 = arith.constant dense<0.000000e+00> : vector<8x8xf32>
    %36 = tpu.matmul %34, %35, %cst_17 {dimension_numbers = #tpu.dot_dimension_numbers<[0], [0], [1], [1], [0, 1, 1, 1], [], []>} : vector<4x8xf32>, vector<4x8xf32>, vector<8x8xf32> -> vector<8x8xf32>
    %37 = arith.addf %33, %36 : vector<8x8xf32>
    %38 = vector.extract_strided_slice %4 {offsets = [0, 56], sizes = [4, 8], strides = [1, 1]} : vector<4x128xf32> to vector<4x8xf32>
    %39 = vector.extract_strided_slice %6 {offsets = [0, 56], sizes = [4, 8], strides = [1, 1]} : vector<4x128xf32> to vector<4x8xf32>
    %cst_18 = arith.constant dense<0.000000e+00> : vector<8x8xf32>
    %40 = tpu.matmul %38, %39, %cst_18 {dimension_numbers = #tpu.dot_dimension_numbers<[0], [0], [1], [1], [0, 1, 1, 1], [], []>} : vector<4x8xf32>, vector<4x8xf32>, vector<8x8xf32> -> vector<8x8xf32>
    %41 = arith.addf %37, %40 : vector<8x8xf32>
    %42 = vector.extract_strided_slice %4 {offsets = [0, 64], sizes = [4, 8], strides = [1, 1]} : vector<4x128xf32> to vector<4x8xf32>
    %43 = vector.extract_strided_slice %6 {offsets = [0, 64], sizes = [4, 8], strides = [1, 1]} : vector<4x128xf32> to vector<4x8xf32>
    %cst_19 = arith.constant dense<0.000000e+00> : vector<8x8xf32>
    %44 = tpu.matmul %42, %43, %cst_19 {dimension_numbers = #tpu.dot_dimension_numbers<[0], [0], [1], [1], [0, 1, 1, 1], [], []>} : vector<4x8xf32>, vector<4x8xf32>, vector<8x8xf32> -> vector<8x8xf32>
    %45 = arith.addf %41, %44 : vector<8x8xf32>
    %46 = vector.extract_strided_slice %4 {offsets = [0, 72], sizes = [4, 8], strides = [1, 1]} : vector<4x128xf32> to vector<4x8xf32>
    %47 = vector.extract_strided_slice %6 {offsets = [0, 72], sizes = [4, 8], strides = [1, 1]} : vector<4x128xf32> to vector<4x8xf32>
    %cst_20 = arith.constant dense<0.000000e+00> : vector<8x8xf32>
    %48 = tpu.matmul %46, %47, %cst_20 {dimension_numbers = #tpu.dot_dimension_numbers<[0], [0], [1], [1], [0, 1, 1, 1], [], []>} : vector<4x8xf32>, vector<4x8xf32>, vector<8x8xf32> -> vector<8x8xf32>
    %49 = arith.addf %45, %48 : vector<8x8xf32>
    %50 = vector.extract_strided_slice %4 {offsets = [0, 80], sizes = [4, 8], strides = [1, 1]} : vector<4x128xf32> to vector<4x8xf32>
    %51 = vector.extract_strided_slice %6 {offsets = [0, 80], sizes = [4, 8], strides = [1, 1]} : vector<4x128xf32> to vector<4x8xf32>
    %cst_21 = arith.constant dense<0.000000e+00> : vector<8x8xf32>
    %52 = tpu.matmul %50, %51, %cst_21 {dimension_numbers = #tpu.dot_dimension_numbers<[0], [0], [1], [1], [0, 1, 1, 1], [], []>} : vector<4x8xf32>, vector<4x8xf32>, vector<8x8xf32> -> vector<8x8xf32>
    %53 = arith.addf %49, %52 : vector<8x8xf32>
    %54 = vector.extract_strided_slice %4 {offsets = [0, 88], sizes = [4, 8], strides = [1, 1]} : vector<4x128xf32> to vector<4x8xf32>
    %55 = vector.extract_strided_slice %6 {offsets = [0, 88], sizes = [4, 8], strides = [1, 1]} : vector<4x128xf32> to vector<4x8xf32>
    %cst_22 = arith.constant dense<0.000000e+00> : vector<8x8xf32>
    %56 = tpu.matmul %54, %55, %cst_22 {dimension_numbers = #tpu.dot_dimension_numbers<[0], [0], [1], [1], [0, 1, 1, 1], [], []>} : vector<4x8xf32>, vector<4x8xf32>, vector<8x8xf32> -> vector<8x8xf32>
    %57 = arith.addf %53, %56 : vector<8x8xf32>
    %58 = vector.extract_strided_slice %4 {offsets = [0, 96], sizes = [4, 8], strides = [1, 1]} : vector<4x128xf32> to vector<4x8xf32>
    %59 = vector.extract_strided_slice %6 {offsets = [0, 96], sizes = [4, 8], strides = [1, 1]} : vector<4x128xf32> to vector<4x8xf32>
    %cst_23 = arith.constant dense<0.000000e+00> : vector<8x8xf32>
    %60 = tpu.matmul %58, %59, %cst_23 {dimension_numbers = #tpu.dot_dimension_numbers<[0], [0], [1], [1], [0, 1, 1, 1], [], []>} : vector<4x8xf32>, vector<4x8xf32>, vector<8x8xf32> -> vector<8x8xf32>
    %61 = arith.addf %57, %60 : vector<8x8xf32>
    %62 = vector.extract_strided_slice %4 {offsets = [0, 104], sizes = [4, 8], strides = [1, 1]} : vector<4x128xf32> to vector<4x8xf32>
    %63 = vector.extract_strided_slice %6 {offsets = [0, 104], sizes = [4, 8], strides = [1, 1]} : vector<4x128xf32> to vector<4x8xf32>
    %cst_24 = arith.constant dense<0.000000e+00> : vector<8x8xf32>
    %64 = tpu.matmul %62, %63, %cst_24 {dimension_numbers = #tpu.dot_dimension_numbers<[0], [0], [1], [1], [0, 1, 1, 1], [], []>} : vector<4x8xf32>, vector<4x8xf32>, vector<8x8xf32> -> vector<8x8xf32>
    %65 = arith.addf %61, %64 : vector<8x8xf32>
    %66 = vector.extract_strided_slice %4 {offsets = [0, 112], sizes = [4, 8], strides = [1, 1]} : vector<4x128xf32> to vector<4x8xf32>
    %67 = vector.extract_strided_slice %6 {offsets = [0, 112], sizes = [4, 8], strides = [1, 1]} : vector<4x128xf32> to vector<4x8xf32>
    %cst_25 = arith.constant dense<0.000000e+00> : vector<8x8xf32>
    %68 = tpu.matmul %66, %67, %cst_25 {dimension_numbers = #tpu.dot_dimension_numbers<[0], [0], [1], [1], [0, 1, 1, 1], [], []>} : vector<4x8xf32>, vector<4x8xf32>, vector<8x8xf32> -> vector<8x8xf32>
    %69 = arith.addf %65, %68 : vector<8x8xf32>
    %70 = vector.extract_strided_slice %4 {offsets = [0, 120], sizes = [4, 8], strides = [1, 1]} : vector<4x128xf32> to vector<4x8xf32>
    %71 = vector.extract_strided_slice %6 {offsets = [0, 120], sizes = [4, 8], strides = [1, 1]} : vector<4x128xf32> to vector<4x8xf32>
    %cst_26 = arith.constant dense<0.000000e+00> : vector<8x8xf32>
    %72 = tpu.matmul %70, %71, %cst_26 {dimension_numbers = #tpu.dot_dimension_numbers<[0], [0], [1], [1], [0, 1, 1, 1], [], []>} : vector<4x8xf32>, vector<4x8xf32>, vector<8x8xf32> -> vector<8x8xf32>
    %73 = arith.addf %69, %72 : vector<8x8xf32>
    %cst_27 = arith.constant 0.000000e+00 : f32
    %74 = vector.broadcast %cst_27 : f32 to vector<8x8xf32>
    %75 = arith.subf %74, %73 : vector<8x8xf32>
    %76 = math.exp %75 : vector<8x8xf32>
    %cst_28 = arith.constant 1.000000e+00 : f32
    %77 = vector.broadcast %cst_28 : f32 to vector<8x8xf32>
    %78 = arith.addf %77, %76 : vector<8x8xf32>
    %79 = tpu.reciprocal %78 {approx = true} : vector<8x8xf32> -> vector<8x8xf32>
    %80 = arith.truncf %79 : vector<8x8xf32> to vector<8x8xbf16>
    %81 = arith.truncf %8 : vector<32x128xf32> to vector<32x128xbf16>
    %82 = vector.extract_strided_slice %81 {offsets = [0, 0], sizes = [32, 8], strides = [1, 1]} : vector<32x128xbf16> to vector<32x8xbf16>
    %cst_29 = arith.constant dense<0.000000e+00> : vector<32x8xf32>
    %83 = tpu.matmul %82, %80, %cst_29 {dimension_numbers = #tpu.dot_dimension_numbers<[1], [1], [0], [0], [0, 0, 1, 0], [], []>} : vector<32x8xbf16>, vector<8x8xbf16>, vector<32x8xf32> -> vector<32x8xf32>
    %84 = vector.extract_strided_slice %81 {offsets = [0, 8], sizes = [32, 8], strides = [1, 1]} : vector<32x128xbf16> to vector<32x8xbf16>
    %cst_30 = arith.constant dense<0.000000e+00> : vector<32x8xf32>
    %85 = tpu.matmul %84, %80, %cst_30 {dimension_numbers = #tpu.dot_dimension_numbers<[1], [1], [0], [0], [0, 0, 1, 0], [], []>} : vector<32x8xbf16>, vector<8x8xbf16>, vector<32x8xf32> -> vector<32x8xf32>
    %86 = vector.extract_strided_slice %81 {offsets = [0, 16], sizes = [32, 8], strides = [1, 1]} : vector<32x128xbf16> to vector<32x8xbf16>
    %cst_31 = arith.constant dense<0.000000e+00> : vector<32x8xf32>
    %87 = tpu.matmul %86, %80, %cst_31 {dimension_numbers = #tpu.dot_dimension_numbers<[1], [1], [0], [0], [0, 0, 1, 0], [], []>} : vector<32x8xbf16>, vector<8x8xbf16>, vector<32x8xf32> -> vector<32x8xf32>
    %88 = vector.extract_strided_slice %81 {offsets = [0, 24], sizes = [32, 8], strides = [1, 1]} : vector<32x128xbf16> to vector<32x8xbf16>
    %cst_32 = arith.constant dense<0.000000e+00> : vector<32x8xf32>
    %89 = tpu.matmul %88, %80, %cst_32 {dimension_numbers = #tpu.dot_dimension_numbers<[1], [1], [0], [0], [0, 0, 1, 0], [], []>} : vector<32x8xbf16>, vector<8x8xbf16>, vector<32x8xf32> -> vector<32x8xf32>
    %90 = vector.extract_strided_slice %81 {offsets = [0, 32], sizes = [32, 8], strides = [1, 1]} : vector<32x128xbf16> to vector<32x8xbf16>
    %cst_33 = arith.constant dense<0.000000e+00> : vector<32x8xf32>
    %91 = tpu.matmul %90, %80, %cst_33 {dimension_numbers = #tpu.dot_dimension_numbers<[1], [1], [0], [0], [0, 0, 1, 0], [], []>} : vector<32x8xbf16>, vector<8x8xbf16>, vector<32x8xf32> -> vector<32x8xf32>
    %92 = vector.extract_strided_slice %81 {offsets = [0, 40], sizes = [32, 8], strides = [1, 1]} : vector<32x128xbf16> to vector<32x8xbf16>
    %cst_34 = arith.constant dense<0.000000e+00> : vector<32x8xf32>
    %93 = tpu.matmul %92, %80, %cst_34 {dimension_numbers = #tpu.dot_dimension_numbers<[1], [1], [0], [0], [0, 0, 1, 0], [], []>} : vector<32x8xbf16>, vector<8x8xbf16>, vector<32x8xf32> -> vector<32x8xf32>
    %94 = vector.extract_strided_slice %81 {offsets = [0, 48], sizes = [32, 8], strides = [1, 1]} : vector<32x128xbf16> to vector<32x8xbf16>
    %cst_35 = arith.constant dense<0.000000e+00> : vector<32x8xf32>
    %95 = tpu.matmul %94, %80, %cst_35 {dimension_numbers = #tpu.dot_dimension_numbers<[1], [1], [0], [0], [0, 0, 1, 0], [], []>} : vector<32x8xbf16>, vector<8x8xbf16>, vector<32x8xf32> -> vector<32x8xf32>
    %96 = vector.extract_strided_slice %81 {offsets = [0, 56], sizes = [32, 8], strides = [1, 1]} : vector<32x128xbf16> to vector<32x8xbf16>
    %cst_36 = arith.constant dense<0.000000e+00> : vector<32x8xf32>
    %97 = tpu.matmul %96, %80, %cst_36 {dimension_numbers = #tpu.dot_dimension_numbers<[1], [1], [0], [0], [0, 0, 1, 0], [], []>} : vector<32x8xbf16>, vector<8x8xbf16>, vector<32x8xf32> -> vector<32x8xf32>
    %98 = vector.extract_strided_slice %81 {offsets = [0, 64], sizes = [32, 8], strides = [1, 1]} : vector<32x128xbf16> to vector<32x8xbf16>
    %cst_37 = arith.constant dense<0.000000e+00> : vector<32x8xf32>
    %99 = tpu.matmul %98, %80, %cst_37 {dimension_numbers = #tpu.dot_dimension_numbers<[1], [1], [0], [0], [0, 0, 1, 0], [], []>} : vector<32x8xbf16>, vector<8x8xbf16>, vector<32x8xf32> -> vector<32x8xf32>
    %100 = vector.extract_strided_slice %81 {offsets = [0, 72], sizes = [32, 8], strides = [1, 1]} : vector<32x128xbf16> to vector<32x8xbf16>
    %cst_38 = arith.constant dense<0.000000e+00> : vector<32x8xf32>
    %101 = tpu.matmul %100, %80, %cst_38 {dimension_numbers = #tpu.dot_dimension_numbers<[1], [1], [0], [0], [0, 0, 1, 0], [], []>} : vector<32x8xbf16>, vector<8x8xbf16>, vector<32x8xf32> -> vector<32x8xf32>
    %102 = vector.extract_strided_slice %81 {offsets = [0, 80], sizes = [32, 8], strides = [1, 1]} : vector<32x128xbf16> to vector<32x8xbf16>
    %cst_39 = arith.constant dense<0.000000e+00> : vector<32x8xf32>
    %103 = tpu.matmul %102, %80, %cst_39 {dimension_numbers = #tpu.dot_dimension_numbers<[1], [1], [0], [0], [0, 0, 1, 0], [], []>} : vector<32x8xbf16>, vector<8x8xbf16>, vector<32x8xf32> -> vector<32x8xf32>
    %104 = vector.extract_strided_slice %81 {offsets = [0, 88], sizes = [32, 8], strides = [1, 1]} : vector<32x128xbf16> to vector<32x8xbf16>
    %cst_40 = arith.constant dense<0.000000e+00> : vector<32x8xf32>
    %105 = tpu.matmul %104, %80, %cst_40 {dimension_numbers = #tpu.dot_dimension_numbers<[1], [1], [0], [0], [0, 0, 1, 0], [], []>} : vector<32x8xbf16>, vector<8x8xbf16>, vector<32x8xf32> -> vector<32x8xf32>
    %106 = vector.extract_strided_slice %81 {offsets = [0, 96], sizes = [32, 8], strides = [1, 1]} : vector<32x128xbf16> to vector<32x8xbf16>
    %cst_41 = arith.constant dense<0.000000e+00> : vector<32x8xf32>
    %107 = tpu.matmul %106, %80, %cst_41 {dimension_numbers = #tpu.dot_dimension_numbers<[1], [1], [0], [0], [0, 0, 1, 0], [], []>} : vector<32x8xbf16>, vector<8x8xbf16>, vector<32x8xf32> -> vector<32x8xf32>
    %108 = vector.extract_strided_slice %81 {offsets = [0, 104], sizes = [32, 8], strides = [1, 1]} : vector<32x128xbf16> to vector<32x8xbf16>
    %cst_42 = arith.constant dense<0.000000e+00> : vector<32x8xf32>
    %109 = tpu.matmul %108, %80, %cst_42 {dimension_numbers = #tpu.dot_dimension_numbers<[1], [1], [0], [0], [0, 0, 1, 0], [], []>} : vector<32x8xbf16>, vector<8x8xbf16>, vector<32x8xf32> -> vector<32x8xf32>
    %110 = vector.extract_strided_slice %81 {offsets = [0, 112], sizes = [32, 8], strides = [1, 1]} : vector<32x128xbf16> to vector<32x8xbf16>
    %cst_43 = arith.constant dense<0.000000e+00> : vector<32x8xf32>
    %111 = tpu.matmul %110, %80, %cst_43 {dimension_numbers = #tpu.dot_dimension_numbers<[1], [1], [0], [0], [0, 0, 1, 0], [], []>} : vector<32x8xbf16>, vector<8x8xbf16>, vector<32x8xf32> -> vector<32x8xf32>
    %112 = vector.extract_strided_slice %81 {offsets = [0, 120], sizes = [32, 8], strides = [1, 1]} : vector<32x128xbf16> to vector<32x8xbf16>
    %cst_44 = arith.constant dense<0.000000e+00> : vector<32x8xf32>
    %113 = tpu.matmul %112, %80, %cst_44 {dimension_numbers = #tpu.dot_dimension_numbers<[1], [1], [0], [0], [0, 0, 1, 0], [], []>} : vector<32x8xbf16>, vector<8x8xbf16>, vector<32x8xf32> -> vector<32x8xf32>
    %114 = tpu.concatenate %83, %85, %87, %89, %91, %93, %95, %97, %99, %101, %103, %105, %107, %109, %111, %113 in 1 : vector<32x8xf32>, vector<32x8xf32>, vector<32x8xf32>, vector<32x8xf32>, vector<32x8xf32>, vector<32x8xf32>, vector<32x8xf32>, vector<32x8xf32>, vector<32x8xf32>, vector<32x8xf32>, vector<32x8xf32>, vector<32x8xf32>, vector<32x8xf32>, vector<32x8xf32>, vector<32x8xf32>, vector<32x8xf32> -> vector<32x128xf32>
    %c0_45 = arith.constant 0 : index
    %115 = memref.load %arg5[%c0_45] : memref<1xf32, #tpu.memory_space<smem>>
    %116 = vector.broadcast %115 : f32 to vector<32x128xf32>
    %117 = arith.mulf %116, %114 : vector<32x128xf32>
    %118 = arith.addf %117, %1 : vector<32x128xf32>
    %c0_46 = arith.constant 0 : index
    %c0_47 = arith.constant 0 : index
    %c0_48 = arith.constant 0 : index
    %119 = vector.load %arg6[%c0_46, %c0_47, %c0_48] : memref<1x32x128xf32, #tpu.memory_space<vmem>>, vector<1x32x128xf32>
    %120 = vector.shape_cast %119 : vector<1x32x128xf32> to vector<32x128xf32>
    %121 = vector.shape_cast %118 : vector<32x128xf32> to vector<1x32x128xf32>
    tpu.vector_store %arg6[%c0_46, %c0_47, %c0_48], %121 {strides = array<i32>} : memref<1x32x128xf32, #tpu.memory_space<vmem>>, vector<1x32x128xf32>,
    return
  }
  func.func @transform_0(%arg0: i32) -> (i32, i32, i32) {
    %c0_i32 = arith.constant 0 : i32
    %c0_i32_0 = arith.constant 0 : i32
    %c0_i32_1 = arith.constant 0 : i32
    return %arg0, %c0_i32, %c0_i32_0 : i32, i32, i32
  }
  func.func @transform_1(%arg0: i32) -> (i32, i32) {
    %c0_i32 = arith.constant 0 : i32
    %c0_i32_0 = arith.constant 0 : i32
    %c0_i32_1 = arith.constant 0 : i32
    return %c0_i32, %c0_i32_0 : i32, i32
  }
  func.func @transform_2(%arg0: i32) -> (i32, i32) {
    %c0_i32 = arith.constant 0 : i32
    %c0_i32_0 = arith.constant 0 : i32
    %c0_i32_1 = arith.constant 0 : i32
    return %c0_i32, %c0_i32_0 : i32, i32
  }
  func.func @transform_3(%arg0: i32) -> (i32, i32) {
    %c0_i32 = arith.constant 0 : i32
    %c0_i32_0 = arith.constant 0 : i32
    %c0_i32_1 = arith.constant 0 : i32
    return %c0_i32, %c0_i32_0 : i32, i32
  }
  func.func @transform_4(%arg0: i32) -> i32 {
    %c0_i32 = arith.constant 0 : i32
    %c0_i32_0 = arith.constant 0 : i32
    return %c0_i32 : i32
  }
  func.func @transform_5(%arg0: i32) -> (i32, i32, i32) {
    %c0_i32 = arith.constant 0 : i32
    %c0_i32_0 = arith.constant 0 : i32
    %c0_i32_1 = arith.constant 0 : i32
    return %arg0, %c0_i32, %c0_i32_0 : i32, i32, i32
  }
}

</mosaic_0001>

<llo_original>
// kernel: aa_kernel_forward.3
$region0: #{aa_kernel_forward.3}
  #allocation0 [shape = 'u32[]', space=smem, size = 0x4, offset = 0x4, fixed_abs, tag = 'smem constant byte address 0x4 - core index']
  #allocation1 [shape = 'u32[144,128]{1,0:T(1,128)}', space=vmem, size = 0x12000, scoped, tag = 'internal scratch']
  %s0 = inlined_call_operand.vmem [shape: f32[2,16,128], index: 0, kind: input, shape index: {}]
  %s1 = inlined_call_operand.vmem [shape: bf16[32,16], index: 1, kind: input, shape index: {}]
  %s2 = inlined_call_operand.vmem [shape: bf16[9,32,32], index: 2, kind: input, shape index: {}]
  %s3 = inlined_call_operand.vmem [shape: f32[9,1,128], index: 3, kind: input, shape index: {}]
  %s4 = inlined_call_operand.vmem [shape: f32[2,32,128], index: 4, kind: output, shape index: {}]
  %s5 = sld [smem:[#allocation0]]
  $region49: #{aa_kernel_forward.3} parent=0
    _
  %s7 = ssub.s32 1, %s5
  %s8 = scalar_select 0, %s7, %s5
  loop: start=0, step=1, limit=4
  $region2: #{aa_kernel_forward.3} parent=0 // loop_pre_header
    _
  $region3: #{aa_kernel_forward.3} parent=0 // loop_header
    %s10 = sphi 0, %s14
    %p11 = scmp.ge.s32.totalorder %s10, 4
    %s20 = sphi 0, %s22
    %s23 = sphi 0, %s20
    %s24 = sphi 0, %s23
    %s40 = sphi 0, %s24
    %s44 = sphi 0, %s44
    %s46 = sphi 0, %s44
    %s47 = sphi 0, %s46
    %s61 = sphi 0, %s47
    %s65 = sphi 0, %s65
    %s67 = sphi 0, %s65
    %s68 = sphi 0, %s67
    %s82 = sphi 0, %s68
    %s86 = sphi 0, %s86
    %s88 = sphi 0, %s86
    %s89 = sphi 0, %s88
    %s103 = sphi 0, %s89
    %s109 = sphi 0, %s111
    %s112 = sphi 0, %s109
    %s113 = sphi 0, %s112
    %s129 = sphi 0, %s113
  $region4: #{aa_kernel_forward.3} parent=0 // loop_header_branch
    %13 = sbr.rel (%p11) target = $region8
  $region5: #{aa_kernel_forward.3} parent=0 // loop_body
    %s15 = ssub.s32 %s10, 1
    %s16 = ssub.s32 %s10, 2
    %s17 = sadd.s32 %s10, 1
    %s18 = ssub.s32 %s10, %s17
    %p19 = scmp.eq.s32.totalorder %s18, 0
    %s21 = sadd.s32 %s20, 1
    %s22 = scalar_select %p19, %s20, %s21
    %p25 = pneg %p19
    %p26 = scmp.eq.s32.totalorder %s10, 1
    %p27 = por %p25, %p26
    %p28 = scmp.ne.s32.totalorder %s20, %s23
    %p29 = scmp.eq.s32.totalorder %s10, 0
    %p30 = por %p28, %p29
    %p31 = scmp.ne.s32.totalorder %s20, %s23
    %p32 = scmp.eq.s32.totalorder %s15, 1
    %p33 = por %p31, %p32
    %p34 = scmp.ne.s32.totalorder %s23, %s24
    %p35 = scmp.eq.s32.totalorder %s15, 0
    %p36 = por %p34, %p35
    %p37 = scmp.ne.s32.totalorder %s23, %s24
    %p38 = scmp.eq.s32.totalorder %s16, 1
    %p39 = por %p37, %p38
    %p41 = scmp.ne.s32.totalorder %s24, %s40
    %p42 = scmp.eq.s32.totalorder %s16, 0
    %p43 = por %p41, %p42
    %s45 = sadd.s32 %s44, 1
    %p48 = scmp.eq.s32.totalorder %s10, 1
    %p49 = scmp.ne.s32.totalorder %s44, %s46
    %p50 = scmp.eq.s32.totalorder %s10, 0
    %p51 = por %p49, %p50
    %p52 = scmp.ne.s32.totalorder %s44, %s46
    %p53 = scmp.eq.s32.totalorder %s15, 1
    %p54 = por %p52, %p53
    %p55 = scmp.ne.s32.totalorder %s46, %s47
    %p56 = scmp.eq.s32.totalorder %s15, 0
    %p57 = por %p55, %p56
    %p58 = scmp.ne.s32.totalorder %s46, %s47
    %p59 = scmp.eq.s32.totalorder %s16, 1
    %p60 = por %p58, %p59
    %p62 = scmp.ne.s32.totalorder %s47, %s61
    %p63 = scmp.eq.s32.totalorder %s16, 0
    %p64 = por %p62, %p63
    %s66 = sadd.s32 %s65, 1
    %p69 = scmp.eq.s32.totalorder %s10, 1
    %p70 = scmp.ne.s32.totalorder %s65, %s67
    %p71 = scmp.eq.s32.totalorder %s10, 0
    %p72 = por %p70, %p71
    %p73 = scmp.ne.s32.totalorder %s65, %s67
    %p74 = scmp.eq.s32.totalorder %s15, 1
    %p75 = por %p73, %p74
    %p76 = scmp.ne.s32.totalorder %s67, %s68
    %p77 = scmp.eq.s32.totalorder %s15, 0
    %p78 = por %p76, %p77
    %p79 = scmp.ne.s32.totalorder %s67, %s68
    %p80 = scmp.eq.s32.totalorder %s16, 1
    %p81 = por %p79, %p80
    %p83 = scmp.ne.s32.totalorder %s68, %s82
    %p84 = scmp.eq.s32.totalorder %s16, 0
    %p85 = por %p83, %p84
    %s87 = sadd.s32 %s86, 1
    %p90 = scmp.eq.s32.totalorder %s10, 1
    %p91 = scmp.ne.s32.totalorder %s86, %s88
    %p92 = scmp.eq.s32.totalorder %s10, 0
    %p93 = por %p91, %p92
    %p94 = scmp.ne.s32.totalorder %s86, %s88
    %p95 = scmp.eq.s32.totalorder %s15, 1
    %p96 = por %p94, %p95
    %p97 = scmp.ne.s32.totalorder %s88, %s89
    %p98 = scmp.eq.s32.totalorder %s15, 0
    %p99 = por %p97, %p98
    %p100 = scmp.ne.s32.totalorder %s88, %s89
    %p101 = scmp.eq.s32.totalorder %s16, 1
    %p102 = por %p100, %p101
    %p104 = scmp.ne.s32.totalorder %s89, %s103
    %p105 = scmp.eq.s32.totalorder %s16, 0
    %p106 = por %p104, %p105
    %s107 = ssub.s32 %s10, %s17
    %p108 = scmp.eq.s32.totalorder %s107, 0
    %s110 = sadd.s32 %s109, 1
    %s111 = scalar_select %p108, %s109, %s110
    %p114 = pneg %p108
    %p115 = scmp.eq.s32.totalorder %s10, 1
    %p116 = por %p114, %p115
    %p117 = scmp.ne.s32.totalorder %s109, %s112
    %p118 = scmp.eq.s32.totalorder %s10, 0
    %p119 = por %p117, %p118
    %p120 = scmp.ne.s32.totalorder %s109, %s112
    %p121 = scmp.eq.s32.totalorder %s15, 1
    %p122 = por %p120, %p121
    %p123 = scmp.ne.s32.totalorder %s112, %s113
    %p124 = scmp.eq.s32.totalorder %s15, 0
    %p125 = por %p123, %p124
    %p126 = scmp.ne.s32.totalorder %s112, %s113
    %p127 = scmp.eq.s32.totalorder %s16, 1
    %p128 = por %p126, %p127
    %p130 = scmp.ne.s32.totalorder %s113, %s129
    %p131 = scmp.eq.s32.totalorder %s16, 0
    %p132 = por %p130, %p131
    %p133 = scmp.le.s32.totalorder 1, %s10
    %p134 = scmp.lt.s32.totalorder %s10, 3
    %p135 = pnand %p133, %p134
    %p136 = pneg %p135
    // Predicated region
    $region9: #{aa_kernel_forward.3} parent=5 // pred_check
      _
    $region10: #{aa_kernel_forward.3} parent=5 // pred_check_branch
      %138 = sbr.rel (%p135) target = $region12
    $region11: #{aa_kernel_forward.3} parent=5 // pred_region
      %s139 = ssub.s32 %s10, 1
      // Predicated region
      $region13: #{aa_kernel_forward.3} parent=11 // pred_check
        %p140 = pneg %p57
      $region14: #{aa_kernel_forward.3} parent=11 // pred_check_branch
        %142 = sbr.rel (%p140) target = $region16
      $region15: #{aa_kernel_forward.3} parent=11 // pred_region
        _
      $region16: #{aa_kernel_forward.3} parent=11 // pred_fallthru
        _
      // Predicated region
      $region17: #{aa_kernel_forward.3} parent=11 // pred_check
        %p143 = pneg %p78
      $region18: #{aa_kernel_forward.3} parent=11 // pred_check_branch
        %145 = sbr.rel (%p143) target = $region20
      $region19: #{aa_kernel_forward.3} parent=11 // pred_region
        _
      $region20: #{aa_kernel_forward.3} parent=11 // pred_fallthru
        _
      // Predicated region
      $region21: #{aa_kernel_forward.3} parent=11 // pred_check
        %p146 = pneg %p99
      $region22: #{aa_kernel_forward.3} parent=11 // pred_check_branch
        %148 = sbr.rel (%p146) target = $region24
      $region23: #{aa_kernel_forward.3} parent=11 // pred_region
        _
      $region24: #{aa_kernel_forward.3} parent=11 // pred_fallthru
        _
    $region12: #{aa_kernel_forward.3} parent=5 // pred_fallthru
      _
    %p149 = scmp.lt.s32.totalorder %s10, 2
    // Predicated region
    $region25: #{aa_kernel_forward.3} parent=5 // pred_check
      %p150 = pneg %p149
    $region26: #{aa_kernel_forward.3} parent=5 // pred_check_branch
      %152 = sbr.rel (%p150) target = $region28
    $region27: #{aa_kernel_forward.3} parent=5 // pred_region
      // Predicated region
      $region29: #{aa_kernel_forward.3} parent=27 // pred_check
        %p153 = pneg %p30
      $region30: #{aa_kernel_forward.3} parent=27 // pred_check_branch
        %155 = sbr.rel (%p153) target = $region32
      $region31: #{aa_kernel_forward.3} parent=27 // pred_region
        %p156 = scmp.lt.s32.totalorder %s10, 1
        %s157 = scalar_select %p156, %s10, 1
        %s158 = smul.addr %s157, 2
        %s159 = smul.addr %s158, 8
        %s160 = scalar_lea.vmem %s0, %s159
      $region32: #{aa_kernel_forward.3} parent=27 // pred_fallthru
        _
    $region28: #{aa_kernel_forward.3} parent=5 // pred_fallthru
      _
    %p161 = scmp.le.s32.totalorder 1, %s10
    %p162 = scmp.lt.s32.totalorder %s10, 3
    %p163 = pnand %p161, %p162
    %p164 = pneg %p163
    // Predicated region
    $region33: #{aa_kernel_forward.3} parent=5 // pred_check
      _
    $region34: #{aa_kernel_forward.3} parent=5 // pred_check_branch
      %166 = sbr.rel (%p163) target = $region36
    $region35: #{aa_kernel_forward.3} parent=5 // pred_region
      %s167 = ssub.s32 %s10, 1
      %p168 = scmp.lt.s32.totalorder %s15, 1
      %s169 = scalar_select %p168, %s15, 1
      %s170 = smul.addr %s169, 2
      %s171 = smul.addr %s170, 8
      %s172 = scalar_lea.vmem %s0, %s171
      %p173 = pneg %p36
      %p174 = pneg %p33
      %p175 = pneg %p57
      %p176 = pneg %p54
      %p177 = pneg %p78
      %p178 = pneg %p75
      %p179 = pneg %p99
      %p180 = pneg %p96
      %p181 = pneg %p125
      %p182 = pneg %p122
      %p183 = scmp.lt.s32.totalorder %s15, 1
      %s184 = scalar_select %p183, %s15, 1
      %s185 = smul.addr %s184, 4
      %s186 = smul.addr %s185, 8
      %s187 = scalar_lea.vmem %s4, %s186
      %p188 = scmp.lt.s32.totalorder %s15, 1
      %s189 = scalar_select %p188, %s15, 1
      %s190 = smul.addr %s189, 2
      %s191 = smul.addr %s190, 8
      %s192 = scalar_lea.vmem %s0, %s191
      %p193 = scmp.lt.s32.totalorder %s15, 1
      %s194 = scalar_select %p193, %s15, 1
      %s195 = smul.addr %s194, 4
      %s196 = smul.addr %s195, 8
      %s197 = scalar_lea.vmem %s4, %s196
      %v199 = vld [vmem:[%s192] sm:$0xff]
      %v200 = vld [vmem:[%s192 + $0x8] sm:$0xff]
      %v201 = vpack.c.bf16 %v200, %v199
      %v202 = vld [vmem:[%s1] sm:$0xf]
      %v203 = vld [vmem:[%s1 + $0x4] sm:$0xf]
      %v204 = vld [vmem:[%s1 + $0x8] sm:$0xf]
      %v205 = vld [vmem:[%s1 + $0xc] sm:$0xf]
      %v210 = vunpack.c.l.b16 %v202
      %v211 = vunpack.c.l.b16 %v203
      %v212 = vunpack.c.l.b16 %v204
      %v213 = vunpack.c.l.b16 %v205
      %v214 = vpack.c.b16 %v211, %v210
      %v215 = vpack.c.b16 %v213, %v212
      %vm216 = vcmask 130048
      %v218 = vsel %vm216, %v214, 0
      %v221 = vsel %vm216, %v215, 0
      %223 = vmatprep.subr.bf16.mxu0 0
      %224 = vmatpush1.bf16.msra.mxu0 %v201
      %225 = vmatprep.subr.bf16.mxu0 0
      %226 = vmatpush1.bf16.msra.mxu0 0
      %227 = vmatprep.subr.bf16.mxu0 0
      %228 = vmatpush1.bf16.msra.mxu0 0
      %229 = vmatprep.subr.bf16.mxu0 0
      %230 = vmatpush1.bf16.msra.mxu0 0
      %231 = vmatprep.subr.bf16.mxu0 0
      %232 = vmatpush1.bf16.msra.mxu0 0
      %233 = vmatprep.subr.bf16.mxu0 0
      %234 = vmatpush1.bf16.msra.mxu0 0
      %235 = vmatprep.subr.bf16.mxu0 0
      %236 = vmatpush1.bf16.msra.mxu0 0
      %237 = vmatprep.subr.bf16.mxu0 0
      %238 = vmatpush1.bf16.msra.mxu0 0
      %239 = vmatprep.subr.bf16.mxu0 0
      %240 = vmatpush1.bf16.msra.mxu0 0
      %241 = vmatprep.subr.bf16.mxu0 0
      %242 = vmatpush1.bf16.msra.mxu0 0
      %243 = vmatprep.subr.bf16.mxu0 0
      %244 = vmatpush1.bf16.msra.mxu0 0
      %245 = vmatprep.subr.bf16.mxu0 0
      %246 = vmatpush1.bf16.msra.mxu0 0
      %247 = vmatprep.subr.bf16.mxu0 0
      %248 = vmatpush1.bf16.msra.mxu0 0
      %249 = vmatprep.subr.bf16.mxu0 0
      %250 = vmatpush1.bf16.msra.mxu0 0
      %251 = vmatprep.subr.bf16.mxu0 0
      %252 = vmatpush1.bf16.msra.mxu0 0
      %253 = vmatprep.subr.bf16.mxu0 0
      %254 = vmatpush1.bf16.msra.mxu0 0
      %255 = vmatprep.mubr.bf16.mxu0 0
      %256 = vmatmul.mubr.bf16.gmra.mrb[0].mxu0 %v218
      %v257 = vpop.f32.mrb[0].mxu0
      %v258 = vadd.f32 0.0, %v257
      %v259 = vpop.f32.mrb[0].mxu0
      %v260 = vpop.f32.mrb[0].mxu0
      %v261 = vadd.f32 0.0, %v260
      %v262 = vpop.f32.mrb[0].mxu0
      %263 = vmatprep.mubr.bf16.mxu0 0
      %264 = vmatmul.mubr.bf16.gmra.mrb[0].mxu0 %v221
      %v265 = vpop.f32.mrb[0].mxu0
      %v266 = vadd.f32 0.0, %v265
      %v267 = vpop.f32.mrb[0].mxu0
      %v268 = vpop.f32.mrb[0].mxu0
      %v269 = vadd.f32 0.0, %v268
      %v270 = vpop.f32.mrb[0].mxu0
      %271 = vdwg.mxu0
      %272 = vrot.lane.b32.xlu0 %v258, 9
      %v273 = vpop.permute.xlu0 %272
      %274 = vrot.lane.b32.xlu0 %v261, 9
      %v275 = vpop.permute.xlu0 %274
      %276 = vrot.lane.b32.xlu0 %v266, 9
      %v277 = vpop.permute.xlu0 %276
      %278 = vrot.lane.b32.xlu0 %v269, 9
      %v279 = vpop.permute.xlu0 %278
      %v280 = vld [vmem:[%s3] sm:$0x1]
      %v282 = vlaneseq
      %v283 = vshrl.u32 %v282, 7
      %v284 = vsub.s32 0, %v283
      %v285 = vrot.slane %v280, %v284
      %v287 = vmul.f32 %v273, %v285
      %v288 = vmul.f32 %v275, %v285
      %v289 = vmul.f32 %v277, %v285
      %v290 = vmul.f32 %v279, %v285
      %v291 = vpack.c.bf16 %v288, %v287
      %v292 = vpack.c.bf16 %v290, %v289
      %v293 = vld [vmem:[%s2] sm:$0xf]
      %v294 = vld [vmem:[%s2 + $0x4] sm:$0xf]
      %v295 = vld [vmem:[%s2 + $0x8] sm:$0xf]
      %v296 = vld [vmem:[%s2 + $0xc] sm:$0xf]
      %297 = vrot.lane.b32.xlu0 %v258, 8
      %v298 = vpop.permute.xlu0 %297
      %299 = vrot.lane.b32.xlu0 %v261, 8
      %v300 = vpop.permute.xlu0 %299
      %301 = vrot.lane.b32.xlu0 %v266, 8
      %v302 = vpop.permute.xlu0 %301
      %303 = vrot.lane.b32.xlu0 %v269, 8
      %v304 = vpop.permute.xlu0 %303
      %s305 = scalar_lea.vmem %s3, 1
      %v306 = vld [vmem:[%s305] sm:$0x1]
      %v308 = vlaneseq
      %v309 = vshrl.u32 %v308, 7
      %v310 = vsub.s32 0, %v309
      %v311 = vrot.slane %v306, %v310
      %v313 = vmul.f32 %v298, %v311
      %v314 = vmul.f32 %v300, %v311
      %v315 = vmul.f32 %v302, %v311
      %v316 = vmul.f32 %v304, %v311
      %v317 = vpack.c.bf16 %v314, %v313
      %v318 = vpack.c.bf16 %v316, %v315
      %s319 = scalar_lea.vmem %s2, 16
      %v320 = vld [vmem:[%s319] sm:$0xf]
      %v321 = vld [vmem:[%s319 + $0x4] sm:$0xf]
      %v322 = vld [vmem:[%s319 + $0x8] sm:$0xf]
      %v323 = vld [vmem:[%s319 + $0xc] sm:$0xf]
      %v328 = vunpack.c.l.b16 %v320
      %v329 = vunpack.c.l.b16 %v321
      %v330 = vunpack.c.l.b16 %v322
      %v331 = vunpack.c.l.b16 %v323
      %v332 = vpack.c.b16 %v329, %v328
      %v333 = vpack.c.b16 %v331, %v330
      %vm334 = vcmask 261120
      %v336 = vsel %vm334, %v332, 0
      %v339 = vsel %vm334, %v333, 0
      %341 = vmatprep.subr.bf16.mxu0 0
      %342 = vmatpush1.bf16.msra.mxu0 %v317
      %343 = vmatprep.subr.bf16.mxu0 0
      %344 = vmatpush1.bf16.msra.mxu0 %v318
      %345 = vmatprep.subr.bf16.mxu0 0
      %346 = vmatpush1.bf16.msra.mxu0 0
      %347 = vmatprep.subr.bf16.mxu0 0
      %348 = vmatpush1.bf16.msra.mxu0 0
      %349 = vmatprep.subr.bf16.mxu0 0
      %350 = vmatpush1.bf16.msra.mxu0 0
      %351 = vmatprep.subr.bf16.mxu0 0
      %352 = vmatpush1.bf16.msra.mxu0 0
      %353 = vmatprep.subr.bf16.mxu0 0
      %354 = vmatpush1.bf16.msra.mxu0 0
      %355 = vmatprep.subr.bf16.mxu0 0
      %356 = vmatpush1.bf16.msra.mxu0 0
      %357 = vmatprep.subr.bf16.mxu0 0
      %358 = vmatpush1.bf16.msra.mxu0 0
      %359 = vmatprep.subr.bf16.mxu0 0
      %360 = vmatpush1.bf16.msra.mxu0 0
      %361 = vmatprep.subr.bf16.mxu0 0
      %362 = vmatpush1.bf16.msra.mxu0 0
      %363 = vmatprep.subr.bf16.mxu0 0
      %364 = vmatpush1.bf16.msra.mxu0 0
      %365 = vmatprep.subr.bf16.mxu0 0
      %366 = vmatpush1.bf16.msra.mxu0 0
      %367 = vmatprep.subr.bf16.mxu0 0
      %368 = vmatpush1.bf16.msra.mxu0 0
      %369 = vmatprep.subr.bf16.mxu0 0
      %370 = vmatpush1.bf16.msra.mxu0 0
      %371 = vmatprep.subr.bf16.mxu0 0
      %372 = vmatpush1.bf16.msra.mxu0 0
      %373 = vmatprep.mubr.bf16.mxu0 0
      %374 = vmatmul.mubr.bf16.gmra.mrb[0].mxu0 %v336
      %v375 = vpop.f32.mrb[0].mxu0
      %v376 = vadd.f32 0.0, %v375
      %v377 = vpop.f32.mrb[0].mxu0
      %v378 = vpop.f32.mrb[0].mxu0
      %v379 = vadd.f32 0.0, %v378
      %v380 = vpop.f32.mrb[0].mxu0
      %381 = vmatprep.mubr.bf16.mxu0 0
      %382 = vmatmul.mubr.bf16.gmra.mrb[0].mxu0 %v339
      %v383 = vpop.f32.mrb[0].mxu0
      %v384 = vadd.f32 0.0, %v383
      %v385 = vpop.f32.mrb[0].mxu0
      %v386 = vpop.f32.mrb[0].mxu0
      %v387 = vadd.f32 0.0, %v386
      %v388 = vpop.f32.mrb[0].mxu0
      %389 = vdwg.mxu0
      %v394 = vunpack.c.l.b16 %v293
      %v395 = vunpack.c.l.b16 %v294
      %v396 = vunpack.c.l.b16 %v295
      %v397 = vunpack.c.l.b16 %v296
      %v398 = vpack.c.b16 %v395, %v394
      %v399 = vpack.c.b16 %v397, %v396
      %v401 = vsel %vm334, %v398, 0
      %v404 = vsel %vm334, %v399, 0
      %406 = vmatprep.subr.bf16.mxu0 0
      %407 = vmatpush1.bf16.msra.mxu0 %v291
      %408 = vmatprep.subr.bf16.mxu0 0
      %409 = vmatpush1.bf16.msra.mxu0 %v292
      %410 = vmatprep.subr.bf16.mxu0 0
      %411 = vmatpush1.bf16.msra.mxu0 0
      %412 = vmatprep.subr.bf16.mxu0 0
      %413 = vmatpush1.bf16.msra.mxu0 0
      %414 = vmatprep.subr.bf16.mxu0 0
      %415 = vmatpush1.bf16.msra.mxu0 0
      %416 = vmatprep.subr.bf16.mxu0 0
      %417 = vmatpush1.bf16.msra.mxu0 0
      %418 = vmatprep.subr.bf16.mxu0 0
      %419 = vmatpush1.bf16.msra.mxu0 0
      %420 = vmatprep.subr.bf16.mxu0 0
      %421 = vmatpush1.bf16.msra.mxu0 0
      %422 = vmatprep.subr.bf16.mxu0 0
      %423 = vmatpush1.bf16.msra.mxu0 0
      %424 = vmatprep.subr.bf16.mxu0 0
      %425 = vmatpush1.bf16.msra.mxu0 0
      %426 = vmatprep.subr.bf16.mxu0 0
      %427 = vmatpush1.bf16.msra.mxu0 0
      %428 = vmatprep.subr.bf16.mxu0 0
      %429 = vmatpush1.bf16.msra.mxu0 0
      %430 = vmatprep.subr.bf16.mxu0 0
      %431 = vmatpush1.bf16.msra.mxu0 0
      %432 = vmatprep.subr.bf16.mxu0 0
      %433 = vmatpush1.bf16.msra.mxu0 0
      %434 = vmatprep.subr.bf16.mxu0 0
      %435 = vmatpush1.bf16.msra.mxu0 0
      %436 = vmatprep.subr.bf16.mxu0 0
      %437 = vmatpush1.bf16.msra.mxu0 0
      %438 = vmatprep.mubr.bf16.mxu0 0
      %439 = vmatmul.mubr.bf16.gmra.mrb[0].mxu0 %v401
      %v440 = vpop.f32.mrb[0].mxu0
      %v441 = vadd.f32 %v376, %v440
      %v442 = vpop.f32.mrb[0].mxu0
      %v443 = vpop.f32.mrb[0].mxu0
      %v444 = vadd.f32 %v379, %v443
      %v445 = vpop.f32.mrb[0].mxu0
      %446 = vmatprep.mubr.bf16.mxu0 0
      %447 = vmatmul.mubr.bf16.gmra.mrb[0].mxu0 %v404
      %v448 = vpop.f32.mrb[0].mxu0
      %v449 = vadd.f32 %v384, %v448
      %v450 = vpop.f32.mrb[0].mxu0
      %v451 = vpop.f32.mrb[0].mxu0
      %v452 = vadd.f32 %v387, %v451
      %v453 = vpop.f32.mrb[0].mxu0
      %454 = vdwg.mxu0
      %455 = vrot.lane.b32.xlu0 %v258, 7
      %v456 = vpop.permute.xlu0 %455
      %457 = vrot.lane.b32.xlu0 %v261, 7
      %v458 = vpop.permute.xlu0 %457
      %459 = vrot.lane.b32.xlu0 %v266, 7
      %v460 = vpop.permute.xlu0 %459
      %461 = vrot.lane.b32.xlu0 %v269, 7
      %v462 = vpop.permute.xlu0 %461
      %s463 = scalar_lea.vmem %s3, 2
      %v464 = vld [vmem:[%s463] sm:$0x1]
      %v466 = vlaneseq
      %v467 = vshrl.u32 %v466, 7
      %v468 = vsub.s32 0, %v467
      %v469 = vrot.slane %v464, %v468
      %v471 = vmul.f32 %v456, %v469
      %v472 = vmul.f32 %v458, %v469
      %v473 = vmul.f32 %v460, %v469
      %v474 = vmul.f32 %v462, %v469
      %v475 = vpack.c.bf16 %v472, %v471
      %v476 = vpack.c.bf16 %v474, %v473
      %s477 = scalar_lea.vmem %s2, 32
      %v478 = vld [vmem:[%s477] sm:$0xf]
      %v479 = vld [vmem:[%s477 + $0x4] sm:$0xf]
      %v480 = vld [vmem:[%s477 + $0x8] sm:$0xf]
      %v481 = vld [vmem:[%s477 + $0xc] sm:$0xf]
      %v486 = vunpack.c.l.b16 %v478
      %v487 = vunpack.c.l.b16 %v479
      %v488 = vunpack.c.l.b16 %v480
      %v489 = vunpack.c.l.b16 %v481
      %v490 = vpack.c.b16 %v487, %v486
      %v491 = vpack.c.b16 %v489, %v488
      %v493 = vsel %vm334, %v490, 0
      %v496 = vsel %vm334, %v491, 0
      %498 = vmatprep.subr.bf16.mxu0 0
      %499 = vmatpush1.bf16.msra.mxu0 %v475
      %500 = vmatprep.subr.bf16.mxu0 0
      %501 = vmatpush1.bf16.msra.mxu0 %v476
      %502 = vmatprep.subr.bf16.mxu0 0
      %503 = vmatpush1.bf16.msra.mxu0 0
      %504 = vmatprep.subr.bf16.mxu0 0
      %505 = vmatpush1.bf16.msra.mxu0 0
      %506 = vmatprep.subr.bf16.mxu0 0
      %507 = vmatpush1.bf16.msra.mxu0 0
      %508 = vmatprep.subr.bf16.mxu0 0
      %509 = vmatpush1.bf16.msra.mxu0 0
      %510 = vmatprep.subr.bf16.mxu0 0
      %511 = vmatpush1.bf16.msra.mxu0 0
      %512 = vmatprep.subr.bf16.mxu0 0
      %513 = vmatpush1.bf16.msra.mxu0 0
      %514 = vmatprep.subr.bf16.mxu0 0
      %515 = vmatpush1.bf16.msra.mxu0 0
      %516 = vmatprep.subr.bf16.mxu0 0
      %517 = vmatpush1.bf16.msra.mxu0 0
      %518 = vmatprep.subr.bf16.mxu0 0
      %519 = vmatpush1.bf16.msra.mxu0 0
      %520 = vmatprep.subr.bf16.mxu0 0
      %521 = vmatpush1.bf16.msra.mxu0 0
      %522 = vmatprep.subr.bf16.mxu0 0
      %523 = vmatpush1.bf16.msra.mxu0 0
      %524 = vmatprep.subr.bf16.mxu0 0
      %525 = vmatpush1.bf16.msra.mxu0 0
      %526 = vmatprep.subr.bf16.mxu0 0
      %527 = vmatpush1.bf16.msra.mxu0 0
      %528 = vmatprep.subr.bf16.mxu0 0
      %529 = vmatpush1.bf16.msra.mxu0 0
      %530 = vmatprep.mubr.bf16.mxu0 0
      %531 = vmatmul.mubr.bf16.gmra.mrb[0].mxu0 %v493
      %v532 = vpop.f32.mrb[0].mxu0
      %v533 = vadd.f32 0.0, %v532
      %v534 = vpop.f32.mrb[0].mxu0
      %v535 = vpop.f32.mrb[0].mxu0
      %v536 = vadd.f32 0.0, %v535
      %v537 = vpop.f32.mrb[0].mxu0
      %538 = vmatprep.mubr.bf16.mxu0 0
      %539 = vmatmul.mubr.bf16.gmra.mrb[0].mxu0 %v496
      %v540 = vpop.f32.mrb[0].mxu0
      %v541 = vadd.f32 0.0, %v540
      %v542 = vpop.f32.mrb[0].mxu0
      %v543 = vpop.f32.mrb[0].mxu0
      %v544 = vadd.f32 0.0, %v543
      %v545 = vpop.f32.mrb[0].mxu0
      %546 = vdwg.mxu0
      %v547 = vadd.f32 %v441, %v533
      %v548 = vadd.f32 %v444, %v536
      %v549 = vadd.f32 %v449, %v541
      %v550 = vadd.f32 %v452, %v544
      %551 = vrot.lane.b32.xlu0 %v258, 1
      %v552 = vpop.permute.xlu0 %551
      %553 = vrot.lane.b32.xlu0 %v261, 1
      %v554 = vpop.permute.xlu0 %553
      %555 = vrot.lane.b32.xlu0 %v266, 1
      %v556 = vpop.permute.xlu0 %555
      %557 = vrot.lane.b32.xlu0 %v269, 1
      %v558 = vpop.permute.xlu0 %557
      %s559 = scalar_lea.vmem %s3, 3
      %v560 = vld [vmem:[%s559] sm:$0x1]
      %v562 = vlaneseq
      %v563 = vshrl.u32 %v562, 7
      %v564 = vsub.s32 0, %v563
      %v565 = vrot.slane %v560, %v564
      %v567 = vmul.f32 %v552, %v565
      %v568 = vmul.f32 %v554, %v565
      %v569 = vmul.f32 %v556, %v565
      %v570 = vmul.f32 %v558, %v565
      %v571 = vpack.c.bf16 %v568, %v567
      %v572 = vpack.c.bf16 %v570, %v569
      %s573 = scalar_lea.vmem %s2, 48
      %v574 = vld [vmem:[%s573] sm:$0xf]
      %v575 = vld [vmem:[%s573 + $0x4] sm:$0xf]
      %v576 = vld [vmem:[%s573 + $0x8] sm:$0xf]
      %v577 = vld [vmem:[%s573 + $0xc] sm:$0xf]
      %v582 = vunpack.c.l.b16 %v574
      %v583 = vunpack.c.l.b16 %v575
      %v584 = vunpack.c.l.b16 %v576
      %v585 = vunpack.c.l.b16 %v577
      %v586 = vpack.c.b16 %v583, %v582
      %v587 = vpack.c.b16 %v585, %v584
      %v589 = vsel %vm334, %v586, 0
      %v592 = vsel %vm334, %v587, 0
      %594 = vmatprep.subr.bf16.mxu0 0
      %595 = vmatpush1.bf16.msra.mxu0 %v571
      %596 = vmatprep.subr.bf16.mxu0 0
      %597 = vmatpush1.bf16.msra.mxu0 %v572
      %598 = vmatprep.subr.bf16.mxu0 0
      %599 = vmatpush1.bf16.msra.mxu0 0
      %600 = vmatprep.subr.bf16.mxu0 0
      %601 = vmatpush1.bf16.msra.mxu0 0
      %602 = vmatprep.subr.bf16.mxu0 0
      %603 = vmatpush1.bf16.msra.mxu0 0
      %604 = vmatprep.subr.bf16.mxu0 0
      %605 = vmatpush1.bf16.msra.mxu0 0
      %606 = vmatprep.subr.bf16.mxu0 0
      %607 = vmatpush1.bf16.msra.mxu0 0
      %608 = vmatprep.subr.bf16.mxu0 0
      %609 = vmatpush1.bf16.msra.mxu0 0
      %610 = vmatprep.subr.bf16.mxu0 0
      %611 = vmatpush1.bf16.msra.mxu0 0
      %612 = vmatprep.subr.bf16.mxu0 0
      %613 = vmatpush1.bf16.msra.mxu0 0
      %614 = vmatprep.subr.bf16.mxu0 0
      %615 = vmatpush1.bf16.msra.mxu0 0
      %616 = vmatprep.subr.bf16.mxu0 0
      %617 = vmatpush1.bf16.msra.mxu0 0
      %618 = vmatprep.subr.bf16.mxu0 0
      %619 = vmatpush1.bf16.msra.mxu0 0
      %620 = vmatprep.subr.bf16.mxu0 0
      %621 = vmatpush1.bf16.msra.mxu0 0
      %622 = vmatprep.subr.bf16.mxu0 0
      %623 = vmatpush1.bf16.msra.mxu0 0
      %624 = vmatprep.subr.bf16.mxu0 0
      %625 = vmatpush1.bf16.msra.mxu0 0
      %626 = vmatprep.mubr.bf16.mxu0 0
      %627 = vmatmul.mubr.bf16.gmra.mrb[0].mxu0 %v589
      %v628 = vpop.f32.mrb[0].mxu0
      %v629 = vadd.f32 0.0, %v628
      %v630 = vpop.f32.mrb[0].mxu0
      %v631 = vpop.f32.mrb[0].mxu0
      %v632 = vadd.f32 0.0, %v631
      %v633 = vpop.f32.mrb[0].mxu0
      %634 = vmatprep.mubr.bf16.mxu0 0
      %635 = vmatmul.mubr.bf16.gmra.mrb[0].mxu0 %v592
      %v636 = vpop.f32.mrb[0].mxu0
      %v637 = vadd.f32 0.0, %v636
      %v638 = vpop.f32.mrb[0].mxu0
      %v639 = vpop.f32.mrb[0].mxu0
      %v640 = vadd.f32 0.0, %v639
      %v641 = vpop.f32.mrb[0].mxu0
      %642 = vdwg.mxu0
      %v643 = vadd.f32 %v547, %v629
      %v644 = vadd.f32 %v548, %v632
      %v645 = vadd.f32 %v549, %v637
      %v646 = vadd.f32 %v550, %v640
      %s647 = scalar_lea.vmem %s3, 4
      %v648 = vld [vmem:[%s647] sm:$0x1]
      %v650 = vlaneseq
      %v651 = vshrl.u32 %v650, 7
      %v652 = vsub.s32 0, %v651
      %v653 = vrot.slane %v648, %v652
      %v655 = vmul.f32 %v258, %v653
      %v656 = vmul.f32 %v261, %v653
      %v657 = vmul.f32 %v266, %v653
      %v658 = vmul.f32 %v269, %v653
      %v659 = vpack.c.bf16 %v656, %v655
      %v660 = vpack.c.bf16 %v658, %v657
      %s661 = scalar_lea.vmem %s2, 64
      %v662 = vld [vmem:[%s661] sm:$0xf]
      %v663 = vld [vmem:[%s661 + $0x4] sm:$0xf]
      %v664 = vld [vmem:[%s661 + $0x8] sm:$0xf]
      %v665 = vld [vmem:[%s661 + $0xc] sm:$0xf]
      %v670 = vunpack.c.l.b16 %v662
      %v671 = vunpack.c.l.b16 %v663
      %v672 = vunpack.c.l.b16 %v664
      %v673 = vunpack.c.l.b16 %v665
      %v674 = vpack.c.b16 %v671, %v670
      %v675 = vpack.c.b16 %v673, %v672
      %v677 = vsel %vm334, %v674, 0
      %v680 = vsel %vm334, %v675, 0
      %682 = vmatprep.subr.bf16.mxu0 0
      %683 = vmatpush1.bf16.msra.mxu0 %v659
      %684 = vmatprep.subr.bf16.mxu0 0
      %685 = vmatpush1.bf16.msra.mxu0 %v660
      %686 = vmatprep.subr.bf16.mxu0 0
      %687 = vmatpush1.bf16.msra.mxu0 0
      %688 = vmatprep.subr.bf16.mxu0 0
      %689 = vmatpush1.bf16.msra.mxu0 0
      %690 = vmatprep.subr.bf16.mxu0 0
      %691 = vmatpush1.bf16.msra.mxu0 0
      %692 = vmatprep.subr.bf16.mxu0 0
      %693 = vmatpush1.bf16.msra.mxu0 0
      %694 = vmatprep.subr.bf16.mxu0 0
      %695 = vmatpush1.bf16.msra.mxu0 0
      %696 = vmatprep.subr.bf16.mxu0 0
      %697 = vmatpush1.bf16.msra.mxu0 0
      %698 = vmatprep.subr.bf16.mxu0 0
      %699 = vmatpush1.bf16.msra.mxu0 0
      %700 = vmatprep.subr.bf16.mxu0 0
      %701 = vmatpush1.bf16.msra.mxu0 0
      %702 = vmatprep.subr.bf16.mxu0 0
      %703 = vmatpush1.bf16.msra.mxu0 0
      %704 = vmatprep.subr.bf16.mxu0 0
      %705 = vmatpush1.bf16.msra.mxu0 0
      %706 = vmatprep.subr.bf16.mxu0 0
      %707 = vmatpush1.bf16.msra.mxu0 0
      %708 = vmatprep.subr.bf16.mxu0 0
      %709 = vmatpush1.bf16.msra.mxu0 0
      %710 = vmatprep.subr.bf16.mxu0 0
      %711 = vmatpush1.bf16.msra.mxu0 0
      %712 = vmatprep.subr.bf16.mxu0 0
      %713 = vmatpush1.bf16.msra.mxu0 0
      %714 = vmatprep.mubr.bf16.mxu0 0
      %715 = vmatmul.mubr.bf16.gmra.mrb[0].mxu0 %v677
      %v716 = vpop.f32.mrb[0].mxu0
      %v717 = vadd.f32 0.0, %v716
      %v718 = vpop.f32.mrb[0].mxu0
      %v719 = vpop.f32.mrb[0].mxu0
      %v720 = vadd.f32 0.0, %v719
      %v721 = vpop.f32.mrb[0].mxu0
      %722 = vmatprep.mubr.bf16.mxu0 0
      %723 = vmatmul.mubr.bf16.gmra.mrb[0].mxu0 %v680
      %v724 = vpop.f32.mrb[0].mxu0
      %v725 = vadd.f32 0.0, %v724
      %v726 = vpop.f32.mrb[0].mxu0
      %v727 = vpop.f32.mrb[0].mxu0
      %v728 = vadd.f32 0.0, %v727
      %v729 = vpop.f32.mrb[0].mxu0
      %730 = vdwg.mxu0
      %v731 = vadd.f32 %v643, %v717
      %v732 = vadd.f32 %v644, %v720
      %v733 = vadd.f32 %v645, %v725
      %v734 = vadd.f32 %v646, %v728
      %735 = vrot.lane.b32.xlu0 %v258, 127
      %v736 = vpop.permute.xlu0 %735
      %737 = vrot.lane.b32.xlu0 %v261, 127
      %v738 = vpop.permute.xlu0 %737
      %739 = vrot.lane.b32.xlu0 %v266, 127
      %v740 = vpop.permute.xlu0 %739
      %741 = vrot.lane.b32.xlu0 %v269, 127
      %v742 = vpop.permute.xlu0 %741
      %s743 = scalar_lea.vmem %s3, 5
      %v744 = vld [vmem:[%s743] sm:$0x1]
      %v746 = vlaneseq
      %v747 = vshrl.u32 %v746, 7
      %v748 = vsub.s32 0, %v747
      %v749 = vrot.slane %v744, %v748
      %v751 = vmul.f32 %v736, %v749
      %v752 = vmul.f32 %v738, %v749
      %v753 = vmul.f32 %v740, %v749
      %v754 = vmul.f32 %v742, %v749
      %v755 = vpack.c.bf16 %v752, %v751
      %v756 = vpack.c.bf16 %v754, %v753
      %s757 = scalar_lea.vmem %s2, 80
      %v758 = vld [vmem:[%s757] sm:$0xf]
      %v759 = vld [vmem:[%s757 + $0x4] sm:$0xf]
      %v760 = vld [vmem:[%s757 + $0x8] sm:$0xf]
      %v761 = vld [vmem:[%s757 + $0xc] sm:$0xf]
      %v766 = vunpack.c.l.b16 %v758
      %v767 = vunpack.c.l.b16 %v759
      %v768 = vunpack.c.l.b16 %v760
      %v769 = vunpack.c.l.b16 %v761
      %v770 = vpack.c.b16 %v767, %v766
      %v771 = vpack.c.b16 %v769, %v768
      %v773 = vsel %vm334, %v770, 0
      %v776 = vsel %vm334, %v771, 0
      %778 = vmatprep.subr.bf16.mxu0 0
      %779 = vmatpush1.bf16.msra.mxu0 %v755
      %780 = vmatprep.subr.bf16.mxu0 0
      %781 = vmatpush1.bf16.msra.mxu0 %v756
      %782 = vmatprep.subr.bf16.mxu0 0
      %783 = vmatpush1.bf16.msra.mxu0 0
      %784 = vmatprep.subr.bf16.mxu0 0
      %785 = vmatpush1.bf16.msra.mxu0 0
      %786 = vmatprep.subr.bf16.mxu0 0
      %787 = vmatpush1.bf16.msra.mxu0 0
      %788 = vmatprep.subr.bf16.mxu0 0
      %789 = vmatpush1.bf16.msra.mxu0 0
      %790 = vmatprep.subr.bf16.mxu0 0
      %791 = vmatpush1.bf16.msra.mxu0 0
      %792 = vmatprep.subr.bf16.mxu0 0
      %793 = vmatpush1.bf16.msra.mxu0 0
      %794 = vmatprep.subr.bf16.mxu0 0
      %795 = vmatpush1.bf16.msra.mxu0 0
      %796 = vmatprep.subr.bf16.mxu0 0
      %797 = vmatpush1.bf16.msra.mxu0 0
      %798 = vmatprep.subr.bf16.mxu0 0
      %799 = vmatpush1.bf16.msra.mxu0 0
      %800 = vmatprep.subr.bf16.mxu0 0
      %801 = vmatpush1.bf16.msra.mxu0 0
      %802 = vmatprep.subr.bf16.mxu0 0
      %803 = vmatpush1.bf16.msra.mxu0 0
      %804 = vmatprep.subr.bf16.mxu0 0
      %805 = vmatpush1.bf16.msra.mxu0 0
      %806 = vmatprep.subr.bf16.mxu0 0
      %807 = vmatpush1.bf16.msra.mxu0 0
      %808 = vmatprep.subr.bf16.mxu0 0
      %809 = vmatpush1.bf16.msra.mxu0 0
      %810 = vmatprep.mubr.bf16.mxu0 0
      %811 = vmatmul.mubr.bf16.gmra.mrb[0].mxu0 %v773
      %v812 = vpop.f32.mrb[0].mxu0
      %v813 = vadd.f32 0.0, %v812
      %v814 = vpop.f32.mrb[0].mxu0
      %v815 = vpop.f32.mrb[0].mxu0
      %v816 = vadd.f32 0.0, %v815
      %v817 = vpop.f32.mrb[0].mxu0
      %818 = vmatprep.mubr.bf16.mxu0 0
      %819 = vmatmul.mubr.bf16.gmra.mrb[0].mxu0 %v776
      %v820 = vpop.f32.mrb[0].mxu0
      %v821 = vadd.f32 0.0, %v820
      %v822 = vpop.f32.mrb[0].mxu0
      %v823 = vpop.f32.mrb[0].mxu0
      %v824 = vadd.f32 0.0, %v823
      %v825 = vpop.f32.mrb[0].mxu0
      %826 = vdwg.mxu0
      %v827 = vadd.f32 %v731, %v813
      %v828 = vadd.f32 %v732, %v816
      %v829 = vadd.f32 %v733, %v821
      %v830 = vadd.f32 %v734, %v824
      %831 = vrot.lane.b32.xlu0 %v258, 121
      %v832 = vpop.permute.xlu0 %831
      %833 = vrot.lane.b32.xlu0 %v261, 121
      %v834 = vpop.permute.xlu0 %833
      %835 = vrot.lane.b32.xlu0 %v266, 121
      %v836 = vpop.permute.xlu0 %835
      %837 = vrot.lane.b32.xlu0 %v269, 121
      %v838 = vpop.permute.xlu0 %837
      %s839 = scalar_lea.vmem %s3, 6
      %v840 = vld [vmem:[%s839] sm:$0x1]
      %v842 = vlaneseq
      %v843 = vshrl.u32 %v842, 7
      %v844 = vsub.s32 0, %v843
      %v845 = vrot.slane %v840, %v844
      %v847 = vmul.f32 %v832, %v845
      %v848 = vmul.f32 %v834, %v845
      %v849 = vmul.f32 %v836, %v845
      %v850 = vmul.f32 %v838, %v845
      %v851 = vpack.c.bf16 %v848, %v847
      %v852 = vpack.c.bf16 %v850, %v849
      %s853 = scalar_lea.vmem %s2, 96
      %v854 = vld [vmem:[%s853] sm:$0xf]
      %v855 = vld [vmem:[%s853 + $0x4] sm:$0xf]
      %v856 = vld [vmem:[%s853 + $0x8] sm:$0xf]
      %v857 = vld [vmem:[%s853 + $0xc] sm:$0xf]
      %v862 = vunpack.c.l.b16 %v854
      %v863 = vunpack.c.l.b16 %v855
      %v864 = vunpack.c.l.b16 %v856
      %v865 = vunpack.c.l.b16 %v857
      %v866 = vpack.c.b16 %v863, %v862
      %v867 = vpack.c.b16 %v865, %v864
      %v869 = vsel %vm334, %v866, 0
      %v872 = vsel %vm334, %v867, 0
      %874 = vmatprep.subr.bf16.mxu0 0
      %875 = vmatpush1.bf16.msra.mxu0 %v851
      %876 = vmatprep.subr.bf16.mxu0 0
      %877 = vmatpush1.bf16.msra.mxu0 %v852
      %878 = vmatprep.subr.bf16.mxu0 0
      %879 = vmatpush1.bf16.msra.mxu0 0
      %880 = vmatprep.subr.bf16.mxu0 0
      %881 = vmatpush1.bf16.msra.mxu0 0
      %882 = vmatprep.subr.bf16.mxu0 0
      %883 = vmatpush1.bf16.msra.mxu0 0
      %884 = vmatprep.subr.bf16.mxu0 0
      %885 = vmatpush1.bf16.msra.mxu0 0
      %886 = vmatprep.subr.bf16.mxu0 0
      %887 = vmatpush1.bf16.msra.mxu0 0
      %888 = vmatprep.subr.bf16.mxu0 0
      %889 = vmatpush1.bf16.msra.mxu0 0
      %890 = vmatprep.subr.bf16.mxu0 0
      %891 = vmatpush1.bf16.msra.mxu0 0
      %892 = vmatprep.subr.bf16.mxu0 0
      %893 = vmatpush1.bf16.msra.mxu0 0
      %894 = vmatprep.subr.bf16.mxu0 0
      %895 = vmatpush1.bf16.msra.mxu0 0
      %896 = vmatprep.subr.bf16.mxu0 0
      %897 = vmatpush1.bf16.msra.mxu0 0
      %898 = vmatprep.subr.bf16.mxu0 0
      %899 = vmatpush1.bf16.msra.mxu0 0
      %900 = vmatprep.subr.bf16.mxu0 0
      %901 = vmatpush1.bf16.msra.mxu0 0
      %902 = vmatprep.subr.bf16.mxu0 0
      %903 = vmatpush1.bf16.msra.mxu0 0
      %904 = vmatprep.subr.bf16.mxu0 0
      %905 = vmatpush1.bf16.msra.mxu0 0
      %906 = vmatprep.mubr.bf16.mxu0 0
      %907 = vmatmul.mubr.bf16.gmra.mrb[0].mxu0 %v869
      %v908 = vpop.f32.mrb[0].mxu0
      %v909 = vadd.f32 0.0, %v908
      %v910 = vpop.f32.mrb[0].mxu0
      %v911 = vpop.f32.mrb[0].mxu0
      %v912 = vadd.f32 0.0, %v911
      %v913 = vpop.f32.mrb[0].mxu0
      %914 = vmatprep.mubr.bf16.mxu0 0
      %915 = vmatmul.mubr.bf16.gmra.mrb[0].mxu0 %v872
      %v916 = vpop.f32.mrb[0].mxu0
      %v917 = vadd.f32 0.0, %v916
      %v918 = vpop.f32.mrb[0].mxu0
      %v919 = vpop.f32.mrb[0].mxu0
      %v920 = vadd.f32 0.0, %v919
      %v921 = vpop.f32.mrb[0].mxu0
      %922 = vdwg.mxu0
      %v923 = vadd.f32 %v827, %v909
      %v924 = vadd.f32 %v828, %v912
      %v925 = vadd.f32 %v829, %v917
      %v926 = vadd.f32 %v830, %v920
      %927 = vrot.lane.b32.xlu0 %v258, 120
      %v928 = vpop.permute.xlu0 %927
      %929 = vrot.lane.b32.xlu0 %v261, 120
      %v930 = vpop.permute.xlu0 %929
      %931 = vrot.lane.b32.xlu0 %v266, 120
      %v932 = vpop.permute.xlu0 %931
      %933 = vrot.lane.b32.xlu0 %v269, 120
      %v934 = vpop.permute.xlu0 %933
      %s935 = scalar_lea.vmem %s3, 7
      %v936 = vld [vmem:[%s935] sm:$0x1]
      %v938 = vlaneseq
      %v939 = vshrl.u32 %v938, 7
      %v940 = vsub.s32 0, %v939
      %v941 = vrot.slane %v936, %v940
      %v943 = vmul.f32 %v928, %v941
      %v944 = vmul.f32 %v930, %v941
      %v945 = vmul.f32 %v932, %v941
      %v946 = vmul.f32 %v934, %v941
      %v947 = vpack.c.bf16 %v944, %v943
      %v948 = vpack.c.bf16 %v946, %v945
      %s949 = scalar_lea.vmem %s2, 112
      %v950 = vld [vmem:[%s949] sm:$0xf]
      %v951 = vld [vmem:[%s949 + $0x4] sm:$0xf]
      %v952 = vld [vmem:[%s949 + $0x8] sm:$0xf]
      %v953 = vld [vmem:[%s949 + $0xc] sm:$0xf]
      %v958 = vunpack.c.l.b16 %v950
      %v959 = vunpack.c.l.b16 %v951
      %v960 = vunpack.c.l.b16 %v952
      %v961 = vunpack.c.l.b16 %v953
      %v962 = vpack.c.b16 %v959, %v958
      %v963 = vpack.c.b16 %v961, %v960
      %v965 = vsel %vm334, %v962, 0
      %v968 = vsel %vm334, %v963, 0
      %970 = vmatprep.subr.bf16.mxu0 0
      %971 = vmatpush1.bf16.msra.mxu0 %v947
      %972 = vmatprep.subr.bf16.mxu0 0
      %973 = vmatpush1.bf16.msra.mxu0 %v948
      %974 = vmatprep.subr.bf16.mxu0 0
      %975 = vmatpush1.bf16.msra.mxu0 0
      %976 = vmatprep.subr.bf16.mxu0 0
      %977 = vmatpush1.bf16.msra.mxu0 0
      %978 = vmatprep.subr.bf16.mxu0 0
      %979 = vmatpush1.bf16.msra.mxu0 0
      %980 = vmatprep.subr.bf16.mxu0 0
      %981 = vmatpush1.bf16.msra.mxu0 0
      %982 = vmatprep.subr.bf16.mxu0 0
      %983 = vmatpush1.bf16.msra.mxu0 0
      %984 = vmatprep.subr.bf16.mxu0 0
      %985 = vmatpush1.bf16.msra.mxu0 0
      %986 = vmatprep.subr.bf16.mxu0 0
      %987 = vmatpush1.bf16.msra.mxu0 0
      %988 = vmatprep.subr.bf16.mxu0 0
      %989 = vmatpush1.bf16.msra.mxu0 0
      %990 = vmatprep.subr.bf16.mxu0 0
      %991 = vmatpush1.bf16.msra.mxu0 0
      %992 = vmatprep.subr.bf16.mxu0 0
      %993 = vmatpush1.bf16.msra.mxu0 0
      %994 = vmatprep.subr.bf16.mxu0 0
      %995 = vmatpush1.bf16.msra.mxu0 0
      %996 = vmatprep.subr.bf16.mxu0 0
      %997 = vmatpush1.bf16.msra.mxu0 0
      %998 = vmatprep.subr.bf16.mxu0 0
      %999 = vmatpush1.bf16.msra.mxu0 0
      %1000 = vmatprep.subr.bf16.mxu0 0
      %1001 = vmatpush1.bf16.msra.mxu0 0
      %1002 = vmatprep.mubr.bf16.mxu0 0
      %1003 = vmatmul.mubr.bf16.gmra.mrb[0].mxu0 %v965
      %v1004 = vpop.f32.mrb[0].mxu0
      %v1005 = vadd.f32 0.0, %v1004
      %v1006 = vpop.f32.mrb[0].mxu0
      %v1007 = vpop.f32.mrb[0].mxu0
      %v1008 = vadd.f32 0.0, %v1007
      %v1009 = vpop.f32.mrb[0].mxu0
      %1010 = vmatprep.mubr.bf16.mxu0 0
      %1011 = vmatmul.mubr.bf16.gmra.mrb[0].mxu0 %v968
      %v1012 = vpop.f32.mrb[0].mxu0
      %v1013 = vadd.f32 0.0, %v1012
      %v1014 = vpop.f32.mrb[0].mxu0
      %v1015 = vpop.f32.mrb[0].mxu0
      %v1016 = vadd.f32 0.0, %v1015
      %v1017 = vpop.f32.mrb[0].mxu0
      %1018 = vdwg.mxu0
      %v1019 = vadd.f32 %v923, %v1005
      %v1020 = vadd.f32 %v924, %v1008
      %v1021 = vadd.f32 %v925, %v1013
      %v1022 = vadd.f32 %v926, %v1016
      %1023 = vrot.lane.b32.xlu0 %v258, 119
      %v1024 = vpop.permute.xlu0 %1023
      %1025 = vrot.lane.b32.xlu0 %v261, 119
      %v1026 = vpop.permute.xlu0 %1025
      %1027 = vrot.lane.b32.xlu0 %v266, 119
      %v1028 = vpop.permute.xlu0 %1027
      %1029 = vrot.lane.b32.xlu0 %v269, 119
      %v1030 = vpop.permute.xlu0 %1029
      %s1031 = scalar_lea.vmem %s3, 8
      %v1032 = vld [vmem:[%s1031] sm:$0x1]
      %v1034 = vlaneseq
      %v1035 = vshrl.u32 %v1034, 7
      %v1036 = vsub.s32 0, %v1035
      %v1037 = vrot.slane %v1032, %v1036
      %v1039 = vmul.f32 %v1024, %v1037
      %v1040 = vmul.f32 %v1026, %v1037
      %v1041 = vmul.f32 %v1028, %v1037
      %v1042 = vmul.f32 %v1030, %v1037
      %v1043 = vpack.c.bf16 %v1040, %v1039
      %v1044 = vpack.c.bf16 %v1042, %v1041
      %s1045 = scalar_lea.vmem %s2, 128
      %v1046 = vld [vmem:[%s1045] sm:$0xf]
      %v1047 = vld [vmem:[%s1045 + $0x4] sm:$0xf]
      %v1048 = vld [vmem:[%s1045 + $0x8] sm:$0xf]
      %v1049 = vld [vmem:[%s1045 + $0xc] sm:$0xf]
      %v1054 = vunpack.c.l.b16 %v1046
      %v1055 = vunpack.c.l.b16 %v1047
      %v1056 = vunpack.c.l.b16 %v1048
      %v1057 = vunpack.c.l.b16 %v1049
      %v1058 = vpack.c.b16 %v1055, %v1054
      %v1059 = vpack.c.b16 %v1057, %v1056
      %v1061 = vsel %vm334, %v1058, 0
      %v1064 = vsel %vm334, %v1059, 0
      %1066 = vmatprep.subr.bf16.mxu0 0
      %1067 = vmatpush1.bf16.msra.mxu0 %v1043
      %1068 = vmatprep.subr.bf16.mxu0 0
      %1069 = vmatpush1.bf16.msra.mxu0 %v1044
      %1070 = vmatprep.subr.bf16.mxu0 0
      %1071 = vmatpush1.bf16.msra.mxu0 0
      %1072 = vmatprep.subr.bf16.mxu0 0
      %1073 = vmatpush1.bf16.msra.mxu0 0
      %1074 = vmatprep.subr.bf16.mxu0 0
      %1075 = vmatpush1.bf16.msra.mxu0 0
      %1076 = vmatprep.subr.bf16.mxu0 0
      %1077 = vmatpush1.bf16.msra.mxu0 0
      %1078 = vmatprep.subr.bf16.mxu0 0
      %1079 = vmatpush1.bf16.msra.mxu0 0
      %1080 = vmatprep.subr.bf16.mxu0 0
      %1081 = vmatpush1.bf16.msra.mxu0 0
      %1082 = vmatprep.subr.bf16.mxu0 0
      %1083 = vmatpush1.bf16.msra.mxu0 0
      %1084 = vmatprep.subr.bf16.mxu0 0
      %1085 = vmatpush1.bf16.msra.mxu0 0
      %1086 = vmatprep.subr.bf16.mxu0 0
      %1087 = vmatpush1.bf16.msra.mxu0 0
      %1088 = vmatprep.subr.bf16.mxu0 0
      %1089 = vmatpush1.bf16.msra.mxu0 0
      %1090 = vmatprep.subr.bf16.mxu0 0
      %1091 = vmatpush1.bf16.msra.mxu0 0
      %1092 = vmatprep.subr.bf16.mxu0 0
      %1093 = vmatpush1.bf16.msra.mxu0 0
      %1094 = vmatprep.subr.bf16.mxu0 0
      %1095 = vmatpush1.bf16.msra.mxu0 0
      %1096 = vmatprep.subr.bf16.mxu0 0
      %1097 = vmatpush1.bf16.msra.mxu0 0
      %1098 = vmatprep.mubr.bf16.mxu0 0
      %1099 = vmatmul.mubr.bf16.gmra.mrb[0].mxu0 %v1061
      %v1100 = vpop.f32.mrb[0].mxu0
      %v1101 = vadd.f32 0.0, %v1100
      %v1102 = vpop.f32.mrb[0].mxu0
      %v1103 = vpop.f32.mrb[0].mxu0
      %v1104 = vadd.f32 0.0, %v1103
      %v1105 = vpop.f32.mrb[0].mxu0
      %1106 = vmatprep.mubr.bf16.mxu0 0
      %1107 = vmatmul.mubr.bf16.gmra.mrb[0].mxu0 %v1064
      %v1108 = vpop.f32.mrb[0].mxu0
      %v1109 = vadd.f32 0.0, %v1108
      %v1110 = vpop.f32.mrb[0].mxu0
      %v1111 = vpop.f32.mrb[0].mxu0
      %v1112 = vadd.f32 0.0, %v1111
      %v1113 = vpop.f32.mrb[0].mxu0
      %1114 = vdwg.mxu0
      %v1115 = vadd.f32 %v1019, %v1101
      %v1116 = vadd.f32 %v1020, %v1104
      %v1117 = vadd.f32 %v1021, %v1109
      %v1118 = vadd.f32 %v1022, %v1112
      %1119 = vst [vmem:[%s197] sm:$0xff] %v1115
      %1120 = vst [vmem:[%s197 + $0x8] sm:$0xff] %v1116
      %1121 = vst [vmem:[%s197 + $0x10] sm:$0xff] %v1117
      %1122 = vst [vmem:[%s197 + $0x18] sm:$0xff] %v1118
      %p1123 = scmp.lt.s32.totalorder %s15, 1
      %s1124 = scalar_select %p1123, %s15, 1
      %s1125 = smul.addr %s1124, 4
      %s1126 = smul.addr %s1125, 8
      %s1127 = scalar_lea.vmem %s4, %s1126
      // Predicated region
      $region37: #{aa_kernel_forward.3} parent=35 // pred_check
        %p1128 = pneg %p122
      $region38: #{aa_kernel_forward.3} parent=35 // pred_check_branch
        %1130 = sbr.rel (%p1128) target = $region40
      $region39: #{aa_kernel_forward.3} parent=35 // pred_region
        _
      $region40: #{aa_kernel_forward.3} parent=35 // pred_fallthru
        _
    $region36: #{aa_kernel_forward.3} parent=5 // pred_fallthru
      _
    %p1131 = scmp.le.s32.totalorder 2, %s10
    // Predicated region
    $region41: #{aa_kernel_forward.3} parent=5 // pred_check
      %p1132 = pneg %p1131
    $region42: #{aa_kernel_forward.3} parent=5 // pred_check_branch
      %1134 = sbr.rel (%p1132) target = $region44
    $region43: #{aa_kernel_forward.3} parent=5 // pred_region
      %s1135 = ssub.s32 %s10, 2
      // Predicated region
      $region45: #{aa_kernel_forward.3} parent=43 // pred_check
        %p1136 = pneg %p128
      $region46: #{aa_kernel_forward.3} parent=43 // pred_check_branch
        %1138 = sbr.rel (%p1136) target = $region48
      $region47: #{aa_kernel_forward.3} parent=43 // pred_region
        %p1139 = scmp.lt.s32.totalorder %s16, 1
        %s1140 = scalar_select %p1139, %s16, 1
        %s1141 = smul.addr %s1140, 4
        %s1142 = smul.addr %s1141, 8
        %s1143 = scalar_lea.vmem %s4, %s1142
      $region48: #{aa_kernel_forward.3} parent=43 // pred_fallthru
        _
    $region44: #{aa_kernel_forward.3} parent=5 // pred_fallthru
      _
  $region6: #{aa_kernel_forward.3} parent=0 // loop_footer
    %s14 = sadd.s32 1, %s10
  $region7: #{aa_kernel_forward.3} parent=0 // loop_footer_branch
    %9 = sbr.rel target = $region3
  $region8: #{aa_kernel_forward.3} parent=0 // loop_exit
    _

// kernel: aa_kernel_forward.4
$region0: #{aa_kernel_forward.4}
  #allocation0 [shape = 'u32[]', space=smem, size = 0x4, offset = 0x4, fixed_abs, tag = 'smem constant byte address 0x4 - core index']
  #allocation1 [shape = 'u32[144,128]{1,0:T(1,128)}', space=vmem, size = 0x12000, scoped, tag = 'internal scratch']
  #allocation2 [shape = 'f32[1]{0:T(128)S(6)}', space=smem, size = 0x200, scoped, tag = 'scoped memory for aa_kernel_forward.4']
  %s0 = inlined_call_operand.vmem [shape: f32[2,32,128], index: 0, kind: input, shape index: {}]
  %s1 = inlined_call_operand.vmem [shape: bf16[4,32], index: 1, kind: input, shape index: {}]
  %s2 = inlined_call_operand.vmem [shape: bf16[4,32], index: 2, kind: input, shape index: {}]
  %s3 = inlined_call_operand.vmem [shape: bf16[32,32], index: 3, kind: input, shape index: {}]
  %s4 = inlined_call_operand.<no memory space> [shape: f32[1], index: 4, kind: input, shape index: {}]
  %s5 = inlined_call_operand.vmem [shape: f32[2,32,128], index: 5, kind: output, shape index: {}]
  %s6 = sld [smem:[#allocation0]]
  $region53: #{aa_kernel_forward.4} parent=0
    _
  %s8 = ssub.s32 1, %s6
  %s9 = scalar_select 0, %s8, %s6
  %10 = sst [smem:[#allocation2]] %s4
  loop: start=0, step=1, limit=4
  $region2: #{aa_kernel_forward.4} parent=0 // loop_pre_header
    _
  $region3: #{aa_kernel_forward.4} parent=0 // loop_header
    %s12 = sphi 0, %s16
    %p13 = scmp.ge.s32.totalorder %s12, 4
    %s22 = sphi 0, %s24
    %s25 = sphi 0, %s22
    %s26 = sphi 0, %s25
    %s42 = sphi 0, %s26
    %s46 = sphi 0, %s46
    %s48 = sphi 0, %s46
    %s49 = sphi 0, %s48
    %s63 = sphi 0, %s49
    %s67 = sphi 0, %s67
    %s69 = sphi 0, %s67
    %s70 = sphi 0, %s69
    %s84 = sphi 0, %s70
    %s88 = sphi 0, %s88
    %s90 = sphi 0, %s88
    %s91 = sphi 0, %s90
    %s105 = sphi 0, %s91
    %s109 = sphi 0, %s109
    %s111 = sphi 0, %s109
    %s112 = sphi 0, %s111
    %s126 = sphi 0, %s112
    %s132 = sphi 0, %s134
    %s135 = sphi 0, %s132
    %s136 = sphi 0, %s135
    %s152 = sphi 0, %s136
  $region4: #{aa_kernel_forward.4} parent=0 // loop_header_branch
    %15 = sbr.rel (%p13) target = $region8
  $region5: #{aa_kernel_forward.4} parent=0 // loop_body
    %s17 = ssub.s32 %s12, 1
    %s18 = ssub.s32 %s12, 2
    %s19 = sadd.s32 %s12, 1
    %s20 = ssub.s32 %s12, %s19
    %p21 = scmp.eq.s32.totalorder %s20, 0
    %s23 = sadd.s32 %s22, 1
    %s24 = scalar_select %p21, %s22, %s23
    %p27 = pneg %p21
    %p28 = scmp.eq.s32.totalorder %s12, 1
    %p29 = por %p27, %p28
    %p30 = scmp.ne.s32.totalorder %s22, %s25
    %p31 = scmp.eq.s32.totalorder %s12, 0
    %p32 = por %p30, %p31
    %p33 = scmp.ne.s32.totalorder %s22, %s25
    %p34 = scmp.eq.s32.totalorder %s17, 1
    %p35 = por %p33, %p34
    %p36 = scmp.ne.s32.totalorder %s25, %s26
    %p37 = scmp.eq.s32.totalorder %s17, 0
    %p38 = por %p36, %p37
    %p39 = scmp.ne.s32.totalorder %s25, %s26
    %p40 = scmp.eq.s32.totalorder %s18, 1
    %p41 = por %p39, %p40
    %p43 = scmp.ne.s32.totalorder %s26, %s42
    %p44 = scmp.eq.s32.totalorder %s18, 0
    %p45 = por %p43, %p44
    %s47 = sadd.s32 %s46, 1
    %p50 = scmp.eq.s32.totalorder %s12, 1
    %p51 = scmp.ne.s32.totalorder %s46, %s48
    %p52 = scmp.eq.s32.totalorder %s12, 0
    %p53 = por %p51, %p52
    %p54 = scmp.ne.s32.totalorder %s46, %s48
    %p55 = scmp.eq.s32.totalorder %s17, 1
    %p56 = por %p54, %p55
    %p57 = scmp.ne.s32.totalorder %s48, %s49
    %p58 = scmp.eq.s32.totalorder %s17, 0
    %p59 = por %p57, %p58
    %p60 = scmp.ne.s32.totalorder %s48, %s49
    %p61 = scmp.eq.s32.totalorder %s18, 1
    %p62 = por %p60, %p61
    %p64 = scmp.ne.s32.totalorder %s49, %s63
    %p65 = scmp.eq.s32.totalorder %s18, 0
    %p66 = por %p64, %p65
    %s68 = sadd.s32 %s67, 1
    %p71 = scmp.eq.s32.totalorder %s12, 1
    %p72 = scmp.ne.s32.totalorder %s67, %s69
    %p73 = scmp.eq.s32.totalorder %s12, 0
    %p74 = por %p72, %p73
    %p75 = scmp.ne.s32.totalorder %s67, %s69
    %p76 = scmp.eq.s32.totalorder %s17, 1
    %p77 = por %p75, %p76
    %p78 = scmp.ne.s32.totalorder %s69, %s70
    %p79 = scmp.eq.s32.totalorder %s17, 0
    %p80 = por %p78, %p79
    %p81 = scmp.ne.s32.totalorder %s69, %s70
    %p82 = scmp.eq.s32.totalorder %s18, 1
    %p83 = por %p81, %p82
    %p85 = scmp.ne.s32.totalorder %s70, %s84
    %p86 = scmp.eq.s32.totalorder %s18, 0
    %p87 = por %p85, %p86
    %s89 = sadd.s32 %s88, 1
    %p92 = scmp.eq.s32.totalorder %s12, 1
    %p93 = scmp.ne.s32.totalorder %s88, %s90
    %p94 = scmp.eq.s32.totalorder %s12, 0
    %p95 = por %p93, %p94
    %p96 = scmp.ne.s32.totalorder %s88, %s90
    %p97 = scmp.eq.s32.totalorder %s17, 1
    %p98 = por %p96, %p97
    %p99 = scmp.ne.s32.totalorder %s90, %s91
    %p100 = scmp.eq.s32.totalorder %s17, 0
    %p101 = por %p99, %p100
    %p102 = scmp.ne.s32.totalorder %s90, %s91
    %p103 = scmp.eq.s32.totalorder %s18, 1
    %p104 = por %p102, %p103
    %p106 = scmp.ne.s32.totalorder %s91, %s105
    %p107 = scmp.eq.s32.totalorder %s18, 0
    %p108 = por %p106, %p107
    %s110 = sadd.s32 %s109, 1
    %p113 = scmp.eq.s32.totalorder %s12, 1
    %p114 = scmp.ne.s32.totalorder %s109, %s111
    %p115 = scmp.eq.s32.totalorder %s12, 0
    %p116 = por %p114, %p115
    %p117 = scmp.ne.s32.totalorder %s109, %s111
    %p118 = scmp.eq.s32.totalorder %s17, 1
    %p119 = por %p117, %p118
    %p120 = scmp.ne.s32.totalorder %s111, %s112
    %p121 = scmp.eq.s32.totalorder %s17, 0
    %p122 = por %p120, %p121
    %p123 = scmp.ne.s32.totalorder %s111, %s112
    %p124 = scmp.eq.s32.totalorder %s18, 1
    %p125 = por %p123, %p124
    %p127 = scmp.ne.s32.totalorder %s112, %s126
    %p128 = scmp.eq.s32.totalorder %s18, 0
    %p129 = por %p127, %p128
    %s130 = ssub.s32 %s12, %s19
    %p131 = scmp.eq.s32.totalorder %s130, 0
    %s133 = sadd.s32 %s132, 1
    %s134 = scalar_select %p131, %s132, %s133
    %p137 = pneg %p131
    %p138 = scmp.eq.s32.totalorder %s12, 1
    %p139 = por %p137, %p138
    %p140 = scmp.ne.s32.totalorder %s132, %s135
    %p141 = scmp.eq.s32.totalorder %s12, 0
    %p142 = por %p140, %p141
    %p143 = scmp.ne.s32.totalorder %s132, %s135
    %p144 = scmp.eq.s32.totalorder %s17, 1
    %p145 = por %p143, %p144
    %p146 = scmp.ne.s32.totalorder %s135, %s136
    %p147 = scmp.eq.s32.totalorder %s17, 0
    %p148 = por %p146, %p147
    %p149 = scmp.ne.s32.totalorder %s135, %s136
    %p150 = scmp.eq.s32.totalorder %s18, 1
    %p151 = por %p149, %p150
    %p153 = scmp.ne.s32.totalorder %s136, %s152
    %p154 = scmp.eq.s32.totalorder %s18, 0
    %p155 = por %p153, %p154
    %p156 = scmp.le.s32.totalorder 1, %s12
    %p157 = scmp.lt.s32.totalorder %s12, 3
    %p158 = pnand %p156, %p157
    %p159 = pneg %p158
    // Predicated region
    $region9: #{aa_kernel_forward.4} parent=5 // pred_check
      _
    $region10: #{aa_kernel_forward.4} parent=5 // pred_check_branch
      %161 = sbr.rel (%p158) target = $region12
    $region11: #{aa_kernel_forward.4} parent=5 // pred_region
      %s162 = ssub.s32 %s12, 1
      // Predicated region
      $region13: #{aa_kernel_forward.4} parent=11 // pred_check
        %p163 = pneg %p59
      $region14: #{aa_kernel_forward.4} parent=11 // pred_check_branch
        %165 = sbr.rel (%p163) target = $region16
      $region15: #{aa_kernel_forward.4} parent=11 // pred_region
        _
      $region16: #{aa_kernel_forward.4} parent=11 // pred_fallthru
        _
      // Predicated region
      $region17: #{aa_kernel_forward.4} parent=11 // pred_check
        %p166 = pneg %p80
      $region18: #{aa_kernel_forward.4} parent=11 // pred_check_branch
        %168 = sbr.rel (%p166) target = $region20
      $region19: #{aa_kernel_forward.4} parent=11 // pred_region
        _
      $region20: #{aa_kernel_forward.4} parent=11 // pred_fallthru
        _
      // Predicated region
      $region21: #{aa_kernel_forward.4} parent=11 // pred_check
        %p169 = pneg %p101
      $region22: #{aa_kernel_forward.4} parent=11 // pred_check_branch
        %171 = sbr.rel (%p169) target = $region24
      $region23: #{aa_kernel_forward.4} parent=11 // pred_region
        _
      $region24: #{aa_kernel_forward.4} parent=11 // pred_fallthru
        _
      // Predicated region
      $region25: #{aa_kernel_forward.4} parent=11 // pred_check
        %p172 = pneg %p122
      $region26: #{aa_kernel_forward.4} parent=11 // pred_check_branch
        %174 = sbr.rel (%p172) target = $region28
      $region27: #{aa_kernel_forward.4} parent=11 // pred_region
        _
      $region28: #{aa_kernel_forward.4} parent=11 // pred_fallthru
        _
    $region12: #{aa_kernel_forward.4} parent=5 // pred_fallthru
      _
    %p175 = scmp.lt.s32.totalorder %s12, 2
    // Predicated region
    $region29: #{aa_kernel_forward.4} parent=5 // pred_check
      %p176 = pneg %p175
    $region30: #{aa_kernel_forward.4} parent=5 // pred_check_branch
      %178 = sbr.rel (%p176) target = $region32
    $region31: #{aa_kernel_forward.4} parent=5 // pred_region
      // Predicated region
      $region33: #{aa_kernel_forward.4} parent=31 // pred_check
        %p179 = pneg %p32
      $region34: #{aa_kernel_forward.4} parent=31 // pred_check_branch
        %181 = sbr.rel (%p179) target = $region36
      $region35: #{aa_kernel_forward.4} parent=31 // pred_region
        %p182 = scmp.lt.s32.totalorder %s12, 1
        %s183 = scalar_select %p182, %s12, 1
        %s184 = smul.addr %s183, 4
        %s185 = smul.addr %s184, 8
        %s186 = scalar_lea.vmem %s0, %s185
      $region36: #{aa_kernel_forward.4} parent=31 // pred_fallthru
        _
    $region32: #{aa_kernel_forward.4} parent=5 // pred_fallthru
      _
    %p187 = scmp.le.s32.totalorder 1, %s12
    %p188 = scmp.lt.s32.totalorder %s12, 3
    %p189 = pnand %p187, %p188
    %p190 = pneg %p189
    // Predicated region
    $region37: #{aa_kernel_forward.4} parent=5 // pred_check
      _
    $region38: #{aa_kernel_forward.4} parent=5 // pred_check_branch
      %192 = sbr.rel (%p189) target = $region40
    $region39: #{aa_kernel_forward.4} parent=5 // pred_region
      %s193 = ssub.s32 %s12, 1
      %p194 = scmp.lt.s32.totalorder %s17, 1
      %s195 = scalar_select %p194, %s17, 1
      %s196 = smul.addr %s195, 4
      %s197 = smul.addr %s196, 8
      %s198 = scalar_lea.vmem %s0, %s197
      %p199 = pneg %p38
      %p200 = pneg %p35
      %p201 = pneg %p59
      %p202 = pneg %p56
      %p203 = pneg %p80
      %p204 = pneg %p77
      %p205 = pneg %p101
      %p206 = pneg %p98
      %p207 = pneg %p122
      %p208 = pneg %p119
      %p209 = pneg %p148
      %p210 = pneg %p145
      %p211 = scmp.lt.s32.totalorder %s17, 1
      %s212 = scalar_select %p211, %s17, 1
      %s213 = smul.addr %s212, 4
      %s214 = smul.addr %s213, 8
      %s215 = scalar_lea.vmem %s5, %s214
      %p216 = scmp.lt.s32.totalorder %s17, 1
      %s217 = scalar_select %p216, %s17, 1
      %s218 = smul.addr %s217, 4
      %s219 = smul.addr %s218, 8
      %s220 = scalar_lea.vmem %s0, %s219
      %p221 = scmp.lt.s32.totalorder %s17, 1
      %s222 = scalar_select %p221, %s17, 1
      %s223 = smul.addr %s222, 4
      %s224 = smul.addr %s223, 8
      %s225 = scalar_lea.vmem %s5, %s224
      %v227 = vld [vmem:[%s220] sm:$0xff]
      %v228 = vld [vmem:[%s220 + $0x8] sm:$0xff]
      %v229 = vld [vmem:[%s220 + $0x10] sm:$0xff]
      %v230 = vld [vmem:[%s220 + $0x18] sm:$0xff]
      %v231 = vpack.c.bf16 %v228, %v227
      %v232 = vpack.c.bf16 %v230, %v229
      %v233 = vld [vmem:[%s1] sm:$0x3]
      %vm234 = vcmask 261120
      %v236 = vsel %vm234, %v233, 0
      %238 = vmatprep.subr.bf16.mxu0 0
      %239 = vmatpush1.bf16.msra.mxu0 %v231
      %240 = vmatprep.subr.bf16.mxu0 0
      %241 = vmatpush1.bf16.msra.mxu0 %v232
      %242 = vmatprep.subr.bf16.mxu0 0
      %243 = vmatpush1.bf16.msra.mxu0 0
      %244 = vmatprep.subr.bf16.mxu0 0
      %245 = vmatpush1.bf16.msra.mxu0 0
      %246 = vmatprep.subr.bf16.mxu0 0
      %247 = vmatpush1.bf16.msra.mxu0 0
      %248 = vmatprep.subr.bf16.mxu0 0
      %249 = vmatpush1.bf16.msra.mxu0 0
      %250 = vmatprep.subr.bf16.mxu0 0
      %251 = vmatpush1.bf16.msra.mxu0 0
      %252 = vmatprep.subr.bf16.mxu0 0
      %253 = vmatpush1.bf16.msra.mxu0 0
      %254 = vmatprep.subr.bf16.mxu0 0
      %255 = vmatpush1.bf16.msra.mxu0 0
      %256 = vmatprep.subr.bf16.mxu0 0
      %257 = vmatpush1.bf16.msra.mxu0 0
      %258 = vmatprep.subr.bf16.mxu0 0
      %259 = vmatpush1.bf16.msra.mxu0 0
      %260 = vmatprep.subr.bf16.mxu0 0
      %261 = vmatpush1.bf16.msra.mxu0 0
      %262 = vmatprep.subr.bf16.mxu0 0
      %263 = vmatpush1.bf16.msra.mxu0 0
      %264 = vmatprep.subr.bf16.mxu0 0
      %265 = vmatpush1.bf16.msra.mxu0 0
      %266 = vmatprep.subr.bf16.mxu0 0
      %267 = vmatpush1.bf16.msra.mxu0 0
      %268 = vmatprep.subr.bf16.mxu0 0
      %269 = vmatpush1.bf16.msra.mxu0 0
      %270 = vmatprep.mubr.bf16.mxu0 0
      %271 = vmatmul.mubr.bf16.gmra.mrb[0].mxu0 %v236
      %v272 = vpop.f32.mrb[0].mxu0
      %v273 = vadd.f32 0.0, %v272
      %v274 = vpop.f32.mrb[0].mxu0
      %v275 = vpop.f32.mrb[0].mxu0
      %v276 = vpop.f32.mrb[0].mxu0
      %277 = vdwg.mxu0
      %v278 = vld [vmem:[%s2] sm:$0x3]
      %v280 = vsel %vm234, %v278, 0
      %282 = vmatprep.subr.bf16.mxu0 0
      %283 = vmatpush1.bf16.msra.mxu0 %v231
      %284 = vmatprep.subr.bf16.mxu0 0
      %285 = vmatpush1.bf16.msra.mxu0 %v232
      %286 = vmatprep.subr.bf16.mxu0 0
      %287 = vmatpush1.bf16.msra.mxu0 0
      %288 = vmatprep.subr.bf16.mxu0 0
      %289 = vmatpush1.bf16.msra.mxu0 0
      %290 = vmatprep.subr.bf16.mxu0 0
      %291 = vmatpush1.bf16.msra.mxu0 0
      %292 = vmatprep.subr.bf16.mxu0 0
      %293 = vmatpush1.bf16.msra.mxu0 0
      %294 = vmatprep.subr.bf16.mxu0 0
      %295 = vmatpush1.bf16.msra.mxu0 0
      %296 = vmatprep.subr.bf16.mxu0 0
      %297 = vmatpush1.bf16.msra.mxu0 0
      %298 = vmatprep.subr.bf16.mxu0 0
      %299 = vmatpush1.bf16.msra.mxu0 0
      %300 = vmatprep.subr.bf16.mxu0 0
      %301 = vmatpush1.bf16.msra.mxu0 0
      %302 = vmatprep.subr.bf16.mxu0 0
      %303 = vmatpush1.bf16.msra.mxu0 0
      %304 = vmatprep.subr.bf16.mxu0 0
      %305 = vmatpush1.bf16.msra.mxu0 0
      %306 = vmatprep.subr.bf16.mxu0 0
      %307 = vmatpush1.bf16.msra.mxu0 0
      %308 = vmatprep.subr.bf16.mxu0 0
      %309 = vmatpush1.bf16.msra.mxu0 0
      %310 = vmatprep.subr.bf16.mxu0 0
      %311 = vmatpush1.bf16.msra.mxu0 0
      %312 = vmatprep.subr.bf16.mxu0 0
      %313 = vmatpush1.bf16.msra.mxu0 0
      %314 = vmatprep.mubr.bf16.mxu0 0
      %315 = vmatmul.mubr.bf16.gmra.mrb[0].mxu0 %v280
      %v316 = vpop.f32.mrb[0].mxu0
      %v317 = vadd.f32 0.0, %v316
      %v318 = vpop.f32.mrb[0].mxu0
      %v319 = vpop.f32.mrb[0].mxu0
      %v320 = vpop.f32.mrb[0].mxu0
      %321 = vdwg.mxu0
      %v322 = vld [vmem:[%s3] sm:$0xf]
      %v323 = vld [vmem:[%s3 + $0x4] sm:$0xf]
      %v324 = vld [vmem:[%s3 + $0x8] sm:$0xf]
      %v325 = vld [vmem:[%s3 + $0xc] sm:$0xf]
      %v330 = vunpack.c.l.b16 %v322
      %v331 = vunpack.c.l.b16 %v323
      %v332 = vunpack.c.l.b16 %v324
      %v333 = vunpack.c.l.b16 %v325
      %v334 = vpack.c.b16 %v331, %v330
      %v335 = vpack.c.b16 %v333, %v332
      %v337 = vsel %vm234, %v334, 0
      %v340 = vsel %vm234, %v335, 0
      %342 = vmatprep.subr.bf16.mxu0 0
      %343 = vmatpush1.bf16.msra.mxu0 %v231
      %344 = vmatprep.subr.bf16.mxu0 0
      %345 = vmatpush1.bf16.msra.mxu0 %v232
      %346 = vmatprep.subr.bf16.mxu0 0
      %347 = vmatpush1.bf16.msra.mxu0 0
      %348 = vmatprep.subr.bf16.mxu0 0
      %349 = vmatpush1.bf16.msra.mxu0 0
      %350 = vmatprep.subr.bf16.mxu0 0
      %351 = vmatpush1.bf16.msra.mxu0 0
      %352 = vmatprep.subr.bf16.mxu0 0
      %353 = vmatpush1.bf16.msra.mxu0 0
      %354 = vmatprep.subr.bf16.mxu0 0
      %355 = vmatpush1.bf16.msra.mxu0 0
      %356 = vmatprep.subr.bf16.mxu0 0
      %357 = vmatpush1.bf16.msra.mxu0 0
      %358 = vmatprep.subr.bf16.mxu0 0
      %359 = vmatpush1.bf16.msra.mxu0 0
      %360 = vmatprep.subr.bf16.mxu0 0
      %361 = vmatpush1.bf16.msra.mxu0 0
      %362 = vmatprep.subr.bf16.mxu0 0
      %363 = vmatpush1.bf16.msra.mxu0 0
      %364 = vmatprep.subr.bf16.mxu0 0
      %365 = vmatpush1.bf16.msra.mxu0 0
      %366 = vmatprep.subr.bf16.mxu0 0
      %367 = vmatpush1.bf16.msra.mxu0 0
      %368 = vmatprep.subr.bf16.mxu0 0
      %369 = vmatpush1.bf16.msra.mxu0 0
      %370 = vmatprep.subr.bf16.mxu0 0
      %371 = vmatpush1.bf16.msra.mxu0 0
      %372 = vmatprep.subr.bf16.mxu0 0
      %373 = vmatpush1.bf16.msra.mxu0 0
      %374 = vmatprep.mubr.bf16.mxu0 0
      %375 = vmatmul.mubr.bf16.gmra.mrb[0].mxu0 %v337
      %v376 = vpop.f32.mrb[0].mxu0
      %v377 = vadd.f32 0.0, %v376
      %v378 = vpop.f32.mrb[0].mxu0
      %v379 = vpop.f32.mrb[0].mxu0
      %v380 = vadd.f32 0.0, %v379
      %v381 = vpop.f32.mrb[0].mxu0
      %382 = vmatprep.mubr.bf16.mxu0 0
      %383 = vmatmul.mubr.bf16.gmra.mrb[0].mxu0 %v340
      %v384 = vpop.f32.mrb[0].mxu0
      %v385 = vadd.f32 0.0, %v384
      %v386 = vpop.f32.mrb[0].mxu0
      %v387 = vpop.f32.mrb[0].mxu0
      %v388 = vadd.f32 0.0, %v387
      %v389 = vpop.f32.mrb[0].mxu0
      %390 = vdwg.mxu0
      %392 = vrot.lane.b32.xlu0 %v273, 112
      %v393 = vpop.permute.xlu0 %392
      %395 = vxpose.xlu0.b32.start [1/16] %v393, 128
      %396 = vxpose.xlu0.b32.cont [2/16] 0.0, 128
      %397 = vxpose.xlu0.b32.cont [3/16] 0.0, 128
      %398 = vxpose.xlu0.b32.cont [4/16] 0.0, 128
      %399 = vxpose.xlu0.b32.cont [5/16] 0.0, 128
      %400 = vxpose.xlu0.b32.cont [6/16] 0.0, 128
      %401 = vxpose.xlu0.b32.cont [7/16] 0.0, 128
      %402 = vxpose.xlu0.b32.cont [8/16] 0.0, 128
      %403 = vxpose.xlu0.b32.cont [9/16] 0.0, 128
      %404 = vxpose.xlu0.b32.cont [10/16] 0.0, 128
      %405 = vxpose.xlu0.b32.cont [11/16] 0.0, 128
      %406 = vxpose.xlu0.b32.cont [12/16] 0.0, 128
      %407 = vxpose.xlu0.b32.cont [13/16] 0.0, 128
      %408 = vxpose.xlu0.b32.cont [14/16] 0.0, 128
      %409 = vxpose.xlu0.b32.cont [15/16] 0.0, 128
      %410 = vxpose.xlu0.b32.end [16/16] 0.0, 128
      %v411 = vpop.trf.xlu0
      %v412 = vpop.trf.xlu0
      %v413 = vpop.trf.xlu0
      %v414 = vpop.trf.xlu0
      %v415 = vpop.trf.xlu0
      %v416 = vpop.trf.xlu0
      %v417 = vpop.trf.xlu0
      %v418 = vpop.trf.xlu0
      %v419 = vpop.trf.xlu0
      %v420 = vpop.trf.xlu0
      %v421 = vpop.trf.xlu0
      %v422 = vpop.trf.xlu0
      %v423 = vpop.trf.xlu0
      %v424 = vpop.trf.xlu0
      %v425 = vpop.trf.xlu0
      %v426 = vpop.trf.xlu0
      %428 = vrot.lane.b32.xlu0 %v317, 112
      %v429 = vpop.permute.xlu0 %428
      %vm430 = vcmask 31744
      %v432 = vsel %vm430, %v411, 0
      %v435 = vsel %vm430, %v412, 0
      %vm437 = vcmask 1043456
      %v438 = vsel %vm437, %v429, 0
      %440 = vmatprep.subr.mxu0 0.0
      %441 = vmatpush1.msra.mxu0 %v438
      %442 = vmatprep.subr.mxu0 0.0
      %443 = vmatpush1.msra.mxu0 0.0
      %444 = vmatprep.subr.mxu0 0.0
      %445 = vmatpush1.msra.mxu0 0.0
      %446 = vmatprep.subr.mxu0 0.0
      %447 = vmatpush1.msra.mxu0 0.0
      %448 = vmatprep.subr.mxu0 0.0
      %449 = vmatpush1.msra.mxu0 0.0
      %450 = vmatprep.subr.mxu0 0.0
      %451 = vmatpush1.msra.mxu0 0.0
      %452 = vmatprep.subr.mxu0 0.0
      %453 = vmatpush1.msra.mxu0 0.0
      %454 = vmatprep.subr.mxu0 0.0
      %455 = vmatpush1.msra.mxu0 0.0
      %456 = vmatprep.subr.mxu0 0.0
      %457 = vmatpush1.msra.mxu0 0.0
      %458 = vmatprep.subr.mxu0 0.0
      %459 = vmatpush1.msra.mxu0 0.0
      %460 = vmatprep.subr.mxu0 0.0
      %461 = vmatpush1.msra.mxu0 0.0
      %462 = vmatprep.subr.mxu0 0.0
      %463 = vmatpush1.msra.mxu0 0.0
      %464 = vmatprep.subr.mxu0 0.0
      %465 = vmatpush1.msra.mxu0 0.0
      %466 = vmatprep.subr.mxu0 0.0
      %467 = vmatpush1.msra.mxu0 0.0
      %468 = vmatprep.subr.mxu0 0.0
      %469 = vmatpush1.msra.mxu0 0.0
      %470 = vmatprep.subr.mxu0 0.0
      %471 = vmatpush1.msra.mxu0 0.0
      %472 = vmatprep.subr.mxu0 0.0
      %473 = vmatpush1.msra.mxu0 0.0
      %474 = vmatprep.subr.mxu0 0.0
      %475 = vmatpush1.msra.mxu0 0.0
      %476 = vmatprep.subr.mxu0 0.0
      %477 = vmatpush1.msra.mxu0 0.0
      %478 = vmatprep.subr.mxu0 0.0
      %479 = vmatpush1.msra.mxu0 0.0
      %480 = vmatprep.subr.mxu0 0.0
      %481 = vmatpush1.msra.mxu0 0.0
      %482 = vmatprep.subr.mxu0 0.0
      %483 = vmatpush1.msra.mxu0 0.0
      %484 = vmatprep.subr.mxu0 0.0
      %485 = vmatpush1.msra.mxu0 0.0
      %486 = vmatprep.subr.mxu0 0.0
      %487 = vmatpush1.msra.mxu0 0.0
      %488 = vmatprep.subr.mxu0 0.0
      %489 = vmatpush1.msra.mxu0 0.0
      %490 = vmatprep.subr.mxu0 0.0
      %491 = vmatpush1.msra.mxu0 0.0
      %492 = vmatprep.subr.mxu0 0.0
      %493 = vmatpush1.msra.mxu0 0.0
      %494 = vmatprep.subr.mxu0 0.0
      %495 = vmatpush1.msra.mxu0 0.0
      %496 = vmatprep.subr.mxu0 0.0
      %497 = vmatpush1.msra.mxu0 0.0
      %498 = vmatprep.subr.mxu0 0.0
      %499 = vmatpush1.msra.mxu0 0.0
      %500 = vmatprep.subr.mxu0 0.0
      %501 = vmatpush1.msra.mxu0 0.0
      %502 = vmatprep.subr.mxu0 0.0
      %503 = vmatpush1.msra.mxu0 0.0
      %504 = vmatprep.mubr.f32.mxu0 0.0
      %505 = vmatmul.mubr.f32.gmra.mrb[0].mxu0 %v432
      %v506 = vpop.f32.mrb[0].mxu0
      %v507 = vadd.f32 0.0, %v506
      %v508 = vpop.f32.mrb[0].mxu0
      %509 = vmatprep.mubr.f32.mxu0 0.0
      %510 = vmatmul.mubr.f32.gmra.mrb[0].mxu0 %v435
      %v511 = vpop.f32.mrb[0].mxu0
      %v512 = vadd.f32 0.0, %v511
      %v513 = vpop.f32.mrb[0].mxu0
      %514 = vdwg.mxu0
      %515 = vxpose.xlu0.b32.start [1/16] %v273, 128
      %516 = vxpose.xlu0.b32.cont [2/16] 0.0, 128
      %517 = vxpose.xlu0.b32.cont [3/16] 0.0, 128
      %518 = vxpose.xlu0.b32.cont [4/16] 0.0, 128
      %519 = vxpose.xlu0.b32.cont [5/16] 0.0, 128
      %520 = vxpose.xlu0.b32.cont [6/16] 0.0, 128
      %521 = vxpose.xlu0.b32.cont [7/16] 0.0, 128
      %522 = vxpose.xlu0.b32.cont [8/16] 0.0, 128
      %523 = vxpose.xlu0.b32.cont [9/16] 0.0, 128
      %524 = vxpose.xlu0.b32.cont [10/16] 0.0, 128
      %525 = vxpose.xlu0.b32.cont [11/16] 0.0, 128
      %526 = vxpose.xlu0.b32.cont [12/16] 0.0, 128
      %527 = vxpose.xlu0.b32.cont [13/16] 0.0, 128
      %528 = vxpose.xlu0.b32.cont [14/16] 0.0, 128
      %529 = vxpose.xlu0.b32.cont [15/16] 0.0, 128
      %530 = vxpose.xlu0.b32.end [16/16] 0.0, 128
      %v531 = vpop.trf.xlu0
      %v532 = vpop.trf.xlu0
      %v533 = vpop.trf.xlu0
      %v534 = vpop.trf.xlu0
      %v535 = vpop.trf.xlu0
      %v536 = vpop.trf.xlu0
      %v537 = vpop.trf.xlu0
      %v538 = vpop.trf.xlu0
      %v539 = vpop.trf.xlu0
      %v540 = vpop.trf.xlu0
      %v541 = vpop.trf.xlu0
      %v542 = vpop.trf.xlu0
      %v543 = vpop.trf.xlu0
      %v544 = vpop.trf.xlu0
      %v545 = vpop.trf.xlu0
      %v546 = vpop.trf.xlu0
      %v548 = vsel %vm430, %v531, 0
      %v551 = vsel %vm430, %v532, 0
      %v553 = vsel %vm437, %v317, 0
      %555 = vmatprep.subr.mxu0 0.0
      %556 = vmatpush1.msra.mxu0 %v553
      %557 = vmatprep.subr.mxu0 0.0
      %558 = vmatpush1.msra.mxu0 0.0
      %559 = vmatprep.subr.mxu0 0.0
      %560 = vmatpush1.msra.mxu0 0.0
      %561 = vmatprep.subr.mxu0 0.0
      %562 = vmatpush1.msra.mxu0 0.0
      %563 = vmatprep.subr.mxu0 0.0
      %564 = vmatpush1.msra.mxu0 0.0
      %565 = vmatprep.subr.mxu0 0.0
      %566 = vmatpush1.msra.mxu0 0.0
      %567 = vmatprep.subr.mxu0 0.0
      %568 = vmatpush1.msra.mxu0 0.0
      %569 = vmatprep.subr.mxu0 0.0
      %570 = vmatpush1.msra.mxu0 0.0
      %571 = vmatprep.subr.mxu0 0.0
      %572 = vmatpush1.msra.mxu0 0.0
      %573 = vmatprep.subr.mxu0 0.0
      %574 = vmatpush1.msra.mxu0 0.0
      %575 = vmatprep.subr.mxu0 0.0
      %576 = vmatpush1.msra.mxu0 0.0
      %577 = vmatprep.subr.mxu0 0.0
      %578 = vmatpush1.msra.mxu0 0.0
      %579 = vmatprep.subr.mxu0 0.0
      %580 = vmatpush1.msra.mxu0 0.0
      %581 = vmatprep.subr.mxu0 0.0
      %582 = vmatpush1.msra.mxu0 0.0
      %583 = vmatprep.subr.mxu0 0.0
      %584 = vmatpush1.msra.mxu0 0.0
      %585 = vmatprep.subr.mxu0 0.0
      %586 = vmatpush1.msra.mxu0 0.0
      %587 = vmatprep.subr.mxu0 0.0
      %588 = vmatpush1.msra.mxu0 0.0
      %589 = vmatprep.subr.mxu0 0.0
      %590 = vmatpush1.msra.mxu0 0.0
      %591 = vmatprep.subr.mxu0 0.0
      %592 = vmatpush1.msra.mxu0 0.0
      %593 = vmatprep.subr.mxu0 0.0
      %594 = vmatpush1.msra.mxu0 0.0
      %595 = vmatprep.subr.mxu0 0.0
      %596 = vmatpush1.msra.mxu0 0.0
      %597 = vmatprep.subr.mxu0 0.0
      %598 = vmatpush1.msra.mxu0 0.0
      %599 = vmatprep.subr.mxu0 0.0
      %600 = vmatpush1.msra.mxu0 0.0
      %601 = vmatprep.subr.mxu0 0.0
      %602 = vmatpush1.msra.mxu0 0.0
      %603 = vmatprep.subr.mxu0 0.0
      %604 = vmatpush1.msra.mxu0 0.0
      %605 = vmatprep.subr.mxu0 0.0
      %606 = vmatpush1.msra.mxu0 0.0
      %607 = vmatprep.subr.mxu0 0.0
      %608 = vmatpush1.msra.mxu0 0.0
      %609 = vmatprep.subr.mxu0 0.0
      %610 = vmatpush1.msra.mxu0 0.0
      %611 = vmatprep.subr.mxu0 0.0
      %612 = vmatpush1.msra.mxu0 0.0
      %613 = vmatprep.subr.mxu0 0.0
      %614 = vmatpush1.msra.mxu0 0.0
      %615 = vmatprep.subr.mxu0 0.0
      %616 = vmatpush1.msra.mxu0 0.0
      %617 = vmatprep.subr.mxu0 0.0
      %618 = vmatpush1.msra.mxu0 0.0
      %619 = vmatprep.mubr.f32.mxu0 0.0
      %620 = vmatmul.mubr.f32.gmra.mrb[0].mxu0 %v548
      %v621 = vpop.f32.mrb[0].mxu0
      %v622 = vadd.f32 %v507, %v621
      %v623 = vpop.f32.mrb[0].mxu0
      %624 = vmatprep.mubr.f32.mxu0 0.0
      %625 = vmatmul.mubr.f32.gmra.mrb[0].mxu0 %v551
      %v626 = vpop.f32.mrb[0].mxu0
      %v627 = vadd.f32 %v512, %v626
      %v628 = vpop.f32.mrb[0].mxu0
      %629 = vdwg.mxu0
      %630 = vrot.lane.b32.xlu0 %v273, 96
      %v631 = vpop.permute.xlu0 %630
      %633 = vxpose.xlu0.b32.start [1/16] %v631, 128
      %634 = vxpose.xlu0.b32.cont [2/16] 0.0, 128
      %635 = vxpose.xlu0.b32.cont [3/16] 0.0, 128
      %636 = vxpose.xlu0.b32.cont [4/16] 0.0, 128
      %637 = vxpose.xlu0.b32.cont [5/16] 0.0, 128
      %638 = vxpose.xlu0.b32.cont [6/16] 0.0, 128
      %639 = vxpose.xlu0.b32.cont [7/16] 0.0, 128
      %640 = vxpose.xlu0.b32.cont [8/16] 0.0, 128
      %641 = vxpose.xlu0.b32.cont [9/16] 0.0, 128
      %642 = vxpose.xlu0.b32.cont [10/16] 0.0, 128
      %643 = vxpose.xlu0.b32.cont [11/16] 0.0, 128
      %644 = vxpose.xlu0.b32.cont [12/16] 0.0, 128
      %645 = vxpose.xlu0.b32.cont [13/16] 0.0, 128
      %646 = vxpose.xlu0.b32.cont [14/16] 0.0, 128
      %647 = vxpose.xlu0.b32.cont [15/16] 0.0, 128
      %648 = vxpose.xlu0.b32.end [16/16] 0.0, 128
      %v649 = vpop.trf.xlu0
      %v650 = vpop.trf.xlu0
      %v651 = vpop.trf.xlu0
      %v652 = vpop.trf.xlu0
      %v653 = vpop.trf.xlu0
      %v654 = vpop.trf.xlu0
      %v655 = vpop.trf.xlu0
      %v656 = vpop.trf.xlu0
      %v657 = vpop.trf.xlu0
      %v658 = vpop.trf.xlu0
      %v659 = vpop.trf.xlu0
      %v660 = vpop.trf.xlu0
      %v661 = vpop.trf.xlu0
      %v662 = vpop.trf.xlu0
      %v663 = vpop.trf.xlu0
      %v664 = vpop.trf.xlu0
      %665 = vrot.lane.b32.xlu0 %v317, 96
      %v666 = vpop.permute.xlu0 %665
      %v668 = vsel %vm430, %v649, 0
      %v671 = vsel %vm430, %v650, 0
      %v673 = vsel %vm437, %v666, 0
      %675 = vmatprep.subr.mxu0 0.0
      %676 = vmatpush1.msra.mxu0 %v673
      %677 = vmatprep.subr.mxu0 0.0
      %678 = vmatpush1.msra.mxu0 0.0
      %679 = vmatprep.subr.mxu0 0.0
      %680 = vmatpush1.msra.mxu0 0.0
      %681 = vmatprep.subr.mxu0 0.0
      %682 = vmatpush1.msra.mxu0 0.0
      %683 = vmatprep.subr.mxu0 0.0
      %684 = vmatpush1.msra.mxu0 0.0
      %685 = vmatprep.subr.mxu0 0.0
      %686 = vmatpush1.msra.mxu0 0.0
      %687 = vmatprep.subr.mxu0 0.0
      %688 = vmatpush1.msra.mxu0 0.0
      %689 = vmatprep.subr.mxu0 0.0
      %690 = vmatpush1.msra.mxu0 0.0
      %691 = vmatprep.subr.mxu0 0.0
      %692 = vmatpush1.msra.mxu0 0.0
      %693 = vmatprep.subr.mxu0 0.0
      %694 = vmatpush1.msra.mxu0 0.0
      %695 = vmatprep.subr.mxu0 0.0
      %696 = vmatpush1.msra.mxu0 0.0
      %697 = vmatprep.subr.mxu0 0.0
      %698 = vmatpush1.msra.mxu0 0.0
      %699 = vmatprep.subr.mxu0 0.0
      %700 = vmatpush1.msra.mxu0 0.0
      %701 = vmatprep.subr.mxu0 0.0
      %702 = vmatpush1.msra.mxu0 0.0
      %703 = vmatprep.subr.mxu0 0.0
      %704 = vmatpush1.msra.mxu0 0.0
      %705 = vmatprep.subr.mxu0 0.0
      %706 = vmatpush1.msra.mxu0 0.0
      %707 = vmatprep.subr.mxu0 0.0
      %708 = vmatpush1.msra.mxu0 0.0
      %709 = vmatprep.subr.mxu0 0.0
      %710 = vmatpush1.msra.mxu0 0.0
      %711 = vmatprep.subr.mxu0 0.0
      %712 = vmatpush1.msra.mxu0 0.0
      %713 = vmatprep.subr.mxu0 0.0
      %714 = vmatpush1.msra.mxu0 0.0
      %715 = vmatprep.subr.mxu0 0.0
      %716 = vmatpush1.msra.mxu0 0.0
      %717 = vmatprep.subr.mxu0 0.0
      %718 = vmatpush1.msra.mxu0 0.0
      %719 = vmatprep.subr.mxu0 0.0
      %720 = vmatpush1.msra.mxu0 0.0
      %721 = vmatprep.subr.mxu0 0.0
      %722 = vmatpush1.msra.mxu0 0.0
      %723 = vmatprep.subr.mxu0 0.0
      %724 = vmatpush1.msra.mxu0 0.0
      %725 = vmatprep.subr.mxu0 0.0
      %726 = vmatpush1.msra.mxu0 0.0
      %727 = vmatprep.subr.mxu0 0.0
      %728 = vmatpush1.msra.mxu0 0.0
      %729 = vmatprep.subr.mxu0 0.0
      %730 = vmatpush1.msra.mxu0 0.0
      %731 = vmatprep.subr.mxu0 0.0
      %732 = vmatpush1.msra.mxu0 0.0
      %733 = vmatprep.subr.mxu0 0.0
      %734 = vmatpush1.msra.mxu0 0.0
      %735 = vmatprep.subr.mxu0 0.0
      %736 = vmatpush1.msra.mxu0 0.0
      %737 = vmatprep.subr.mxu0 0.0
      %738 = vmatpush1.msra.mxu0 0.0
      %739 = vmatprep.mubr.f32.mxu0 0.0
      %740 = vmatmul.mubr.f32.gmra.mrb[0].mxu0 %v668
      %v741 = vpop.f32.mrb[0].mxu0
      %v742 = vadd.f32 0.0, %v741
      %v743 = vpop.f32.mrb[0].mxu0
      %744 = vmatprep.mubr.f32.mxu0 0.0
      %745 = vmatmul.mubr.f32.gmra.mrb[0].mxu0 %v671
      %v746 = vpop.f32.mrb[0].mxu0
      %v747 = vadd.f32 0.0, %v746
      %v748 = vpop.f32.mrb[0].mxu0
      %749 = vdwg.mxu0
      %v750 = vadd.f32 %v622, %v742
      %v751 = vadd.f32 %v627, %v747
      %752 = vrot.lane.b32.xlu0 %v273, 80
      %v753 = vpop.permute.xlu0 %752
      %755 = vxpose.xlu0.b32.start [1/16] %v753, 128
      %756 = vxpose.xlu0.b32.cont [2/16] 0.0, 128
      %757 = vxpose.xlu0.b32.cont [3/16] 0.0, 128
      %758 = vxpose.xlu0.b32.cont [4/16] 0.0, 128
      %759 = vxpose.xlu0.b32.cont [5/16] 0.0, 128
      %760 = vxpose.xlu0.b32.cont [6/16] 0.0, 128
      %761 = vxpose.xlu0.b32.cont [7/16] 0.0, 128
      %762 = vxpose.xlu0.b32.cont [8/16] 0.0, 128
      %763 = vxpose.xlu0.b32.cont [9/16] 0.0, 128
      %764 = vxpose.xlu0.b32.cont [10/16] 0.0, 128
      %765 = vxpose.xlu0.b32.cont [11/16] 0.0, 128
      %766 = vxpose.xlu0.b32.cont [12/16] 0.0, 128
      %767 = vxpose.xlu0.b32.cont [13/16] 0.0, 128
      %768 = vxpose.xlu0.b32.cont [14/16] 0.0, 128
      %769 = vxpose.xlu0.b32.cont [15/16] 0.0, 128
      %770 = vxpose.xlu0.b32.end [16/16] 0.0, 128
      %v771 = vpop.trf.xlu0
      %v772 = vpop.trf.xlu0
      %v773 = vpop.trf.xlu0
      %v774 = vpop.trf.xlu0
      %v775 = vpop.trf.xlu0
      %v776 = vpop.trf.xlu0
      %v777 = vpop.trf.xlu0
      %v778 = vpop.trf.xlu0
      %v779 = vpop.trf.xlu0
      %v780 = vpop.trf.xlu0
      %v781 = vpop.trf.xlu0
      %v782 = vpop.trf.xlu0
      %v783 = vpop.trf.xlu0
      %v784 = vpop.trf.xlu0
      %v785 = vpop.trf.xlu0
      %v786 = vpop.trf.xlu0
      %787 = vrot.lane.b32.xlu0 %v317, 80
      %v788 = vpop.permute.xlu0 %787
      %v790 = vsel %vm430, %v771, 0
      %v793 = vsel %vm430, %v772, 0
      %v795 = vsel %vm437, %v788, 0
      %797 = vmatprep.subr.mxu0 0.0
      %798 = vmatpush1.msra.mxu0 %v795
      %799 = vmatprep.subr.mxu0 0.0
      %800 = vmatpush1.msra.mxu0 0.0
      %801 = vmatprep.subr.mxu0 0.0
      %802 = vmatpush1.msra.mxu0 0.0
      %803 = vmatprep.subr.mxu0 0.0
      %804 = vmatpush1.msra.mxu0 0.0
      %805 = vmatprep.subr.mxu0 0.0
      %806 = vmatpush1.msra.mxu0 0.0
      %807 = vmatprep.subr.mxu0 0.0
      %808 = vmatpush1.msra.mxu0 0.0
      %809 = vmatprep.subr.mxu0 0.0
      %810 = vmatpush1.msra.mxu0 0.0
      %811 = vmatprep.subr.mxu0 0.0
      %812 = vmatpush1.msra.mxu0 0.0
      %813 = vmatprep.subr.mxu0 0.0
      %814 = vmatpush1.msra.mxu0 0.0
      %815 = vmatprep.subr.mxu0 0.0
      %816 = vmatpush1.msra.mxu0 0.0
      %817 = vmatprep.subr.mxu0 0.0
      %818 = vmatpush1.msra.mxu0 0.0
      %819 = vmatprep.subr.mxu0 0.0
      %820 = vmatpush1.msra.mxu0 0.0
      %821 = vmatprep.subr.mxu0 0.0
      %822 = vmatpush1.msra.mxu0 0.0
      %823 = vmatprep.subr.mxu0 0.0
      %824 = vmatpush1.msra.mxu0 0.0
      %825 = vmatprep.subr.mxu0 0.0
      %826 = vmatpush1.msra.mxu0 0.0
      %827 = vmatprep.subr.mxu0 0.0
      %828 = vmatpush1.msra.mxu0 0.0
      %829 = vmatprep.subr.mxu0 0.0
      %830 = vmatpush1.msra.mxu0 0.0
      %831 = vmatprep.subr.mxu0 0.0
      %832 = vmatpush1.msra.mxu0 0.0
      %833 = vmatprep.subr.mxu0 0.0
      %834 = vmatpush1.msra.mxu0 0.0
      %835 = vmatprep.subr.mxu0 0.0
      %836 = vmatpush1.msra.mxu0 0.0
      %837 = vmatprep.subr.mxu0 0.0
      %838 = vmatpush1.msra.mxu0 0.0
      %839 = vmatprep.subr.mxu0 0.0
      %840 = vmatpush1.msra.mxu0 0.0
      %841 = vmatprep.subr.mxu0 0.0
      %842 = vmatpush1.msra.mxu0 0.0
      %843 = vmatprep.subr.mxu0 0.0
      %844 = vmatpush1.msra.mxu0 0.0
      %845 = vmatprep.subr.mxu0 0.0
      %846 = vmatpush1.msra.mxu0 0.0
      %847 = vmatprep.subr.mxu0 0.0
      %848 = vmatpush1.msra.mxu0 0.0
      %849 = vmatprep.subr.mxu0 0.0
      %850 = vmatpush1.msra.mxu0 0.0
      %851 = vmatprep.subr.mxu0 0.0
      %852 = vmatpush1.msra.mxu0 0.0
      %853 = vmatprep.subr.mxu0 0.0
      %854 = vmatpush1.msra.mxu0 0.0
      %855 = vmatprep.subr.mxu0 0.0
      %856 = vmatpush1.msra.mxu0 0.0
      %857 = vmatprep.subr.mxu0 0.0
      %858 = vmatpush1.msra.mxu0 0.0
      %859 = vmatprep.subr.mxu0 0.0
      %860 = vmatpush1.msra.mxu0 0.0
      %861 = vmatprep.mubr.f32.mxu0 0.0
      %862 = vmatmul.mubr.f32.gmra.mrb[0].mxu0 %v790
      %v863 = vpop.f32.mrb[0].mxu0
      %v864 = vadd.f32 0.0, %v863
      %v865 = vpop.f32.mrb[0].mxu0
      %866 = vmatprep.mubr.f32.mxu0 0.0
      %867 = vmatmul.mubr.f32.gmra.mrb[0].mxu0 %v793
      %v868 = vpop.f32.mrb[0].mxu0
      %v869 = vadd.f32 0.0, %v868
      %v870 = vpop.f32.mrb[0].mxu0
      %871 = vdwg.mxu0
      %v872 = vadd.f32 %v750, %v864
      %v873 = vadd.f32 %v751, %v869
      %874 = vrot.lane.b32.xlu0 %v273, 64
      %v875 = vpop.permute.xlu0 %874
      %877 = vxpose.xlu0.b32.start [1/16] %v875, 128
      %878 = vxpose.xlu0.b32.cont [2/16] 0.0, 128
      %879 = vxpose.xlu0.b32.cont [3/16] 0.0, 128
      %880 = vxpose.xlu0.b32.cont [4/16] 0.0, 128
      %881 = vxpose.xlu0.b32.cont [5/16] 0.0, 128
      %882 = vxpose.xlu0.b32.cont [6/16] 0.0, 128
      %883 = vxpose.xlu0.b32.cont [7/16] 0.0, 128
      %884 = vxpose.xlu0.b32.cont [8/16] 0.0, 128
      %885 = vxpose.xlu0.b32.cont [9/16] 0.0, 128
      %886 = vxpose.xlu0.b32.cont [10/16] 0.0, 128
      %887 = vxpose.xlu0.b32.cont [11/16] 0.0, 128
      %888 = vxpose.xlu0.b32.cont [12/16] 0.0, 128
      %889 = vxpose.xlu0.b32.cont [13/16] 0.0, 128
      %890 = vxpose.xlu0.b32.cont [14/16] 0.0, 128
      %891 = vxpose.xlu0.b32.cont [15/16] 0.0, 128
      %892 = vxpose.xlu0.b32.end [16/16] 0.0, 128
      %v893 = vpop.trf.xlu0
      %v894 = vpop.trf.xlu0
      %v895 = vpop.trf.xlu0
      %v896 = vpop.trf.xlu0
      %v897 = vpop.trf.xlu0
      %v898 = vpop.trf.xlu0
      %v899 = vpop.trf.xlu0
      %v900 = vpop.trf.xlu0
      %v901 = vpop.trf.xlu0
      %v902 = vpop.trf.xlu0
      %v903 = vpop.trf.xlu0
      %v904 = vpop.trf.xlu0
      %v905 = vpop.trf.xlu0
      %v906 = vpop.trf.xlu0
      %v907 = vpop.trf.xlu0
      %v908 = vpop.trf.xlu0
      %909 = vrot.lane.b32.xlu0 %v317, 64
      %v910 = vpop.permute.xlu0 %909
      %v912 = vsel %vm430, %v893, 0
      %v915 = vsel %vm430, %v894, 0
      %v917 = vsel %vm437, %v910, 0
      %919 = vmatprep.subr.mxu0 0.0
      %920 = vmatpush1.msra.mxu0 %v917
      %921 = vmatprep.subr.mxu0 0.0
      %922 = vmatpush1.msra.mxu0 0.0
      %923 = vmatprep.subr.mxu0 0.0
      %924 = vmatpush1.msra.mxu0 0.0
      %925 = vmatprep.subr.mxu0 0.0
      %926 = vmatpush1.msra.mxu0 0.0
      %927 = vmatprep.subr.mxu0 0.0
      %928 = vmatpush1.msra.mxu0 0.0
      %929 = vmatprep.subr.mxu0 0.0
      %930 = vmatpush1.msra.mxu0 0.0
      %931 = vmatprep.subr.mxu0 0.0
      %932 = vmatpush1.msra.mxu0 0.0
      %933 = vmatprep.subr.mxu0 0.0
      %934 = vmatpush1.msra.mxu0 0.0
      %935 = vmatprep.subr.mxu0 0.0
      %936 = vmatpush1.msra.mxu0 0.0
      %937 = vmatprep.subr.mxu0 0.0
      %938 = vmatpush1.msra.mxu0 0.0
      %939 = vmatprep.subr.mxu0 0.0
      %940 = vmatpush1.msra.mxu0 0.0
      %941 = vmatprep.subr.mxu0 0.0
      %942 = vmatpush1.msra.mxu0 0.0
      %943 = vmatprep.subr.mxu0 0.0
      %944 = vmatpush1.msra.mxu0 0.0
      %945 = vmatprep.subr.mxu0 0.0
      %946 = vmatpush1.msra.mxu0 0.0
      %947 = vmatprep.subr.mxu0 0.0
      %948 = vmatpush1.msra.mxu0 0.0
      %949 = vmatprep.subr.mxu0 0.0
      %950 = vmatpush1.msra.mxu0 0.0
      %951 = vmatprep.subr.mxu0 0.0
      %952 = vmatpush1.msra.mxu0 0.0
      %953 = vmatprep.subr.mxu0 0.0
      %954 = vmatpush1.msra.mxu0 0.0
      %955 = vmatprep.subr.mxu0 0.0
      %956 = vmatpush1.msra.mxu0 0.0
      %957 = vmatprep.subr.mxu0 0.0
      %958 = vmatpush1.msra.mxu0 0.0
      %959 = vmatprep.subr.mxu0 0.0
      %960 = vmatpush1.msra.mxu0 0.0
      %961 = vmatprep.subr.mxu0 0.0
      %962 = vmatpush1.msra.mxu0 0.0
      %963 = vmatprep.subr.mxu0 0.0
      %964 = vmatpush1.msra.mxu0 0.0
      %965 = vmatprep.subr.mxu0 0.0
      %966 = vmatpush1.msra.mxu0 0.0
      %967 = vmatprep.subr.mxu0 0.0
      %968 = vmatpush1.msra.mxu0 0.0
      %969 = vmatprep.subr.mxu0 0.0
      %970 = vmatpush1.msra.mxu0 0.0
      %971 = vmatprep.subr.mxu0 0.0
      %972 = vmatpush1.msra.mxu0 0.0
      %973 = vmatprep.subr.mxu0 0.0
      %974 = vmatpush1.msra.mxu0 0.0
      %975 = vmatprep.subr.mxu0 0.0
      %976 = vmatpush1.msra.mxu0 0.0
      %977 = vmatprep.subr.mxu0 0.0
      %978 = vmatpush1.msra.mxu0 0.0
      %979 = vmatprep.subr.mxu0 0.0
      %980 = vmatpush1.msra.mxu0 0.0
      %981 = vmatprep.subr.mxu0 0.0
      %982 = vmatpush1.msra.mxu0 0.0
      %983 = vmatprep.mubr.f32.mxu0 0.0
      %984 = vmatmul.mubr.f32.gmra.mrb[0].mxu0 %v912
      %v985 = vpop.f32.mrb[0].mxu0
      %v986 = vadd.f32 0.0, %v985
      %v987 = vpop.f32.mrb[0].mxu0
      %988 = vmatprep.mubr.f32.mxu0 0.0
      %989 = vmatmul.mubr.f32.gmra.mrb[0].mxu0 %v915
      %v990 = vpop.f32.mrb[0].mxu0
      %v991 = vadd.f32 0.0, %v990
      %v992 = vpop.f32.mrb[0].mxu0
      %993 = vdwg.mxu0
      %v994 = vadd.f32 %v872, %v986
      %v995 = vadd.f32 %v873, %v991
      %996 = vrot.lane.b32.xlu0 %v273, 48
      %v997 = vpop.permute.xlu0 %996
      %999 = vxpose.xlu0.b32.start [1/16] %v997, 128
      %1000 = vxpose.xlu0.b32.cont [2/16] 0.0, 128
      %1001 = vxpose.xlu0.b32.cont [3/16] 0.0, 128
      %1002 = vxpose.xlu0.b32.cont [4/16] 0.0, 128
      %1003 = vxpose.xlu0.b32.cont [5/16] 0.0, 128
      %1004 = vxpose.xlu0.b32.cont [6/16] 0.0, 128
      %1005 = vxpose.xlu0.b32.cont [7/16] 0.0, 128
      %1006 = vxpose.xlu0.b32.cont [8/16] 0.0, 128
      %1007 = vxpose.xlu0.b32.cont [9/16] 0.0, 128
      %1008 = vxpose.xlu0.b32.cont [10/16] 0.0, 128
      %1009 = vxpose.xlu0.b32.cont [11/16] 0.0, 128
      %1010 = vxpose.xlu0.b32.cont [12/16] 0.0, 128
      %1011 = vxpose.xlu0.b32.cont [13/16] 0.0, 128
      %1012 = vxpose.xlu0.b32.cont [14/16] 0.0, 128
      %1013 = vxpose.xlu0.b32.cont [15/16] 0.0, 128
      %1014 = vxpose.xlu0.b32.end [16/16] 0.0, 128
      %v1015 = vpop.trf.xlu0
      %v1016 = vpop.trf.xlu0
      %v1017 = vpop.trf.xlu0
      %v1018 = vpop.trf.xlu0
      %v1019 = vpop.trf.xlu0
      %v1020 = vpop.trf.xlu0
      %v1021 = vpop.trf.xlu0
      %v1022 = vpop.trf.xlu0
      %v1023 = vpop.trf.xlu0
      %v1024 = vpop.trf.xlu0
      %v1025 = vpop.trf.xlu0
      %v1026 = vpop.trf.xlu0
      %v1027 = vpop.trf.xlu0
      %v1028 = vpop.trf.xlu0
      %v1029 = vpop.trf.xlu0
      %v1030 = vpop.trf.xlu0
      %1031 = vrot.lane.b32.xlu0 %v317, 48
      %v1032 = vpop.permute.xlu0 %1031
      %v1034 = vsel %vm430, %v1015, 0
      %v1037 = vsel %vm430, %v1016, 0
      %v1039 = vsel %vm437, %v1032, 0
      %1041 = vmatprep.subr.mxu0 0.0
      %1042 = vmatpush1.msra.mxu0 %v1039
      %1043 = vmatprep.subr.mxu0 0.0
      %1044 = vmatpush1.msra.mxu0 0.0
      %1045 = vmatprep.subr.mxu0 0.0
      %1046 = vmatpush1.msra.mxu0 0.0
      %1047 = vmatprep.subr.mxu0 0.0
      %1048 = vmatpush1.msra.mxu0 0.0
      %1049 = vmatprep.subr.mxu0 0.0
      %1050 = vmatpush1.msra.mxu0 0.0
      %1051 = vmatprep.subr.mxu0 0.0
      %1052 = vmatpush1.msra.mxu0 0.0
      %1053 = vmatprep.subr.mxu0 0.0
      %1054 = vmatpush1.msra.mxu0 0.0
      %1055 = vmatprep.subr.mxu0 0.0
      %1056 = vmatpush1.msra.mxu0 0.0
      %1057 = vmatprep.subr.mxu0 0.0
      %1058 = vmatpush1.msra.mxu0 0.0
      %1059 = vmatprep.subr.mxu0 0.0
      %1060 = vmatpush1.msra.mxu0 0.0
      %1061 = vmatprep.subr.mxu0 0.0
      %1062 = vmatpush1.msra.mxu0 0.0
      %1063 = vmatprep.subr.mxu0 0.0
      %1064 = vmatpush1.msra.mxu0 0.0
      %1065 = vmatprep.subr.mxu0 0.0
      %1066 = vmatpush1.msra.mxu0 0.0
      %1067 = vmatprep.subr.mxu0 0.0
      %1068 = vmatpush1.msra.mxu0 0.0
      %1069 = vmatprep.subr.mxu0 0.0
      %1070 = vmatpush1.msra.mxu0 0.0
      %1071 = vmatprep.subr.mxu0 0.0
      %1072 = vmatpush1.msra.mxu0 0.0
      %1073 = vmatprep.subr.mxu0 0.0
      %1074 = vmatpush1.msra.mxu0 0.0
      %1075 = vmatprep.subr.mxu0 0.0
      %1076 = vmatpush1.msra.mxu0 0.0
      %1077 = vmatprep.subr.mxu0 0.0
      %1078 = vmatpush1.msra.mxu0 0.0
      %1079 = vmatprep.subr.mxu0 0.0
      %1080 = vmatpush1.msra.mxu0 0.0
      %1081 = vmatprep.subr.mxu0 0.0
      %1082 = vmatpush1.msra.mxu0 0.0
      %1083 = vmatprep.subr.mxu0 0.0
      %1084 = vmatpush1.msra.mxu0 0.0
      %1085 = vmatprep.subr.mxu0 0.0
      %1086 = vmatpush1.msra.mxu0 0.0
      %1087 = vmatprep.subr.mxu0 0.0
      %1088 = vmatpush1.msra.mxu0 0.0
      %1089 = vmatprep.subr.mxu0 0.0
      %1090 = vmatpush1.msra.mxu0 0.0
      %1091 = vmatprep.subr.mxu0 0.0
      %1092 = vmatpush1.msra.mxu0 0.0
      %1093 = vmatprep.subr.mxu0 0.0
      %1094 = vmatpush1.msra.mxu0 0.0
      %1095 = vmatprep.subr.mxu0 0.0
      %1096 = vmatpush1.msra.mxu0 0.0
      %1097 = vmatprep.subr.mxu0 0.0
      %1098 = vmatpush1.msra.mxu0 0.0
      %1099 = vmatprep.subr.mxu0 0.0
      %1100 = vmatpush1.msra.mxu0 0.0
      %1101 = vmatprep.subr.mxu0 0.0
      %1102 = vmatpush1.msra.mxu0 0.0
      %1103 = vmatprep.subr.mxu0 0.0
      %1104 = vmatpush1.msra.mxu0 0.0
      %1105 = vmatprep.mubr.f32.mxu0 0.0
      %1106 = vmatmul.mubr.f32.gmra.mrb[0].mxu0 %v1034
      %v1107 = vpop.f32.mrb[0].mxu0
      %v1108 = vadd.f32 0.0, %v1107
      %v1109 = vpop.f32.mrb[0].mxu0
      %1110 = vmatprep.mubr.f32.mxu0 0.0
      %1111 = vmatmul.mubr.f32.gmra.mrb[0].mxu0 %v1037
      %v1112 = vpop.f32.mrb[0].mxu0
      %v1113 = vadd.f32 0.0, %v1112
      %v1114 = vpop.f32.mrb[0].mxu0
      %1115 = vdwg.mxu0
      %v1116 = vadd.f32 %v994, %v1108
      %v1117 = vadd.f32 %v995, %v1113
      %1118 = vrot.lane.b32.xlu0 %v273, 32
      %v1119 = vpop.permute.xlu0 %1118
      %1121 = vxpose.xlu0.b32.start [1/16] %v1119, 128
      %1122 = vxpose.xlu0.b32.cont [2/16] 0.0, 128
      %1123 = vxpose.xlu0.b32.cont [3/16] 0.0, 128
      %1124 = vxpose.xlu0.b32.cont [4/16] 0.0, 128
      %1125 = vxpose.xlu0.b32.cont [5/16] 0.0, 128
      %1126 = vxpose.xlu0.b32.cont [6/16] 0.0, 128
      %1127 = vxpose.xlu0.b32.cont [7/16] 0.0, 128
      %1128 = vxpose.xlu0.b32.cont [8/16] 0.0, 128
      %1129 = vxpose.xlu0.b32.cont [9/16] 0.0, 128
      %1130 = vxpose.xlu0.b32.cont [10/16] 0.0, 128
      %1131 = vxpose.xlu0.b32.cont [11/16] 0.0, 128
      %1132 = vxpose.xlu0.b32.cont [12/16] 0.0, 128
      %1133 = vxpose.xlu0.b32.cont [13/16] 0.0, 128
      %1134 = vxpose.xlu0.b32.cont [14/16] 0.0, 128
      %1135 = vxpose.xlu0.b32.cont [15/16] 0.0, 128
      %1136 = vxpose.xlu0.b32.end [16/16] 0.0, 128
      %v1137 = vpop.trf.xlu0
      %v1138 = vpop.trf.xlu0
      %v1139 = vpop.trf.xlu0
      %v1140 = vpop.trf.xlu0
      %v1141 = vpop.trf.xlu0
      %v1142 = vpop.trf.xlu0
      %v1143 = vpop.trf.xlu0
      %v1144 = vpop.trf.xlu0
      %v1145 = vpop.trf.xlu0
      %v1146 = vpop.trf.xlu0
      %v1147 = vpop.trf.xlu0
      %v1148 = vpop.trf.xlu0
      %v1149 = vpop.trf.xlu0
      %v1150 = vpop.trf.xlu0
      %v1151 = vpop.trf.xlu0
      %v1152 = vpop.trf.xlu0
      %1153 = vrot.lane.b32.xlu0 %v317, 32
      %v1154 = vpop.permute.xlu0 %1153
      %v1156 = vsel %vm430, %v1137, 0
      %v1159 = vsel %vm430, %v1138, 0
      %v1161 = vsel %vm437, %v1154, 0
      %1163 = vmatprep.subr.mxu0 0.0
      %1164 = vmatpush1.msra.mxu0 %v1161
      %1165 = vmatprep.subr.mxu0 0.0
      %1166 = vmatpush1.msra.mxu0 0.0
      %1167 = vmatprep.subr.mxu0 0.0
      %1168 = vmatpush1.msra.mxu0 0.0
      %1169 = vmatprep.subr.mxu0 0.0
      %1170 = vmatpush1.msra.mxu0 0.0
      %1171 = vmatprep.subr.mxu0 0.0
      %1172 = vmatpush1.msra.mxu0 0.0
      %1173 = vmatprep.subr.mxu0 0.0
      %1174 = vmatpush1.msra.mxu0 0.0
      %1175 = vmatprep.subr.mxu0 0.0
      %1176 = vmatpush1.msra.mxu0 0.0
      %1177 = vmatprep.subr.mxu0 0.0
      %1178 = vmatpush1.msra.mxu0 0.0
      %1179 = vmatprep.subr.mxu0 0.0
      %1180 = vmatpush1.msra.mxu0 0.0
      %1181 = vmatprep.subr.mxu0 0.0
      %1182 = vmatpush1.msra.mxu0 0.0
      %1183 = vmatprep.subr.mxu0 0.0
      %1184 = vmatpush1.msra.mxu0 0.0
      %1185 = vmatprep.subr.mxu0 0.0
      %1186 = vmatpush1.msra.mxu0 0.0
      %1187 = vmatprep.subr.mxu0 0.0
      %1188 = vmatpush1.msra.mxu0 0.0
      %1189 = vmatprep.subr.mxu0 0.0
      %1190 = vmatpush1.msra.mxu0 0.0
      %1191 = vmatprep.subr.mxu0 0.0
      %1192 = vmatpush1.msra.mxu0 0.0
      %1193 = vmatprep.subr.mxu0 0.0
      %1194 = vmatpush1.msra.mxu0 0.0
      %1195 = vmatprep.subr.mxu0 0.0
      %1196 = vmatpush1.msra.mxu0 0.0
      %1197 = vmatprep.subr.mxu0 0.0
      %1198 = vmatpush1.msra.mxu0 0.0
      %1199 = vmatprep.subr.mxu0 0.0
      %1200 = vmatpush1.msra.mxu0 0.0
      %1201 = vmatprep.subr.mxu0 0.0
      %1202 = vmatpush1.msra.mxu0 0.0
      %1203 = vmatprep.subr.mxu0 0.0
      %1204 = vmatpush1.msra.mxu0 0.0
      %1205 = vmatprep.subr.mxu0 0.0
      %1206 = vmatpush1.msra.mxu0 0.0
      %1207 = vmatprep.subr.mxu0 0.0
      %1208 = vmatpush1.msra.mxu0 0.0
      %1209 = vmatprep.subr.mxu0 0.0
      %1210 = vmatpush1.msra.mxu0 0.0
      %1211 = vmatprep.subr.mxu0 0.0
      %1212 = vmatpush1.msra.mxu0 0.0
      %1213 = vmatprep.subr.mxu0 0.0
      %1214 = vmatpush1.msra.mxu0 0.0
      %1215 = vmatprep.subr.mxu0 0.0
      %1216 = vmatpush1.msra.mxu0 0.0
      %1217 = vmatprep.subr.mxu0 0.0
      %1218 = vmatpush1.msra.mxu0 0.0
      %1219 = vmatprep.subr.mxu0 0.0
      %1220 = vmatpush1.msra.mxu0 0.0
      %1221 = vmatprep.subr.mxu0 0.0
      %1222 = vmatpush1.msra.mxu0 0.0
      %1223 = vmatprep.subr.mxu0 0.0
      %1224 = vmatpush1.msra.mxu0 0.0
      %1225 = vmatprep.subr.mxu0 0.0
      %1226 = vmatpush1.msra.mxu0 0.0
      %1227 = vmatprep.mubr.f32.mxu0 0.0
      %1228 = vmatmul.mubr.f32.gmra.mrb[0].mxu0 %v1156
      %v1229 = vpop.f32.mrb[0].mxu0
      %v1230 = vadd.f32 0.0, %v1229
      %v1231 = vpop.f32.mrb[0].mxu0
      %1232 = vmatprep.mubr.f32.mxu0 0.0
      %1233 = vmatmul.mubr.f32.gmra.mrb[0].mxu0 %v1159
      %v1234 = vpop.f32.mrb[0].mxu0
      %v1235 = vadd.f32 0.0, %v1234
      %v1236 = vpop.f32.mrb[0].mxu0
      %1237 = vdwg.mxu0
      %v1238 = vadd.f32 %v1116, %v1230
      %v1239 = vadd.f32 %v1117, %v1235
      %1240 = vrot.lane.b32.xlu0 %v273, 16
      %v1241 = vpop.permute.xlu0 %1240
      %1243 = vxpose.xlu0.b32.start [1/16] %v1241, 128
      %1244 = vxpose.xlu0.b32.cont [2/16] 0.0, 128
      %1245 = vxpose.xlu0.b32.cont [3/16] 0.0, 128
      %1246 = vxpose.xlu0.b32.cont [4/16] 0.0, 128
      %1247 = vxpose.xlu0.b32.cont [5/16] 0.0, 128
      %1248 = vxpose.xlu0.b32.cont [6/16] 0.0, 128
      %1249 = vxpose.xlu0.b32.cont [7/16] 0.0, 128
      %1250 = vxpose.xlu0.b32.cont [8/16] 0.0, 128
      %1251 = vxpose.xlu0.b32.cont [9/16] 0.0, 128
      %1252 = vxpose.xlu0.b32.cont [10/16] 0.0, 128
      %1253 = vxpose.xlu0.b32.cont [11/16] 0.0, 128
      %1254 = vxpose.xlu0.b32.cont [12/16] 0.0, 128
      %1255 = vxpose.xlu0.b32.cont [13/16] 0.0, 128
      %1256 = vxpose.xlu0.b32.cont [14/16] 0.0, 128
      %1257 = vxpose.xlu0.b32.cont [15/16] 0.0, 128
      %1258 = vxpose.xlu0.b32.end [16/16] 0.0, 128
      %v1259 = vpop.trf.xlu0
      %v1260 = vpop.trf.xlu0
      %v1261 = vpop.trf.xlu0
      %v1262 = vpop.trf.xlu0
      %v1263 = vpop.trf.xlu0
      %v1264 = vpop.trf.xlu0
      %v1265 = vpop.trf.xlu0
      %v1266 = vpop.trf.xlu0
      %v1267 = vpop.trf.xlu0
      %v1268 = vpop.trf.xlu0
      %v1269 = vpop.trf.xlu0
      %v1270 = vpop.trf.xlu0
      %v1271 = vpop.trf.xlu0
      %v1272 = vpop.trf.xlu0
      %v1273 = vpop.trf.xlu0
      %v1274 = vpop.trf.xlu0
      %1275 = vrot.lane.b32.xlu0 %v317, 16
      %v1276 = vpop.permute.xlu0 %1275
      %v1278 = vsel %vm430, %v1259, 0
      %v1281 = vsel %vm430, %v1260, 0
      %v1283 = vsel %vm437, %v1276, 0
      %1285 = vmatprep.subr.mxu0 0.0
      %1286 = vmatpush1.msra.mxu0 %v1283
      %1287 = vmatprep.subr.mxu0 0.0
      %1288 = vmatpush1.msra.mxu0 0.0
      %1289 = vmatprep.subr.mxu0 0.0
      %1290 = vmatpush1.msra.mxu0 0.0
      %1291 = vmatprep.subr.mxu0 0.0
      %1292 = vmatpush1.msra.mxu0 0.0
      %1293 = vmatprep.subr.mxu0 0.0
      %1294 = vmatpush1.msra.mxu0 0.0
      %1295 = vmatprep.subr.mxu0 0.0
      %1296 = vmatpush1.msra.mxu0 0.0
      %1297 = vmatprep.subr.mxu0 0.0
      %1298 = vmatpush1.msra.mxu0 0.0
      %1299 = vmatprep.subr.mxu0 0.0
      %1300 = vmatpush1.msra.mxu0 0.0
      %1301 = vmatprep.subr.mxu0 0.0
      %1302 = vmatpush1.msra.mxu0 0.0
      %1303 = vmatprep.subr.mxu0 0.0
      %1304 = vmatpush1.msra.mxu0 0.0
      %1305 = vmatprep.subr.mxu0 0.0
      %1306 = vmatpush1.msra.mxu0 0.0
      %1307 = vmatprep.subr.mxu0 0.0
      %1308 = vmatpush1.msra.mxu0 0.0
      %1309 = vmatprep.subr.mxu0 0.0
      %1310 = vmatpush1.msra.mxu0 0.0
      %1311 = vmatprep.subr.mxu0 0.0
      %1312 = vmatpush1.msra.mxu0 0.0
      %1313 = vmatprep.subr.mxu0 0.0
      %1314 = vmatpush1.msra.mxu0 0.0
      %1315 = vmatprep.subr.mxu0 0.0
      %1316 = vmatpush1.msra.mxu0 0.0
      %1317 = vmatprep.subr.mxu0 0.0
      %1318 = vmatpush1.msra.mxu0 0.0
      %1319 = vmatprep.subr.mxu0 0.0
      %1320 = vmatpush1.msra.mxu0 0.0
      %1321 = vmatprep.subr.mxu0 0.0
      %1322 = vmatpush1.msra.mxu0 0.0
      %1323 = vmatprep.subr.mxu0 0.0
      %1324 = vmatpush1.msra.mxu0 0.0
      %1325 = vmatprep.subr.mxu0 0.0
      %1326 = vmatpush1.msra.mxu0 0.0
      %1327 = vmatprep.subr.mxu0 0.0
      %1328 = vmatpush1.msra.mxu0 0.0
      %1329 = vmatprep.subr.mxu0 0.0
      %1330 = vmatpush1.msra.mxu0 0.0
      %1331 = vmatprep.subr.mxu0 0.0
      %1332 = vmatpush1.msra.mxu0 0.0
      %1333 = vmatprep.subr.mxu0 0.0
      %1334 = vmatpush1.msra.mxu0 0.0
      %1335 = vmatprep.subr.mxu0 0.0
      %1336 = vmatpush1.msra.mxu0 0.0
      %1337 = vmatprep.subr.mxu0 0.0
      %1338 = vmatpush1.msra.mxu0 0.0
      %1339 = vmatprep.subr.mxu0 0.0
      %1340 = vmatpush1.msra.mxu0 0.0
      %1341 = vmatprep.subr.mxu0 0.0
      %1342 = vmatpush1.msra.mxu0 0.0
      %1343 = vmatprep.subr.mxu0 0.0
      %1344 = vmatpush1.msra.mxu0 0.0
      %1345 = vmatprep.subr.mxu0 0.0
      %1346 = vmatpush1.msra.mxu0 0.0
      %1347 = vmatprep.subr.mxu0 0.0
      %1348 = vmatpush1.msra.mxu0 0.0
      %1349 = vmatprep.mubr.f32.mxu0 0.0
      %1350 = vmatmul.mubr.f32.gmra.mrb[0].mxu0 %v1278
      %v1351 = vpop.f32.mrb[0].mxu0
      %v1352 = vadd.f32 0.0, %v1351
      %v1353 = vpop.f32.mrb[0].mxu0
      %1354 = vmatprep.mubr.f32.mxu0 0.0
      %1355 = vmatmul.mubr.f32.gmra.mrb[0].mxu0 %v1281
      %v1356 = vpop.f32.mrb[0].mxu0
      %v1357 = vadd.f32 0.0, %v1356
      %v1358 = vpop.f32.mrb[0].mxu0
      %1359 = vdwg.mxu0
      %v1360 = vadd.f32 %v1238, %v1352
      %v1361 = vadd.f32 %v1239, %v1357
      %v1362 = vsub.f32 0.0, %v1360
      %v1363 = vsub.f32 0.0, %v1361
      %v1364 = vmul.f32 %v1362, 1.442695
      %v1365 = vpow.pop %v1364
      %v1366 = vmul.f32 %v1363, 1.442695
      %v1367 = vpow.pop %v1366
      %v1368 = vadd.f32 %v1365, 1.0
      %v1369 = vadd.f32 %v1367, 1.0
      %v1370 = vrcp.pop %v1368
      %v1371 = vrcp.pop %v1369
      %v1372 = vpack.c.bf16 %v1371, %v1370
      %v1373 = vpack.c.bf16 %v380, %v377
      %v1374 = vpack.c.bf16 %v388, %v385
      %vm1375 = vcmask 130048
      %v1377 = vsel %vm1375, %v1373, 0
      %v1380 = vsel %vm1375, %v1374, 0
      %v1383 = vsel %vm1375, %v1372, 0
      %1385 = vmatprep.subr.bf16.mxu0 0
      %1386 = vmatpush1.bf16.xpose.msra.mxu0 %v1383
      %1387 = vmatprep.subr.bf16.mxu0 0
      %1388 = vmatpush1.bf16.xpose.msra.mxu0 0
      %1389 = vmatprep.subr.bf16.mxu0 0
      %1390 = vmatpush1.bf16.xpose.msra.mxu0 0
      %1391 = vmatprep.subr.bf16.mxu0 0
      %1392 = vmatpush1.bf16.xpose.msra.mxu0 0
      %1393 = vmatprep.subr.bf16.mxu0 0
      %1394 = vmatpush1.bf16.xpose.msra.mxu0 0
      %1395 = vmatprep.subr.bf16.mxu0 0
      %1396 = vmatpush1.bf16.xpose.msra.mxu0 0
      %1397 = vmatprep.subr.bf16.mxu0 0
      %1398 = vmatpush1.bf16.xpose.msra.mxu0 0
      %1399 = vmatprep.subr.bf16.mxu0 0
      %1400 = vmatpush1.bf16.xpose.msra.mxu0 0
      %1401 = vmatprep.subr.bf16.mxu0 0
      %1402 = vmatpush1.bf16.xpose.msra.mxu0 0
      %1403 = vmatprep.subr.bf16.mxu0 0
      %1404 = vmatpush1.bf16.xpose.msra.mxu0 0
      %1405 = vmatprep.subr.bf16.mxu0 0
      %1406 = vmatpush1.bf16.xpose.msra.mxu0 0
      %1407 = vmatprep.subr.bf16.mxu0 0
      %1408 = vmatpush1.bf16.xpose.msra.mxu0 0
      %1409 = vmatprep.subr.bf16.mxu0 0
      %1410 = vmatpush1.bf16.xpose.msra.mxu0 0
      %1411 = vmatprep.subr.bf16.mxu0 0
      %1412 = vmatpush1.bf16.xpose.msra.mxu0 0
      %1413 = vmatprep.subr.bf16.mxu0 0
      %1414 = vmatpush1.bf16.xpose.msra.mxu0 0
      %1415 = vmatprep.subr.bf16.mxu0 0
      %1416 = vmatpush1.bf16.xpose.msra.mxu0 0
      %1417 = vmatprep.mubr.bf16.mxu0 0
      %1418 = vmatmul.mubr.bf16.gmra.mrb[0].mxu0 %v1377
      %v1419 = vpop.f32.mrb[0].mxu0
      %v1420 = vadd.f32 0.0, %v1419
      %v1421 = vpop.f32.mrb[0].mxu0
      %v1422 = vpop.f32.mrb[0].mxu0
      %v1423 = vadd.f32 0.0, %v1422
      %v1424 = vpop.f32.mrb[0].mxu0
      %1425 = vmatprep.mubr.bf16.mxu0 0
      %1426 = vmatmul.mubr.bf16.gmra.mrb[0].mxu0 %v1380
      %v1427 = vpop.f32.mrb[0].mxu0
      %v1428 = vadd.f32 0.0, %v1427
      %v1429 = vpop.f32.mrb[0].mxu0
      %v1430 = vpop.f32.mrb[0].mxu0
      %v1431 = vadd.f32 0.0, %v1430
      %v1432 = vpop.f32.mrb[0].mxu0
      %1433 = vdwg.mxu0
      %1436 = vrot.lane.b32.xlu0 %v1373, 112
      %v1437 = vpop.permute.xlu0 %1436
      %1438 = vrot.lane.b32.xlu0 %v1374, 112
      %v1439 = vpop.permute.xlu0 %1438
      %v1441 = vsel %vm1375, %v1437, 0
      %v1444 = vsel %vm1375, %v1439, 0
      %1446 = vmatprep.subr.bf16.mxu0 0
      %1447 = vmatpush1.bf16.xpose.msra.mxu0 %v1383
      %1448 = vmatprep.subr.bf16.mxu0 0
      %1449 = vmatpush1.bf16.xpose.msra.mxu0 0
      %1450 = vmatprep.subr.bf16.mxu0 0
      %1451 = vmatpush1.bf16.xpose.msra.mxu0 0
      %1452 = vmatprep.subr.bf16.mxu0 0
      %1453 = vmatpush1.bf16.xpose.msra.mxu0 0
      %1454 = vmatprep.subr.bf16.mxu0 0
      %1455 = vmatpush1.bf16.xpose.msra.mxu0 0
      %1456 = vmatprep.subr.bf16.mxu0 0
      %1457 = vmatpush1.bf16.xpose.msra.mxu0 0
      %1458 = vmatprep.subr.bf16.mxu0 0
      %1459 = vmatpush1.bf16.xpose.msra.mxu0 0
      %1460 = vmatprep.subr.bf16.mxu0 0
      %1461 = vmatpush1.bf16.xpose.msra.mxu0 0
      %1462 = vmatprep.subr.bf16.mxu0 0
      %1463 = vmatpush1.bf16.xpose.msra.mxu0 0
      %1464 = vmatprep.subr.bf16.mxu0 0
      %1465 = vmatpush1.bf16.xpose.msra.mxu0 0
      %1466 = vmatprep.subr.bf16.mxu0 0
      %1467 = vmatpush1.bf16.xpose.msra.mxu0 0
      %1468 = vmatprep.subr.bf16.mxu0 0
      %1469 = vmatpush1.bf16.xpose.msra.mxu0 0
      %1470 = vmatprep.subr.bf16.mxu0 0
      %1471 = vmatpush1.bf16.xpose.msra.mxu0 0
      %1472 = vmatprep.subr.bf16.mxu0 0
      %1473 = vmatpush1.bf16.xpose.msra.mxu0 0
      %1474 = vmatprep.subr.bf16.mxu0 0
      %1475 = vmatpush1.bf16.xpose.msra.mxu0 0
      %1476 = vmatprep.subr.bf16.mxu0 0
      %1477 = vmatpush1.bf16.xpose.msra.mxu0 0
      %1478 = vmatprep.mubr.bf16.mxu0 0
      %1479 = vmatmul.mubr.bf16.gmra.mrb[0].mxu0 %v1441
      %v1480 = vpop.f32.mrb[0].mxu0
      %v1481 = vadd.f32 0.0, %v1480
      %v1482 = vpop.f32.mrb[0].mxu0
      %v1483 = vpop.f32.mrb[0].mxu0
      %v1484 = vadd.f32 0.0, %v1483
      %v1485 = vpop.f32.mrb[0].mxu0
      %1486 = vmatprep.mubr.bf16.mxu0 0
      %1487 = vmatmul.mubr.bf16.gmra.mrb[0].mxu0 %v1444
      %v1488 = vpop.f32.mrb[0].mxu0
      %v1489 = vadd.f32 0.0, %v1488
      %v1490 = vpop.f32.mrb[0].mxu0
      %v1491 = vpop.f32.mrb[0].mxu0
      %v1492 = vadd.f32 0.0, %v1491
      %v1493 = vpop.f32.mrb[0].mxu0
      %1494 = vdwg.mxu0
      %1495 = vrot.lane.b32.xlu0 %v1373, 96
      %v1496 = vpop.permute.xlu0 %1495
      %1497 = vrot.lane.b32.xlu0 %v1374, 96
      %v1498 = vpop.permute.xlu0 %1497
      %v1500 = vsel %vm1375, %v1496, 0
      %v1503 = vsel %vm1375, %v1498, 0
      %1505 = vmatprep.subr.bf16.mxu0 0
      %1506 = vmatpush1.bf16.xpose.msra.mxu0 %v1383
      %1507 = vmatprep.subr.bf16.mxu0 0
      %1508 = vmatpush1.bf16.xpose.msra.mxu0 0
      %1509 = vmatprep.subr.bf16.mxu0 0
      %1510 = vmatpush1.bf16.xpose.msra.mxu0 0
      %1511 = vmatprep.subr.bf16.mxu0 0
      %1512 = vmatpush1.bf16.xpose.msra.mxu0 0
      %1513 = vmatprep.subr.bf16.mxu0 0
      %1514 = vmatpush1.bf16.xpose.msra.mxu0 0
      %1515 = vmatprep.subr.bf16.mxu0 0
      %1516 = vmatpush1.bf16.xpose.msra.mxu0 0
      %1517 = vmatprep.subr.bf16.mxu0 0
      %1518 = vmatpush1.bf16.xpose.msra.mxu0 0
      %1519 = vmatprep.subr.bf16.mxu0 0
      %1520 = vmatpush1.bf16.xpose.msra.mxu0 0
      %1521 = vmatprep.subr.bf16.mxu0 0
      %1522 = vmatpush1.bf16.xpose.msra.mxu0 0
      %1523 = vmatprep.subr.bf16.mxu0 0
      %1524 = vmatpush1.bf16.xpose.msra.mxu0 0
      %1525 = vmatprep.subr.bf16.mxu0 0
      %1526 = vmatpush1.bf16.xpose.msra.mxu0 0
      %1527 = vmatprep.subr.bf16.mxu0 0
      %1528 = vmatpush1.bf16.xpose.msra.mxu0 0
      %1529 = vmatprep.subr.bf16.mxu0 0
      %1530 = vmatpush1.bf16.xpose.msra.mxu0 0
      %1531 = vmatprep.subr.bf16.mxu0 0
      %1532 = vmatpush1.bf16.xpose.msra.mxu0 0
      %1533 = vmatprep.subr.bf16.mxu0 0
      %1534 = vmatpush1.bf16.xpose.msra.mxu0 0
      %1535 = vmatprep.subr.bf16.mxu0 0
      %1536 = vmatpush1.bf16.xpose.msra.mxu0 0
      %1537 = vmatprep.mubr.bf16.mxu0 0
      %1538 = vmatmul.mubr.bf16.gmra.mrb[0].mxu0 %v1500
      %v1539 = vpop.f32.mrb[0].mxu0
      %v1540 = vadd.f32 0.0, %v1539
      %v1541 = vpop.f32.mrb[0].mxu0
      %v1542 = vpop.f32.mrb[0].mxu0
      %v1543 = vadd.f32 0.0, %v1542
      %v1544 = vpop.f32.mrb[0].mxu0
      %1545 = vmatprep.mubr.bf16.mxu0 0
      %1546 = vmatmul.mubr.bf16.gmra.mrb[0].mxu0 %v1503
      %v1547 = vpop.f32.mrb[0].mxu0
      %v1548 = vadd.f32 0.0, %v1547
      %v1549 = vpop.f32.mrb[0].mxu0
      %v1550 = vpop.f32.mrb[0].mxu0
      %v1551 = vadd.f32 0.0, %v1550
      %v1552 = vpop.f32.mrb[0].mxu0
      %1553 = vdwg.mxu0
      %1554 = vrot.lane.b32.xlu0 %v1373, 80
      %v1555 = vpop.permute.xlu0 %1554
      %1556 = vrot.lane.b32.xlu0 %v1374, 80
      %v1557 = vpop.permute.xlu0 %1556
      %v1559 = vsel %vm1375, %v1555, 0
      %v1562 = vsel %vm1375, %v1557, 0
      %1564 = vmatprep.subr.bf16.mxu0 0
      %1565 = vmatpush1.bf16.xpose.msra.mxu0 %v1383
      %1566 = vmatprep.subr.bf16.mxu0 0
      %1567 = vmatpush1.bf16.xpose.msra.mxu0 0
      %1568 = vmatprep.subr.bf16.mxu0 0
      %1569 = vmatpush1.bf16.xpose.msra.mxu0 0
      %1570 = vmatprep.subr.bf16.mxu0 0
      %1571 = vmatpush1.bf16.xpose.msra.mxu0 0
      %1572 = vmatprep.subr.bf16.mxu0 0
      %1573 = vmatpush1.bf16.xpose.msra.mxu0 0
      %1574 = vmatprep.subr.bf16.mxu0 0
      %1575 = vmatpush1.bf16.xpose.msra.mxu0 0
      %1576 = vmatprep.subr.bf16.mxu0 0
      %1577 = vmatpush1.bf16.xpose.msra.mxu0 0
      %1578 = vmatprep.subr.bf16.mxu0 0
      %1579 = vmatpush1.bf16.xpose.msra.mxu0 0
      %1580 = vmatprep.subr.bf16.mxu0 0
      %1581 = vmatpush1.bf16.xpose.msra.mxu0 0
      %1582 = vmatprep.subr.bf16.mxu0 0
      %1583 = vmatpush1.bf16.xpose.msra.mxu0 0
      %1584 = vmatprep.subr.bf16.mxu0 0
      %1585 = vmatpush1.bf16.xpose.msra.mxu0 0
      %1586 = vmatprep.subr.bf16.mxu0 0
      %1587 = vmatpush1.bf16.xpose.msra.mxu0 0
      %1588 = vmatprep.subr.bf16.mxu0 0
      %1589 = vmatpush1.bf16.xpose.msra.mxu0 0
      %1590 = vmatprep.subr.bf16.mxu0 0
      %1591 = vmatpush1.bf16.xpose.msra.mxu0 0
      %1592 = vmatprep.subr.bf16.mxu0 0
      %1593 = vmatpush1.bf16.xpose.msra.mxu0 0
      %1594 = vmatprep.subr.bf16.mxu0 0
      %1595 = vmatpush1.bf16.xpose.msra.mxu0 0
      %1596 = vmatprep.mubr.bf16.mxu0 0
      %1597 = vmatmul.mubr.bf16.gmra.mrb[0].mxu0 %v1559
      %v1598 = vpop.f32.mrb[0].mxu0
      %v1599 = vadd.f32 0.0, %v1598
      %v1600 = vpop.f32.mrb[0].mxu0
      %v1601 = vpop.f32.mrb[0].mxu0
      %v1602 = vadd.f32 0.0, %v1601
      %v1603 = vpop.f32.mrb[0].mxu0
      %1604 = vmatprep.mubr.bf16.mxu0 0
      %1605 = vmatmul.mubr.bf16.gmra.mrb[0].mxu0 %v1562
      %v1606 = vpop.f32.mrb[0].mxu0
      %v1607 = vadd.f32 0.0, %v1606
      %v1608 = vpop.f32.mrb[0].mxu0
      %v1609 = vpop.f32.mrb[0].mxu0
      %v1610 = vadd.f32 0.0, %v1609
      %v1611 = vpop.f32.mrb[0].mxu0
      %1612 = vdwg.mxu0
      %1613 = vrot.lane.b32.xlu0 %v1373, 64
      %v1614 = vpop.permute.xlu0 %1613
      %1615 = vrot.lane.b32.xlu0 %v1374, 64
      %v1616 = vpop.permute.xlu0 %1615
      %v1618 = vsel %vm1375, %v1614, 0
      %v1621 = vsel %vm1375, %v1616, 0
      %1623 = vmatprep.subr.bf16.mxu0 0
      %1624 = vmatpush1.bf16.xpose.msra.mxu0 %v1383
      %1625 = vmatprep.subr.bf16.mxu0 0
      %1626 = vmatpush1.bf16.xpose.msra.mxu0 0
      %1627 = vmatprep.subr.bf16.mxu0 0
      %1628 = vmatpush1.bf16.xpose.msra.mxu0 0
      %1629 = vmatprep.subr.bf16.mxu0 0
      %1630 = vmatpush1.bf16.xpose.msra.mxu0 0
      %1631 = vmatprep.subr.bf16.mxu0 0
      %1632 = vmatpush1.bf16.xpose.msra.mxu0 0
      %1633 = vmatprep.subr.bf16.mxu0 0
      %1634 = vmatpush1.bf16.xpose.msra.mxu0 0
      %1635 = vmatprep.subr.bf16.mxu0 0
      %1636 = vmatpush1.bf16.xpose.msra.mxu0 0
      %1637 = vmatprep.subr.bf16.mxu0 0
      %1638 = vmatpush1.bf16.xpose.msra.mxu0 0
      %1639 = vmatprep.subr.bf16.mxu0 0
      %1640 = vmatpush1.bf16.xpose.msra.mxu0 0
      %1641 = vmatprep.subr.bf16.mxu0 0
      %1642 = vmatpush1.bf16.xpose.msra.mxu0 0
      %1643 = vmatprep.subr.bf16.mxu0 0
      %1644 = vmatpush1.bf16.xpose.msra.mxu0 0
      %1645 = vmatprep.subr.bf16.mxu0 0
      %1646 = vmatpush1.bf16.xpose.msra.mxu0 0
      %1647 = vmatprep.subr.bf16.mxu0 0
      %1648 = vmatpush1.bf16.xpose.msra.mxu0 0
      %1649 = vmatprep.subr.bf16.mxu0 0
      %1650 = vmatpush1.bf16.xpose.msra.mxu0 0
      %1651 = vmatprep.subr.bf16.mxu0 0
      %1652 = vmatpush1.bf16.xpose.msra.mxu0 0
      %1653 = vmatprep.subr.bf16.mxu0 0
      %1654 = vmatpush1.bf16.xpose.msra.mxu0 0
      %1655 = vmatprep.mubr.bf16.mxu0 0
      %1656 = vmatmul.mubr.bf16.gmra.mrb[0].mxu0 %v1618
      %v1657 = vpop.f32.mrb[0].mxu0
      %v1658 = vadd.f32 0.0, %v1657
      %v1659 = vpop.f32.mrb[0].mxu0
      %v1660 = vpop.f32.mrb[0].mxu0
      %v1661 = vadd.f32 0.0, %v1660
      %v1662 = vpop.f32.mrb[0].mxu0
      %1663 = vmatprep.mubr.bf16.mxu0 0
      %1664 = vmatmul.mubr.bf16.gmra.mrb[0].mxu0 %v1621
      %v1665 = vpop.f32.mrb[0].mxu0
      %v1666 = vadd.f32 0.0, %v1665
      %v1667 = vpop.f32.mrb[0].mxu0
      %v1668 = vpop.f32.mrb[0].mxu0
      %v1669 = vadd.f32 0.0, %v1668
      %v1670 = vpop.f32.mrb[0].mxu0
      %1671 = vdwg.mxu0
      %1672 = vrot.lane.b32.xlu0 %v1373, 48
      %v1673 = vpop.permute.xlu0 %1672
      %1674 = vrot.lane.b32.xlu0 %v1374, 48
      %v1675 = vpop.permute.xlu0 %1674
      %v1677 = vsel %vm1375, %v1673, 0
      %v1680 = vsel %vm1375, %v1675, 0
      %1682 = vmatprep.subr.bf16.mxu0 0
      %1683 = vmatpush1.bf16.xpose.msra.mxu0 %v1383
      %1684 = vmatprep.subr.bf16.mxu0 0
      %1685 = vmatpush1.bf16.xpose.msra.mxu0 0
      %1686 = vmatprep.subr.bf16.mxu0 0
      %1687 = vmatpush1.bf16.xpose.msra.mxu0 0
      %1688 = vmatprep.subr.bf16.mxu0 0
      %1689 = vmatpush1.bf16.xpose.msra.mxu0 0
      %1690 = vmatprep.subr.bf16.mxu0 0
      %1691 = vmatpush1.bf16.xpose.msra.mxu0 0
      %1692 = vmatprep.subr.bf16.mxu0 0
      %1693 = vmatpush1.bf16.xpose.msra.mxu0 0
      %1694 = vmatprep.subr.bf16.mxu0 0
      %1695 = vmatpush1.bf16.xpose.msra.mxu0 0
      %1696 = vmatprep.subr.bf16.mxu0 0
      %1697 = vmatpush1.bf16.xpose.msra.mxu0 0
      %1698 = vmatprep.subr.bf16.mxu0 0
      %1699 = vmatpush1.bf16.xpose.msra.mxu0 0
      %1700 = vmatprep.subr.bf16.mxu0 0
      %1701 = vmatpush1.bf16.xpose.msra.mxu0 0
      %1702 = vmatprep.subr.bf16.mxu0 0
      %1703 = vmatpush1.bf16.xpose.msra.mxu0 0
      %1704 = vmatprep.subr.bf16.mxu0 0
      %1705 = vmatpush1.bf16.xpose.msra.mxu0 0
      %1706 = vmatprep.subr.bf16.mxu0 0
      %1707 = vmatpush1.bf16.xpose.msra.mxu0 0
      %1708 = vmatprep.subr.bf16.mxu0 0
      %1709 = vmatpush1.bf16.xpose.msra.mxu0 0
      %1710 = vmatprep.subr.bf16.mxu0 0
      %1711 = vmatpush1.bf16.xpose.msra.mxu0 0
      %1712 = vmatprep.subr.bf16.mxu0 0
      %1713 = vmatpush1.bf16.xpose.msra.mxu0 0
      %1714 = vmatprep.mubr.bf16.mxu0 0
      %1715 = vmatmul.mubr.bf16.gmra.mrb[0].mxu0 %v1677
      %v1716 = vpop.f32.mrb[0].mxu0
      %v1717 = vadd.f32 0.0, %v1716
      %v1718 = vpop.f32.mrb[0].mxu0
      %v1719 = vpop.f32.mrb[0].mxu0
      %v1720 = vadd.f32 0.0, %v1719
      %v1721 = vpop.f32.mrb[0].mxu0
      %1722 = vmatprep.mubr.bf16.mxu0 0
      %1723 = vmatmul.mubr.bf16.gmra.mrb[0].mxu0 %v1680
      %v1724 = vpop.f32.mrb[0].mxu0
      %v1725 = vadd.f32 0.0, %v1724
      %v1726 = vpop.f32.mrb[0].mxu0
      %v1727 = vpop.f32.mrb[0].mxu0
      %v1728 = vadd.f32 0.0, %v1727
      %v1729 = vpop.f32.mrb[0].mxu0
      %1730 = vdwg.mxu0
      %1731 = vrot.lane.b32.xlu0 %v1373, 32
      %v1732 = vpop.permute.xlu0 %1731
      %1733 = vrot.lane.b32.xlu0 %v1374, 32
      %v1734 = vpop.permute.xlu0 %1733
      %v1736 = vsel %vm1375, %v1732, 0
      %v1739 = vsel %vm1375, %v1734, 0
      %1741 = vmatprep.subr.bf16.mxu0 0
      %1742 = vmatpush1.bf16.xpose.msra.mxu0 %v1383
      %1743 = vmatprep.subr.bf16.mxu0 0
      %1744 = vmatpush1.bf16.xpose.msra.mxu0 0
      %1745 = vmatprep.subr.bf16.mxu0 0
      %1746 = vmatpush1.bf16.xpose.msra.mxu0 0
      %1747 = vmatprep.subr.bf16.mxu0 0
      %1748 = vmatpush1.bf16.xpose.msra.mxu0 0
      %1749 = vmatprep.subr.bf16.mxu0 0
      %1750 = vmatpush1.bf16.xpose.msra.mxu0 0
      %1751 = vmatprep.subr.bf16.mxu0 0
      %1752 = vmatpush1.bf16.xpose.msra.mxu0 0
      %1753 = vmatprep.subr.bf16.mxu0 0
      %1754 = vmatpush1.bf16.xpose.msra.mxu0 0
      %1755 = vmatprep.subr.bf16.mxu0 0
      %1756 = vmatpush1.bf16.xpose.msra.mxu0 0
      %1757 = vmatprep.subr.bf16.mxu0 0
      %1758 = vmatpush1.bf16.xpose.msra.mxu0 0
      %1759 = vmatprep.subr.bf16.mxu0 0
      %1760 = vmatpush1.bf16.xpose.msra.mxu0 0
      %1761 = vmatprep.subr.bf16.mxu0 0
      %1762 = vmatpush1.bf16.xpose.msra.mxu0 0
      %1763 = vmatprep.subr.bf16.mxu0 0
      %1764 = vmatpush1.bf16.xpose.msra.mxu0 0
      %1765 = vmatprep.subr.bf16.mxu0 0
      %1766 = vmatpush1.bf16.xpose.msra.mxu0 0
      %1767 = vmatprep.subr.bf16.mxu0 0
      %1768 = vmatpush1.bf16.xpose.msra.mxu0 0
      %1769 = vmatprep.subr.bf16.mxu0 0
      %1770 = vmatpush1.bf16.xpose.msra.mxu0 0
      %1771 = vmatprep.subr.bf16.mxu0 0
      %1772 = vmatpush1.bf16.xpose.msra.mxu0 0
      %1773 = vmatprep.mubr.bf16.mxu0 0
      %1774 = vmatmul.mubr.bf16.gmra.mrb[0].mxu0 %v1736
      %v1775 = vpop.f32.mrb[0].mxu0
      %v1776 = vadd.f32 0.0, %v1775
      %v1777 = vpop.f32.mrb[0].mxu0
      %v1778 = vpop.f32.mrb[0].mxu0
      %v1779 = vadd.f32 0.0, %v1778
      %v1780 = vpop.f32.mrb[0].mxu0
      %1781 = vmatprep.mubr.bf16.mxu0 0
      %1782 = vmatmul.mubr.bf16.gmra.mrb[0].mxu0 %v1739
      %v1783 = vpop.f32.mrb[0].mxu0
      %v1784 = vadd.f32 0.0, %v1783
      %v1785 = vpop.f32.mrb[0].mxu0
      %v1786 = vpop.f32.mrb[0].mxu0
      %v1787 = vadd.f32 0.0, %v1786
      %v1788 = vpop.f32.mrb[0].mxu0
      %1789 = vdwg.mxu0
      %1790 = vrot.lane.b32.xlu0 %v1373, 16
      %v1791 = vpop.permute.xlu0 %1790
      %1792 = vrot.lane.b32.xlu0 %v1374, 16
      %v1793 = vpop.permute.xlu0 %1792
      %v1795 = vsel %vm1375, %v1791, 0
      %v1798 = vsel %vm1375, %v1793, 0
      %1800 = vmatprep.subr.bf16.mxu0 0
      %1801 = vmatpush1.bf16.xpose.msra.mxu0 %v1383
      %1802 = vmatprep.subr.bf16.mxu0 0
      %1803 = vmatpush1.bf16.xpose.msra.mxu0 0
      %1804 = vmatprep.subr.bf16.mxu0 0
      %1805 = vmatpush1.bf16.xpose.msra.mxu0 0
      %1806 = vmatprep.subr.bf16.mxu0 0
      %1807 = vmatpush1.bf16.xpose.msra.mxu0 0
      %1808 = vmatprep.subr.bf16.mxu0 0
      %1809 = vmatpush1.bf16.xpose.msra.mxu0 0
      %1810 = vmatprep.subr.bf16.mxu0 0
      %1811 = vmatpush1.bf16.xpose.msra.mxu0 0
      %1812 = vmatprep.subr.bf16.mxu0 0
      %1813 = vmatpush1.bf16.xpose.msra.mxu0 0
      %1814 = vmatprep.subr.bf16.mxu0 0
      %1815 = vmatpush1.bf16.xpose.msra.mxu0 0
      %1816 = vmatprep.subr.bf16.mxu0 0
      %1817 = vmatpush1.bf16.xpose.msra.mxu0 0
      %1818 = vmatprep.subr.bf16.mxu0 0
      %1819 = vmatpush1.bf16.xpose.msra.mxu0 0
      %1820 = vmatprep.subr.bf16.mxu0 0
      %1821 = vmatpush1.bf16.xpose.msra.mxu0 0
      %1822 = vmatprep.subr.bf16.mxu0 0
      %1823 = vmatpush1.bf16.xpose.msra.mxu0 0
      %1824 = vmatprep.subr.bf16.mxu0 0
      %1825 = vmatpush1.bf16.xpose.msra.mxu0 0
      %1826 = vmatprep.subr.bf16.mxu0 0
      %1827 = vmatpush1.bf16.xpose.msra.mxu0 0
      %1828 = vmatprep.subr.bf16.mxu0 0
      %1829 = vmatpush1.bf16.xpose.msra.mxu0 0
      %1830 = vmatprep.subr.bf16.mxu0 0
      %1831 = vmatpush1.bf16.xpose.msra.mxu0 0
      %1832 = vmatprep.mubr.bf16.mxu0 0
      %1833 = vmatmul.mubr.bf16.gmra.mrb[0].mxu0 %v1795
      %v1834 = vpop.f32.mrb[0].mxu0
      %v1835 = vadd.f32 0.0, %v1834
      %v1836 = vpop.f32.mrb[0].mxu0
      %v1837 = vpop.f32.mrb[0].mxu0
      %v1838 = vadd.f32 0.0, %v1837
      %v1839 = vpop.f32.mrb[0].mxu0
      %1840 = vmatprep.mubr.bf16.mxu0 0
      %1841 = vmatmul.mubr.bf16.gmra.mrb[0].mxu0 %v1798
      %v1842 = vpop.f32.mrb[0].mxu0
      %v1843 = vadd.f32 0.0, %v1842
      %v1844 = vpop.f32.mrb[0].mxu0
      %v1845 = vpop.f32.mrb[0].mxu0
      %v1846 = vadd.f32 0.0, %v1845
      %v1847 = vpop.f32.mrb[0].mxu0
      %1848 = vdwg.mxu0
      %1853 = vrot.lane.b32.xlu0 %v1481, 16
      %v1854 = vpop.permute.xlu0 %1853
      %1855 = vrot.lane.b32.xlu0 %v1484, 16
      %v1856 = vpop.permute.xlu0 %1855
      %1857 = vrot.lane.b32.xlu0 %v1489, 16
      %v1858 = vpop.permute.xlu0 %1857
      %1859 = vrot.lane.b32.xlu0 %v1492, 16
      %v1860 = vpop.permute.xlu0 %1859
      %1869 = vrot.lane.b32.xlu0 %v1540, 32
      %v1870 = vpop.permute.xlu0 %1869
      %1871 = vrot.lane.b32.xlu0 %v1543, 32
      %v1872 = vpop.permute.xlu0 %1871
      %1873 = vrot.lane.b32.xlu0 %v1548, 32
      %v1874 = vpop.permute.xlu0 %1873
      %1875 = vrot.lane.b32.xlu0 %v1551, 32
      %v1876 = vpop.permute.xlu0 %1875
      %1885 = vrot.lane.b32.xlu0 %v1599, 48
      %v1886 = vpop.permute.xlu0 %1885
      %1887 = vrot.lane.b32.xlu0 %v1602, 48
      %v1888 = vpop.permute.xlu0 %1887
      %1889 = vrot.lane.b32.xlu0 %v1607, 48
      %v1890 = vpop.permute.xlu0 %1889
      %1891 = vrot.lane.b32.xlu0 %v1610, 48
      %v1892 = vpop.permute.xlu0 %1891
      %1901 = vrot.lane.b32.xlu0 %v1658, 64
      %v1902 = vpop.permute.xlu0 %1901
      %1903 = vrot.lane.b32.xlu0 %v1661, 64
      %v1904 = vpop.permute.xlu0 %1903
      %1905 = vrot.lane.b32.xlu0 %v1666, 64
      %v1906 = vpop.permute.xlu0 %1905
      %1907 = vrot.lane.b32.xlu0 %v1669, 64
      %v1908 = vpop.permute.xlu0 %1907
      %1917 = vrot.lane.b32.xlu0 %v1717, 80
      %v1918 = vpop.permute.xlu0 %1917
      %1919 = vrot.lane.b32.xlu0 %v1720, 80
      %v1920 = vpop.permute.xlu0 %1919
      %1921 = vrot.lane.b32.xlu0 %v1725, 80
      %v1922 = vpop.permute.xlu0 %1921
      %1923 = vrot.lane.b32.xlu0 %v1728, 80
      %v1924 = vpop.permute.xlu0 %1923
      %1933 = vrot.lane.b32.xlu0 %v1776, 96
      %v1934 = vpop.permute.xlu0 %1933
      %1935 = vrot.lane.b32.xlu0 %v1779, 96
      %v1936 = vpop.permute.xlu0 %1935
      %1937 = vrot.lane.b32.xlu0 %v1784, 96
      %v1938 = vpop.permute.xlu0 %1937
      %1939 = vrot.lane.b32.xlu0 %v1787, 96
      %v1940 = vpop.permute.xlu0 %1939
      %1949 = vrot.lane.b32.xlu0 %v1835, 112
      %v1950 = vpop.permute.xlu0 %1949
      %1951 = vrot.lane.b32.xlu0 %v1838, 112
      %v1952 = vpop.permute.xlu0 %1951
      %1953 = vrot.lane.b32.xlu0 %v1843, 112
      %v1954 = vpop.permute.xlu0 %1953
      %1955 = vrot.lane.b32.xlu0 %v1846, 112
      %v1956 = vpop.permute.xlu0 %1955
      %v1961 = vsel %vm1375, %v1420, %v1854
      %v1962 = vsel %vm1375, %v1423, %v1856
      %v1963 = vsel %vm1375, %v1428, %v1858
      %v1964 = vsel %vm1375, %v1431, %v1860
      %v1965 = vsel %vm234, %v1961, %v1870
      %v1966 = vsel %vm234, %v1962, %v1872
      %v1967 = vsel %vm234, %v1963, %v1874
      %v1968 = vsel %vm234, %v1964, %v1876
      %vm1969 = vcmask 392192
      %v1970 = vsel %vm1969, %v1965, %v1886
      %v1971 = vsel %vm1969, %v1966, %v1888
      %v1972 = vsel %vm1969, %v1967, %v1890
      %v1973 = vsel %vm1969, %v1968, %v1892
      %vm1974 = vcmask 523264
      %v1975 = vsel %vm1974, %v1970, %v1902
      %v1976 = vsel %vm1974, %v1971, %v1904
      %v1977 = vsel %vm1974, %v1972, %v1906
      %v1978 = vsel %vm1974, %v1973, %v1908
      %vm1979 = vcmask 654336
      %v1980 = vsel %vm1979, %v1975, %v1918
      %v1981 = vsel %vm1979, %v1976, %v1920
      %v1982 = vsel %vm1979, %v1977, %v1922
      %v1983 = vsel %vm1979, %v1978, %v1924
      %vm1984 = vcmask 785408
      %v1985 = vsel %vm1984, %v1980, %v1934
      %v1986 = vsel %vm1984, %v1981, %v1936
      %v1987 = vsel %vm1984, %v1982, %v1938
      %v1988 = vsel %vm1984, %v1983, %v1940
      %vm1989 = vcmask 916480
      %v1990 = vsel %vm1989, %v1985, %v1950
      %v1991 = vsel %vm1989, %v1986, %v1952
      %v1992 = vsel %vm1989, %v1987, %v1954
      %v1993 = vsel %vm1989, %v1988, %v1956
      %s1994 = sld [smem:[#allocation2]]
      %v1995 = vstv %s1994
      %v1996 = vmul.f32 %v1995, %v1990
      %v1997 = vmul.f32 %v1995, %v1991
      %v1998 = vmul.f32 %v1995, %v1992
      %v1999 = vmul.f32 %v1995, %v1993
      %v2000 = vadd.f32 %v1996, %v227
      %v2001 = vadd.f32 %v1997, %v228
      %v2002 = vadd.f32 %v1998, %v229
      %v2003 = vadd.f32 %v1999, %v230
      %2004 = vst [vmem:[%s225] sm:$0xff] %v2000
      %2005 = vst [vmem:[%s225 + $0x8] sm:$0xff] %v2001
      %2006 = vst [vmem:[%s225 + $0x10] sm:$0xff] %v2002
      %2007 = vst [vmem:[%s225 + $0x18] sm:$0xff] %v2003
      %p2008 = scmp.lt.s32.totalorder %s17, 1
      %s2009 = scalar_select %p2008, %s17, 1
      %s2010 = smul.addr %s2009, 4
      %s2011 = smul.addr %s2010, 8
      %s2012 = scalar_lea.vmem %s5, %s2011
      // Predicated region
      $region41: #{aa_kernel_forward.4} parent=39 // pred_check
        %p2013 = pneg %p145
      $region42: #{aa_kernel_forward.4} parent=39 // pred_check_branch
        %2015 = sbr.rel (%p2013) target = $region44
      $region43: #{aa_kernel_forward.4} parent=39 // pred_region
        _
      $region44: #{aa_kernel_forward.4} parent=39 // pred_fallthru
        _
    $region40: #{aa_kernel_forward.4} parent=5 // pred_fallthru
      _
    %p2016 = scmp.le.s32.totalorder 2, %s12
    // Predicated region
    $region45: #{aa_kernel_forward.4} parent=5 // pred_check
      %p2017 = pneg %p2016
    $region46: #{aa_kernel_forward.4} parent=5 // pred_check_branch
      %2019 = sbr.rel (%p2017) target = $region48
    $region47: #{aa_kernel_forward.4} parent=5 // pred_region
      %s2020 = ssub.s32 %s12, 2
      // Predicated region
      $region49: #{aa_kernel_forward.4} parent=47 // pred_check
        %p2021 = pneg %p151
      $region50: #{aa_kernel_forward.4} parent=47 // pred_check_branch
        %2023 = sbr.rel (%p2021) target = $region52
      $region51: #{aa_kernel_forward.4} parent=47 // pred_region
        %p2024 = scmp.lt.s32.totalorder %s18, 1
        %s2025 = scalar_select %p2024, %s18, 1
        %s2026 = smul.addr %s2025, 4
        %s2027 = smul.addr %s2026, 8
        %s2028 = scalar_lea.vmem %s5, %s2027
      $region52: #{aa_kernel_forward.4} parent=47 // pred_fallthru
        _
    $region48: #{aa_kernel_forward.4} parent=5 // pred_fallthru
      _
  $region6: #{aa_kernel_forward.4} parent=0 // loop_footer
    %s16 = sadd.s32 1, %s12
  $region7: #{aa_kernel_forward.4} parent=0 // loop_footer_branch
    %11 = sbr.rel target = $region3
  $region8: #{aa_kernel_forward.4} parent=0 // loop_exit
    _

// kernel: aa_kernel_forward.5
$region0: #{aa_kernel_forward.5}
  #allocation0 [shape = 'u32[]', space=smem, size = 0x4, offset = 0x4, fixed_abs, tag = 'smem constant byte address 0x4 - core index']
  #allocation1 [shape = 'u32[144,128]{1,0:T(1,128)}', space=vmem, size = 0x12000, scoped, tag = 'internal scratch']
  #allocation2 [shape = 'f32[1]{0:T(128)S(6)}', space=smem, size = 0x200, scoped, tag = 'scoped memory for aa_kernel_forward.5']
  %s0 = inlined_call_operand.vmem [shape: f32[2,32,128], index: 0, kind: input, shape index: {}]
  %s1 = inlined_call_operand.vmem [shape: bf16[4,32], index: 1, kind: input, shape index: {}]
  %s2 = inlined_call_operand.vmem [shape: bf16[4,32], index: 2, kind: input, shape index: {}]
  %s3 = inlined_call_operand.vmem [shape: bf16[32,32], index: 3, kind: input, shape index: {}]
  %s4 = inlined_call_operand.<no memory space> [shape: f32[1], index: 4, kind: input, shape index: {}]
  %s5 = inlined_call_operand.vmem [shape: f32[2,32,128], index: 5, kind: output, shape index: {}]
  %s6 = sld [smem:[#allocation0]]
  $region53: #{aa_kernel_forward.5} parent=0
    _
  %s8 = ssub.s32 1, %s6
  %s9 = scalar_select 0, %s8, %s6
  %10 = sst [smem:[#allocation2]] %s4
  loop: start=0, step=1, limit=4
  $region2: #{aa_kernel_forward.5} parent=0 // loop_pre_header
    _
  $region3: #{aa_kernel_forward.5} parent=0 // loop_header
    %s12 = sphi 0, %s16
    %p13 = scmp.ge.s32.totalorder %s12, 4
    %s22 = sphi 0, %s24
    %s25 = sphi 0, %s22
    %s26 = sphi 0, %s25
    %s42 = sphi 0, %s26
    %s46 = sphi 0, %s46
    %s48 = sphi 0, %s46
    %s49 = sphi 0, %s48
    %s63 = sphi 0, %s49
    %s67 = sphi 0, %s67
    %s69 = sphi 0, %s67
    %s70 = sphi 0, %s69
    %s84 = sphi 0, %s70
    %s88 = sphi 0, %s88
    %s90 = sphi 0, %s88
    %s91 = sphi 0, %s90
    %s105 = sphi 0, %s91
    %s109 = sphi 0, %s109
    %s111 = sphi 0, %s109
    %s112 = sphi 0, %s111
    %s126 = sphi 0, %s112
    %s132 = sphi 0, %s134
    %s135 = sphi 0, %s132
    %s136 = sphi 0, %s135
    %s152 = sphi 0, %s136
  $region4: #{aa_kernel_forward.5} parent=0 // loop_header_branch
    %15 = sbr.rel (%p13) target = $region8
  $region5: #{aa_kernel_forward.5} parent=0 // loop_body
    %s17 = ssub.s32 %s12, 1
    %s18 = ssub.s32 %s12, 2
    %s19 = sadd.s32 %s12, 1
    %s20 = ssub.s32 %s12, %s19
    %p21 = scmp.eq.s32.totalorder %s20, 0
    %s23 = sadd.s32 %s22, 1
    %s24 = scalar_select %p21, %s22, %s23
    %p27 = pneg %p21
    %p28 = scmp.eq.s32.totalorder %s12, 1
    %p29 = por %p27, %p28
    %p30 = scmp.ne.s32.totalorder %s22, %s25
    %p31 = scmp.eq.s32.totalorder %s12, 0
    %p32 = por %p30, %p31
    %p33 = scmp.ne.s32.totalorder %s22, %s25
    %p34 = scmp.eq.s32.totalorder %s17, 1
    %p35 = por %p33, %p34
    %p36 = scmp.ne.s32.totalorder %s25, %s26
    %p37 = scmp.eq.s32.totalorder %s17, 0
    %p38 = por %p36, %p37
    %p39 = scmp.ne.s32.totalorder %s25, %s26
    %p40 = scmp.eq.s32.totalorder %s18, 1
    %p41 = por %p39, %p40
    %p43 = scmp.ne.s32.totalorder %s26, %s42
    %p44 = scmp.eq.s32.totalorder %s18, 0
    %p45 = por %p43, %p44
    %s47 = sadd.s32 %s46, 1
    %p50 = scmp.eq.s32.totalorder %s12, 1
    %p51 = scmp.ne.s32.totalorder %s46, %s48
    %p52 = scmp.eq.s32.totalorder %s12, 0
    %p53 = por %p51, %p52
    %p54 = scmp.ne.s32.totalorder %s46, %s48
    %p55 = scmp.eq.s32.totalorder %s17, 1
    %p56 = por %p54, %p55
    %p57 = scmp.ne.s32.totalorder %s48, %s49
    %p58 = scmp.eq.s32.totalorder %s17, 0
    %p59 = por %p57, %p58
    %p60 = scmp.ne.s32.totalorder %s48, %s49
    %p61 = scmp.eq.s32.totalorder %s18, 1
    %p62 = por %p60, %p61
    %p64 = scmp.ne.s32.totalorder %s49, %s63
    %p65 = scmp.eq.s32.totalorder %s18, 0
    %p66 = por %p64, %p65
    %s68 = sadd.s32 %s67, 1
    %p71 = scmp.eq.s32.totalorder %s12, 1
    %p72 = scmp.ne.s32.totalorder %s67, %s69
    %p73 = scmp.eq.s32.totalorder %s12, 0
    %p74 = por %p72, %p73
    %p75 = scmp.ne.s32.totalorder %s67, %s69
    %p76 = scmp.eq.s32.totalorder %s17, 1
    %p77 = por %p75, %p76
    %p78 = scmp.ne.s32.totalorder %s69, %s70
    %p79 = scmp.eq.s32.totalorder %s17, 0
    %p80 = por %p78, %p79
    %p81 = scmp.ne.s32.totalorder %s69, %s70
    %p82 = scmp.eq.s32.totalorder %s18, 1
    %p83 = por %p81, %p82
    %p85 = scmp.ne.s32.totalorder %s70, %s84
    %p86 = scmp.eq.s32.totalorder %s18, 0
    %p87 = por %p85, %p86
    %s89 = sadd.s32 %s88, 1
    %p92 = scmp.eq.s32.totalorder %s12, 1
    %p93 = scmp.ne.s32.totalorder %s88, %s90
    %p94 = scmp.eq.s32.totalorder %s12, 0
    %p95 = por %p93, %p94
    %p96 = scmp.ne.s32.totalorder %s88, %s90
    %p97 = scmp.eq.s32.totalorder %s17, 1
    %p98 = por %p96, %p97
    %p99 = scmp.ne.s32.totalorder %s90, %s91
    %p100 = scmp.eq.s32.totalorder %s17, 0
    %p101 = por %p99, %p100
    %p102 = scmp.ne.s32.totalorder %s90, %s91
    %p103 = scmp.eq.s32.totalorder %s18, 1
    %p104 = por %p102, %p103
    %p106 = scmp.ne.s32.totalorder %s91, %s105
    %p107 = scmp.eq.s32.totalorder %s18, 0
    %p108 = por %p106, %p107
    %s110 = sadd.s32 %s109, 1
    %p113 = scmp.eq.s32.totalorder %s12, 1
    %p114 = scmp.ne.s32.totalorder %s109, %s111
    %p115 = scmp.eq.s32.totalorder %s12, 0
    %p116 = por %p114, %p115
    %p117 = scmp.ne.s32.totalorder %s109, %s111
    %p118 = scmp.eq.s32.totalorder %s17, 1
    %p119 = por %p117, %p118
    %p120 = scmp.ne.s32.totalorder %s111, %s112
    %p121 = scmp.eq.s32.totalorder %s17, 0
    %p122 = por %p120, %p121
    %p123 = scmp.ne.s32.totalorder %s111, %s112
    %p124 = scmp.eq.s32.totalorder %s18, 1
    %p125 = por %p123, %p124
    %p127 = scmp.ne.s32.totalorder %s112, %s126
    %p128 = scmp.eq.s32.totalorder %s18, 0
    %p129 = por %p127, %p128
    %s130 = ssub.s32 %s12, %s19
    %p131 = scmp.eq.s32.totalorder %s130, 0
    %s133 = sadd.s32 %s132, 1
    %s134 = scalar_select %p131, %s132, %s133
    %p137 = pneg %p131
    %p138 = scmp.eq.s32.totalorder %s12, 1
    %p139 = por %p137, %p138
    %p140 = scmp.ne.s32.totalorder %s132, %s135
    %p141 = scmp.eq.s32.totalorder %s12, 0
    %p142 = por %p140, %p141
    %p143 = scmp.ne.s32.totalorder %s132, %s135
    %p144 = scmp.eq.s32.totalorder %s17, 1
    %p145 = por %p143, %p144
    %p146 = scmp.ne.s32.totalorder %s135, %s136
    %p147 = scmp.eq.s32.totalorder %s17, 0
    %p148 = por %p146, %p147
    %p149 = scmp.ne.s32.totalorder %s135, %s136
    %p150 = scmp.eq.s32.totalorder %s18, 1
    %p151 = por %p149, %p150
    %p153 = scmp.ne.s32.totalorder %s136, %s152
    %p154 = scmp.eq.s32.totalorder %s18, 0
    %p155 = por %p153, %p154
    %p156 = scmp.le.s32.totalorder 1, %s12
    %p157 = scmp.lt.s32.totalorder %s12, 3
    %p158 = pnand %p156, %p157
    %p159 = pneg %p158
    // Predicated region
    $region9: #{aa_kernel_forward.5} parent=5 // pred_check
      _
    $region10: #{aa_kernel_forward.5} parent=5 // pred_check_branch
      %161 = sbr.rel (%p158) target = $region12
    $region11: #{aa_kernel_forward.5} parent=5 // pred_region
      %s162 = ssub.s32 %s12, 1
      // Predicated region
      $region13: #{aa_kernel_forward.5} parent=11 // pred_check
        %p163 = pneg %p59
      $region14: #{aa_kernel_forward.5} parent=11 // pred_check_branch
        %165 = sbr.rel (%p163) target = $region16
      $region15: #{aa_kernel_forward.5} parent=11 // pred_region
        _
      $region16: #{aa_kernel_forward.5} parent=11 // pred_fallthru
        _
      // Predicated region
      $region17: #{aa_kernel_forward.5} parent=11 // pred_check
        %p166 = pneg %p80
      $region18: #{aa_kernel_forward.5} parent=11 // pred_check_branch
        %168 = sbr.rel (%p166) target = $region20
      $region19: #{aa_kernel_forward.5} parent=11 // pred_region
        _
      $region20: #{aa_kernel_forward.5} parent=11 // pred_fallthru
        _
      // Predicated region
      $region21: #{aa_kernel_forward.5} parent=11 // pred_check
        %p169 = pneg %p101
      $region22: #{aa_kernel_forward.5} parent=11 // pred_check_branch
        %171 = sbr.rel (%p169) target = $region24
      $region23: #{aa_kernel_forward.5} parent=11 // pred_region
        _
      $region24: #{aa_kernel_forward.5} parent=11 // pred_fallthru
        _
      // Predicated region
      $region25: #{aa_kernel_forward.5} parent=11 // pred_check
        %p172 = pneg %p122
      $region26: #{aa_kernel_forward.5} parent=11 // pred_check_branch
        %174 = sbr.rel (%p172) target = $region28
      $region27: #{aa_kernel_forward.5} parent=11 // pred_region
        _
      $region28: #{aa_kernel_forward.5} parent=11 // pred_fallthru
        _
    $region12: #{aa_kernel_forward.5} parent=5 // pred_fallthru
      _
    %p175 = scmp.lt.s32.totalorder %s12, 2
    // Predicated region
    $region29: #{aa_kernel_forward.5} parent=5 // pred_check
      %p176 = pneg %p175
    $region30: #{aa_kernel_forward.5} parent=5 // pred_check_branch
      %178 = sbr.rel (%p176) target = $region32
    $region31: #{aa_kernel_forward.5} parent=5 // pred_region
      // Predicated region
      $region33: #{aa_kernel_forward.5} parent=31 // pred_check
        %p179 = pneg %p32
      $region34: #{aa_kernel_forward.5} parent=31 // pred_check_branch
        %181 = sbr.rel (%p179) target = $region36
      $region35: #{aa_kernel_forward.5} parent=31 // pred_region
        %p182 = scmp.lt.s32.totalorder %s12, 1
        %s183 = scalar_select %p182, %s12, 1
        %s184 = smul.addr %s183, 4
        %s185 = smul.addr %s184, 8
        %s186 = scalar_lea.vmem %s0, %s185
      $region36: #{aa_kernel_forward.5} parent=31 // pred_fallthru
        _
    $region32: #{aa_kernel_forward.5} parent=5 // pred_fallthru
      _
    %p187 = scmp.le.s32.totalorder 1, %s12
    %p188 = scmp.lt.s32.totalorder %s12, 3
    %p189 = pnand %p187, %p188
    %p190 = pneg %p189
    // Predicated region
    $region37: #{aa_kernel_forward.5} parent=5 // pred_check
      _
    $region38: #{aa_kernel_forward.5} parent=5 // pred_check_branch
      %192 = sbr.rel (%p189) target = $region40
    $region39: #{aa_kernel_forward.5} parent=5 // pred_region
      %s193 = ssub.s32 %s12, 1
      %p194 = scmp.lt.s32.totalorder %s17, 1
      %s195 = scalar_select %p194, %s17, 1
      %s196 = smul.addr %s195, 4
      %s197 = smul.addr %s196, 8
      %s198 = scalar_lea.vmem %s0, %s197
      %p199 = pneg %p38
      %p200 = pneg %p35
      %p201 = pneg %p59
      %p202 = pneg %p56
      %p203 = pneg %p80
      %p204 = pneg %p77
      %p205 = pneg %p101
      %p206 = pneg %p98
      %p207 = pneg %p122
      %p208 = pneg %p119
      %p209 = pneg %p148
      %p210 = pneg %p145
      %p211 = scmp.lt.s32.totalorder %s17, 1
      %s212 = scalar_select %p211, %s17, 1
      %s213 = smul.addr %s212, 4
      %s214 = smul.addr %s213, 8
      %s215 = scalar_lea.vmem %s5, %s214
      %p216 = scmp.lt.s32.totalorder %s17, 1
      %s217 = scalar_select %p216, %s17, 1
      %s218 = smul.addr %s217, 4
      %s219 = smul.addr %s218, 8
      %s220 = scalar_lea.vmem %s0, %s219
      %p221 = scmp.lt.s32.totalorder %s17, 1
      %s222 = scalar_select %p221, %s17, 1
      %s223 = smul.addr %s222, 4
      %s224 = smul.addr %s223, 8
      %s225 = scalar_lea.vmem %s5, %s224
      %v227 = vld [vmem:[%s220] sm:$0xff]
      %v228 = vld [vmem:[%s220 + $0x8] sm:$0xff]
      %v229 = vld [vmem:[%s220 + $0x10] sm:$0xff]
      %v230 = vld [vmem:[%s220 + $0x18] sm:$0xff]
      %v231 = vpack.c.bf16 %v228, %v227
      %v232 = vpack.c.bf16 %v230, %v229
      %v233 = vld [vmem:[%s1] sm:$0x3]
      %vm234 = vcmask 261120
      %v236 = vsel %vm234, %v233, 0
      %238 = vmatprep.subr.bf16.mxu0 0
      %239 = vmatpush1.bf16.msra.mxu0 %v231
      %240 = vmatprep.subr.bf16.mxu0 0
      %241 = vmatpush1.bf16.msra.mxu0 %v232
      %242 = vmatprep.subr.bf16.mxu0 0
      %243 = vmatpush1.bf16.msra.mxu0 0
      %244 = vmatprep.subr.bf16.mxu0 0
      %245 = vmatpush1.bf16.msra.mxu0 0
      %246 = vmatprep.subr.bf16.mxu0 0
      %247 = vmatpush1.bf16.msra.mxu0 0
      %248 = vmatprep.subr.bf16.mxu0 0
      %249 = vmatpush1.bf16.msra.mxu0 0
      %250 = vmatprep.subr.bf16.mxu0 0
      %251 = vmatpush1.bf16.msra.mxu0 0
      %252 = vmatprep.subr.bf16.mxu0 0
      %253 = vmatpush1.bf16.msra.mxu0 0
      %254 = vmatprep.subr.bf16.mxu0 0
      %255 = vmatpush1.bf16.msra.mxu0 0
      %256 = vmatprep.subr.bf16.mxu0 0
      %257 = vmatpush1.bf16.msra.mxu0 0
      %258 = vmatprep.subr.bf16.mxu0 0
      %259 = vmatpush1.bf16.msra.mxu0 0
      %260 = vmatprep.subr.bf16.mxu0 0
      %261 = vmatpush1.bf16.msra.mxu0 0
      %262 = vmatprep.subr.bf16.mxu0 0
      %263 = vmatpush1.bf16.msra.mxu0 0
      %264 = vmatprep.subr.bf16.mxu0 0
      %265 = vmatpush1.bf16.msra.mxu0 0
      %266 = vmatprep.subr.bf16.mxu0 0
      %267 = vmatpush1.bf16.msra.mxu0 0
      %268 = vmatprep.subr.bf16.mxu0 0
      %269 = vmatpush1.bf16.msra.mxu0 0
      %270 = vmatprep.mubr.bf16.mxu0 0
      %271 = vmatmul.mubr.bf16.gmra.mrb[0].mxu0 %v236
      %v272 = vpop.f32.mrb[0].mxu0
      %v273 = vadd.f32 0.0, %v272
      %v274 = vpop.f32.mrb[0].mxu0
      %v275 = vpop.f32.mrb[0].mxu0
      %v276 = vpop.f32.mrb[0].mxu0
      %277 = vdwg.mxu0
      %v278 = vld [vmem:[%s2] sm:$0x3]
      %v280 = vsel %vm234, %v278, 0
      %282 = vmatprep.subr.bf16.mxu0 0
      %283 = vmatpush1.bf16.msra.mxu0 %v231
      %284 = vmatprep.subr.bf16.mxu0 0
      %285 = vmatpush1.bf16.msra.mxu0 %v232
      %286 = vmatprep.subr.bf16.mxu0 0
      %287 = vmatpush1.bf16.msra.mxu0 0
      %288 = vmatprep.subr.bf16.mxu0 0
      %289 = vmatpush1.bf16.msra.mxu0 0
      %290 = vmatprep.subr.bf16.mxu0 0
      %291 = vmatpush1.bf16.msra.mxu0 0
      %292 = vmatprep.subr.bf16.mxu0 0
      %293 = vmatpush1.bf16.msra.mxu0 0
      %294 = vmatprep.subr.bf16.mxu0 0
      %295 = vmatpush1.bf16.msra.mxu0 0
      %296 = vmatprep.subr.bf16.mxu0 0
      %297 = vmatpush1.bf16.msra.mxu0 0
      %298 = vmatprep.subr.bf16.mxu0 0
      %299 = vmatpush1.bf16.msra.mxu0 0
      %300 = vmatprep.subr.bf16.mxu0 0
      %301 = vmatpush1.bf16.msra.mxu0 0
      %302 = vmatprep.subr.bf16.mxu0 0
      %303 = vmatpush1.bf16.msra.mxu0 0
      %304 = vmatprep.subr.bf16.mxu0 0
      %305 = vmatpush1.bf16.msra.mxu0 0
      %306 = vmatprep.subr.bf16.mxu0 0
      %307 = vmatpush1.bf16.msra.mxu0 0
      %308 = vmatprep.subr.bf16.mxu0 0
      %309 = vmatpush1.bf16.msra.mxu0 0
      %310 = vmatprep.subr.bf16.mxu0 0
      %311 = vmatpush1.bf16.msra.mxu0 0
      %312 = vmatprep.subr.bf16.mxu0 0
      %313 = vmatpush1.bf16.msra.mxu0 0
      %314 = vmatprep.mubr.bf16.mxu0 0
      %315 = vmatmul.mubr.bf16.gmra.mrb[0].mxu0 %v280
      %v316 = vpop.f32.mrb[0].mxu0
      %v317 = vadd.f32 0.0, %v316
      %v318 = vpop.f32.mrb[0].mxu0
      %v319 = vpop.f32.mrb[0].mxu0
      %v320 = vpop.f32.mrb[0].mxu0
      %321 = vdwg.mxu0
      %v322 = vld [vmem:[%s3] sm:$0xf]
      %v323 = vld [vmem:[%s3 + $0x4] sm:$0xf]
      %v324 = vld [vmem:[%s3 + $0x8] sm:$0xf]
      %v325 = vld [vmem:[%s3 + $0xc] sm:$0xf]
      %v330 = vunpack.c.l.b16 %v322
      %v331 = vunpack.c.l.b16 %v323
      %v332 = vunpack.c.l.b16 %v324
      %v333 = vunpack.c.l.b16 %v325
      %v334 = vpack.c.b16 %v331, %v330
      %v335 = vpack.c.b16 %v333, %v332
      %v337 = vsel %vm234, %v334, 0
      %v340 = vsel %vm234, %v335, 0
      %342 = vmatprep.subr.bf16.mxu0 0
      %343 = vmatpush1.bf16.msra.mxu0 %v231
      %344 = vmatprep.subr.bf16.mxu0 0
      %345 = vmatpush1.bf16.msra.mxu0 %v232
      %346 = vmatprep.subr.bf16.mxu0 0
      %347 = vmatpush1.bf16.msra.mxu0 0
      %348 = vmatprep.subr.bf16.mxu0 0
      %349 = vmatpush1.bf16.msra.mxu0 0
      %350 = vmatprep.subr.bf16.mxu0 0
      %351 = vmatpush1.bf16.msra.mxu0 0
      %352 = vmatprep.subr.bf16.mxu0 0
      %353 = vmatpush1.bf16.msra.mxu0 0
      %354 = vmatprep.subr.bf16.mxu0 0
      %355 = vmatpush1.bf16.msra.mxu0 0
      %356 = vmatprep.subr.bf16.mxu0 0
      %357 = vmatpush1.bf16.msra.mxu0 0
      %358 = vmatprep.subr.bf16.mxu0 0
      %359 = vmatpush1.bf16.msra.mxu0 0
      %360 = vmatprep.subr.bf16.mxu0 0
      %361 = vmatpush1.bf16.msra.mxu0 0
      %362 = vmatprep.subr.bf16.mxu0 0
      %363 = vmatpush1.bf16.msra.mxu0 0
      %364 = vmatprep.subr.bf16.mxu0 0
      %365 = vmatpush1.bf16.msra.mxu0 0
      %366 = vmatprep.subr.bf16.mxu0 0
      %367 = vmatpush1.bf16.msra.mxu0 0
      %368 = vmatprep.subr.bf16.mxu0 0
      %369 = vmatpush1.bf16.msra.mxu0 0
      %370 = vmatprep.subr.bf16.mxu0 0
      %371 = vmatpush1.bf16.msra.mxu0 0
      %372 = vmatprep.subr.bf16.mxu0 0
      %373 = vmatpush1.bf16.msra.mxu0 0
      %374 = vmatprep.mubr.bf16.mxu0 0
      %375 = vmatmul.mubr.bf16.gmra.mrb[0].mxu0 %v337
      %v376 = vpop.f32.mrb[0].mxu0
      %v377 = vadd.f32 0.0, %v376
      %v378 = vpop.f32.mrb[0].mxu0
      %v379 = vpop.f32.mrb[0].mxu0
      %v380 = vadd.f32 0.0, %v379
      %v381 = vpop.f32.mrb[0].mxu0
      %382 = vmatprep.mubr.bf16.mxu0 0
      %383 = vmatmul.mubr.bf16.gmra.mrb[0].mxu0 %v340
      %v384 = vpop.f32.mrb[0].mxu0
      %v385 = vadd.f32 0.0, %v384
      %v386 = vpop.f32.mrb[0].mxu0
      %v387 = vpop.f32.mrb[0].mxu0
      %v388 = vadd.f32 0.0, %v387
      %v389 = vpop.f32.mrb[0].mxu0
      %390 = vdwg.mxu0
      %392 = vrot.lane.b32.xlu0 %v273, 120
      %v393 = vpop.permute.xlu0 %392
      %395 = vxpose.xlu0.b32.start [1/16] %v393, 128
      %396 = vxpose.xlu0.b32.cont [2/16] 0.0, 128
      %397 = vxpose.xlu0.b32.cont [3/16] 0.0, 128
      %398 = vxpose.xlu0.b32.cont [4/16] 0.0, 128
      %399 = vxpose.xlu0.b32.cont [5/16] 0.0, 128
      %400 = vxpose.xlu0.b32.cont [6/16] 0.0, 128
      %401 = vxpose.xlu0.b32.cont [7/16] 0.0, 128
      %402 = vxpose.xlu0.b32.cont [8/16] 0.0, 128
      %403 = vxpose.xlu0.b32.cont [9/16] 0.0, 128
      %404 = vxpose.xlu0.b32.cont [10/16] 0.0, 128
      %405 = vxpose.xlu0.b32.cont [11/16] 0.0, 128
      %406 = vxpose.xlu0.b32.cont [12/16] 0.0, 128
      %407 = vxpose.xlu0.b32.cont [13/16] 0.0, 128
      %408 = vxpose.xlu0.b32.cont [14/16] 0.0, 128
      %409 = vxpose.xlu0.b32.cont [15/16] 0.0, 128
      %410 = vxpose.xlu0.b32.end [16/16] 0.0, 128
      %v411 = vpop.trf.xlu0
      %v412 = vpop.trf.xlu0
      %v413 = vpop.trf.xlu0
      %v414 = vpop.trf.xlu0
      %v415 = vpop.trf.xlu0
      %v416 = vpop.trf.xlu0
      %v417 = vpop.trf.xlu0
      %v418 = vpop.trf.xlu0
      %v419 = vpop.trf.xlu0
      %v420 = vpop.trf.xlu0
      %v421 = vpop.trf.xlu0
      %v422 = vpop.trf.xlu0
      %v423 = vpop.trf.xlu0
      %v424 = vpop.trf.xlu0
      %v425 = vpop.trf.xlu0
      %v426 = vpop.trf.xlu0
      %428 = vrot.lane.b32.xlu0 %v317, 120
      %v429 = vpop.permute.xlu0 %428
      %vm430 = vcmask 31744
      %v432 = vsel %vm430, %v411, 0
      %vm434 = vcmask 1043456
      %v435 = vsel %vm434, %v429, 0
      %437 = vmatprep.subr.mxu0 0.0
      %438 = vmatpush1.msra.mxu0 %v435
      %439 = vmatprep.subr.mxu0 0.0
      %440 = vmatpush1.msra.mxu0 0.0
      %441 = vmatprep.subr.mxu0 0.0
      %442 = vmatpush1.msra.mxu0 0.0
      %443 = vmatprep.subr.mxu0 0.0
      %444 = vmatpush1.msra.mxu0 0.0
      %445 = vmatprep.subr.mxu0 0.0
      %446 = vmatpush1.msra.mxu0 0.0
      %447 = vmatprep.subr.mxu0 0.0
      %448 = vmatpush1.msra.mxu0 0.0
      %449 = vmatprep.subr.mxu0 0.0
      %450 = vmatpush1.msra.mxu0 0.0
      %451 = vmatprep.subr.mxu0 0.0
      %452 = vmatpush1.msra.mxu0 0.0
      %453 = vmatprep.subr.mxu0 0.0
      %454 = vmatpush1.msra.mxu0 0.0
      %455 = vmatprep.subr.mxu0 0.0
      %456 = vmatpush1.msra.mxu0 0.0
      %457 = vmatprep.subr.mxu0 0.0
      %458 = vmatpush1.msra.mxu0 0.0
      %459 = vmatprep.subr.mxu0 0.0
      %460 = vmatpush1.msra.mxu0 0.0
      %461 = vmatprep.subr.mxu0 0.0
      %462 = vmatpush1.msra.mxu0 0.0
      %463 = vmatprep.subr.mxu0 0.0
      %464 = vmatpush1.msra.mxu0 0.0
      %465 = vmatprep.subr.mxu0 0.0
      %466 = vmatpush1.msra.mxu0 0.0
      %467 = vmatprep.subr.mxu0 0.0
      %468 = vmatpush1.msra.mxu0 0.0
      %469 = vmatprep.subr.mxu0 0.0
      %470 = vmatpush1.msra.mxu0 0.0
      %471 = vmatprep.subr.mxu0 0.0
      %472 = vmatpush1.msra.mxu0 0.0
      %473 = vmatprep.subr.mxu0 0.0
      %474 = vmatpush1.msra.mxu0 0.0
      %475 = vmatprep.subr.mxu0 0.0
      %476 = vmatpush1.msra.mxu0 0.0
      %477 = vmatprep.subr.mxu0 0.0
      %478 = vmatpush1.msra.mxu0 0.0
      %479 = vmatprep.subr.mxu0 0.0
      %480 = vmatpush1.msra.mxu0 0.0
      %481 = vmatprep.subr.mxu0 0.0
      %482 = vmatpush1.msra.mxu0 0.0
      %483 = vmatprep.subr.mxu0 0.0
      %484 = vmatpush1.msra.mxu0 0.0
      %485 = vmatprep.subr.mxu0 0.0
      %486 = vmatpush1.msra.mxu0 0.0
      %487 = vmatprep.subr.mxu0 0.0
      %488 = vmatpush1.msra.mxu0 0.0
      %489 = vmatprep.subr.mxu0 0.0
      %490 = vmatpush1.msra.mxu0 0.0
      %491 = vmatprep.subr.mxu0 0.0
      %492 = vmatpush1.msra.mxu0 0.0
      %493 = vmatprep.subr.mxu0 0.0
      %494 = vmatpush1.msra.mxu0 0.0
      %495 = vmatprep.subr.mxu0 0.0
      %496 = vmatpush1.msra.mxu0 0.0
      %497 = vmatprep.subr.mxu0 0.0
      %498 = vmatpush1.msra.mxu0 0.0
      %499 = vmatprep.subr.mxu0 0.0
      %500 = vmatpush1.msra.mxu0 0.0
      %501 = vmatprep.mubr.f32.mxu0 0.0
      %502 = vmatmul.mubr.f32.gmra.mrb[0].mxu0 %v432
      %v503 = vpop.f32.mrb[0].mxu0
      %v504 = vadd.f32 0.0, %v503
      %v505 = vpop.f32.mrb[0].mxu0
      %506 = vdwg.mxu0
      %507 = vxpose.xlu0.b32.start [1/16] %v273, 128
      %508 = vxpose.xlu0.b32.cont [2/16] 0.0, 128
      %509 = vxpose.xlu0.b32.cont [3/16] 0.0, 128
      %510 = vxpose.xlu0.b32.cont [4/16] 0.0, 128
      %511 = vxpose.xlu0.b32.cont [5/16] 0.0, 128
      %512 = vxpose.xlu0.b32.cont [6/16] 0.0, 128
      %513 = vxpose.xlu0.b32.cont [7/16] 0.0, 128
      %514 = vxpose.xlu0.b32.cont [8/16] 0.0, 128
      %515 = vxpose.xlu0.b32.cont [9/16] 0.0, 128
      %516 = vxpose.xlu0.b32.cont [10/16] 0.0, 128
      %517 = vxpose.xlu0.b32.cont [11/16] 0.0, 128
      %518 = vxpose.xlu0.b32.cont [12/16] 0.0, 128
      %519 = vxpose.xlu0.b32.cont [13/16] 0.0, 128
      %520 = vxpose.xlu0.b32.cont [14/16] 0.0, 128
      %521 = vxpose.xlu0.b32.cont [15/16] 0.0, 128
      %522 = vxpose.xlu0.b32.end [16/16] 0.0, 128
      %v523 = vpop.trf.xlu0
      %v524 = vpop.trf.xlu0
      %v525 = vpop.trf.xlu0
      %v526 = vpop.trf.xlu0
      %v527 = vpop.trf.xlu0
      %v528 = vpop.trf.xlu0
      %v529 = vpop.trf.xlu0
      %v530 = vpop.trf.xlu0
      %v531 = vpop.trf.xlu0
      %v532 = vpop.trf.xlu0
      %v533 = vpop.trf.xlu0
      %v534 = vpop.trf.xlu0
      %v535 = vpop.trf.xlu0
      %v536 = vpop.trf.xlu0
      %v537 = vpop.trf.xlu0
      %v538 = vpop.trf.xlu0
      %v540 = vsel %vm430, %v523, 0
      %v542 = vsel %vm434, %v317, 0
      %544 = vmatprep.subr.mxu0 0.0
      %545 = vmatpush1.msra.mxu0 %v542
      %546 = vmatprep.subr.mxu0 0.0
      %547 = vmatpush1.msra.mxu0 0.0
      %548 = vmatprep.subr.mxu0 0.0
      %549 = vmatpush1.msra.mxu0 0.0
      %550 = vmatprep.subr.mxu0 0.0
      %551 = vmatpush1.msra.mxu0 0.0
      %552 = vmatprep.subr.mxu0 0.0
      %553 = vmatpush1.msra.mxu0 0.0
      %554 = vmatprep.subr.mxu0 0.0
      %555 = vmatpush1.msra.mxu0 0.0
      %556 = vmatprep.subr.mxu0 0.0
      %557 = vmatpush1.msra.mxu0 0.0
      %558 = vmatprep.subr.mxu0 0.0
      %559 = vmatpush1.msra.mxu0 0.0
      %560 = vmatprep.subr.mxu0 0.0
      %561 = vmatpush1.msra.mxu0 0.0
      %562 = vmatprep.subr.mxu0 0.0
      %563 = vmatpush1.msra.mxu0 0.0
      %564 = vmatprep.subr.mxu0 0.0
      %565 = vmatpush1.msra.mxu0 0.0
      %566 = vmatprep.subr.mxu0 0.0
      %567 = vmatpush1.msra.mxu0 0.0
      %568 = vmatprep.subr.mxu0 0.0
      %569 = vmatpush1.msra.mxu0 0.0
      %570 = vmatprep.subr.mxu0 0.0
      %571 = vmatpush1.msra.mxu0 0.0
      %572 = vmatprep.subr.mxu0 0.0
      %573 = vmatpush1.msra.mxu0 0.0
      %574 = vmatprep.subr.mxu0 0.0
      %575 = vmatpush1.msra.mxu0 0.0
      %576 = vmatprep.subr.mxu0 0.0
      %577 = vmatpush1.msra.mxu0 0.0
      %578 = vmatprep.subr.mxu0 0.0
      %579 = vmatpush1.msra.mxu0 0.0
      %580 = vmatprep.subr.mxu0 0.0
      %581 = vmatpush1.msra.mxu0 0.0
      %582 = vmatprep.subr.mxu0 0.0
      %583 = vmatpush1.msra.mxu0 0.0
      %584 = vmatprep.subr.mxu0 0.0
      %585 = vmatpush1.msra.mxu0 0.0
      %586 = vmatprep.subr.mxu0 0.0
      %587 = vmatpush1.msra.mxu0 0.0
      %588 = vmatprep.subr.mxu0 0.0
      %589 = vmatpush1.msra.mxu0 0.0
      %590 = vmatprep.subr.mxu0 0.0
      %591 = vmatpush1.msra.mxu0 0.0
      %592 = vmatprep.subr.mxu0 0.0
      %593 = vmatpush1.msra.mxu0 0.0
      %594 = vmatprep.subr.mxu0 0.0
      %595 = vmatpush1.msra.mxu0 0.0
      %596 = vmatprep.subr.mxu0 0.0
      %597 = vmatpush1.msra.mxu0 0.0
      %598 = vmatprep.subr.mxu0 0.0
      %599 = vmatpush1.msra.mxu0 0.0
      %600 = vmatprep.subr.mxu0 0.0
      %601 = vmatpush1.msra.mxu0 0.0
      %602 = vmatprep.subr.mxu0 0.0
      %603 = vmatpush1.msra.mxu0 0.0
      %604 = vmatprep.subr.mxu0 0.0
      %605 = vmatpush1.msra.mxu0 0.0
      %606 = vmatprep.subr.mxu0 0.0
      %607 = vmatpush1.msra.mxu0 0.0
      %608 = vmatprep.mubr.f32.mxu0 0.0
      %609 = vmatmul.mubr.f32.gmra.mrb[0].mxu0 %v540
      %v610 = vpop.f32.mrb[0].mxu0
      %v611 = vadd.f32 %v504, %v610
      %v612 = vpop.f32.mrb[0].mxu0
      %613 = vdwg.mxu0
      %614 = vrot.lane.b32.xlu0 %v273, 112
      %v615 = vpop.permute.xlu0 %614
      %617 = vxpose.xlu0.b32.start [1/16] %v615, 128
      %618 = vxpose.xlu0.b32.cont [2/16] 0.0, 128
      %619 = vxpose.xlu0.b32.cont [3/16] 0.0, 128
      %620 = vxpose.xlu0.b32.cont [4/16] 0.0, 128
      %621 = vxpose.xlu0.b32.cont [5/16] 0.0, 128
      %622 = vxpose.xlu0.b32.cont [6/16] 0.0, 128
      %623 = vxpose.xlu0.b32.cont [7/16] 0.0, 128
      %624 = vxpose.xlu0.b32.cont [8/16] 0.0, 128
      %625 = vxpose.xlu0.b32.cont [9/16] 0.0, 128
      %626 = vxpose.xlu0.b32.cont [10/16] 0.0, 128
      %627 = vxpose.xlu0.b32.cont [11/16] 0.0, 128
      %628 = vxpose.xlu0.b32.cont [12/16] 0.0, 128
      %629 = vxpose.xlu0.b32.cont [13/16] 0.0, 128
      %630 = vxpose.xlu0.b32.cont [14/16] 0.0, 128
      %631 = vxpose.xlu0.b32.cont [15/16] 0.0, 128
      %632 = vxpose.xlu0.b32.end [16/16] 0.0, 128
      %v633 = vpop.trf.xlu0
      %v634 = vpop.trf.xlu0
      %v635 = vpop.trf.xlu0
      %v636 = vpop.trf.xlu0
      %v637 = vpop.trf.xlu0
      %v638 = vpop.trf.xlu0
      %v639 = vpop.trf.xlu0
      %v640 = vpop.trf.xlu0
      %v641 = vpop.trf.xlu0
      %v642 = vpop.trf.xlu0
      %v643 = vpop.trf.xlu0
      %v644 = vpop.trf.xlu0
      %v645 = vpop.trf.xlu0
      %v646 = vpop.trf.xlu0
      %v647 = vpop.trf.xlu0
      %v648 = vpop.trf.xlu0
      %649 = vrot.lane.b32.xlu0 %v317, 112
      %v650 = vpop.permute.xlu0 %649
      %v652 = vsel %vm430, %v633, 0
      %v654 = vsel %vm434, %v650, 0
      %656 = vmatprep.subr.mxu0 0.0
      %657 = vmatpush1.msra.mxu0 %v654
      %658 = vmatprep.subr.mxu0 0.0
      %659 = vmatpush1.msra.mxu0 0.0
      %660 = vmatprep.subr.mxu0 0.0
      %661 = vmatpush1.msra.mxu0 0.0
      %662 = vmatprep.subr.mxu0 0.0
      %663 = vmatpush1.msra.mxu0 0.0
      %664 = vmatprep.subr.mxu0 0.0
      %665 = vmatpush1.msra.mxu0 0.0
      %666 = vmatprep.subr.mxu0 0.0
      %667 = vmatpush1.msra.mxu0 0.0
      %668 = vmatprep.subr.mxu0 0.0
      %669 = vmatpush1.msra.mxu0 0.0
      %670 = vmatprep.subr.mxu0 0.0
      %671 = vmatpush1.msra.mxu0 0.0
      %672 = vmatprep.subr.mxu0 0.0
      %673 = vmatpush1.msra.mxu0 0.0
      %674 = vmatprep.subr.mxu0 0.0
      %675 = vmatpush1.msra.mxu0 0.0
      %676 = vmatprep.subr.mxu0 0.0
      %677 = vmatpush1.msra.mxu0 0.0
      %678 = vmatprep.subr.mxu0 0.0
      %679 = vmatpush1.msra.mxu0 0.0
      %680 = vmatprep.subr.mxu0 0.0
      %681 = vmatpush1.msra.mxu0 0.0
      %682 = vmatprep.subr.mxu0 0.0
      %683 = vmatpush1.msra.mxu0 0.0
      %684 = vmatprep.subr.mxu0 0.0
      %685 = vmatpush1.msra.mxu0 0.0
      %686 = vmatprep.subr.mxu0 0.0
      %687 = vmatpush1.msra.mxu0 0.0
      %688 = vmatprep.subr.mxu0 0.0
      %689 = vmatpush1.msra.mxu0 0.0
      %690 = vmatprep.subr.mxu0 0.0
      %691 = vmatpush1.msra.mxu0 0.0
      %692 = vmatprep.subr.mxu0 0.0
      %693 = vmatpush1.msra.mxu0 0.0
      %694 = vmatprep.subr.mxu0 0.0
      %695 = vmatpush1.msra.mxu0 0.0
      %696 = vmatprep.subr.mxu0 0.0
      %697 = vmatpush1.msra.mxu0 0.0
      %698 = vmatprep.subr.mxu0 0.0
      %699 = vmatpush1.msra.mxu0 0.0
      %700 = vmatprep.subr.mxu0 0.0
      %701 = vmatpush1.msra.mxu0 0.0
      %702 = vmatprep.subr.mxu0 0.0
      %703 = vmatpush1.msra.mxu0 0.0
      %704 = vmatprep.subr.mxu0 0.0
      %705 = vmatpush1.msra.mxu0 0.0
      %706 = vmatprep.subr.mxu0 0.0
      %707 = vmatpush1.msra.mxu0 0.0
      %708 = vmatprep.subr.mxu0 0.0
      %709 = vmatpush1.msra.mxu0 0.0
      %710 = vmatprep.subr.mxu0 0.0
      %711 = vmatpush1.msra.mxu0 0.0
      %712 = vmatprep.subr.mxu0 0.0
      %713 = vmatpush1.msra.mxu0 0.0
      %714 = vmatprep.subr.mxu0 0.0
      %715 = vmatpush1.msra.mxu0 0.0
      %716 = vmatprep.subr.mxu0 0.0
      %717 = vmatpush1.msra.mxu0 0.0
      %718 = vmatprep.subr.mxu0 0.0
      %719 = vmatpush1.msra.mxu0 0.0
      %720 = vmatprep.mubr.f32.mxu0 0.0
      %721 = vmatmul.mubr.f32.gmra.mrb[0].mxu0 %v652
      %v722 = vpop.f32.mrb[0].mxu0
      %v723 = vadd.f32 0.0, %v722
      %v724 = vpop.f32.mrb[0].mxu0
      %725 = vdwg.mxu0
      %v726 = vadd.f32 %v611, %v723
      %727 = vrot.lane.b32.xlu0 %v273, 104
      %v728 = vpop.permute.xlu0 %727
      %730 = vxpose.xlu0.b32.start [1/16] %v728, 128
      %731 = vxpose.xlu0.b32.cont [2/16] 0.0, 128
      %732 = vxpose.xlu0.b32.cont [3/16] 0.0, 128
      %733 = vxpose.xlu0.b32.cont [4/16] 0.0, 128
      %734 = vxpose.xlu0.b32.cont [5/16] 0.0, 128
      %735 = vxpose.xlu0.b32.cont [6/16] 0.0, 128
      %736 = vxpose.xlu0.b32.cont [7/16] 0.0, 128
      %737 = vxpose.xlu0.b32.cont [8/16] 0.0, 128
      %738 = vxpose.xlu0.b32.cont [9/16] 0.0, 128
      %739 = vxpose.xlu0.b32.cont [10/16] 0.0, 128
      %740 = vxpose.xlu0.b32.cont [11/16] 0.0, 128
      %741 = vxpose.xlu0.b32.cont [12/16] 0.0, 128
      %742 = vxpose.xlu0.b32.cont [13/16] 0.0, 128
      %743 = vxpose.xlu0.b32.cont [14/16] 0.0, 128
      %744 = vxpose.xlu0.b32.cont [15/16] 0.0, 128
      %745 = vxpose.xlu0.b32.end [16/16] 0.0, 128
      %v746 = vpop.trf.xlu0
      %v747 = vpop.trf.xlu0
      %v748 = vpop.trf.xlu0
      %v749 = vpop.trf.xlu0
      %v750 = vpop.trf.xlu0
      %v751 = vpop.trf.xlu0
      %v752 = vpop.trf.xlu0
      %v753 = vpop.trf.xlu0
      %v754 = vpop.trf.xlu0
      %v755 = vpop.trf.xlu0
      %v756 = vpop.trf.xlu0
      %v757 = vpop.trf.xlu0
      %v758 = vpop.trf.xlu0
      %v759 = vpop.trf.xlu0
      %v760 = vpop.trf.xlu0
      %v761 = vpop.trf.xlu0
      %762 = vrot.lane.b32.xlu0 %v317, 104
      %v763 = vpop.permute.xlu0 %762
      %v765 = vsel %vm430, %v746, 0
      %v767 = vsel %vm434, %v763, 0
      %769 = vmatprep.subr.mxu0 0.0
      %770 = vmatpush1.msra.mxu0 %v767
      %771 = vmatprep.subr.mxu0 0.0
      %772 = vmatpush1.msra.mxu0 0.0
      %773 = vmatprep.subr.mxu0 0.0
      %774 = vmatpush1.msra.mxu0 0.0
      %775 = vmatprep.subr.mxu0 0.0
      %776 = vmatpush1.msra.mxu0 0.0
      %777 = vmatprep.subr.mxu0 0.0
      %778 = vmatpush1.msra.mxu0 0.0
      %779 = vmatprep.subr.mxu0 0.0
      %780 = vmatpush1.msra.mxu0 0.0
      %781 = vmatprep.subr.mxu0 0.0
      %782 = vmatpush1.msra.mxu0 0.0
      %783 = vmatprep.subr.mxu0 0.0
      %784 = vmatpush1.msra.mxu0 0.0
      %785 = vmatprep.subr.mxu0 0.0
      %786 = vmatpush1.msra.mxu0 0.0
      %787 = vmatprep.subr.mxu0 0.0
      %788 = vmatpush1.msra.mxu0 0.0
      %789 = vmatprep.subr.mxu0 0.0
      %790 = vmatpush1.msra.mxu0 0.0
      %791 = vmatprep.subr.mxu0 0.0
      %792 = vmatpush1.msra.mxu0 0.0
      %793 = vmatprep.subr.mxu0 0.0
      %794 = vmatpush1.msra.mxu0 0.0
      %795 = vmatprep.subr.mxu0 0.0
      %796 = vmatpush1.msra.mxu0 0.0
      %797 = vmatprep.subr.mxu0 0.0
      %798 = vmatpush1.msra.mxu0 0.0
      %799 = vmatprep.subr.mxu0 0.0
      %800 = vmatpush1.msra.mxu0 0.0
      %801 = vmatprep.subr.mxu0 0.0
      %802 = vmatpush1.msra.mxu0 0.0
      %803 = vmatprep.subr.mxu0 0.0
      %804 = vmatpush1.msra.mxu0 0.0
      %805 = vmatprep.subr.mxu0 0.0
      %806 = vmatpush1.msra.mxu0 0.0
      %807 = vmatprep.subr.mxu0 0.0
      %808 = vmatpush1.msra.mxu0 0.0
      %809 = vmatprep.subr.mxu0 0.0
      %810 = vmatpush1.msra.mxu0 0.0
      %811 = vmatprep.subr.mxu0 0.0
      %812 = vmatpush1.msra.mxu0 0.0
      %813 = vmatprep.subr.mxu0 0.0
      %814 = vmatpush1.msra.mxu0 0.0
      %815 = vmatprep.subr.mxu0 0.0
      %816 = vmatpush1.msra.mxu0 0.0
      %817 = vmatprep.subr.mxu0 0.0
      %818 = vmatpush1.msra.mxu0 0.0
      %819 = vmatprep.subr.mxu0 0.0
      %820 = vmatpush1.msra.mxu0 0.0
      %821 = vmatprep.subr.mxu0 0.0
      %822 = vmatpush1.msra.mxu0 0.0
      %823 = vmatprep.subr.mxu0 0.0
      %824 = vmatpush1.msra.mxu0 0.0
      %825 = vmatprep.subr.mxu0 0.0
      %826 = vmatpush1.msra.mxu0 0.0
      %827 = vmatprep.subr.mxu0 0.0
      %828 = vmatpush1.msra.mxu0 0.0
      %829 = vmatprep.subr.mxu0 0.0
      %830 = vmatpush1.msra.mxu0 0.0
      %831 = vmatprep.subr.mxu0 0.0
      %832 = vmatpush1.msra.mxu0 0.0
      %833 = vmatprep.mubr.f32.mxu0 0.0
      %834 = vmatmul.mubr.f32.gmra.mrb[0].mxu0 %v765
      %v835 = vpop.f32.mrb[0].mxu0
      %v836 = vadd.f32 0.0, %v835
      %v837 = vpop.f32.mrb[0].mxu0
      %838 = vdwg.mxu0
      %v839 = vadd.f32 %v726, %v836
      %840 = vrot.lane.b32.xlu0 %v273, 96
      %v841 = vpop.permute.xlu0 %840
      %843 = vxpose.xlu0.b32.start [1/16] %v841, 128
      %844 = vxpose.xlu0.b32.cont [2/16] 0.0, 128
      %845 = vxpose.xlu0.b32.cont [3/16] 0.0, 128
      %846 = vxpose.xlu0.b32.cont [4/16] 0.0, 128
      %847 = vxpose.xlu0.b32.cont [5/16] 0.0, 128
      %848 = vxpose.xlu0.b32.cont [6/16] 0.0, 128
      %849 = vxpose.xlu0.b32.cont [7/16] 0.0, 128
      %850 = vxpose.xlu0.b32.cont [8/16] 0.0, 128
      %851 = vxpose.xlu0.b32.cont [9/16] 0.0, 128
      %852 = vxpose.xlu0.b32.cont [10/16] 0.0, 128
      %853 = vxpose.xlu0.b32.cont [11/16] 0.0, 128
      %854 = vxpose.xlu0.b32.cont [12/16] 0.0, 128
      %855 = vxpose.xlu0.b32.cont [13/16] 0.0, 128
      %856 = vxpose.xlu0.b32.cont [14/16] 0.0, 128
      %857 = vxpose.xlu0.b32.cont [15/16] 0.0, 128
      %858 = vxpose.xlu0.b32.end [16/16] 0.0, 128
      %v859 = vpop.trf.xlu0
      %v860 = vpop.trf.xlu0
      %v861 = vpop.trf.xlu0
      %v862 = vpop.trf.xlu0
      %v863 = vpop.trf.xlu0
      %v864 = vpop.trf.xlu0
      %v865 = vpop.trf.xlu0
      %v866 = vpop.trf.xlu0
      %v867 = vpop.trf.xlu0
      %v868 = vpop.trf.xlu0
      %v869 = vpop.trf.xlu0
      %v870 = vpop.trf.xlu0
      %v871 = vpop.trf.xlu0
      %v872 = vpop.trf.xlu0
      %v873 = vpop.trf.xlu0
      %v874 = vpop.trf.xlu0
      %875 = vrot.lane.b32.xlu0 %v317, 96
      %v876 = vpop.permute.xlu0 %875
      %v878 = vsel %vm430, %v859, 0
      %v880 = vsel %vm434, %v876, 0
      %882 = vmatprep.subr.mxu0 0.0
      %883 = vmatpush1.msra.mxu0 %v880
      %884 = vmatprep.subr.mxu0 0.0
      %885 = vmatpush1.msra.mxu0 0.0
      %886 = vmatprep.subr.mxu0 0.0
      %887 = vmatpush1.msra.mxu0 0.0
      %888 = vmatprep.subr.mxu0 0.0
      %889 = vmatpush1.msra.mxu0 0.0
      %890 = vmatprep.subr.mxu0 0.0
      %891 = vmatpush1.msra.mxu0 0.0
      %892 = vmatprep.subr.mxu0 0.0
      %893 = vmatpush1.msra.mxu0 0.0
      %894 = vmatprep.subr.mxu0 0.0
      %895 = vmatpush1.msra.mxu0 0.0
      %896 = vmatprep.subr.mxu0 0.0
      %897 = vmatpush1.msra.mxu0 0.0
      %898 = vmatprep.subr.mxu0 0.0
      %899 = vmatpush1.msra.mxu0 0.0
      %900 = vmatprep.subr.mxu0 0.0
      %901 = vmatpush1.msra.mxu0 0.0
      %902 = vmatprep.subr.mxu0 0.0
      %903 = vmatpush1.msra.mxu0 0.0
      %904 = vmatprep.subr.mxu0 0.0
      %905 = vmatpush1.msra.mxu0 0.0
      %906 = vmatprep.subr.mxu0 0.0
      %907 = vmatpush1.msra.mxu0 0.0
      %908 = vmatprep.subr.mxu0 0.0
      %909 = vmatpush1.msra.mxu0 0.0
      %910 = vmatprep.subr.mxu0 0.0
      %911 = vmatpush1.msra.mxu0 0.0
      %912 = vmatprep.subr.mxu0 0.0
      %913 = vmatpush1.msra.mxu0 0.0
      %914 = vmatprep.subr.mxu0 0.0
      %915 = vmatpush1.msra.mxu0 0.0
      %916 = vmatprep.subr.mxu0 0.0
      %917 = vmatpush1.msra.mxu0 0.0
      %918 = vmatprep.subr.mxu0 0.0
      %919 = vmatpush1.msra.mxu0 0.0
      %920 = vmatprep.subr.mxu0 0.0
      %921 = vmatpush1.msra.mxu0 0.0
      %922 = vmatprep.subr.mxu0 0.0
      %923 = vmatpush1.msra.mxu0 0.0
      %924 = vmatprep.subr.mxu0 0.0
      %925 = vmatpush1.msra.mxu0 0.0
      %926 = vmatprep.subr.mxu0 0.0
      %927 = vmatpush1.msra.mxu0 0.0
      %928 = vmatprep.subr.mxu0 0.0
      %929 = vmatpush1.msra.mxu0 0.0
      %930 = vmatprep.subr.mxu0 0.0
      %931 = vmatpush1.msra.mxu0 0.0
      %932 = vmatprep.subr.mxu0 0.0
      %933 = vmatpush1.msra.mxu0 0.0
      %934 = vmatprep.subr.mxu0 0.0
      %935 = vmatpush1.msra.mxu0 0.0
      %936 = vmatprep.subr.mxu0 0.0
      %937 = vmatpush1.msra.mxu0 0.0
      %938 = vmatprep.subr.mxu0 0.0
      %939 = vmatpush1.msra.mxu0 0.0
      %940 = vmatprep.subr.mxu0 0.0
      %941 = vmatpush1.msra.mxu0 0.0
      %942 = vmatprep.subr.mxu0 0.0
      %943 = vmatpush1.msra.mxu0 0.0
      %944 = vmatprep.subr.mxu0 0.0
      %945 = vmatpush1.msra.mxu0 0.0
      %946 = vmatprep.mubr.f32.mxu0 0.0
      %947 = vmatmul.mubr.f32.gmra.mrb[0].mxu0 %v878
      %v948 = vpop.f32.mrb[0].mxu0
      %v949 = vadd.f32 0.0, %v948
      %v950 = vpop.f32.mrb[0].mxu0
      %951 = vdwg.mxu0
      %v952 = vadd.f32 %v839, %v949
      %953 = vrot.lane.b32.xlu0 %v273, 88
      %v954 = vpop.permute.xlu0 %953
      %956 = vxpose.xlu0.b32.start [1/16] %v954, 128
      %957 = vxpose.xlu0.b32.cont [2/16] 0.0, 128
      %958 = vxpose.xlu0.b32.cont [3/16] 0.0, 128
      %959 = vxpose.xlu0.b32.cont [4/16] 0.0, 128
      %960 = vxpose.xlu0.b32.cont [5/16] 0.0, 128
      %961 = vxpose.xlu0.b32.cont [6/16] 0.0, 128
      %962 = vxpose.xlu0.b32.cont [7/16] 0.0, 128
      %963 = vxpose.xlu0.b32.cont [8/16] 0.0, 128
      %964 = vxpose.xlu0.b32.cont [9/16] 0.0, 128
      %965 = vxpose.xlu0.b32.cont [10/16] 0.0, 128
      %966 = vxpose.xlu0.b32.cont [11/16] 0.0, 128
      %967 = vxpose.xlu0.b32.cont [12/16] 0.0, 128
      %968 = vxpose.xlu0.b32.cont [13/16] 0.0, 128
      %969 = vxpose.xlu0.b32.cont [14/16] 0.0, 128
      %970 = vxpose.xlu0.b32.cont [15/16] 0.0, 128
      %971 = vxpose.xlu0.b32.end [16/16] 0.0, 128
      %v972 = vpop.trf.xlu0
      %v973 = vpop.trf.xlu0
      %v974 = vpop.trf.xlu0
      %v975 = vpop.trf.xlu0
      %v976 = vpop.trf.xlu0
      %v977 = vpop.trf.xlu0
      %v978 = vpop.trf.xlu0
      %v979 = vpop.trf.xlu0
      %v980 = vpop.trf.xlu0
      %v981 = vpop.trf.xlu0
      %v982 = vpop.trf.xlu0
      %v983 = vpop.trf.xlu0
      %v984 = vpop.trf.xlu0
      %v985 = vpop.trf.xlu0
      %v986 = vpop.trf.xlu0
      %v987 = vpop.trf.xlu0
      %988 = vrot.lane.b32.xlu0 %v317, 88
      %v989 = vpop.permute.xlu0 %988
      %v991 = vsel %vm430, %v972, 0
      %v993 = vsel %vm434, %v989, 0
      %995 = vmatprep.subr.mxu0 0.0
      %996 = vmatpush1.msra.mxu0 %v993
      %997 = vmatprep.subr.mxu0 0.0
      %998 = vmatpush1.msra.mxu0 0.0
      %999 = vmatprep.subr.mxu0 0.0
      %1000 = vmatpush1.msra.mxu0 0.0
      %1001 = vmatprep.subr.mxu0 0.0
      %1002 = vmatpush1.msra.mxu0 0.0
      %1003 = vmatprep.subr.mxu0 0.0
      %1004 = vmatpush1.msra.mxu0 0.0
      %1005 = vmatprep.subr.mxu0 0.0
      %1006 = vmatpush1.msra.mxu0 0.0
      %1007 = vmatprep.subr.mxu0 0.0
      %1008 = vmatpush1.msra.mxu0 0.0
      %1009 = vmatprep.subr.mxu0 0.0
      %1010 = vmatpush1.msra.mxu0 0.0
      %1011 = vmatprep.subr.mxu0 0.0
      %1012 = vmatpush1.msra.mxu0 0.0
      %1013 = vmatprep.subr.mxu0 0.0
      %1014 = vmatpush1.msra.mxu0 0.0
      %1015 = vmatprep.subr.mxu0 0.0
      %1016 = vmatpush1.msra.mxu0 0.0
      %1017 = vmatprep.subr.mxu0 0.0
      %1018 = vmatpush1.msra.mxu0 0.0
      %1019 = vmatprep.subr.mxu0 0.0
      %1020 = vmatpush1.msra.mxu0 0.0
      %1021 = vmatprep.subr.mxu0 0.0
      %1022 = vmatpush1.msra.mxu0 0.0
      %1023 = vmatprep.subr.mxu0 0.0
      %1024 = vmatpush1.msra.mxu0 0.0
      %1025 = vmatprep.subr.mxu0 0.0
      %1026 = vmatpush1.msra.mxu0 0.0
      %1027 = vmatprep.subr.mxu0 0.0
      %1028 = vmatpush1.msra.mxu0 0.0
      %1029 = vmatprep.subr.mxu0 0.0
      %1030 = vmatpush1.msra.mxu0 0.0
      %1031 = vmatprep.subr.mxu0 0.0
      %1032 = vmatpush1.msra.mxu0 0.0
      %1033 = vmatprep.subr.mxu0 0.0
      %1034 = vmatpush1.msra.mxu0 0.0
      %1035 = vmatprep.subr.mxu0 0.0
      %1036 = vmatpush1.msra.mxu0 0.0
      %1037 = vmatprep.subr.mxu0 0.0
      %1038 = vmatpush1.msra.mxu0 0.0
      %1039 = vmatprep.subr.mxu0 0.0
      %1040 = vmatpush1.msra.mxu0 0.0
      %1041 = vmatprep.subr.mxu0 0.0
      %1042 = vmatpush1.msra.mxu0 0.0
      %1043 = vmatprep.subr.mxu0 0.0
      %1044 = vmatpush1.msra.mxu0 0.0
      %1045 = vmatprep.subr.mxu0 0.0
      %1046 = vmatpush1.msra.mxu0 0.0
      %1047 = vmatprep.subr.mxu0 0.0
      %1048 = vmatpush1.msra.mxu0 0.0
      %1049 = vmatprep.subr.mxu0 0.0
      %1050 = vmatpush1.msra.mxu0 0.0
      %1051 = vmatprep.subr.mxu0 0.0
      %1052 = vmatpush1.msra.mxu0 0.0
      %1053 = vmatprep.subr.mxu0 0.0
      %1054 = vmatpush1.msra.mxu0 0.0
      %1055 = vmatprep.subr.mxu0 0.0
      %1056 = vmatpush1.msra.mxu0 0.0
      %1057 = vmatprep.subr.mxu0 0.0
      %1058 = vmatpush1.msra.mxu0 0.0
      %1059 = vmatprep.mubr.f32.mxu0 0.0
      %1060 = vmatmul.mubr.f32.gmra.mrb[0].mxu0 %v991
      %v1061 = vpop.f32.mrb[0].mxu0
      %v1062 = vadd.f32 0.0, %v1061
      %v1063 = vpop.f32.mrb[0].mxu0
      %1064 = vdwg.mxu0
      %v1065 = vadd.f32 %v952, %v1062
      %1066 = vrot.lane.b32.xlu0 %v273, 80
      %v1067 = vpop.permute.xlu0 %1066
      %1069 = vxpose.xlu0.b32.start [1/16] %v1067, 128
      %1070 = vxpose.xlu0.b32.cont [2/16] 0.0, 128
      %1071 = vxpose.xlu0.b32.cont [3/16] 0.0, 128
      %1072 = vxpose.xlu0.b32.cont [4/16] 0.0, 128
      %1073 = vxpose.xlu0.b32.cont [5/16] 0.0, 128
      %1074 = vxpose.xlu0.b32.cont [6/16] 0.0, 128
      %1075 = vxpose.xlu0.b32.cont [7/16] 0.0, 128
      %1076 = vxpose.xlu0.b32.cont [8/16] 0.0, 128
      %1077 = vxpose.xlu0.b32.cont [9/16] 0.0, 128
      %1078 = vxpose.xlu0.b32.cont [10/16] 0.0, 128
      %1079 = vxpose.xlu0.b32.cont [11/16] 0.0, 128
      %1080 = vxpose.xlu0.b32.cont [12/16] 0.0, 128
      %1081 = vxpose.xlu0.b32.cont [13/16] 0.0, 128
      %1082 = vxpose.xlu0.b32.cont [14/16] 0.0, 128
      %1083 = vxpose.xlu0.b32.cont [15/16] 0.0, 128
      %1084 = vxpose.xlu0.b32.end [16/16] 0.0, 128
      %v1085 = vpop.trf.xlu0
      %v1086 = vpop.trf.xlu0
      %v1087 = vpop.trf.xlu0
      %v1088 = vpop.trf.xlu0
      %v1089 = vpop.trf.xlu0
      %v1090 = vpop.trf.xlu0
      %v1091 = vpop.trf.xlu0
      %v1092 = vpop.trf.xlu0
      %v1093 = vpop.trf.xlu0
      %v1094 = vpop.trf.xlu0
      %v1095 = vpop.trf.xlu0
      %v1096 = vpop.trf.xlu0
      %v1097 = vpop.trf.xlu0
      %v1098 = vpop.trf.xlu0
      %v1099 = vpop.trf.xlu0
      %v1100 = vpop.trf.xlu0
      %1101 = vrot.lane.b32.xlu0 %v317, 80
      %v1102 = vpop.permute.xlu0 %1101
      %v1104 = vsel %vm430, %v1085, 0
      %v1106 = vsel %vm434, %v1102, 0
      %1108 = vmatprep.subr.mxu0 0.0
      %1109 = vmatpush1.msra.mxu0 %v1106
      %1110 = vmatprep.subr.mxu0 0.0
      %1111 = vmatpush1.msra.mxu0 0.0
      %1112 = vmatprep.subr.mxu0 0.0
      %1113 = vmatpush1.msra.mxu0 0.0
      %1114 = vmatprep.subr.mxu0 0.0
      %1115 = vmatpush1.msra.mxu0 0.0
      %1116 = vmatprep.subr.mxu0 0.0
      %1117 = vmatpush1.msra.mxu0 0.0
      %1118 = vmatprep.subr.mxu0 0.0
      %1119 = vmatpush1.msra.mxu0 0.0
      %1120 = vmatprep.subr.mxu0 0.0
      %1121 = vmatpush1.msra.mxu0 0.0
      %1122 = vmatprep.subr.mxu0 0.0
      %1123 = vmatpush1.msra.mxu0 0.0
      %1124 = vmatprep.subr.mxu0 0.0
      %1125 = vmatpush1.msra.mxu0 0.0
      %1126 = vmatprep.subr.mxu0 0.0
      %1127 = vmatpush1.msra.mxu0 0.0
      %1128 = vmatprep.subr.mxu0 0.0
      %1129 = vmatpush1.msra.mxu0 0.0
      %1130 = vmatprep.subr.mxu0 0.0
      %1131 = vmatpush1.msra.mxu0 0.0
      %1132 = vmatprep.subr.mxu0 0.0
      %1133 = vmatpush1.msra.mxu0 0.0
      %1134 = vmatprep.subr.mxu0 0.0
      %1135 = vmatpush1.msra.mxu0 0.0
      %1136 = vmatprep.subr.mxu0 0.0
      %1137 = vmatpush1.msra.mxu0 0.0
      %1138 = vmatprep.subr.mxu0 0.0
      %1139 = vmatpush1.msra.mxu0 0.0
      %1140 = vmatprep.subr.mxu0 0.0
      %1141 = vmatpush1.msra.mxu0 0.0
      %1142 = vmatprep.subr.mxu0 0.0
      %1143 = vmatpush1.msra.mxu0 0.0
      %1144 = vmatprep.subr.mxu0 0.0
      %1145 = vmatpush1.msra.mxu0 0.0
      %1146 = vmatprep.subr.mxu0 0.0
      %1147 = vmatpush1.msra.mxu0 0.0
      %1148 = vmatprep.subr.mxu0 0.0
      %1149 = vmatpush1.msra.mxu0 0.0
      %1150 = vmatprep.subr.mxu0 0.0
      %1151 = vmatpush1.msra.mxu0 0.0
      %1152 = vmatprep.subr.mxu0 0.0
      %1153 = vmatpush1.msra.mxu0 0.0
      %1154 = vmatprep.subr.mxu0 0.0
      %1155 = vmatpush1.msra.mxu0 0.0
      %1156 = vmatprep.subr.mxu0 0.0
      %1157 = vmatpush1.msra.mxu0 0.0
      %1158 = vmatprep.subr.mxu0 0.0
      %1159 = vmatpush1.msra.mxu0 0.0
      %1160 = vmatprep.subr.mxu0 0.0
      %1161 = vmatpush1.msra.mxu0 0.0
      %1162 = vmatprep.subr.mxu0 0.0
      %1163 = vmatpush1.msra.mxu0 0.0
      %1164 = vmatprep.subr.mxu0 0.0
      %1165 = vmatpush1.msra.mxu0 0.0
      %1166 = vmatprep.subr.mxu0 0.0
      %1167 = vmatpush1.msra.mxu0 0.0
      %1168 = vmatprep.subr.mxu0 0.0
      %1169 = vmatpush1.msra.mxu0 0.0
      %1170 = vmatprep.subr.mxu0 0.0
      %1171 = vmatpush1.msra.mxu0 0.0
      %1172 = vmatprep.mubr.f32.mxu0 0.0
      %1173 = vmatmul.mubr.f32.gmra.mrb[0].mxu0 %v1104
      %v1174 = vpop.f32.mrb[0].mxu0
      %v1175 = vadd.f32 0.0, %v1174
      %v1176 = vpop.f32.mrb[0].mxu0
      %1177 = vdwg.mxu0
      %v1178 = vadd.f32 %v1065, %v1175
      %1179 = vrot.lane.b32.xlu0 %v273, 72
      %v1180 = vpop.permute.xlu0 %1179
      %1182 = vxpose.xlu0.b32.start [1/16] %v1180, 128
      %1183 = vxpose.xlu0.b32.cont [2/16] 0.0, 128
      %1184 = vxpose.xlu0.b32.cont [3/16] 0.0, 128
      %1185 = vxpose.xlu0.b32.cont [4/16] 0.0, 128
      %1186 = vxpose.xlu0.b32.cont [5/16] 0.0, 128
      %1187 = vxpose.xlu0.b32.cont [6/16] 0.0, 128
      %1188 = vxpose.xlu0.b32.cont [7/16] 0.0, 128
      %1189 = vxpose.xlu0.b32.cont [8/16] 0.0, 128
      %1190 = vxpose.xlu0.b32.cont [9/16] 0.0, 128
      %1191 = vxpose.xlu0.b32.cont [10/16] 0.0, 128
      %1192 = vxpose.xlu0.b32.cont [11/16] 0.0, 128
      %1193 = vxpose.xlu0.b32.cont [12/16] 0.0, 128
      %1194 = vxpose.xlu0.b32.cont [13/16] 0.0, 128
      %1195 = vxpose.xlu0.b32.cont [14/16] 0.0, 128
      %1196 = vxpose.xlu0.b32.cont [15/16] 0.0, 128
      %1197 = vxpose.xlu0.b32.end [16/16] 0.0, 128
      %v1198 = vpop.trf.xlu0
      %v1199 = vpop.trf.xlu0
      %v1200 = vpop.trf.xlu0
      %v1201 = vpop.trf.xlu0
      %v1202 = vpop.trf.xlu0
      %v1203 = vpop.trf.xlu0
      %v1204 = vpop.trf.xlu0
      %v1205 = vpop.trf.xlu0
      %v1206 = vpop.trf.xlu0
      %v1207 = vpop.trf.xlu0
      %v1208 = vpop.trf.xlu0
      %v1209 = vpop.trf.xlu0
      %v1210 = vpop.trf.xlu0
      %v1211 = vpop.trf.xlu0
      %v1212 = vpop.trf.xlu0
      %v1213 = vpop.trf.xlu0
      %1214 = vrot.lane.b32.xlu0 %v317, 72
      %v1215 = vpop.permute.xlu0 %1214
      %v1217 = vsel %vm430, %v1198, 0
      %v1219 = vsel %vm434, %v1215, 0
      %1221 = vmatprep.subr.mxu0 0.0
      %1222 = vmatpush1.msra.mxu0 %v1219
      %1223 = vmatprep.subr.mxu0 0.0
      %1224 = vmatpush1.msra.mxu0 0.0
      %1225 = vmatprep.subr.mxu0 0.0
      %1226 = vmatpush1.msra.mxu0 0.0
      %1227 = vmatprep.subr.mxu0 0.0
      %1228 = vmatpush1.msra.mxu0 0.0
      %1229 = vmatprep.subr.mxu0 0.0
      %1230 = vmatpush1.msra.mxu0 0.0
      %1231 = vmatprep.subr.mxu0 0.0
      %1232 = vmatpush1.msra.mxu0 0.0
      %1233 = vmatprep.subr.mxu0 0.0
      %1234 = vmatpush1.msra.mxu0 0.0
      %1235 = vmatprep.subr.mxu0 0.0
      %1236 = vmatpush1.msra.mxu0 0.0
      %1237 = vmatprep.subr.mxu0 0.0
      %1238 = vmatpush1.msra.mxu0 0.0
      %1239 = vmatprep.subr.mxu0 0.0
      %1240 = vmatpush1.msra.mxu0 0.0
      %1241 = vmatprep.subr.mxu0 0.0
      %1242 = vmatpush1.msra.mxu0 0.0
      %1243 = vmatprep.subr.mxu0 0.0
      %1244 = vmatpush1.msra.mxu0 0.0
      %1245 = vmatprep.subr.mxu0 0.0
      %1246 = vmatpush1.msra.mxu0 0.0
      %1247 = vmatprep.subr.mxu0 0.0
      %1248 = vmatpush1.msra.mxu0 0.0
      %1249 = vmatprep.subr.mxu0 0.0
      %1250 = vmatpush1.msra.mxu0 0.0
      %1251 = vmatprep.subr.mxu0 0.0
      %1252 = vmatpush1.msra.mxu0 0.0
      %1253 = vmatprep.subr.mxu0 0.0
      %1254 = vmatpush1.msra.mxu0 0.0
      %1255 = vmatprep.subr.mxu0 0.0
      %1256 = vmatpush1.msra.mxu0 0.0
      %1257 = vmatprep.subr.mxu0 0.0
      %1258 = vmatpush1.msra.mxu0 0.0
      %1259 = vmatprep.subr.mxu0 0.0
      %1260 = vmatpush1.msra.mxu0 0.0
      %1261 = vmatprep.subr.mxu0 0.0
      %1262 = vmatpush1.msra.mxu0 0.0
      %1263 = vmatprep.subr.mxu0 0.0
      %1264 = vmatpush1.msra.mxu0 0.0
      %1265 = vmatprep.subr.mxu0 0.0
      %1266 = vmatpush1.msra.mxu0 0.0
      %1267 = vmatprep.subr.mxu0 0.0
      %1268 = vmatpush1.msra.mxu0 0.0
      %1269 = vmatprep.subr.mxu0 0.0
      %1270 = vmatpush1.msra.mxu0 0.0
      %1271 = vmatprep.subr.mxu0 0.0
      %1272 = vmatpush1.msra.mxu0 0.0
      %1273 = vmatprep.subr.mxu0 0.0
      %1274 = vmatpush1.msra.mxu0 0.0
      %1275 = vmatprep.subr.mxu0 0.0
      %1276 = vmatpush1.msra.mxu0 0.0
      %1277 = vmatprep.subr.mxu0 0.0
      %1278 = vmatpush1.msra.mxu0 0.0
      %1279 = vmatprep.subr.mxu0 0.0
      %1280 = vmatpush1.msra.mxu0 0.0
      %1281 = vmatprep.subr.mxu0 0.0
      %1282 = vmatpush1.msra.mxu0 0.0
      %1283 = vmatprep.subr.mxu0 0.0
      %1284 = vmatpush1.msra.mxu0 0.0
      %1285 = vmatprep.mubr.f32.mxu0 0.0
      %1286 = vmatmul.mubr.f32.gmra.mrb[0].mxu0 %v1217
      %v1287 = vpop.f32.mrb[0].mxu0
      %v1288 = vadd.f32 0.0, %v1287
      %v1289 = vpop.f32.mrb[0].mxu0
      %1290 = vdwg.mxu0
      %v1291 = vadd.f32 %v1178, %v1288
      %1292 = vrot.lane.b32.xlu0 %v273, 64
      %v1293 = vpop.permute.xlu0 %1292
      %1295 = vxpose.xlu0.b32.start [1/16] %v1293, 128
      %1296 = vxpose.xlu0.b32.cont [2/16] 0.0, 128
      %1297 = vxpose.xlu0.b32.cont [3/16] 0.0, 128
      %1298 = vxpose.xlu0.b32.cont [4/16] 0.0, 128
      %1299 = vxpose.xlu0.b32.cont [5/16] 0.0, 128
      %1300 = vxpose.xlu0.b32.cont [6/16] 0.0, 128
      %1301 = vxpose.xlu0.b32.cont [7/16] 0.0, 128
      %1302 = vxpose.xlu0.b32.cont [8/16] 0.0, 128
      %1303 = vxpose.xlu0.b32.cont [9/16] 0.0, 128
      %1304 = vxpose.xlu0.b32.cont [10/16] 0.0, 128
      %1305 = vxpose.xlu0.b32.cont [11/16] 0.0, 128
      %1306 = vxpose.xlu0.b32.cont [12/16] 0.0, 128
      %1307 = vxpose.xlu0.b32.cont [13/16] 0.0, 128
      %1308 = vxpose.xlu0.b32.cont [14/16] 0.0, 128
      %1309 = vxpose.xlu0.b32.cont [15/16] 0.0, 128
      %1310 = vxpose.xlu0.b32.end [16/16] 0.0, 128
      %v1311 = vpop.trf.xlu0
      %v1312 = vpop.trf.xlu0
      %v1313 = vpop.trf.xlu0
      %v1314 = vpop.trf.xlu0
      %v1315 = vpop.trf.xlu0
      %v1316 = vpop.trf.xlu0
      %v1317 = vpop.trf.xlu0
      %v1318 = vpop.trf.xlu0
      %v1319 = vpop.trf.xlu0
      %v1320 = vpop.trf.xlu0
      %v1321 = vpop.trf.xlu0
      %v1322 = vpop.trf.xlu0
      %v1323 = vpop.trf.xlu0
      %v1324 = vpop.trf.xlu0
      %v1325 = vpop.trf.xlu0
      %v1326 = vpop.trf.xlu0
      %1327 = vrot.lane.b32.xlu0 %v317, 64
      %v1328 = vpop.permute.xlu0 %1327
      %v1330 = vsel %vm430, %v1311, 0
      %v1332 = vsel %vm434, %v1328, 0
      %1334 = vmatprep.subr.mxu0 0.0
      %1335 = vmatpush1.msra.mxu0 %v1332
      %1336 = vmatprep.subr.mxu0 0.0
      %1337 = vmatpush1.msra.mxu0 0.0
      %1338 = vmatprep.subr.mxu0 0.0
      %1339 = vmatpush1.msra.mxu0 0.0
      %1340 = vmatprep.subr.mxu0 0.0
      %1341 = vmatpush1.msra.mxu0 0.0
      %1342 = vmatprep.subr.mxu0 0.0
      %1343 = vmatpush1.msra.mxu0 0.0
      %1344 = vmatprep.subr.mxu0 0.0
      %1345 = vmatpush1.msra.mxu0 0.0
      %1346 = vmatprep.subr.mxu0 0.0
      %1347 = vmatpush1.msra.mxu0 0.0
      %1348 = vmatprep.subr.mxu0 0.0
      %1349 = vmatpush1.msra.mxu0 0.0
      %1350 = vmatprep.subr.mxu0 0.0
      %1351 = vmatpush1.msra.mxu0 0.0
      %1352 = vmatprep.subr.mxu0 0.0
      %1353 = vmatpush1.msra.mxu0 0.0
      %1354 = vmatprep.subr.mxu0 0.0
      %1355 = vmatpush1.msra.mxu0 0.0
      %1356 = vmatprep.subr.mxu0 0.0
      %1357 = vmatpush1.msra.mxu0 0.0
      %1358 = vmatprep.subr.mxu0 0.0
      %1359 = vmatpush1.msra.mxu0 0.0
      %1360 = vmatprep.subr.mxu0 0.0
      %1361 = vmatpush1.msra.mxu0 0.0
      %1362 = vmatprep.subr.mxu0 0.0
      %1363 = vmatpush1.msra.mxu0 0.0
      %1364 = vmatprep.subr.mxu0 0.0
      %1365 = vmatpush1.msra.mxu0 0.0
      %1366 = vmatprep.subr.mxu0 0.0
      %1367 = vmatpush1.msra.mxu0 0.0
      %1368 = vmatprep.subr.mxu0 0.0
      %1369 = vmatpush1.msra.mxu0 0.0
      %1370 = vmatprep.subr.mxu0 0.0
      %1371 = vmatpush1.msra.mxu0 0.0
      %1372 = vmatprep.subr.mxu0 0.0
      %1373 = vmatpush1.msra.mxu0 0.0
      %1374 = vmatprep.subr.mxu0 0.0
      %1375 = vmatpush1.msra.mxu0 0.0
      %1376 = vmatprep.subr.mxu0 0.0
      %1377 = vmatpush1.msra.mxu0 0.0
      %1378 = vmatprep.subr.mxu0 0.0
      %1379 = vmatpush1.msra.mxu0 0.0
      %1380 = vmatprep.subr.mxu0 0.0
      %1381 = vmatpush1.msra.mxu0 0.0
      %1382 = vmatprep.subr.mxu0 0.0
      %1383 = vmatpush1.msra.mxu0 0.0
      %1384 = vmatprep.subr.mxu0 0.0
      %1385 = vmatpush1.msra.mxu0 0.0
      %1386 = vmatprep.subr.mxu0 0.0
      %1387 = vmatpush1.msra.mxu0 0.0
      %1388 = vmatprep.subr.mxu0 0.0
      %1389 = vmatpush1.msra.mxu0 0.0
      %1390 = vmatprep.subr.mxu0 0.0
      %1391 = vmatpush1.msra.mxu0 0.0
      %1392 = vmatprep.subr.mxu0 0.0
      %1393 = vmatpush1.msra.mxu0 0.0
      %1394 = vmatprep.subr.mxu0 0.0
      %1395 = vmatpush1.msra.mxu0 0.0
      %1396 = vmatprep.subr.mxu0 0.0
      %1397 = vmatpush1.msra.mxu0 0.0
      %1398 = vmatprep.mubr.f32.mxu0 0.0
      %1399 = vmatmul.mubr.f32.gmra.mrb[0].mxu0 %v1330
      %v1400 = vpop.f32.mrb[0].mxu0
      %v1401 = vadd.f32 0.0, %v1400
      %v1402 = vpop.f32.mrb[0].mxu0
      %1403 = vdwg.mxu0
      %v1404 = vadd.f32 %v1291, %v1401
      %1405 = vrot.lane.b32.xlu0 %v273, 56
      %v1406 = vpop.permute.xlu0 %1405
      %1408 = vxpose.xlu0.b32.start [1/16] %v1406, 128
      %1409 = vxpose.xlu0.b32.cont [2/16] 0.0, 128
      %1410 = vxpose.xlu0.b32.cont [3/16] 0.0, 128
      %1411 = vxpose.xlu0.b32.cont [4/16] 0.0, 128
      %1412 = vxpose.xlu0.b32.cont [5/16] 0.0, 128
      %1413 = vxpose.xlu0.b32.cont [6/16] 0.0, 128
      %1414 = vxpose.xlu0.b32.cont [7/16] 0.0, 128
      %1415 = vxpose.xlu0.b32.cont [8/16] 0.0, 128
      %1416 = vxpose.xlu0.b32.cont [9/16] 0.0, 128
      %1417 = vxpose.xlu0.b32.cont [10/16] 0.0, 128
      %1418 = vxpose.xlu0.b32.cont [11/16] 0.0, 128
      %1419 = vxpose.xlu0.b32.cont [12/16] 0.0, 128
      %1420 = vxpose.xlu0.b32.cont [13/16] 0.0, 128
      %1421 = vxpose.xlu0.b32.cont [14/16] 0.0, 128
      %1422 = vxpose.xlu0.b32.cont [15/16] 0.0, 128
      %1423 = vxpose.xlu0.b32.end [16/16] 0.0, 128
      %v1424 = vpop.trf.xlu0
      %v1425 = vpop.trf.xlu0
      %v1426 = vpop.trf.xlu0
      %v1427 = vpop.trf.xlu0
      %v1428 = vpop.trf.xlu0
      %v1429 = vpop.trf.xlu0
      %v1430 = vpop.trf.xlu0
      %v1431 = vpop.trf.xlu0
      %v1432 = vpop.trf.xlu0
      %v1433 = vpop.trf.xlu0
      %v1434 = vpop.trf.xlu0
      %v1435 = vpop.trf.xlu0
      %v1436 = vpop.trf.xlu0
      %v1437 = vpop.trf.xlu0
      %v1438 = vpop.trf.xlu0
      %v1439 = vpop.trf.xlu0
      %1440 = vrot.lane.b32.xlu0 %v317, 56
      %v1441 = vpop.permute.xlu0 %1440
      %v1443 = vsel %vm430, %v1424, 0
      %v1445 = vsel %vm434, %v1441, 0
      %1447 = vmatprep.subr.mxu0 0.0
      %1448 = vmatpush1.msra.mxu0 %v1445
      %1449 = vmatprep.subr.mxu0 0.0
      %1450 = vmatpush1.msra.mxu0 0.0
      %1451 = vmatprep.subr.mxu0 0.0
      %1452 = vmatpush1.msra.mxu0 0.0
      %1453 = vmatprep.subr.mxu0 0.0
      %1454 = vmatpush1.msra.mxu0 0.0
      %1455 = vmatprep.subr.mxu0 0.0
      %1456 = vmatpush1.msra.mxu0 0.0
      %1457 = vmatprep.subr.mxu0 0.0
      %1458 = vmatpush1.msra.mxu0 0.0
      %1459 = vmatprep.subr.mxu0 0.0
      %1460 = vmatpush1.msra.mxu0 0.0
      %1461 = vmatprep.subr.mxu0 0.0
      %1462 = vmatpush1.msra.mxu0 0.0
      %1463 = vmatprep.subr.mxu0 0.0
      %1464 = vmatpush1.msra.mxu0 0.0
      %1465 = vmatprep.subr.mxu0 0.0
      %1466 = vmatpush1.msra.mxu0 0.0
      %1467 = vmatprep.subr.mxu0 0.0
      %1468 = vmatpush1.msra.mxu0 0.0
      %1469 = vmatprep.subr.mxu0 0.0
      %1470 = vmatpush1.msra.mxu0 0.0
      %1471 = vmatprep.subr.mxu0 0.0
      %1472 = vmatpush1.msra.mxu0 0.0
      %1473 = vmatprep.subr.mxu0 0.0
      %1474 = vmatpush1.msra.mxu0 0.0
      %1475 = vmatprep.subr.mxu0 0.0
      %1476 = vmatpush1.msra.mxu0 0.0
      %1477 = vmatprep.subr.mxu0 0.0
      %1478 = vmatpush1.msra.mxu0 0.0
      %1479 = vmatprep.subr.mxu0 0.0
      %1480 = vmatpush1.msra.mxu0 0.0
      %1481 = vmatprep.subr.mxu0 0.0
      %1482 = vmatpush1.msra.mxu0 0.0
      %1483 = vmatprep.subr.mxu0 0.0
      %1484 = vmatpush1.msra.mxu0 0.0
      %1485 = vmatprep.subr.mxu0 0.0
      %1486 = vmatpush1.msra.mxu0 0.0
      %1487 = vmatprep.subr.mxu0 0.0
      %1488 = vmatpush1.msra.mxu0 0.0
      %1489 = vmatprep.subr.mxu0 0.0
      %1490 = vmatpush1.msra.mxu0 0.0
      %1491 = vmatprep.subr.mxu0 0.0
      %1492 = vmatpush1.msra.mxu0 0.0
      %1493 = vmatprep.subr.mxu0 0.0
      %1494 = vmatpush1.msra.mxu0 0.0
      %1495 = vmatprep.subr.mxu0 0.0
      %1496 = vmatpush1.msra.mxu0 0.0
      %1497 = vmatprep.subr.mxu0 0.0
      %1498 = vmatpush1.msra.mxu0 0.0
      %1499 = vmatprep.subr.mxu0 0.0
      %1500 = vmatpush1.msra.mxu0 0.0
      %1501 = vmatprep.subr.mxu0 0.0
      %1502 = vmatpush1.msra.mxu0 0.0
      %1503 = vmatprep.subr.mxu0 0.0
      %1504 = vmatpush1.msra.mxu0 0.0
      %1505 = vmatprep.subr.mxu0 0.0
      %1506 = vmatpush1.msra.mxu0 0.0
      %1507 = vmatprep.subr.mxu0 0.0
      %1508 = vmatpush1.msra.mxu0 0.0
      %1509 = vmatprep.subr.mxu0 0.0
      %1510 = vmatpush1.msra.mxu0 0.0
      %1511 = vmatprep.mubr.f32.mxu0 0.0
      %1512 = vmatmul.mubr.f32.gmra.mrb[0].mxu0 %v1443
      %v1513 = vpop.f32.mrb[0].mxu0
      %v1514 = vadd.f32 0.0, %v1513
      %v1515 = vpop.f32.mrb[0].mxu0
      %1516 = vdwg.mxu0
      %v1517 = vadd.f32 %v1404, %v1514
      %1518 = vrot.lane.b32.xlu0 %v273, 48
      %v1519 = vpop.permute.xlu0 %1518
      %1521 = vxpose.xlu0.b32.start [1/16] %v1519, 128
      %1522 = vxpose.xlu0.b32.cont [2/16] 0.0, 128
      %1523 = vxpose.xlu0.b32.cont [3/16] 0.0, 128
      %1524 = vxpose.xlu0.b32.cont [4/16] 0.0, 128
      %1525 = vxpose.xlu0.b32.cont [5/16] 0.0, 128
      %1526 = vxpose.xlu0.b32.cont [6/16] 0.0, 128
      %1527 = vxpose.xlu0.b32.cont [7/16] 0.0, 128
      %1528 = vxpose.xlu0.b32.cont [8/16] 0.0, 128
      %1529 = vxpose.xlu0.b32.cont [9/16] 0.0, 128
      %1530 = vxpose.xlu0.b32.cont [10/16] 0.0, 128
      %1531 = vxpose.xlu0.b32.cont [11/16] 0.0, 128
      %1532 = vxpose.xlu0.b32.cont [12/16] 0.0, 128
      %1533 = vxpose.xlu0.b32.cont [13/16] 0.0, 128
      %1534 = vxpose.xlu0.b32.cont [14/16] 0.0, 128
      %1535 = vxpose.xlu0.b32.cont [15/16] 0.0, 128
      %1536 = vxpose.xlu0.b32.end [16/16] 0.0, 128
      %v1537 = vpop.trf.xlu0
      %v1538 = vpop.trf.xlu0
      %v1539 = vpop.trf.xlu0
      %v1540 = vpop.trf.xlu0
      %v1541 = vpop.trf.xlu0
      %v1542 = vpop.trf.xlu0
      %v1543 = vpop.trf.xlu0
      %v1544 = vpop.trf.xlu0
      %v1545 = vpop.trf.xlu0
      %v1546 = vpop.trf.xlu0
      %v1547 = vpop.trf.xlu0
      %v1548 = vpop.trf.xlu0
      %v1549 = vpop.trf.xlu0
      %v1550 = vpop.trf.xlu0
      %v1551 = vpop.trf.xlu0
      %v1552 = vpop.trf.xlu0
      %1553 = vrot.lane.b32.xlu0 %v317, 48
      %v1554 = vpop.permute.xlu0 %1553
      %v1556 = vsel %vm430, %v1537, 0
      %v1558 = vsel %vm434, %v1554, 0
      %1560 = vmatprep.subr.mxu0 0.0
      %1561 = vmatpush1.msra.mxu0 %v1558
      %1562 = vmatprep.subr.mxu0 0.0
      %1563 = vmatpush1.msra.mxu0 0.0
      %1564 = vmatprep.subr.mxu0 0.0
      %1565 = vmatpush1.msra.mxu0 0.0
      %1566 = vmatprep.subr.mxu0 0.0
      %1567 = vmatpush1.msra.mxu0 0.0
      %1568 = vmatprep.subr.mxu0 0.0
      %1569 = vmatpush1.msra.mxu0 0.0
      %1570 = vmatprep.subr.mxu0 0.0
      %1571 = vmatpush1.msra.mxu0 0.0
      %1572 = vmatprep.subr.mxu0 0.0
      %1573 = vmatpush1.msra.mxu0 0.0
      %1574 = vmatprep.subr.mxu0 0.0
      %1575 = vmatpush1.msra.mxu0 0.0
      %1576 = vmatprep.subr.mxu0 0.0
      %1577 = vmatpush1.msra.mxu0 0.0
      %1578 = vmatprep.subr.mxu0 0.0
      %1579 = vmatpush1.msra.mxu0 0.0
      %1580 = vmatprep.subr.mxu0 0.0
      %1581 = vmatpush1.msra.mxu0 0.0
      %1582 = vmatprep.subr.mxu0 0.0
      %1583 = vmatpush1.msra.mxu0 0.0
      %1584 = vmatprep.subr.mxu0 0.0
      %1585 = vmatpush1.msra.mxu0 0.0
      %1586 = vmatprep.subr.mxu0 0.0
      %1587 = vmatpush1.msra.mxu0 0.0
      %1588 = vmatprep.subr.mxu0 0.0
      %1589 = vmatpush1.msra.mxu0 0.0
      %1590 = vmatprep.subr.mxu0 0.0
      %1591 = vmatpush1.msra.mxu0 0.0
      %1592 = vmatprep.subr.mxu0 0.0
      %1593 = vmatpush1.msra.mxu0 0.0
      %1594 = vmatprep.subr.mxu0 0.0
      %1595 = vmatpush1.msra.mxu0 0.0
      %1596 = vmatprep.subr.mxu0 0.0
      %1597 = vmatpush1.msra.mxu0 0.0
      %1598 = vmatprep.subr.mxu0 0.0
      %1599 = vmatpush1.msra.mxu0 0.0
      %1600 = vmatprep.subr.mxu0 0.0
      %1601 = vmatpush1.msra.mxu0 0.0
      %1602 = vmatprep.subr.mxu0 0.0
      %1603 = vmatpush1.msra.mxu0 0.0
      %1604 = vmatprep.subr.mxu0 0.0
      %1605 = vmatpush1.msra.mxu0 0.0
      %1606 = vmatprep.subr.mxu0 0.0
      %1607 = vmatpush1.msra.mxu0 0.0
      %1608 = vmatprep.subr.mxu0 0.0
      %1609 = vmatpush1.msra.mxu0 0.0
      %1610 = vmatprep.subr.mxu0 0.0
      %1611 = vmatpush1.msra.mxu0 0.0
      %1612 = vmatprep.subr.mxu0 0.0
      %1613 = vmatpush1.msra.mxu0 0.0
      %1614 = vmatprep.subr.mxu0 0.0
      %1615 = vmatpush1.msra.mxu0 0.0
      %1616 = vmatprep.subr.mxu0 0.0
      %1617 = vmatpush1.msra.mxu0 0.0
      %1618 = vmatprep.subr.mxu0 0.0
      %1619 = vmatpush1.msra.mxu0 0.0
      %1620 = vmatprep.subr.mxu0 0.0
      %1621 = vmatpush1.msra.mxu0 0.0
      %1622 = vmatprep.subr.mxu0 0.0
      %1623 = vmatpush1.msra.mxu0 0.0
      %1624 = vmatprep.mubr.f32.mxu0 0.0
      %1625 = vmatmul.mubr.f32.gmra.mrb[0].mxu0 %v1556
      %v1626 = vpop.f32.mrb[0].mxu0
      %v1627 = vadd.f32 0.0, %v1626
      %v1628 = vpop.f32.mrb[0].mxu0
      %1629 = vdwg.mxu0
      %v1630 = vadd.f32 %v1517, %v1627
      %1631 = vrot.lane.b32.xlu0 %v273, 40
      %v1632 = vpop.permute.xlu0 %1631
      %1634 = vxpose.xlu0.b32.start [1/16] %v1632, 128
      %1635 = vxpose.xlu0.b32.cont [2/16] 0.0, 128
      %1636 = vxpose.xlu0.b32.cont [3/16] 0.0, 128
      %1637 = vxpose.xlu0.b32.cont [4/16] 0.0, 128
      %1638 = vxpose.xlu0.b32.cont [5/16] 0.0, 128
      %1639 = vxpose.xlu0.b32.cont [6/16] 0.0, 128
      %1640 = vxpose.xlu0.b32.cont [7/16] 0.0, 128
      %1641 = vxpose.xlu0.b32.cont [8/16] 0.0, 128
      %1642 = vxpose.xlu0.b32.cont [9/16] 0.0, 128
      %1643 = vxpose.xlu0.b32.cont [10/16] 0.0, 128
      %1644 = vxpose.xlu0.b32.cont [11/16] 0.0, 128
      %1645 = vxpose.xlu0.b32.cont [12/16] 0.0, 128
      %1646 = vxpose.xlu0.b32.cont [13/16] 0.0, 128
      %1647 = vxpose.xlu0.b32.cont [14/16] 0.0, 128
      %1648 = vxpose.xlu0.b32.cont [15/16] 0.0, 128
      %1649 = vxpose.xlu0.b32.end [16/16] 0.0, 128
      %v1650 = vpop.trf.xlu0
      %v1651 = vpop.trf.xlu0
      %v1652 = vpop.trf.xlu0
      %v1653 = vpop.trf.xlu0
      %v1654 = vpop.trf.xlu0
      %v1655 = vpop.trf.xlu0
      %v1656 = vpop.trf.xlu0
      %v1657 = vpop.trf.xlu0
      %v1658 = vpop.trf.xlu0
      %v1659 = vpop.trf.xlu0
      %v1660 = vpop.trf.xlu0
      %v1661 = vpop.trf.xlu0
      %v1662 = vpop.trf.xlu0
      %v1663 = vpop.trf.xlu0
      %v1664 = vpop.trf.xlu0
      %v1665 = vpop.trf.xlu0
      %1666 = vrot.lane.b32.xlu0 %v317, 40
      %v1667 = vpop.permute.xlu0 %1666
      %v1669 = vsel %vm430, %v1650, 0
      %v1671 = vsel %vm434, %v1667, 0
      %1673 = vmatprep.subr.mxu0 0.0
      %1674 = vmatpush1.msra.mxu0 %v1671
      %1675 = vmatprep.subr.mxu0 0.0
      %1676 = vmatpush1.msra.mxu0 0.0
      %1677 = vmatprep.subr.mxu0 0.0
      %1678 = vmatpush1.msra.mxu0 0.0
      %1679 = vmatprep.subr.mxu0 0.0
      %1680 = vmatpush1.msra.mxu0 0.0
      %1681 = vmatprep.subr.mxu0 0.0
      %1682 = vmatpush1.msra.mxu0 0.0
      %1683 = vmatprep.subr.mxu0 0.0
      %1684 = vmatpush1.msra.mxu0 0.0
      %1685 = vmatprep.subr.mxu0 0.0
      %1686 = vmatpush1.msra.mxu0 0.0
      %1687 = vmatprep.subr.mxu0 0.0
      %1688 = vmatpush1.msra.mxu0 0.0
      %1689 = vmatprep.subr.mxu0 0.0
      %1690 = vmatpush1.msra.mxu0 0.0
      %1691 = vmatprep.subr.mxu0 0.0
      %1692 = vmatpush1.msra.mxu0 0.0
      %1693 = vmatprep.subr.mxu0 0.0
      %1694 = vmatpush1.msra.mxu0 0.0
      %1695 = vmatprep.subr.mxu0 0.0
      %1696 = vmatpush1.msra.mxu0 0.0
      %1697 = vmatprep.subr.mxu0 0.0
      %1698 = vmatpush1.msra.mxu0 0.0
      %1699 = vmatprep.subr.mxu0 0.0
      %1700 = vmatpush1.msra.mxu0 0.0
      %1701 = vmatprep.subr.mxu0 0.0
      %1702 = vmatpush1.msra.mxu0 0.0
      %1703 = vmatprep.subr.mxu0 0.0
      %1704 = vmatpush1.msra.mxu0 0.0
      %1705 = vmatprep.subr.mxu0 0.0
      %1706 = vmatpush1.msra.mxu0 0.0
      %1707 = vmatprep.subr.mxu0 0.0
      %1708 = vmatpush1.msra.mxu0 0.0
      %1709 = vmatprep.subr.mxu0 0.0
      %1710 = vmatpush1.msra.mxu0 0.0
      %1711 = vmatprep.subr.mxu0 0.0
      %1712 = vmatpush1.msra.mxu0 0.0
      %1713 = vmatprep.subr.mxu0 0.0
      %1714 = vmatpush1.msra.mxu0 0.0
      %1715 = vmatprep.subr.mxu0 0.0
      %1716 = vmatpush1.msra.mxu0 0.0
      %1717 = vmatprep.subr.mxu0 0.0
      %1718 = vmatpush1.msra.mxu0 0.0
      %1719 = vmatprep.subr.mxu0 0.0
      %1720 = vmatpush1.msra.mxu0 0.0
      %1721 = vmatprep.subr.mxu0 0.0
      %1722 = vmatpush1.msra.mxu0 0.0
      %1723 = vmatprep.subr.mxu0 0.0
      %1724 = vmatpush1.msra.mxu0 0.0
      %1725 = vmatprep.subr.mxu0 0.0
      %1726 = vmatpush1.msra.mxu0 0.0
      %1727 = vmatprep.subr.mxu0 0.0
      %1728 = vmatpush1.msra.mxu0 0.0
      %1729 = vmatprep.subr.mxu0 0.0
      %1730 = vmatpush1.msra.mxu0 0.0
      %1731 = vmatprep.subr.mxu0 0.0
      %1732 = vmatpush1.msra.mxu0 0.0
      %1733 = vmatprep.subr.mxu0 0.0
      %1734 = vmatpush1.msra.mxu0 0.0
      %1735 = vmatprep.subr.mxu0 0.0
      %1736 = vmatpush1.msra.mxu0 0.0
      %1737 = vmatprep.mubr.f32.mxu0 0.0
      %1738 = vmatmul.mubr.f32.gmra.mrb[0].mxu0 %v1669
      %v1739 = vpop.f32.mrb[0].mxu0
      %v1740 = vadd.f32 0.0, %v1739
      %v1741 = vpop.f32.mrb[0].mxu0
      %1742 = vdwg.mxu0
      %v1743 = vadd.f32 %v1630, %v1740
      %1744 = vrot.lane.b32.xlu0 %v273, 32
      %v1745 = vpop.permute.xlu0 %1744
      %1747 = vxpose.xlu0.b32.start [1/16] %v1745, 128
      %1748 = vxpose.xlu0.b32.cont [2/16] 0.0, 128
      %1749 = vxpose.xlu0.b32.cont [3/16] 0.0, 128
      %1750 = vxpose.xlu0.b32.cont [4/16] 0.0, 128
      %1751 = vxpose.xlu0.b32.cont [5/16] 0.0, 128
      %1752 = vxpose.xlu0.b32.cont [6/16] 0.0, 128
      %1753 = vxpose.xlu0.b32.cont [7/16] 0.0, 128
      %1754 = vxpose.xlu0.b32.cont [8/16] 0.0, 128
      %1755 = vxpose.xlu0.b32.cont [9/16] 0.0, 128
      %1756 = vxpose.xlu0.b32.cont [10/16] 0.0, 128
      %1757 = vxpose.xlu0.b32.cont [11/16] 0.0, 128
      %1758 = vxpose.xlu0.b32.cont [12/16] 0.0, 128
      %1759 = vxpose.xlu0.b32.cont [13/16] 0.0, 128
      %1760 = vxpose.xlu0.b32.cont [14/16] 0.0, 128
      %1761 = vxpose.xlu0.b32.cont [15/16] 0.0, 128
      %1762 = vxpose.xlu0.b32.end [16/16] 0.0, 128
      %v1763 = vpop.trf.xlu0
      %v1764 = vpop.trf.xlu0
      %v1765 = vpop.trf.xlu0
      %v1766 = vpop.trf.xlu0
      %v1767 = vpop.trf.xlu0
      %v1768 = vpop.trf.xlu0
      %v1769 = vpop.trf.xlu0
      %v1770 = vpop.trf.xlu0
      %v1771 = vpop.trf.xlu0
      %v1772 = vpop.trf.xlu0
      %v1773 = vpop.trf.xlu0
      %v1774 = vpop.trf.xlu0
      %v1775 = vpop.trf.xlu0
      %v1776 = vpop.trf.xlu0
      %v1777 = vpop.trf.xlu0
      %v1778 = vpop.trf.xlu0
      %1779 = vrot.lane.b32.xlu0 %v317, 32
      %v1780 = vpop.permute.xlu0 %1779
      %v1782 = vsel %vm430, %v1763, 0
      %v1784 = vsel %vm434, %v1780, 0
      %1786 = vmatprep.subr.mxu0 0.0
      %1787 = vmatpush1.msra.mxu0 %v1784
      %1788 = vmatprep.subr.mxu0 0.0
      %1789 = vmatpush1.msra.mxu0 0.0
      %1790 = vmatprep.subr.mxu0 0.0
      %1791 = vmatpush1.msra.mxu0 0.0
      %1792 = vmatprep.subr.mxu0 0.0
      %1793 = vmatpush1.msra.mxu0 0.0
      %1794 = vmatprep.subr.mxu0 0.0
      %1795 = vmatpush1.msra.mxu0 0.0
      %1796 = vmatprep.subr.mxu0 0.0
      %1797 = vmatpush1.msra.mxu0 0.0
      %1798 = vmatprep.subr.mxu0 0.0
      %1799 = vmatpush1.msra.mxu0 0.0
      %1800 = vmatprep.subr.mxu0 0.0
      %1801 = vmatpush1.msra.mxu0 0.0
      %1802 = vmatprep.subr.mxu0 0.0
      %1803 = vmatpush1.msra.mxu0 0.0
      %1804 = vmatprep.subr.mxu0 0.0
      %1805 = vmatpush1.msra.mxu0 0.0
      %1806 = vmatprep.subr.mxu0 0.0
      %1807 = vmatpush1.msra.mxu0 0.0
      %1808 = vmatprep.subr.mxu0 0.0
      %1809 = vmatpush1.msra.mxu0 0.0
      %1810 = vmatprep.subr.mxu0 0.0
      %1811 = vmatpush1.msra.mxu0 0.0
      %1812 = vmatprep.subr.mxu0 0.0
      %1813 = vmatpush1.msra.mxu0 0.0
      %1814 = vmatprep.subr.mxu0 0.0
      %1815 = vmatpush1.msra.mxu0 0.0
      %1816 = vmatprep.subr.mxu0 0.0
      %1817 = vmatpush1.msra.mxu0 0.0
      %1818 = vmatprep.subr.mxu0 0.0
      %1819 = vmatpush1.msra.mxu0 0.0
      %1820 = vmatprep.subr.mxu0 0.0
      %1821 = vmatpush1.msra.mxu0 0.0
      %1822 = vmatprep.subr.mxu0 0.0
      %1823 = vmatpush1.msra.mxu0 0.0
      %1824 = vmatprep.subr.mxu0 0.0
      %1825 = vmatpush1.msra.mxu0 0.0
      %1826 = vmatprep.subr.mxu0 0.0
      %1827 = vmatpush1.msra.mxu0 0.0
      %1828 = vmatprep.subr.mxu0 0.0
      %1829 = vmatpush1.msra.mxu0 0.0
      %1830 = vmatprep.subr.mxu0 0.0
      %1831 = vmatpush1.msra.mxu0 0.0
      %1832 = vmatprep.subr.mxu0 0.0
      %1833 = vmatpush1.msra.mxu0 0.0
      %1834 = vmatprep.subr.mxu0 0.0
      %1835 = vmatpush1.msra.mxu0 0.0
      %1836 = vmatprep.subr.mxu0 0.0
      %1837 = vmatpush1.msra.mxu0 0.0
      %1838 = vmatprep.subr.mxu0 0.0
      %1839 = vmatpush1.msra.mxu0 0.0
      %1840 = vmatprep.subr.mxu0 0.0
      %1841 = vmatpush1.msra.mxu0 0.0
      %1842 = vmatprep.subr.mxu0 0.0
      %1843 = vmatpush1.msra.mxu0 0.0
      %1844 = vmatprep.subr.mxu0 0.0
      %1845 = vmatpush1.msra.mxu0 0.0
      %1846 = vmatprep.subr.mxu0 0.0
      %1847 = vmatpush1.msra.mxu0 0.0
      %1848 = vmatprep.subr.mxu0 0.0
      %1849 = vmatpush1.msra.mxu0 0.0
      %1850 = vmatprep.mubr.f32.mxu0 0.0
      %1851 = vmatmul.mubr.f32.gmra.mrb[0].mxu0 %v1782
      %v1852 = vpop.f32.mrb[0].mxu0
      %v1853 = vadd.f32 0.0, %v1852
      %v1854 = vpop.f32.mrb[0].mxu0
      %1855 = vdwg.mxu0
      %v1856 = vadd.f32 %v1743, %v1853
      %1857 = vrot.lane.b32.xlu0 %v273, 24
      %v1858 = vpop.permute.xlu0 %1857
      %1860 = vxpose.xlu0.b32.start [1/16] %v1858, 128
      %1861 = vxpose.xlu0.b32.cont [2/16] 0.0, 128
      %1862 = vxpose.xlu0.b32.cont [3/16] 0.0, 128
      %1863 = vxpose.xlu0.b32.cont [4/16] 0.0, 128
      %1864 = vxpose.xlu0.b32.cont [5/16] 0.0, 128
      %1865 = vxpose.xlu0.b32.cont [6/16] 0.0, 128
      %1866 = vxpose.xlu0.b32.cont [7/16] 0.0, 128
      %1867 = vxpose.xlu0.b32.cont [8/16] 0.0, 128
      %1868 = vxpose.xlu0.b32.cont [9/16] 0.0, 128
      %1869 = vxpose.xlu0.b32.cont [10/16] 0.0, 128
      %1870 = vxpose.xlu0.b32.cont [11/16] 0.0, 128
      %1871 = vxpose.xlu0.b32.cont [12/16] 0.0, 128
      %1872 = vxpose.xlu0.b32.cont [13/16] 0.0, 128
      %1873 = vxpose.xlu0.b32.cont [14/16] 0.0, 128
      %1874 = vxpose.xlu0.b32.cont [15/16] 0.0, 128
      %1875 = vxpose.xlu0.b32.end [16/16] 0.0, 128
      %v1876 = vpop.trf.xlu0
      %v1877 = vpop.trf.xlu0
      %v1878 = vpop.trf.xlu0
      %v1879 = vpop.trf.xlu0
      %v1880 = vpop.trf.xlu0
      %v1881 = vpop.trf.xlu0
      %v1882 = vpop.trf.xlu0
      %v1883 = vpop.trf.xlu0
      %v1884 = vpop.trf.xlu0
      %v1885 = vpop.trf.xlu0
      %v1886 = vpop.trf.xlu0
      %v1887 = vpop.trf.xlu0
      %v1888 = vpop.trf.xlu0
      %v1889 = vpop.trf.xlu0
      %v1890 = vpop.trf.xlu0
      %v1891 = vpop.trf.xlu0
      %1892 = vrot.lane.b32.xlu0 %v317, 24
      %v1893 = vpop.permute.xlu0 %1892
      %v1895 = vsel %vm430, %v1876, 0
      %v1897 = vsel %vm434, %v1893, 0
      %1899 = vmatprep.subr.mxu0 0.0
      %1900 = vmatpush1.msra.mxu0 %v1897
      %1901 = vmatprep.subr.mxu0 0.0
      %1902 = vmatpush1.msra.mxu0 0.0
      %1903 = vmatprep.subr.mxu0 0.0
      %1904 = vmatpush1.msra.mxu0 0.0
      %1905 = vmatprep.subr.mxu0 0.0
      %1906 = vmatpush1.msra.mxu0 0.0
      %1907 = vmatprep.subr.mxu0 0.0
      %1908 = vmatpush1.msra.mxu0 0.0
      %1909 = vmatprep.subr.mxu0 0.0
      %1910 = vmatpush1.msra.mxu0 0.0
      %1911 = vmatprep.subr.mxu0 0.0
      %1912 = vmatpush1.msra.mxu0 0.0
      %1913 = vmatprep.subr.mxu0 0.0
      %1914 = vmatpush1.msra.mxu0 0.0
      %1915 = vmatprep.subr.mxu0 0.0
      %1916 = vmatpush1.msra.mxu0 0.0
      %1917 = vmatprep.subr.mxu0 0.0
      %1918 = vmatpush1.msra.mxu0 0.0
      %1919 = vmatprep.subr.mxu0 0.0
      %1920 = vmatpush1.msra.mxu0 0.0
      %1921 = vmatprep.subr.mxu0 0.0
      %1922 = vmatpush1.msra.mxu0 0.0
      %1923 = vmatprep.subr.mxu0 0.0
      %1924 = vmatpush1.msra.mxu0 0.0
      %1925 = vmatprep.subr.mxu0 0.0
      %1926 = vmatpush1.msra.mxu0 0.0
      %1927 = vmatprep.subr.mxu0 0.0
      %1928 = vmatpush1.msra.mxu0 0.0
      %1929 = vmatprep.subr.mxu0 0.0
      %1930 = vmatpush1.msra.mxu0 0.0
      %1931 = vmatprep.subr.mxu0 0.0
      %1932 = vmatpush1.msra.mxu0 0.0
      %1933 = vmatprep.subr.mxu0 0.0
      %1934 = vmatpush1.msra.mxu0 0.0
      %1935 = vmatprep.subr.mxu0 0.0
      %1936 = vmatpush1.msra.mxu0 0.0
      %1937 = vmatprep.subr.mxu0 0.0
      %1938 = vmatpush1.msra.mxu0 0.0
      %1939 = vmatprep.subr.mxu0 0.0
      %1940 = vmatpush1.msra.mxu0 0.0
      %1941 = vmatprep.subr.mxu0 0.0
      %1942 = vmatpush1.msra.mxu0 0.0
      %1943 = vmatprep.subr.mxu0 0.0
      %1944 = vmatpush1.msra.mxu0 0.0
      %1945 = vmatprep.subr.mxu0 0.0
      %1946 = vmatpush1.msra.mxu0 0.0
      %1947 = vmatprep.subr.mxu0 0.0
      %1948 = vmatpush1.msra.mxu0 0.0
      %1949 = vmatprep.subr.mxu0 0.0
      %1950 = vmatpush1.msra.mxu0 0.0
      %1951 = vmatprep.subr.mxu0 0.0
      %1952 = vmatpush1.msra.mxu0 0.0
      %1953 = vmatprep.subr.mxu0 0.0
      %1954 = vmatpush1.msra.mxu0 0.0
      %1955 = vmatprep.subr.mxu0 0.0
      %1956 = vmatpush1.msra.mxu0 0.0
      %1957 = vmatprep.subr.mxu0 0.0
      %1958 = vmatpush1.msra.mxu0 0.0
      %1959 = vmatprep.subr.mxu0 0.0
      %1960 = vmatpush1.msra.mxu0 0.0
      %1961 = vmatprep.subr.mxu0 0.0
      %1962 = vmatpush1.msra.mxu0 0.0
      %1963 = vmatprep.mubr.f32.mxu0 0.0
      %1964 = vmatmul.mubr.f32.gmra.mrb[0].mxu0 %v1895
      %v1965 = vpop.f32.mrb[0].mxu0
      %v1966 = vadd.f32 0.0, %v1965
      %v1967 = vpop.f32.mrb[0].mxu0
      %1968 = vdwg.mxu0
      %v1969 = vadd.f32 %v1856, %v1966
      %1970 = vrot.lane.b32.xlu0 %v273, 16
      %v1971 = vpop.permute.xlu0 %1970
      %1973 = vxpose.xlu0.b32.start [1/16] %v1971, 128
      %1974 = vxpose.xlu0.b32.cont [2/16] 0.0, 128
      %1975 = vxpose.xlu0.b32.cont [3/16] 0.0, 128
      %1976 = vxpose.xlu0.b32.cont [4/16] 0.0, 128
      %1977 = vxpose.xlu0.b32.cont [5/16] 0.0, 128
      %1978 = vxpose.xlu0.b32.cont [6/16] 0.0, 128
      %1979 = vxpose.xlu0.b32.cont [7/16] 0.0, 128
      %1980 = vxpose.xlu0.b32.cont [8/16] 0.0, 128
      %1981 = vxpose.xlu0.b32.cont [9/16] 0.0, 128
      %1982 = vxpose.xlu0.b32.cont [10/16] 0.0, 128
      %1983 = vxpose.xlu0.b32.cont [11/16] 0.0, 128
      %1984 = vxpose.xlu0.b32.cont [12/16] 0.0, 128
      %1985 = vxpose.xlu0.b32.cont [13/16] 0.0, 128
      %1986 = vxpose.xlu0.b32.cont [14/16] 0.0, 128
      %1987 = vxpose.xlu0.b32.cont [15/16] 0.0, 128
      %1988 = vxpose.xlu0.b32.end [16/16] 0.0, 128
      %v1989 = vpop.trf.xlu0
      %v1990 = vpop.trf.xlu0
      %v1991 = vpop.trf.xlu0
      %v1992 = vpop.trf.xlu0
      %v1993 = vpop.trf.xlu0
      %v1994 = vpop.trf.xlu0
      %v1995 = vpop.trf.xlu0
      %v1996 = vpop.trf.xlu0
      %v1997 = vpop.trf.xlu0
      %v1998 = vpop.trf.xlu0
      %v1999 = vpop.trf.xlu0
      %v2000 = vpop.trf.xlu0
      %v2001 = vpop.trf.xlu0
      %v2002 = vpop.trf.xlu0
      %v2003 = vpop.trf.xlu0
      %v2004 = vpop.trf.xlu0
      %2005 = vrot.lane.b32.xlu0 %v317, 16
      %v2006 = vpop.permute.xlu0 %2005
      %v2008 = vsel %vm430, %v1989, 0
      %v2010 = vsel %vm434, %v2006, 0
      %2012 = vmatprep.subr.mxu0 0.0
      %2013 = vmatpush1.msra.mxu0 %v2010
      %2014 = vmatprep.subr.mxu0 0.0
      %2015 = vmatpush1.msra.mxu0 0.0
      %2016 = vmatprep.subr.mxu0 0.0
      %2017 = vmatpush1.msra.mxu0 0.0
      %2018 = vmatprep.subr.mxu0 0.0
      %2019 = vmatpush1.msra.mxu0 0.0
      %2020 = vmatprep.subr.mxu0 0.0
      %2021 = vmatpush1.msra.mxu0 0.0
      %2022 = vmatprep.subr.mxu0 0.0
      %2023 = vmatpush1.msra.mxu0 0.0
      %2024 = vmatprep.subr.mxu0 0.0
      %2025 = vmatpush1.msra.mxu0 0.0
      %2026 = vmatprep.subr.mxu0 0.0
      %2027 = vmatpush1.msra.mxu0 0.0
      %2028 = vmatprep.subr.mxu0 0.0
      %2029 = vmatpush1.msra.mxu0 0.0
      %2030 = vmatprep.subr.mxu0 0.0
      %2031 = vmatpush1.msra.mxu0 0.0
      %2032 = vmatprep.subr.mxu0 0.0
      %2033 = vmatpush1.msra.mxu0 0.0
      %2034 = vmatprep.subr.mxu0 0.0
      %2035 = vmatpush1.msra.mxu0 0.0
      %2036 = vmatprep.subr.mxu0 0.0
      %2037 = vmatpush1.msra.mxu0 0.0
      %2038 = vmatprep.subr.mxu0 0.0
      %2039 = vmatpush1.msra.mxu0 0.0
      %2040 = vmatprep.subr.mxu0 0.0
      %2041 = vmatpush1.msra.mxu0 0.0
      %2042 = vmatprep.subr.mxu0 0.0
      %2043 = vmatpush1.msra.mxu0 0.0
      %2044 = vmatprep.subr.mxu0 0.0
      %2045 = vmatpush1.msra.mxu0 0.0
      %2046 = vmatprep.subr.mxu0 0.0
      %2047 = vmatpush1.msra.mxu0 0.0
      %2048 = vmatprep.subr.mxu0 0.0
      %2049 = vmatpush1.msra.mxu0 0.0
      %2050 = vmatprep.subr.mxu0 0.0
      %2051 = vmatpush1.msra.mxu0 0.0
      %2052 = vmatprep.subr.mxu0 0.0
      %2053 = vmatpush1.msra.mxu0 0.0
      %2054 = vmatprep.subr.mxu0 0.0
      %2055 = vmatpush1.msra.mxu0 0.0
      %2056 = vmatprep.subr.mxu0 0.0
      %2057 = vmatpush1.msra.mxu0 0.0
      %2058 = vmatprep.subr.mxu0 0.0
      %2059 = vmatpush1.msra.mxu0 0.0
      %2060 = vmatprep.subr.mxu0 0.0
      %2061 = vmatpush1.msra.mxu0 0.0
      %2062 = vmatprep.subr.mxu0 0.0
      %2063 = vmatpush1.msra.mxu0 0.0
      %2064 = vmatprep.subr.mxu0 0.0
      %2065 = vmatpush1.msra.mxu0 0.0
      %2066 = vmatprep.subr.mxu0 0.0
      %2067 = vmatpush1.msra.mxu0 0.0
      %2068 = vmatprep.subr.mxu0 0.0
      %2069 = vmatpush1.msra.mxu0 0.0
      %2070 = vmatprep.subr.mxu0 0.0
      %2071 = vmatpush1.msra.mxu0 0.0
      %2072 = vmatprep.subr.mxu0 0.0
      %2073 = vmatpush1.msra.mxu0 0.0
      %2074 = vmatprep.subr.mxu0 0.0
      %2075 = vmatpush1.msra.mxu0 0.0
      %2076 = vmatprep.mubr.f32.mxu0 0.0
      %2077 = vmatmul.mubr.f32.gmra.mrb[0].mxu0 %v2008
      %v2078 = vpop.f32.mrb[0].mxu0
      %v2079 = vadd.f32 0.0, %v2078
      %v2080 = vpop.f32.mrb[0].mxu0
      %2081 = vdwg.mxu0
      %v2082 = vadd.f32 %v1969, %v2079
      %2083 = vrot.lane.b32.xlu0 %v273, 8
      %v2084 = vpop.permute.xlu0 %2083
      %2086 = vxpose.xlu0.b32.start [1/16] %v2084, 128
      %2087 = vxpose.xlu0.b32.cont [2/16] 0.0, 128
      %2088 = vxpose.xlu0.b32.cont [3/16] 0.0, 128
      %2089 = vxpose.xlu0.b32.cont [4/16] 0.0, 128
      %2090 = vxpose.xlu0.b32.cont [5/16] 0.0, 128
      %2091 = vxpose.xlu0.b32.cont [6/16] 0.0, 128
      %2092 = vxpose.xlu0.b32.cont [7/16] 0.0, 128
      %2093 = vxpose.xlu0.b32.cont [8/16] 0.0, 128
      %2094 = vxpose.xlu0.b32.cont [9/16] 0.0, 128
      %2095 = vxpose.xlu0.b32.cont [10/16] 0.0, 128
      %2096 = vxpose.xlu0.b32.cont [11/16] 0.0, 128
      %2097 = vxpose.xlu0.b32.cont [12/16] 0.0, 128
      %2098 = vxpose.xlu0.b32.cont [13/16] 0.0, 128
      %2099 = vxpose.xlu0.b32.cont [14/16] 0.0, 128
      %2100 = vxpose.xlu0.b32.cont [15/16] 0.0, 128
      %2101 = vxpose.xlu0.b32.end [16/16] 0.0, 128
      %v2102 = vpop.trf.xlu0
      %v2103 = vpop.trf.xlu0
      %v2104 = vpop.trf.xlu0
      %v2105 = vpop.trf.xlu0
      %v2106 = vpop.trf.xlu0
      %v2107 = vpop.trf.xlu0
      %v2108 = vpop.trf.xlu0
      %v2109 = vpop.trf.xlu0
      %v2110 = vpop.trf.xlu0
      %v2111 = vpop.trf.xlu0
      %v2112 = vpop.trf.xlu0
      %v2113 = vpop.trf.xlu0
      %v2114 = vpop.trf.xlu0
      %v2115 = vpop.trf.xlu0
      %v2116 = vpop.trf.xlu0
      %v2117 = vpop.trf.xlu0
      %2118 = vrot.lane.b32.xlu0 %v317, 8
      %v2119 = vpop.permute.xlu0 %2118
      %v2121 = vsel %vm430, %v2102, 0
      %v2123 = vsel %vm434, %v2119, 0
      %2125 = vmatprep.subr.mxu0 0.0
      %2126 = vmatpush1.msra.mxu0 %v2123
      %2127 = vmatprep.subr.mxu0 0.0
      %2128 = vmatpush1.msra.mxu0 0.0
      %2129 = vmatprep.subr.mxu0 0.0
      %2130 = vmatpush1.msra.mxu0 0.0
      %2131 = vmatprep.subr.mxu0 0.0
      %2132 = vmatpush1.msra.mxu0 0.0
      %2133 = vmatprep.subr.mxu0 0.0
      %2134 = vmatpush1.msra.mxu0 0.0
      %2135 = vmatprep.subr.mxu0 0.0
      %2136 = vmatpush1.msra.mxu0 0.0
      %2137 = vmatprep.subr.mxu0 0.0
      %2138 = vmatpush1.msra.mxu0 0.0
      %2139 = vmatprep.subr.mxu0 0.0
      %2140 = vmatpush1.msra.mxu0 0.0
      %2141 = vmatprep.subr.mxu0 0.0
      %2142 = vmatpush1.msra.mxu0 0.0
      %2143 = vmatprep.subr.mxu0 0.0
      %2144 = vmatpush1.msra.mxu0 0.0
      %2145 = vmatprep.subr.mxu0 0.0
      %2146 = vmatpush1.msra.mxu0 0.0
      %2147 = vmatprep.subr.mxu0 0.0
      %2148 = vmatpush1.msra.mxu0 0.0
      %2149 = vmatprep.subr.mxu0 0.0
      %2150 = vmatpush1.msra.mxu0 0.0
      %2151 = vmatprep.subr.mxu0 0.0
      %2152 = vmatpush1.msra.mxu0 0.0
      %2153 = vmatprep.subr.mxu0 0.0
      %2154 = vmatpush1.msra.mxu0 0.0
      %2155 = vmatprep.subr.mxu0 0.0
      %2156 = vmatpush1.msra.mxu0 0.0
      %2157 = vmatprep.subr.mxu0 0.0
      %2158 = vmatpush1.msra.mxu0 0.0
      %2159 = vmatprep.subr.mxu0 0.0
      %2160 = vmatpush1.msra.mxu0 0.0
      %2161 = vmatprep.subr.mxu0 0.0
      %2162 = vmatpush1.msra.mxu0 0.0
      %2163 = vmatprep.subr.mxu0 0.0
      %2164 = vmatpush1.msra.mxu0 0.0
      %2165 = vmatprep.subr.mxu0 0.0
      %2166 = vmatpush1.msra.mxu0 0.0
      %2167 = vmatprep.subr.mxu0 0.0
      %2168 = vmatpush1.msra.mxu0 0.0
      %2169 = vmatprep.subr.mxu0 0.0
      %2170 = vmatpush1.msra.mxu0 0.0
      %2171 = vmatprep.subr.mxu0 0.0
      %2172 = vmatpush1.msra.mxu0 0.0
      %2173 = vmatprep.subr.mxu0 0.0
      %2174 = vmatpush1.msra.mxu0 0.0
      %2175 = vmatprep.subr.mxu0 0.0
      %2176 = vmatpush1.msra.mxu0 0.0
      %2177 = vmatprep.subr.mxu0 0.0
      %2178 = vmatpush1.msra.mxu0 0.0
      %2179 = vmatprep.subr.mxu0 0.0
      %2180 = vmatpush1.msra.mxu0 0.0
      %2181 = vmatprep.subr.mxu0 0.0
      %2182 = vmatpush1.msra.mxu0 0.0
      %2183 = vmatprep.subr.mxu0 0.0
      %2184 = vmatpush1.msra.mxu0 0.0
      %2185 = vmatprep.subr.mxu0 0.0
      %2186 = vmatpush1.msra.mxu0 0.0
      %2187 = vmatprep.subr.mxu0 0.0
      %2188 = vmatpush1.msra.mxu0 0.0
      %2189 = vmatprep.mubr.f32.mxu0 0.0
      %2190 = vmatmul.mubr.f32.gmra.mrb[0].mxu0 %v2121
      %v2191 = vpop.f32.mrb[0].mxu0
      %v2192 = vadd.f32 0.0, %v2191
      %v2193 = vpop.f32.mrb[0].mxu0
      %2194 = vdwg.mxu0
      %v2195 = vadd.f32 %v2082, %v2192
      %v2196 = vsub.f32 0.0, %v2195
      %v2197 = vmul.f32 %v2196, 1.442695
      %v2198 = vpow.pop %v2197
      %v2199 = vadd.f32 %v2198, 1.0
      %v2200 = vrcp.pop %v2199
      %v2201 = vpack.c.bf16 %v2200, %v2200
      %v2202 = vpack.c.bf16 %v380, %v377
      %v2203 = vpack.c.bf16 %v388, %v385
      %vm2204 = vcmask 64512
      %v2206 = vsel %vm2204, %v2202, 0
      %v2209 = vsel %vm2204, %v2203, 0
      %v2212 = vsel %vm2204, %v2201, 0
      %2214 = vmatprep.subr.bf16.mxu0 0
      %2215 = vmatpush1.bf16.xpose.msra.mxu0 %v2212
      %2216 = vmatprep.subr.bf16.mxu0 0
      %2217 = vmatpush1.bf16.xpose.msra.mxu0 0
      %2218 = vmatprep.subr.bf16.mxu0 0
      %2219 = vmatpush1.bf16.xpose.msra.mxu0 0
      %2220 = vmatprep.subr.bf16.mxu0 0
      %2221 = vmatpush1.bf16.xpose.msra.mxu0 0
      %2222 = vmatprep.subr.bf16.mxu0 0
      %2223 = vmatpush1.bf16.xpose.msra.mxu0 0
      %2224 = vmatprep.subr.bf16.mxu0 0
      %2225 = vmatpush1.bf16.xpose.msra.mxu0 0
      %2226 = vmatprep.subr.bf16.mxu0 0
      %2227 = vmatpush1.bf16.xpose.msra.mxu0 0
      %2228 = vmatprep.subr.bf16.mxu0 0
      %2229 = vmatpush1.bf16.xpose.msra.mxu0 0
      %2230 = vmatprep.subr.bf16.mxu0 0
      %2231 = vmatpush1.bf16.xpose.msra.mxu0 0
      %2232 = vmatprep.subr.bf16.mxu0 0
      %2233 = vmatpush1.bf16.xpose.msra.mxu0 0
      %2234 = vmatprep.subr.bf16.mxu0 0
      %2235 = vmatpush1.bf16.xpose.msra.mxu0 0
      %2236 = vmatprep.subr.bf16.mxu0 0
      %2237 = vmatpush1.bf16.xpose.msra.mxu0 0
      %2238 = vmatprep.subr.bf16.mxu0 0
      %2239 = vmatpush1.bf16.xpose.msra.mxu0 0
      %2240 = vmatprep.subr.bf16.mxu0 0
      %2241 = vmatpush1.bf16.xpose.msra.mxu0 0
      %2242 = vmatprep.subr.bf16.mxu0 0
      %2243 = vmatpush1.bf16.xpose.msra.mxu0 0
      %2244 = vmatprep.subr.bf16.mxu0 0
      %2245 = vmatpush1.bf16.xpose.msra.mxu0 0
      %2246 = vmatprep.mubr.bf16.mxu0 0
      %2247 = vmatmul.mubr.bf16.gmra.mrb[0].mxu0 %v2206
      %v2248 = vpop.f32.mrb[0].mxu0
      %v2249 = vadd.f32 0.0, %v2248
      %v2250 = vpop.f32.mrb[0].mxu0
      %v2251 = vpop.f32.mrb[0].mxu0
      %v2252 = vadd.f32 0.0, %v2251
      %v2253 = vpop.f32.mrb[0].mxu0
      %2254 = vmatprep.mubr.bf16.mxu0 0
      %2255 = vmatmul.mubr.bf16.gmra.mrb[0].mxu0 %v2209
      %v2256 = vpop.f32.mrb[0].mxu0
      %v2257 = vadd.f32 0.0, %v2256
      %v2258 = vpop.f32.mrb[0].mxu0
      %v2259 = vpop.f32.mrb[0].mxu0
      %v2260 = vadd.f32 0.0, %v2259
      %v2261 = vpop.f32.mrb[0].mxu0
      %2262 = vdwg.mxu0
      %2265 = vrot.lane.b32.xlu0 %v2202, 120
      %v2266 = vpop.permute.xlu0 %2265
      %2267 = vrot.lane.b32.xlu0 %v2203, 120
      %v2268 = vpop.permute.xlu0 %2267
      %v2270 = vsel %vm2204, %v2266, 0
      %v2273 = vsel %vm2204, %v2268, 0
      %2275 = vmatprep.subr.bf16.mxu0 0
      %2276 = vmatpush1.bf16.xpose.msra.mxu0 %v2212
      %2277 = vmatprep.subr.bf16.mxu0 0
      %2278 = vmatpush1.bf16.xpose.msra.mxu0 0
      %2279 = vmatprep.subr.bf16.mxu0 0
      %2280 = vmatpush1.bf16.xpose.msra.mxu0 0
      %2281 = vmatprep.subr.bf16.mxu0 0
      %2282 = vmatpush1.bf16.xpose.msra.mxu0 0
      %2283 = vmatprep.subr.bf16.mxu0 0
      %2284 = vmatpush1.bf16.xpose.msra.mxu0 0
      %2285 = vmatprep.subr.bf16.mxu0 0
      %2286 = vmatpush1.bf16.xpose.msra.mxu0 0
      %2287 = vmatprep.subr.bf16.mxu0 0
      %2288 = vmatpush1.bf16.xpose.msra.mxu0 0
      %2289 = vmatprep.subr.bf16.mxu0 0
      %2290 = vmatpush1.bf16.xpose.msra.mxu0 0
      %2291 = vmatprep.subr.bf16.mxu0 0
      %2292 = vmatpush1.bf16.xpose.msra.mxu0 0
      %2293 = vmatprep.subr.bf16.mxu0 0
      %2294 = vmatpush1.bf16.xpose.msra.mxu0 0
      %2295 = vmatprep.subr.bf16.mxu0 0
      %2296 = vmatpush1.bf16.xpose.msra.mxu0 0
      %2297 = vmatprep.subr.bf16.mxu0 0
      %2298 = vmatpush1.bf16.xpose.msra.mxu0 0
      %2299 = vmatprep.subr.bf16.mxu0 0
      %2300 = vmatpush1.bf16.xpose.msra.mxu0 0
      %2301 = vmatprep.subr.bf16.mxu0 0
      %2302 = vmatpush1.bf16.xpose.msra.mxu0 0
      %2303 = vmatprep.subr.bf16.mxu0 0
      %2304 = vmatpush1.bf16.xpose.msra.mxu0 0
      %2305 = vmatprep.subr.bf16.mxu0 0
      %2306 = vmatpush1.bf16.xpose.msra.mxu0 0
      %2307 = vmatprep.mubr.bf16.mxu0 0
      %2308 = vmatmul.mubr.bf16.gmra.mrb[0].mxu0 %v2270
      %v2309 = vpop.f32.mrb[0].mxu0
      %v2310 = vadd.f32 0.0, %v2309
      %v2311 = vpop.f32.mrb[0].mxu0
      %v2312 = vpop.f32.mrb[0].mxu0
      %v2313 = vadd.f32 0.0, %v2312
      %v2314 = vpop.f32.mrb[0].mxu0
      %2315 = vmatprep.mubr.bf16.mxu0 0
      %2316 = vmatmul.mubr.bf16.gmra.mrb[0].mxu0 %v2273
      %v2317 = vpop.f32.mrb[0].mxu0
      %v2318 = vadd.f32 0.0, %v2317
      %v2319 = vpop.f32.mrb[0].mxu0
      %v2320 = vpop.f32.mrb[0].mxu0
      %v2321 = vadd.f32 0.0, %v2320
      %v2322 = vpop.f32.mrb[0].mxu0
      %2323 = vdwg.mxu0
      %2324 = vrot.lane.b32.xlu0 %v2202, 112
      %v2325 = vpop.permute.xlu0 %2324
      %2326 = vrot.lane.b32.xlu0 %v2203, 112
      %v2327 = vpop.permute.xlu0 %2326
      %v2329 = vsel %vm2204, %v2325, 0
      %v2332 = vsel %vm2204, %v2327, 0
      %2334 = vmatprep.subr.bf16.mxu0 0
      %2335 = vmatpush1.bf16.xpose.msra.mxu0 %v2212
      %2336 = vmatprep.subr.bf16.mxu0 0
      %2337 = vmatpush1.bf16.xpose.msra.mxu0 0
      %2338 = vmatprep.subr.bf16.mxu0 0
      %2339 = vmatpush1.bf16.xpose.msra.mxu0 0
      %2340 = vmatprep.subr.bf16.mxu0 0
      %2341 = vmatpush1.bf16.xpose.msra.mxu0 0
      %2342 = vmatprep.subr.bf16.mxu0 0
      %2343 = vmatpush1.bf16.xpose.msra.mxu0 0
      %2344 = vmatprep.subr.bf16.mxu0 0
      %2345 = vmatpush1.bf16.xpose.msra.mxu0 0
      %2346 = vmatprep.subr.bf16.mxu0 0
      %2347 = vmatpush1.bf16.xpose.msra.mxu0 0
      %2348 = vmatprep.subr.bf16.mxu0 0
      %2349 = vmatpush1.bf16.xpose.msra.mxu0 0
      %2350 = vmatprep.subr.bf16.mxu0 0
      %2351 = vmatpush1.bf16.xpose.msra.mxu0 0
      %2352 = vmatprep.subr.bf16.mxu0 0
      %2353 = vmatpush1.bf16.xpose.msra.mxu0 0
      %2354 = vmatprep.subr.bf16.mxu0 0
      %2355 = vmatpush1.bf16.xpose.msra.mxu0 0
      %2356 = vmatprep.subr.bf16.mxu0 0
      %2357 = vmatpush1.bf16.xpose.msra.mxu0 0
      %2358 = vmatprep.subr.bf16.mxu0 0
      %2359 = vmatpush1.bf16.xpose.msra.mxu0 0
      %2360 = vmatprep.subr.bf16.mxu0 0
      %2361 = vmatpush1.bf16.xpose.msra.mxu0 0
      %2362 = vmatprep.subr.bf16.mxu0 0
      %2363 = vmatpush1.bf16.xpose.msra.mxu0 0
      %2364 = vmatprep.subr.bf16.mxu0 0
      %2365 = vmatpush1.bf16.xpose.msra.mxu0 0
      %2366 = vmatprep.mubr.bf16.mxu0 0
      %2367 = vmatmul.mubr.bf16.gmra.mrb[0].mxu0 %v2329
      %v2368 = vpop.f32.mrb[0].mxu0
      %v2369 = vadd.f32 0.0, %v2368
      %v2370 = vpop.f32.mrb[0].mxu0
      %v2371 = vpop.f32.mrb[0].mxu0
      %v2372 = vadd.f32 0.0, %v2371
      %v2373 = vpop.f32.mrb[0].mxu0
      %2374 = vmatprep.mubr.bf16.mxu0 0
      %2375 = vmatmul.mubr.bf16.gmra.mrb[0].mxu0 %v2332
      %v2376 = vpop.f32.mrb[0].mxu0
      %v2377 = vadd.f32 0.0, %v2376
      %v2378 = vpop.f32.mrb[0].mxu0
      %v2379 = vpop.f32.mrb[0].mxu0
      %v2380 = vadd.f32 0.0, %v2379
      %v2381 = vpop.f32.mrb[0].mxu0
      %2382 = vdwg.mxu0
      %2383 = vrot.lane.b32.xlu0 %v2202, 104
      %v2384 = vpop.permute.xlu0 %2383
      %2385 = vrot.lane.b32.xlu0 %v2203, 104
      %v2386 = vpop.permute.xlu0 %2385
      %v2388 = vsel %vm2204, %v2384, 0
      %v2391 = vsel %vm2204, %v2386, 0
      %2393 = vmatprep.subr.bf16.mxu0 0
      %2394 = vmatpush1.bf16.xpose.msra.mxu0 %v2212
      %2395 = vmatprep.subr.bf16.mxu0 0
      %2396 = vmatpush1.bf16.xpose.msra.mxu0 0
      %2397 = vmatprep.subr.bf16.mxu0 0
      %2398 = vmatpush1.bf16.xpose.msra.mxu0 0
      %2399 = vmatprep.subr.bf16.mxu0 0
      %2400 = vmatpush1.bf16.xpose.msra.mxu0 0
      %2401 = vmatprep.subr.bf16.mxu0 0
      %2402 = vmatpush1.bf16.xpose.msra.mxu0 0
      %2403 = vmatprep.subr.bf16.mxu0 0
      %2404 = vmatpush1.bf16.xpose.msra.mxu0 0
      %2405 = vmatprep.subr.bf16.mxu0 0
      %2406 = vmatpush1.bf16.xpose.msra.mxu0 0
      %2407 = vmatprep.subr.bf16.mxu0 0
      %2408 = vmatpush1.bf16.xpose.msra.mxu0 0
      %2409 = vmatprep.subr.bf16.mxu0 0
      %2410 = vmatpush1.bf16.xpose.msra.mxu0 0
      %2411 = vmatprep.subr.bf16.mxu0 0
      %2412 = vmatpush1.bf16.xpose.msra.mxu0 0
      %2413 = vmatprep.subr.bf16.mxu0 0
      %2414 = vmatpush1.bf16.xpose.msra.mxu0 0
      %2415 = vmatprep.subr.bf16.mxu0 0
      %2416 = vmatpush1.bf16.xpose.msra.mxu0 0
      %2417 = vmatprep.subr.bf16.mxu0 0
      %2418 = vmatpush1.bf16.xpose.msra.mxu0 0
      %2419 = vmatprep.subr.bf16.mxu0 0
      %2420 = vmatpush1.bf16.xpose.msra.mxu0 0
      %2421 = vmatprep.subr.bf16.mxu0 0
      %2422 = vmatpush1.bf16.xpose.msra.mxu0 0
      %2423 = vmatprep.subr.bf16.mxu0 0
      %2424 = vmatpush1.bf16.xpose.msra.mxu0 0
      %2425 = vmatprep.mubr.bf16.mxu0 0
      %2426 = vmatmul.mubr.bf16.gmra.mrb[0].mxu0 %v2388
      %v2427 = vpop.f32.mrb[0].mxu0
      %v2428 = vadd.f32 0.0, %v2427
      %v2429 = vpop.f32.mrb[0].mxu0
      %v2430 = vpop.f32.mrb[0].mxu0
      %v2431 = vadd.f32 0.0, %v2430
      %v2432 = vpop.f32.mrb[0].mxu0
      %2433 = vmatprep.mubr.bf16.mxu0 0
      %2434 = vmatmul.mubr.bf16.gmra.mrb[0].mxu0 %v2391
      %v2435 = vpop.f32.mrb[0].mxu0
      %v2436 = vadd.f32 0.0, %v2435
      %v2437 = vpop.f32.mrb[0].mxu0
      %v2438 = vpop.f32.mrb[0].mxu0
      %v2439 = vadd.f32 0.0, %v2438
      %v2440 = vpop.f32.mrb[0].mxu0
      %2441 = vdwg.mxu0
      %2442 = vrot.lane.b32.xlu0 %v2202, 96
      %v2443 = vpop.permute.xlu0 %2442
      %2444 = vrot.lane.b32.xlu0 %v2203, 96
      %v2445 = vpop.permute.xlu0 %2444
      %v2447 = vsel %vm2204, %v2443, 0
      %v2450 = vsel %vm2204, %v2445, 0
      %2452 = vmatprep.subr.bf16.mxu0 0
      %2453 = vmatpush1.bf16.xpose.msra.mxu0 %v2212
      %2454 = vmatprep.subr.bf16.mxu0 0
      %2455 = vmatpush1.bf16.xpose.msra.mxu0 0
      %2456 = vmatprep.subr.bf16.mxu0 0
      %2457 = vmatpush1.bf16.xpose.msra.mxu0 0
      %2458 = vmatprep.subr.bf16.mxu0 0
      %2459 = vmatpush1.bf16.xpose.msra.mxu0 0
      %2460 = vmatprep.subr.bf16.mxu0 0
      %2461 = vmatpush1.bf16.xpose.msra.mxu0 0
      %2462 = vmatprep.subr.bf16.mxu0 0
      %2463 = vmatpush1.bf16.xpose.msra.mxu0 0
      %2464 = vmatprep.subr.bf16.mxu0 0
      %2465 = vmatpush1.bf16.xpose.msra.mxu0 0
      %2466 = vmatprep.subr.bf16.mxu0 0
      %2467 = vmatpush1.bf16.xpose.msra.mxu0 0
      %2468 = vmatprep.subr.bf16.mxu0 0
      %2469 = vmatpush1.bf16.xpose.msra.mxu0 0
      %2470 = vmatprep.subr.bf16.mxu0 0
      %2471 = vmatpush1.bf16.xpose.msra.mxu0 0
      %2472 = vmatprep.subr.bf16.mxu0 0
      %2473 = vmatpush1.bf16.xpose.msra.mxu0 0
      %2474 = vmatprep.subr.bf16.mxu0 0
      %2475 = vmatpush1.bf16.xpose.msra.mxu0 0
      %2476 = vmatprep.subr.bf16.mxu0 0
      %2477 = vmatpush1.bf16.xpose.msra.mxu0 0
      %2478 = vmatprep.subr.bf16.mxu0 0
      %2479 = vmatpush1.bf16.xpose.msra.mxu0 0
      %2480 = vmatprep.subr.bf16.mxu0 0
      %2481 = vmatpush1.bf16.xpose.msra.mxu0 0
      %2482 = vmatprep.subr.bf16.mxu0 0
      %2483 = vmatpush1.bf16.xpose.msra.mxu0 0
      %2484 = vmatprep.mubr.bf16.mxu0 0
      %2485 = vmatmul.mubr.bf16.gmra.mrb[0].mxu0 %v2447
      %v2486 = vpop.f32.mrb[0].mxu0
      %v2487 = vadd.f32 0.0, %v2486
      %v2488 = vpop.f32.mrb[0].mxu0
      %v2489 = vpop.f32.mrb[0].mxu0
      %v2490 = vadd.f32 0.0, %v2489
      %v2491 = vpop.f32.mrb[0].mxu0
      %2492 = vmatprep.mubr.bf16.mxu0 0
      %2493 = vmatmul.mubr.bf16.gmra.mrb[0].mxu0 %v2450
      %v2494 = vpop.f32.mrb[0].mxu0
      %v2495 = vadd.f32 0.0, %v2494
      %v2496 = vpop.f32.mrb[0].mxu0
      %v2497 = vpop.f32.mrb[0].mxu0
      %v2498 = vadd.f32 0.0, %v2497
      %v2499 = vpop.f32.mrb[0].mxu0
      %2500 = vdwg.mxu0
      %2501 = vrot.lane.b32.xlu0 %v2202, 88
      %v2502 = vpop.permute.xlu0 %2501
      %2503 = vrot.lane.b32.xlu0 %v2203, 88
      %v2504 = vpop.permute.xlu0 %2503
      %v2506 = vsel %vm2204, %v2502, 0
      %v2509 = vsel %vm2204, %v2504, 0
      %2511 = vmatprep.subr.bf16.mxu0 0
      %2512 = vmatpush1.bf16.xpose.msra.mxu0 %v2212
      %2513 = vmatprep.subr.bf16.mxu0 0
      %2514 = vmatpush1.bf16.xpose.msra.mxu0 0
      %2515 = vmatprep.subr.bf16.mxu0 0
      %2516 = vmatpush1.bf16.xpose.msra.mxu0 0
      %2517 = vmatprep.subr.bf16.mxu0 0
      %2518 = vmatpush1.bf16.xpose.msra.mxu0 0
      %2519 = vmatprep.subr.bf16.mxu0 0
      %2520 = vmatpush1.bf16.xpose.msra.mxu0 0
      %2521 = vmatprep.subr.bf16.mxu0 0
      %2522 = vmatpush1.bf16.xpose.msra.mxu0 0
      %2523 = vmatprep.subr.bf16.mxu0 0
      %2524 = vmatpush1.bf16.xpose.msra.mxu0 0
      %2525 = vmatprep.subr.bf16.mxu0 0
      %2526 = vmatpush1.bf16.xpose.msra.mxu0 0
      %2527 = vmatprep.subr.bf16.mxu0 0
      %2528 = vmatpush1.bf16.xpose.msra.mxu0 0
      %2529 = vmatprep.subr.bf16.mxu0 0
      %2530 = vmatpush1.bf16.xpose.msra.mxu0 0
      %2531 = vmatprep.subr.bf16.mxu0 0
      %2532 = vmatpush1.bf16.xpose.msra.mxu0 0
      %2533 = vmatprep.subr.bf16.mxu0 0
      %2534 = vmatpush1.bf16.xpose.msra.mxu0 0
      %2535 = vmatprep.subr.bf16.mxu0 0
      %2536 = vmatpush1.bf16.xpose.msra.mxu0 0
      %2537 = vmatprep.subr.bf16.mxu0 0
      %2538 = vmatpush1.bf16.xpose.msra.mxu0 0
      %2539 = vmatprep.subr.bf16.mxu0 0
      %2540 = vmatpush1.bf16.xpose.msra.mxu0 0
      %2541 = vmatprep.subr.bf16.mxu0 0
      %2542 = vmatpush1.bf16.xpose.msra.mxu0 0
      %2543 = vmatprep.mubr.bf16.mxu0 0
      %2544 = vmatmul.mubr.bf16.gmra.mrb[0].mxu0 %v2506
      %v2545 = vpop.f32.mrb[0].mxu0
      %v2546 = vadd.f32 0.0, %v2545
      %v2547 = vpop.f32.mrb[0].mxu0
      %v2548 = vpop.f32.mrb[0].mxu0
      %v2549 = vadd.f32 0.0, %v2548
      %v2550 = vpop.f32.mrb[0].mxu0
      %2551 = vmatprep.mubr.bf16.mxu0 0
      %2552 = vmatmul.mubr.bf16.gmra.mrb[0].mxu0 %v2509
      %v2553 = vpop.f32.mrb[0].mxu0
      %v2554 = vadd.f32 0.0, %v2553
      %v2555 = vpop.f32.mrb[0].mxu0
      %v2556 = vpop.f32.mrb[0].mxu0
      %v2557 = vadd.f32 0.0, %v2556
      %v2558 = vpop.f32.mrb[0].mxu0
      %2559 = vdwg.mxu0
      %2560 = vrot.lane.b32.xlu0 %v2202, 80
      %v2561 = vpop.permute.xlu0 %2560
      %2562 = vrot.lane.b32.xlu0 %v2203, 80
      %v2563 = vpop.permute.xlu0 %2562
      %v2565 = vsel %vm2204, %v2561, 0
      %v2568 = vsel %vm2204, %v2563, 0
      %2570 = vmatprep.subr.bf16.mxu0 0
      %2571 = vmatpush1.bf16.xpose.msra.mxu0 %v2212
      %2572 = vmatprep.subr.bf16.mxu0 0
      %2573 = vmatpush1.bf16.xpose.msra.mxu0 0
      %2574 = vmatprep.subr.bf16.mxu0 0
      %2575 = vmatpush1.bf16.xpose.msra.mxu0 0
      %2576 = vmatprep.subr.bf16.mxu0 0
      %2577 = vmatpush1.bf16.xpose.msra.mxu0 0
      %2578 = vmatprep.subr.bf16.mxu0 0
      %2579 = vmatpush1.bf16.xpose.msra.mxu0 0
      %2580 = vmatprep.subr.bf16.mxu0 0
      %2581 = vmatpush1.bf16.xpose.msra.mxu0 0
      %2582 = vmatprep.subr.bf16.mxu0 0
      %2583 = vmatpush1.bf16.xpose.msra.mxu0 0
      %2584 = vmatprep.subr.bf16.mxu0 0
      %2585 = vmatpush1.bf16.xpose.msra.mxu0 0
      %2586 = vmatprep.subr.bf16.mxu0 0
      %2587 = vmatpush1.bf16.xpose.msra.mxu0 0
      %2588 = vmatprep.subr.bf16.mxu0 0
      %2589 = vmatpush1.bf16.xpose.msra.mxu0 0
      %2590 = vmatprep.subr.bf16.mxu0 0
      %2591 = vmatpush1.bf16.xpose.msra.mxu0 0
      %2592 = vmatprep.subr.bf16.mxu0 0
      %2593 = vmatpush1.bf16.xpose.msra.mxu0 0
      %2594 = vmatprep.subr.bf16.mxu0 0
      %2595 = vmatpush1.bf16.xpose.msra.mxu0 0
      %2596 = vmatprep.subr.bf16.mxu0 0
      %2597 = vmatpush1.bf16.xpose.msra.mxu0 0
      %2598 = vmatprep.subr.bf16.mxu0 0
      %2599 = vmatpush1.bf16.xpose.msra.mxu0 0
      %2600 = vmatprep.subr.bf16.mxu0 0
      %2601 = vmatpush1.bf16.xpose.msra.mxu0 0
      %2602 = vmatprep.mubr.bf16.mxu0 0
      %2603 = vmatmul.mubr.bf16.gmra.mrb[0].mxu0 %v2565
      %v2604 = vpop.f32.mrb[0].mxu0
      %v2605 = vadd.f32 0.0, %v2604
      %v2606 = vpop.f32.mrb[0].mxu0
      %v2607 = vpop.f32.mrb[0].mxu0
      %v2608 = vadd.f32 0.0, %v2607
      %v2609 = vpop.f32.mrb[0].mxu0
      %2610 = vmatprep.mubr.bf16.mxu0 0
      %2611 = vmatmul.mubr.bf16.gmra.mrb[0].mxu0 %v2568
      %v2612 = vpop.f32.mrb[0].mxu0
      %v2613 = vadd.f32 0.0, %v2612
      %v2614 = vpop.f32.mrb[0].mxu0
      %v2615 = vpop.f32.mrb[0].mxu0
      %v2616 = vadd.f32 0.0, %v2615
      %v2617 = vpop.f32.mrb[0].mxu0
      %2618 = vdwg.mxu0
      %2619 = vrot.lane.b32.xlu0 %v2202, 72
      %v2620 = vpop.permute.xlu0 %2619
      %2621 = vrot.lane.b32.xlu0 %v2203, 72
      %v2622 = vpop.permute.xlu0 %2621
      %v2624 = vsel %vm2204, %v2620, 0
      %v2627 = vsel %vm2204, %v2622, 0
      %2629 = vmatprep.subr.bf16.mxu0 0
      %2630 = vmatpush1.bf16.xpose.msra.mxu0 %v2212
      %2631 = vmatprep.subr.bf16.mxu0 0
      %2632 = vmatpush1.bf16.xpose.msra.mxu0 0
      %2633 = vmatprep.subr.bf16.mxu0 0
      %2634 = vmatpush1.bf16.xpose.msra.mxu0 0
      %2635 = vmatprep.subr.bf16.mxu0 0
      %2636 = vmatpush1.bf16.xpose.msra.mxu0 0
      %2637 = vmatprep.subr.bf16.mxu0 0
      %2638 = vmatpush1.bf16.xpose.msra.mxu0 0
      %2639 = vmatprep.subr.bf16.mxu0 0
      %2640 = vmatpush1.bf16.xpose.msra.mxu0 0
      %2641 = vmatprep.subr.bf16.mxu0 0
      %2642 = vmatpush1.bf16.xpose.msra.mxu0 0
      %2643 = vmatprep.subr.bf16.mxu0 0
      %2644 = vmatpush1.bf16.xpose.msra.mxu0 0
      %2645 = vmatprep.subr.bf16.mxu0 0
      %2646 = vmatpush1.bf16.xpose.msra.mxu0 0
      %2647 = vmatprep.subr.bf16.mxu0 0
      %2648 = vmatpush1.bf16.xpose.msra.mxu0 0
      %2649 = vmatprep.subr.bf16.mxu0 0
      %2650 = vmatpush1.bf16.xpose.msra.mxu0 0
      %2651 = vmatprep.subr.bf16.mxu0 0
      %2652 = vmatpush1.bf16.xpose.msra.mxu0 0
      %2653 = vmatprep.subr.bf16.mxu0 0
      %2654 = vmatpush1.bf16.xpose.msra.mxu0 0
      %2655 = vmatprep.subr.bf16.mxu0 0
      %2656 = vmatpush1.bf16.xpose.msra.mxu0 0
      %2657 = vmatprep.subr.bf16.mxu0 0
      %2658 = vmatpush1.bf16.xpose.msra.mxu0 0
      %2659 = vmatprep.subr.bf16.mxu0 0
      %2660 = vmatpush1.bf16.xpose.msra.mxu0 0
      %2661 = vmatprep.mubr.bf16.mxu0 0
      %2662 = vmatmul.mubr.bf16.gmra.mrb[0].mxu0 %v2624
      %v2663 = vpop.f32.mrb[0].mxu0
      %v2664 = vadd.f32 0.0, %v2663
      %v2665 = vpop.f32.mrb[0].mxu0
      %v2666 = vpop.f32.mrb[0].mxu0
      %v2667 = vadd.f32 0.0, %v2666
      %v2668 = vpop.f32.mrb[0].mxu0
      %2669 = vmatprep.mubr.bf16.mxu0 0
      %2670 = vmatmul.mubr.bf16.gmra.mrb[0].mxu0 %v2627
      %v2671 = vpop.f32.mrb[0].mxu0
      %v2672 = vadd.f32 0.0, %v2671
      %v2673 = vpop.f32.mrb[0].mxu0
      %v2674 = vpop.f32.mrb[0].mxu0
      %v2675 = vadd.f32 0.0, %v2674
      %v2676 = vpop.f32.mrb[0].mxu0
      %2677 = vdwg.mxu0
      %2678 = vrot.lane.b32.xlu0 %v2202, 64
      %v2679 = vpop.permute.xlu0 %2678
      %2680 = vrot.lane.b32.xlu0 %v2203, 64
      %v2681 = vpop.permute.xlu0 %2680
      %v2683 = vsel %vm2204, %v2679, 0
      %v2686 = vsel %vm2204, %v2681, 0
      %2688 = vmatprep.subr.bf16.mxu0 0
      %2689 = vmatpush1.bf16.xpose.msra.mxu0 %v2212
      %2690 = vmatprep.subr.bf16.mxu0 0
      %2691 = vmatpush1.bf16.xpose.msra.mxu0 0
      %2692 = vmatprep.subr.bf16.mxu0 0
      %2693 = vmatpush1.bf16.xpose.msra.mxu0 0
      %2694 = vmatprep.subr.bf16.mxu0 0
      %2695 = vmatpush1.bf16.xpose.msra.mxu0 0
      %2696 = vmatprep.subr.bf16.mxu0 0
      %2697 = vmatpush1.bf16.xpose.msra.mxu0 0
      %2698 = vmatprep.subr.bf16.mxu0 0
      %2699 = vmatpush1.bf16.xpose.msra.mxu0 0
      %2700 = vmatprep.subr.bf16.mxu0 0
      %2701 = vmatpush1.bf16.xpose.msra.mxu0 0
      %2702 = vmatprep.subr.bf16.mxu0 0
      %2703 = vmatpush1.bf16.xpose.msra.mxu0 0
      %2704 = vmatprep.subr.bf16.mxu0 0
      %2705 = vmatpush1.bf16.xpose.msra.mxu0 0
      %2706 = vmatprep.subr.bf16.mxu0 0
      %2707 = vmatpush1.bf16.xpose.msra.mxu0 0
      %2708 = vmatprep.subr.bf16.mxu0 0
      %2709 = vmatpush1.bf16.xpose.msra.mxu0 0
      %2710 = vmatprep.subr.bf16.mxu0 0
      %2711 = vmatpush1.bf16.xpose.msra.mxu0 0
      %2712 = vmatprep.subr.bf16.mxu0 0
      %2713 = vmatpush1.bf16.xpose.msra.mxu0 0
      %2714 = vmatprep.subr.bf16.mxu0 0
      %2715 = vmatpush1.bf16.xpose.msra.mxu0 0
      %2716 = vmatprep.subr.bf16.mxu0 0
      %2717 = vmatpush1.bf16.xpose.msra.mxu0 0
      %2718 = vmatprep.subr.bf16.mxu0 0
      %2719 = vmatpush1.bf16.xpose.msra.mxu0 0
      %2720 = vmatprep.mubr.bf16.mxu0 0
      %2721 = vmatmul.mubr.bf16.gmra.mrb[0].mxu0 %v2683
      %v2722 = vpop.f32.mrb[0].mxu0
      %v2723 = vadd.f32 0.0, %v2722
      %v2724 = vpop.f32.mrb[0].mxu0
      %v2725 = vpop.f32.mrb[0].mxu0
      %v2726 = vadd.f32 0.0, %v2725
      %v2727 = vpop.f32.mrb[0].mxu0
      %2728 = vmatprep.mubr.bf16.mxu0 0
      %2729 = vmatmul.mubr.bf16.gmra.mrb[0].mxu0 %v2686
      %v2730 = vpop.f32.mrb[0].mxu0
      %v2731 = vadd.f32 0.0, %v2730
      %v2732 = vpop.f32.mrb[0].mxu0
      %v2733 = vpop.f32.mrb[0].mxu0
      %v2734 = vadd.f32 0.0, %v2733
      %v2735 = vpop.f32.mrb[0].mxu0
      %2736 = vdwg.mxu0
      %2737 = vrot.lane.b32.xlu0 %v2202, 56
      %v2738 = vpop.permute.xlu0 %2737
      %2739 = vrot.lane.b32.xlu0 %v2203, 56
      %v2740 = vpop.permute.xlu0 %2739
      %v2742 = vsel %vm2204, %v2738, 0
      %v2745 = vsel %vm2204, %v2740, 0
      %2747 = vmatprep.subr.bf16.mxu0 0
      %2748 = vmatpush1.bf16.xpose.msra.mxu0 %v2212
      %2749 = vmatprep.subr.bf16.mxu0 0
      %2750 = vmatpush1.bf16.xpose.msra.mxu0 0
      %2751 = vmatprep.subr.bf16.mxu0 0
      %2752 = vmatpush1.bf16.xpose.msra.mxu0 0
      %2753 = vmatprep.subr.bf16.mxu0 0
      %2754 = vmatpush1.bf16.xpose.msra.mxu0 0
      %2755 = vmatprep.subr.bf16.mxu0 0
      %2756 = vmatpush1.bf16.xpose.msra.mxu0 0
      %2757 = vmatprep.subr.bf16.mxu0 0
      %2758 = vmatpush1.bf16.xpose.msra.mxu0 0
      %2759 = vmatprep.subr.bf16.mxu0 0
      %2760 = vmatpush1.bf16.xpose.msra.mxu0 0
      %2761 = vmatprep.subr.bf16.mxu0 0
      %2762 = vmatpush1.bf16.xpose.msra.mxu0 0
      %2763 = vmatprep.subr.bf16.mxu0 0
      %2764 = vmatpush1.bf16.xpose.msra.mxu0 0
      %2765 = vmatprep.subr.bf16.mxu0 0
      %2766 = vmatpush1.bf16.xpose.msra.mxu0 0
      %2767 = vmatprep.subr.bf16.mxu0 0
      %2768 = vmatpush1.bf16.xpose.msra.mxu0 0
      %2769 = vmatprep.subr.bf16.mxu0 0
      %2770 = vmatpush1.bf16.xpose.msra.mxu0 0
      %2771 = vmatprep.subr.bf16.mxu0 0
      %2772 = vmatpush1.bf16.xpose.msra.mxu0 0
      %2773 = vmatprep.subr.bf16.mxu0 0
      %2774 = vmatpush1.bf16.xpose.msra.mxu0 0
      %2775 = vmatprep.subr.bf16.mxu0 0
      %2776 = vmatpush1.bf16.xpose.msra.mxu0 0
      %2777 = vmatprep.subr.bf16.mxu0 0
      %2778 = vmatpush1.bf16.xpose.msra.mxu0 0
      %2779 = vmatprep.mubr.bf16.mxu0 0
      %2780 = vmatmul.mubr.bf16.gmra.mrb[0].mxu0 %v2742
      %v2781 = vpop.f32.mrb[0].mxu0
      %v2782 = vadd.f32 0.0, %v2781
      %v2783 = vpop.f32.mrb[0].mxu0
      %v2784 = vpop.f32.mrb[0].mxu0
      %v2785 = vadd.f32 0.0, %v2784
      %v2786 = vpop.f32.mrb[0].mxu0
      %2787 = vmatprep.mubr.bf16.mxu0 0
      %2788 = vmatmul.mubr.bf16.gmra.mrb[0].mxu0 %v2745
      %v2789 = vpop.f32.mrb[0].mxu0
      %v2790 = vadd.f32 0.0, %v2789
      %v2791 = vpop.f32.mrb[0].mxu0
      %v2792 = vpop.f32.mrb[0].mxu0
      %v2793 = vadd.f32 0.0, %v2792
      %v2794 = vpop.f32.mrb[0].mxu0
      %2795 = vdwg.mxu0
      %2796 = vrot.lane.b32.xlu0 %v2202, 48
      %v2797 = vpop.permute.xlu0 %2796
      %2798 = vrot.lane.b32.xlu0 %v2203, 48
      %v2799 = vpop.permute.xlu0 %2798
      %v2801 = vsel %vm2204, %v2797, 0
      %v2804 = vsel %vm2204, %v2799, 0
      %2806 = vmatprep.subr.bf16.mxu0 0
      %2807 = vmatpush1.bf16.xpose.msra.mxu0 %v2212
      %2808 = vmatprep.subr.bf16.mxu0 0
      %2809 = vmatpush1.bf16.xpose.msra.mxu0 0
      %2810 = vmatprep.subr.bf16.mxu0 0
      %2811 = vmatpush1.bf16.xpose.msra.mxu0 0
      %2812 = vmatprep.subr.bf16.mxu0 0
      %2813 = vmatpush1.bf16.xpose.msra.mxu0 0
      %2814 = vmatprep.subr.bf16.mxu0 0
      %2815 = vmatpush1.bf16.xpose.msra.mxu0 0
      %2816 = vmatprep.subr.bf16.mxu0 0
      %2817 = vmatpush1.bf16.xpose.msra.mxu0 0
      %2818 = vmatprep.subr.bf16.mxu0 0
      %2819 = vmatpush1.bf16.xpose.msra.mxu0 0
      %2820 = vmatprep.subr.bf16.mxu0 0
      %2821 = vmatpush1.bf16.xpose.msra.mxu0 0
      %2822 = vmatprep.subr.bf16.mxu0 0
      %2823 = vmatpush1.bf16.xpose.msra.mxu0 0
      %2824 = vmatprep.subr.bf16.mxu0 0
      %2825 = vmatpush1.bf16.xpose.msra.mxu0 0
      %2826 = vmatprep.subr.bf16.mxu0 0
      %2827 = vmatpush1.bf16.xpose.msra.mxu0 0
      %2828 = vmatprep.subr.bf16.mxu0 0
      %2829 = vmatpush1.bf16.xpose.msra.mxu0 0
      %2830 = vmatprep.subr.bf16.mxu0 0
      %2831 = vmatpush1.bf16.xpose.msra.mxu0 0
      %2832 = vmatprep.subr.bf16.mxu0 0
      %2833 = vmatpush1.bf16.xpose.msra.mxu0 0
      %2834 = vmatprep.subr.bf16.mxu0 0
      %2835 = vmatpush1.bf16.xpose.msra.mxu0 0
      %2836 = vmatprep.subr.bf16.mxu0 0
      %2837 = vmatpush1.bf16.xpose.msra.mxu0 0
      %2838 = vmatprep.mubr.bf16.mxu0 0
      %2839 = vmatmul.mubr.bf16.gmra.mrb[0].mxu0 %v2801
      %v2840 = vpop.f32.mrb[0].mxu0
      %v2841 = vadd.f32 0.0, %v2840
      %v2842 = vpop.f32.mrb[0].mxu0
      %v2843 = vpop.f32.mrb[0].mxu0
      %v2844 = vadd.f32 0.0, %v2843
      %v2845 = vpop.f32.mrb[0].mxu0
      %2846 = vmatprep.mubr.bf16.mxu0 0
      %2847 = vmatmul.mubr.bf16.gmra.mrb[0].mxu0 %v2804
      %v2848 = vpop.f32.mrb[0].mxu0
      %v2849 = vadd.f32 0.0, %v2848
      %v2850 = vpop.f32.mrb[0].mxu0
      %v2851 = vpop.f32.mrb[0].mxu0
      %v2852 = vadd.f32 0.0, %v2851
      %v2853 = vpop.f32.mrb[0].mxu0
      %2854 = vdwg.mxu0
      %2855 = vrot.lane.b32.xlu0 %v2202, 40
      %v2856 = vpop.permute.xlu0 %2855
      %2857 = vrot.lane.b32.xlu0 %v2203, 40
      %v2858 = vpop.permute.xlu0 %2857
      %v2860 = vsel %vm2204, %v2856, 0
      %v2863 = vsel %vm2204, %v2858, 0
      %2865 = vmatprep.subr.bf16.mxu0 0
      %2866 = vmatpush1.bf16.xpose.msra.mxu0 %v2212
      %2867 = vmatprep.subr.bf16.mxu0 0
      %2868 = vmatpush1.bf16.xpose.msra.mxu0 0
      %2869 = vmatprep.subr.bf16.mxu0 0
      %2870 = vmatpush1.bf16.xpose.msra.mxu0 0
      %2871 = vmatprep.subr.bf16.mxu0 0
      %2872 = vmatpush1.bf16.xpose.msra.mxu0 0
      %2873 = vmatprep.subr.bf16.mxu0 0
      %2874 = vmatpush1.bf16.xpose.msra.mxu0 0
      %2875 = vmatprep.subr.bf16.mxu0 0
      %2876 = vmatpush1.bf16.xpose.msra.mxu0 0
      %2877 = vmatprep.subr.bf16.mxu0 0
      %2878 = vmatpush1.bf16.xpose.msra.mxu0 0
      %2879 = vmatprep.subr.bf16.mxu0 0
      %2880 = vmatpush1.bf16.xpose.msra.mxu0 0
      %2881 = vmatprep.subr.bf16.mxu0 0
      %2882 = vmatpush1.bf16.xpose.msra.mxu0 0
      %2883 = vmatprep.subr.bf16.mxu0 0
      %2884 = vmatpush1.bf16.xpose.msra.mxu0 0
      %2885 = vmatprep.subr.bf16.mxu0 0
      %2886 = vmatpush1.bf16.xpose.msra.mxu0 0
      %2887 = vmatprep.subr.bf16.mxu0 0
      %2888 = vmatpush1.bf16.xpose.msra.mxu0 0
      %2889 = vmatprep.subr.bf16.mxu0 0
      %2890 = vmatpush1.bf16.xpose.msra.mxu0 0
      %2891 = vmatprep.subr.bf16.mxu0 0
      %2892 = vmatpush1.bf16.xpose.msra.mxu0 0
      %2893 = vmatprep.subr.bf16.mxu0 0
      %2894 = vmatpush1.bf16.xpose.msra.mxu0 0
      %2895 = vmatprep.subr.bf16.mxu0 0
      %2896 = vmatpush1.bf16.xpose.msra.mxu0 0
      %2897 = vmatprep.mubr.bf16.mxu0 0
      %2898 = vmatmul.mubr.bf16.gmra.mrb[0].mxu0 %v2860
      %v2899 = vpop.f32.mrb[0].mxu0
      %v2900 = vadd.f32 0.0, %v2899
      %v2901 = vpop.f32.mrb[0].mxu0
      %v2902 = vpop.f32.mrb[0].mxu0
      %v2903 = vadd.f32 0.0, %v2902
      %v2904 = vpop.f32.mrb[0].mxu0
      %2905 = vmatprep.mubr.bf16.mxu0 0
      %2906 = vmatmul.mubr.bf16.gmra.mrb[0].mxu0 %v2863
      %v2907 = vpop.f32.mrb[0].mxu0
      %v2908 = vadd.f32 0.0, %v2907
      %v2909 = vpop.f32.mrb[0].mxu0
      %v2910 = vpop.f32.mrb[0].mxu0
      %v2911 = vadd.f32 0.0, %v2910
      %v2912 = vpop.f32.mrb[0].mxu0
      %2913 = vdwg.mxu0
      %2914 = vrot.lane.b32.xlu0 %v2202, 32
      %v2915 = vpop.permute.xlu0 %2914
      %2916 = vrot.lane.b32.xlu0 %v2203, 32
      %v2917 = vpop.permute.xlu0 %2916
      %v2919 = vsel %vm2204, %v2915, 0
      %v2922 = vsel %vm2204, %v2917, 0
      %2924 = vmatprep.subr.bf16.mxu0 0
      %2925 = vmatpush1.bf16.xpose.msra.mxu0 %v2212
      %2926 = vmatprep.subr.bf16.mxu0 0
      %2927 = vmatpush1.bf16.xpose.msra.mxu0 0
      %2928 = vmatprep.subr.bf16.mxu0 0
      %2929 = vmatpush1.bf16.xpose.msra.mxu0 0
      %2930 = vmatprep.subr.bf16.mxu0 0
      %2931 = vmatpush1.bf16.xpose.msra.mxu0 0
      %2932 = vmatprep.subr.bf16.mxu0 0
      %2933 = vmatpush1.bf16.xpose.msra.mxu0 0
      %2934 = vmatprep.subr.bf16.mxu0 0
      %2935 = vmatpush1.bf16.xpose.msra.mxu0 0
      %2936 = vmatprep.subr.bf16.mxu0 0
      %2937 = vmatpush1.bf16.xpose.msra.mxu0 0
      %2938 = vmatprep.subr.bf16.mxu0 0
      %2939 = vmatpush1.bf16.xpose.msra.mxu0 0
      %2940 = vmatprep.subr.bf16.mxu0 0
      %2941 = vmatpush1.bf16.xpose.msra.mxu0 0
      %2942 = vmatprep.subr.bf16.mxu0 0
      %2943 = vmatpush1.bf16.xpose.msra.mxu0 0
      %2944 = vmatprep.subr.bf16.mxu0 0
      %2945 = vmatpush1.bf16.xpose.msra.mxu0 0
      %2946 = vmatprep.subr.bf16.mxu0 0
      %2947 = vmatpush1.bf16.xpose.msra.mxu0 0
      %2948 = vmatprep.subr.bf16.mxu0 0
      %2949 = vmatpush1.bf16.xpose.msra.mxu0 0
      %2950 = vmatprep.subr.bf16.mxu0 0
      %2951 = vmatpush1.bf16.xpose.msra.mxu0 0
      %2952 = vmatprep.subr.bf16.mxu0 0
      %2953 = vmatpush1.bf16.xpose.msra.mxu0 0
      %2954 = vmatprep.subr.bf16.mxu0 0
      %2955 = vmatpush1.bf16.xpose.msra.mxu0 0
      %2956 = vmatprep.mubr.bf16.mxu0 0
      %2957 = vmatmul.mubr.bf16.gmra.mrb[0].mxu0 %v2919
      %v2958 = vpop.f32.mrb[0].mxu0
      %v2959 = vadd.f32 0.0, %v2958
      %v2960 = vpop.f32.mrb[0].mxu0
      %v2961 = vpop.f32.mrb[0].mxu0
      %v2962 = vadd.f32 0.0, %v2961
      %v2963 = vpop.f32.mrb[0].mxu0
      %2964 = vmatprep.mubr.bf16.mxu0 0
      %2965 = vmatmul.mubr.bf16.gmra.mrb[0].mxu0 %v2922
      %v2966 = vpop.f32.mrb[0].mxu0
      %v2967 = vadd.f32 0.0, %v2966
      %v2968 = vpop.f32.mrb[0].mxu0
      %v2969 = vpop.f32.mrb[0].mxu0
      %v2970 = vadd.f32 0.0, %v2969
      %v2971 = vpop.f32.mrb[0].mxu0
      %2972 = vdwg.mxu0
      %2973 = vrot.lane.b32.xlu0 %v2202, 24
      %v2974 = vpop.permute.xlu0 %2973
      %2975 = vrot.lane.b32.xlu0 %v2203, 24
      %v2976 = vpop.permute.xlu0 %2975
      %v2978 = vsel %vm2204, %v2974, 0
      %v2981 = vsel %vm2204, %v2976, 0
      %2983 = vmatprep.subr.bf16.mxu0 0
      %2984 = vmatpush1.bf16.xpose.msra.mxu0 %v2212
      %2985 = vmatprep.subr.bf16.mxu0 0
      %2986 = vmatpush1.bf16.xpose.msra.mxu0 0
      %2987 = vmatprep.subr.bf16.mxu0 0
      %2988 = vmatpush1.bf16.xpose.msra.mxu0 0
      %2989 = vmatprep.subr.bf16.mxu0 0
      %2990 = vmatpush1.bf16.xpose.msra.mxu0 0
      %2991 = vmatprep.subr.bf16.mxu0 0
      %2992 = vmatpush1.bf16.xpose.msra.mxu0 0
      %2993 = vmatprep.subr.bf16.mxu0 0
      %2994 = vmatpush1.bf16.xpose.msra.mxu0 0
      %2995 = vmatprep.subr.bf16.mxu0 0
      %2996 = vmatpush1.bf16.xpose.msra.mxu0 0
      %2997 = vmatprep.subr.bf16.mxu0 0
      %2998 = vmatpush1.bf16.xpose.msra.mxu0 0
      %2999 = vmatprep.subr.bf16.mxu0 0
      %3000 = vmatpush1.bf16.xpose.msra.mxu0 0
      %3001 = vmatprep.subr.bf16.mxu0 0
      %3002 = vmatpush1.bf16.xpose.msra.mxu0 0
      %3003 = vmatprep.subr.bf16.mxu0 0
      %3004 = vmatpush1.bf16.xpose.msra.mxu0 0
      %3005 = vmatprep.subr.bf16.mxu0 0
      %3006 = vmatpush1.bf16.xpose.msra.mxu0 0
      %3007 = vmatprep.subr.bf16.mxu0 0
      %3008 = vmatpush1.bf16.xpose.msra.mxu0 0
      %3009 = vmatprep.subr.bf16.mxu0 0
      %3010 = vmatpush1.bf16.xpose.msra.mxu0 0
      %3011 = vmatprep.subr.bf16.mxu0 0
      %3012 = vmatpush1.bf16.xpose.msra.mxu0 0
      %3013 = vmatprep.subr.bf16.mxu0 0
      %3014 = vmatpush1.bf16.xpose.msra.mxu0 0
      %3015 = vmatprep.mubr.bf16.mxu0 0
      %3016 = vmatmul.mubr.bf16.gmra.mrb[0].mxu0 %v2978
      %v3017 = vpop.f32.mrb[0].mxu0
      %v3018 = vadd.f32 0.0, %v3017
      %v3019 = vpop.f32.mrb[0].mxu0
      %v3020 = vpop.f32.mrb[0].mxu0
      %v3021 = vadd.f32 0.0, %v3020
      %v3022 = vpop.f32.mrb[0].mxu0
      %3023 = vmatprep.mubr.bf16.mxu0 0
      %3024 = vmatmul.mubr.bf16.gmra.mrb[0].mxu0 %v2981
      %v3025 = vpop.f32.mrb[0].mxu0
      %v3026 = vadd.f32 0.0, %v3025
      %v3027 = vpop.f32.mrb[0].mxu0
      %v3028 = vpop.f32.mrb[0].mxu0
      %v3029 = vadd.f32 0.0, %v3028
      %v3030 = vpop.f32.mrb[0].mxu0
      %3031 = vdwg.mxu0
      %3032 = vrot.lane.b32.xlu0 %v2202, 16
      %v3033 = vpop.permute.xlu0 %3032
      %3034 = vrot.lane.b32.xlu0 %v2203, 16
      %v3035 = vpop.permute.xlu0 %3034
      %v3037 = vsel %vm2204, %v3033, 0
      %v3040 = vsel %vm2204, %v3035, 0
      %3042 = vmatprep.subr.bf16.mxu0 0
      %3043 = vmatpush1.bf16.xpose.msra.mxu0 %v2212
      %3044 = vmatprep.subr.bf16.mxu0 0
      %3045 = vmatpush1.bf16.xpose.msra.mxu0 0
      %3046 = vmatprep.subr.bf16.mxu0 0
      %3047 = vmatpush1.bf16.xpose.msra.mxu0 0
      %3048 = vmatprep.subr.bf16.mxu0 0
      %3049 = vmatpush1.bf16.xpose.msra.mxu0 0
      %3050 = vmatprep.subr.bf16.mxu0 0
      %3051 = vmatpush1.bf16.xpose.msra.mxu0 0
      %3052 = vmatprep.subr.bf16.mxu0 0
      %3053 = vmatpush1.bf16.xpose.msra.mxu0 0
      %3054 = vmatprep.subr.bf16.mxu0 0
      %3055 = vmatpush1.bf16.xpose.msra.mxu0 0
      %3056 = vmatprep.subr.bf16.mxu0 0
      %3057 = vmatpush1.bf16.xpose.msra.mxu0 0
      %3058 = vmatprep.subr.bf16.mxu0 0
      %3059 = vmatpush1.bf16.xpose.msra.mxu0 0
      %3060 = vmatprep.subr.bf16.mxu0 0
      %3061 = vmatpush1.bf16.xpose.msra.mxu0 0
      %3062 = vmatprep.subr.bf16.mxu0 0
      %3063 = vmatpush1.bf16.xpose.msra.mxu0 0
      %3064 = vmatprep.subr.bf16.mxu0 0
      %3065 = vmatpush1.bf16.xpose.msra.mxu0 0
      %3066 = vmatprep.subr.bf16.mxu0 0
      %3067 = vmatpush1.bf16.xpose.msra.mxu0 0
      %3068 = vmatprep.subr.bf16.mxu0 0
      %3069 = vmatpush1.bf16.xpose.msra.mxu0 0
      %3070 = vmatprep.subr.bf16.mxu0 0
      %3071 = vmatpush1.bf16.xpose.msra.mxu0 0
      %3072 = vmatprep.subr.bf16.mxu0 0
      %3073 = vmatpush1.bf16.xpose.msra.mxu0 0
      %3074 = vmatprep.mubr.bf16.mxu0 0
      %3075 = vmatmul.mubr.bf16.gmra.mrb[0].mxu0 %v3037
      %v3076 = vpop.f32.mrb[0].mxu0
      %v3077 = vadd.f32 0.0, %v3076
      %v3078 = vpop.f32.mrb[0].mxu0
      %v3079 = vpop.f32.mrb[0].mxu0
      %v3080 = vadd.f32 0.0, %v3079
      %v3081 = vpop.f32.mrb[0].mxu0
      %3082 = vmatprep.mubr.bf16.mxu0 0
      %3083 = vmatmul.mubr.bf16.gmra.mrb[0].mxu0 %v3040
      %v3084 = vpop.f32.mrb[0].mxu0
      %v3085 = vadd.f32 0.0, %v3084
      %v3086 = vpop.f32.mrb[0].mxu0
      %v3087 = vpop.f32.mrb[0].mxu0
      %v3088 = vadd.f32 0.0, %v3087
      %v3089 = vpop.f32.mrb[0].mxu0
      %3090 = vdwg.mxu0
      %3091 = vrot.lane.b32.xlu0 %v2202, 8
      %v3092 = vpop.permute.xlu0 %3091
      %3093 = vrot.lane.b32.xlu0 %v2203, 8
      %v3094 = vpop.permute.xlu0 %3093
      %v3096 = vsel %vm2204, %v3092, 0
      %v3099 = vsel %vm2204, %v3094, 0
      %3101 = vmatprep.subr.bf16.mxu0 0
      %3102 = vmatpush1.bf16.xpose.msra.mxu0 %v2212
      %3103 = vmatprep.subr.bf16.mxu0 0
      %3104 = vmatpush1.bf16.xpose.msra.mxu0 0
      %3105 = vmatprep.subr.bf16.mxu0 0
      %3106 = vmatpush1.bf16.xpose.msra.mxu0 0
      %3107 = vmatprep.subr.bf16.mxu0 0
      %3108 = vmatpush1.bf16.xpose.msra.mxu0 0
      %3109 = vmatprep.subr.bf16.mxu0 0
      %3110 = vmatpush1.bf16.xpose.msra.mxu0 0
      %3111 = vmatprep.subr.bf16.mxu0 0
      %3112 = vmatpush1.bf16.xpose.msra.mxu0 0
      %3113 = vmatprep.subr.bf16.mxu0 0
      %3114 = vmatpush1.bf16.xpose.msra.mxu0 0
      %3115 = vmatprep.subr.bf16.mxu0 0
      %3116 = vmatpush1.bf16.xpose.msra.mxu0 0
      %3117 = vmatprep.subr.bf16.mxu0 0
      %3118 = vmatpush1.bf16.xpose.msra.mxu0 0
      %3119 = vmatprep.subr.bf16.mxu0 0
      %3120 = vmatpush1.bf16.xpose.msra.mxu0 0
      %3121 = vmatprep.subr.bf16.mxu0 0
      %3122 = vmatpush1.bf16.xpose.msra.mxu0 0
      %3123 = vmatprep.subr.bf16.mxu0 0
      %3124 = vmatpush1.bf16.xpose.msra.mxu0 0
      %3125 = vmatprep.subr.bf16.mxu0 0
      %3126 = vmatpush1.bf16.xpose.msra.mxu0 0
      %3127 = vmatprep.subr.bf16.mxu0 0
      %3128 = vmatpush1.bf16.xpose.msra.mxu0 0
      %3129 = vmatprep.subr.bf16.mxu0 0
      %3130 = vmatpush1.bf16.xpose.msra.mxu0 0
      %3131 = vmatprep.subr.bf16.mxu0 0
      %3132 = vmatpush1.bf16.xpose.msra.mxu0 0
      %3133 = vmatprep.mubr.bf16.mxu0 0
      %3134 = vmatmul.mubr.bf16.gmra.mrb[0].mxu0 %v3096
      %v3135 = vpop.f32.mrb[0].mxu0
      %v3136 = vadd.f32 0.0, %v3135
      %v3137 = vpop.f32.mrb[0].mxu0
      %v3138 = vpop.f32.mrb[0].mxu0
      %v3139 = vadd.f32 0.0, %v3138
      %v3140 = vpop.f32.mrb[0].mxu0
      %3141 = vmatprep.mubr.bf16.mxu0 0
      %3142 = vmatmul.mubr.bf16.gmra.mrb[0].mxu0 %v3099
      %v3143 = vpop.f32.mrb[0].mxu0
      %v3144 = vadd.f32 0.0, %v3143
      %v3145 = vpop.f32.mrb[0].mxu0
      %v3146 = vpop.f32.mrb[0].mxu0
      %v3147 = vadd.f32 0.0, %v3146
      %v3148 = vpop.f32.mrb[0].mxu0
      %3149 = vdwg.mxu0
      %3154 = vrot.lane.b32.xlu0 %v2310, 8
      %v3155 = vpop.permute.xlu0 %3154
      %3156 = vrot.lane.b32.xlu0 %v2313, 8
      %v3157 = vpop.permute.xlu0 %3156
      %3158 = vrot.lane.b32.xlu0 %v2318, 8
      %v3159 = vpop.permute.xlu0 %3158
      %3160 = vrot.lane.b32.xlu0 %v2321, 8
      %v3161 = vpop.permute.xlu0 %3160
      %3170 = vrot.lane.b32.xlu0 %v2369, 16
      %v3171 = vpop.permute.xlu0 %3170
      %3172 = vrot.lane.b32.xlu0 %v2372, 16
      %v3173 = vpop.permute.xlu0 %3172
      %3174 = vrot.lane.b32.xlu0 %v2377, 16
      %v3175 = vpop.permute.xlu0 %3174
      %3176 = vrot.lane.b32.xlu0 %v2380, 16
      %v3177 = vpop.permute.xlu0 %3176
      %3186 = vrot.lane.b32.xlu0 %v2428, 24
      %v3187 = vpop.permute.xlu0 %3186
      %3188 = vrot.lane.b32.xlu0 %v2431, 24
      %v3189 = vpop.permute.xlu0 %3188
      %3190 = vrot.lane.b32.xlu0 %v2436, 24
      %v3191 = vpop.permute.xlu0 %3190
      %3192 = vrot.lane.b32.xlu0 %v2439, 24
      %v3193 = vpop.permute.xlu0 %3192
      %3202 = vrot.lane.b32.xlu0 %v2487, 32
      %v3203 = vpop.permute.xlu0 %3202
      %3204 = vrot.lane.b32.xlu0 %v2490, 32
      %v3205 = vpop.permute.xlu0 %3204
      %3206 = vrot.lane.b32.xlu0 %v2495, 32
      %v3207 = vpop.permute.xlu0 %3206
      %3208 = vrot.lane.b32.xlu0 %v2498, 32
      %v3209 = vpop.permute.xlu0 %3208
      %3218 = vrot.lane.b32.xlu0 %v2546, 40
      %v3219 = vpop.permute.xlu0 %3218
      %3220 = vrot.lane.b32.xlu0 %v2549, 40
      %v3221 = vpop.permute.xlu0 %3220
      %3222 = vrot.lane.b32.xlu0 %v2554, 40
      %v3223 = vpop.permute.xlu0 %3222
      %3224 = vrot.lane.b32.xlu0 %v2557, 40
      %v3225 = vpop.permute.xlu0 %3224
      %3234 = vrot.lane.b32.xlu0 %v2605, 48
      %v3235 = vpop.permute.xlu0 %3234
      %3236 = vrot.lane.b32.xlu0 %v2608, 48
      %v3237 = vpop.permute.xlu0 %3236
      %3238 = vrot.lane.b32.xlu0 %v2613, 48
      %v3239 = vpop.permute.xlu0 %3238
      %3240 = vrot.lane.b32.xlu0 %v2616, 48
      %v3241 = vpop.permute.xlu0 %3240
      %3250 = vrot.lane.b32.xlu0 %v2664, 56
      %v3251 = vpop.permute.xlu0 %3250
      %3252 = vrot.lane.b32.xlu0 %v2667, 56
      %v3253 = vpop.permute.xlu0 %3252
      %3254 = vrot.lane.b32.xlu0 %v2672, 56
      %v3255 = vpop.permute.xlu0 %3254
      %3256 = vrot.lane.b32.xlu0 %v2675, 56
      %v3257 = vpop.permute.xlu0 %3256
      %3266 = vrot.lane.b32.xlu0 %v2723, 64
      %v3267 = vpop.permute.xlu0 %3266
      %3268 = vrot.lane.b32.xlu0 %v2726, 64
      %v3269 = vpop.permute.xlu0 %3268
      %3270 = vrot.lane.b32.xlu0 %v2731, 64
      %v3271 = vpop.permute.xlu0 %3270
      %3272 = vrot.lane.b32.xlu0 %v2734, 64
      %v3273 = vpop.permute.xlu0 %3272
      %3282 = vrot.lane.b32.xlu0 %v2782, 72
      %v3283 = vpop.permute.xlu0 %3282
      %3284 = vrot.lane.b32.xlu0 %v2785, 72
      %v3285 = vpop.permute.xlu0 %3284
      %3286 = vrot.lane.b32.xlu0 %v2790, 72
      %v3287 = vpop.permute.xlu0 %3286
      %3288 = vrot.lane.b32.xlu0 %v2793, 72
      %v3289 = vpop.permute.xlu0 %3288
      %3298 = vrot.lane.b32.xlu0 %v2841, 80
      %v3299 = vpop.permute.xlu0 %3298
      %3300 = vrot.lane.b32.xlu0 %v2844, 80
      %v3301 = vpop.permute.xlu0 %3300
      %3302 = vrot.lane.b32.xlu0 %v2849, 80
      %v3303 = vpop.permute.xlu0 %3302
      %3304 = vrot.lane.b32.xlu0 %v2852, 80
      %v3305 = vpop.permute.xlu0 %3304
      %3314 = vrot.lane.b32.xlu0 %v2900, 88
      %v3315 = vpop.permute.xlu0 %3314
      %3316 = vrot.lane.b32.xlu0 %v2903, 88
      %v3317 = vpop.permute.xlu0 %3316
      %3318 = vrot.lane.b32.xlu0 %v2908, 88
      %v3319 = vpop.permute.xlu0 %3318
      %3320 = vrot.lane.b32.xlu0 %v2911, 88
      %v3321 = vpop.permute.xlu0 %3320
      %3330 = vrot.lane.b32.xlu0 %v2959, 96
      %v3331 = vpop.permute.xlu0 %3330
      %3332 = vrot.lane.b32.xlu0 %v2962, 96
      %v3333 = vpop.permute.xlu0 %3332
      %3334 = vrot.lane.b32.xlu0 %v2967, 96
      %v3335 = vpop.permute.xlu0 %3334
      %3336 = vrot.lane.b32.xlu0 %v2970, 96
      %v3337 = vpop.permute.xlu0 %3336
      %3346 = vrot.lane.b32.xlu0 %v3018, 104
      %v3347 = vpop.permute.xlu0 %3346
      %3348 = vrot.lane.b32.xlu0 %v3021, 104
      %v3349 = vpop.permute.xlu0 %3348
      %3350 = vrot.lane.b32.xlu0 %v3026, 104
      %v3351 = vpop.permute.xlu0 %3350
      %3352 = vrot.lane.b32.xlu0 %v3029, 104
      %v3353 = vpop.permute.xlu0 %3352
      %3362 = vrot.lane.b32.xlu0 %v3077, 112
      %v3363 = vpop.permute.xlu0 %3362
      %3364 = vrot.lane.b32.xlu0 %v3080, 112
      %v3365 = vpop.permute.xlu0 %3364
      %3366 = vrot.lane.b32.xlu0 %v3085, 112
      %v3367 = vpop.permute.xlu0 %3366
      %3368 = vrot.lane.b32.xlu0 %v3088, 112
      %v3369 = vpop.permute.xlu0 %3368
      %3378 = vrot.lane.b32.xlu0 %v3136, 120
      %v3379 = vpop.permute.xlu0 %3378
      %3380 = vrot.lane.b32.xlu0 %v3139, 120
      %v3381 = vpop.permute.xlu0 %3380
      %3382 = vrot.lane.b32.xlu0 %v3144, 120
      %v3383 = vpop.permute.xlu0 %3382
      %3384 = vrot.lane.b32.xlu0 %v3147, 120
      %v3385 = vpop.permute.xlu0 %3384
      %v3390 = vsel %vm2204, %v2249, %v3155
      %v3391 = vsel %vm2204, %v2252, %v3157
      %v3392 = vsel %vm2204, %v2257, %v3159
      %v3393 = vsel %vm2204, %v2260, %v3161
      %vm3394 = vcmask 130048
      %v3395 = vsel %vm3394, %v3390, %v3171
      %v3396 = vsel %vm3394, %v3391, %v3173
      %v3397 = vsel %vm3394, %v3392, %v3175
      %v3398 = vsel %vm3394, %v3393, %v3177
      %vm3399 = vcmask 195584
      %v3400 = vsel %vm3399, %v3395, %v3187
      %v3401 = vsel %vm3399, %v3396, %v3189
      %v3402 = vsel %vm3399, %v3397, %v3191
      %v3403 = vsel %vm3399, %v3398, %v3193
      %v3404 = vsel %vm234, %v3400, %v3203
      %v3405 = vsel %vm234, %v3401, %v3205
      %v3406 = vsel %vm234, %v3402, %v3207
      %v3407 = vsel %vm234, %v3403, %v3209
      %vm3408 = vcmask 326656
      %v3409 = vsel %vm3408, %v3404, %v3219
      %v3410 = vsel %vm3408, %v3405, %v3221
      %v3411 = vsel %vm3408, %v3406, %v3223
      %v3412 = vsel %vm3408, %v3407, %v3225
      %vm3413 = vcmask 392192
      %v3414 = vsel %vm3413, %v3409, %v3235
      %v3415 = vsel %vm3413, %v3410, %v3237
      %v3416 = vsel %vm3413, %v3411, %v3239
      %v3417 = vsel %vm3413, %v3412, %v3241
      %vm3418 = vcmask 457728
      %v3419 = vsel %vm3418, %v3414, %v3251
      %v3420 = vsel %vm3418, %v3415, %v3253
      %v3421 = vsel %vm3418, %v3416, %v3255
      %v3422 = vsel %vm3418, %v3417, %v3257
      %vm3423 = vcmask 523264
      %v3424 = vsel %vm3423, %v3419, %v3267
      %v3425 = vsel %vm3423, %v3420, %v3269
      %v3426 = vsel %vm3423, %v3421, %v3271
      %v3427 = vsel %vm3423, %v3422, %v3273
      %vm3428 = vcmask 588800
      %v3429 = vsel %vm3428, %v3424, %v3283
      %v3430 = vsel %vm3428, %v3425, %v3285
      %v3431 = vsel %vm3428, %v3426, %v3287
      %v3432 = vsel %vm3428, %v3427, %v3289
      %vm3433 = vcmask 654336
      %v3434 = vsel %vm3433, %v3429, %v3299
      %v3435 = vsel %vm3433, %v3430, %v3301
      %v3436 = vsel %vm3433, %v3431, %v3303
      %v3437 = vsel %vm3433, %v3432, %v3305
      %vm3438 = vcmask 719872
      %v3439 = vsel %vm3438, %v3434, %v3315
      %v3440 = vsel %vm3438, %v3435, %v3317
      %v3441 = vsel %vm3438, %v3436, %v3319
      %v3442 = vsel %vm3438, %v3437, %v3321
      %vm3443 = vcmask 785408
      %v3444 = vsel %vm3443, %v3439, %v3331
      %v3445 = vsel %vm3443, %v3440, %v3333
      %v3446 = vsel %vm3443, %v3441, %v3335
      %v3447 = vsel %vm3443, %v3442, %v3337
      %vm3448 = vcmask 850944
      %v3449 = vsel %vm3448, %v3444, %v3347
      %v3450 = vsel %vm3448, %v3445, %v3349
      %v3451 = vsel %vm3448, %v3446, %v3351
      %v3452 = vsel %vm3448, %v3447, %v3353
      %vm3453 = vcmask 916480
      %v3454 = vsel %vm3453, %v3449, %v3363
      %v3455 = vsel %vm3453, %v3450, %v3365
      %v3456 = vsel %vm3453, %v3451, %v3367
      %v3457 = vsel %vm3453, %v3452, %v3369
      %vm3458 = vcmask 982016
      %v3459 = vsel %vm3458, %v3454, %v3379
      %v3460 = vsel %vm3458, %v3455, %v3381
      %v3461 = vsel %vm3458, %v3456, %v3383
      %v3462 = vsel %vm3458, %v3457, %v3385
      %s3463 = sld [smem:[#allocation2]]
      %v3464 = vstv %s3463
      %v3465 = vmul.f32 %v3464, %v3459
      %v3466 = vmul.f32 %v3464, %v3460
      %v3467 = vmul.f32 %v3464, %v3461
      %v3468 = vmul.f32 %v3464, %v3462
      %v3469 = vadd.f32 %v3465, %v227
      %v3470 = vadd.f32 %v3466, %v228
      %v3471 = vadd.f32 %v3467, %v229
      %v3472 = vadd.f32 %v3468, %v230
      %3473 = vst [vmem:[%s225] sm:$0xff] %v3469
      %3474 = vst [vmem:[%s225 + $0x8] sm:$0xff] %v3470
      %3475 = vst [vmem:[%s225 + $0x10] sm:$0xff] %v3471
      %3476 = vst [vmem:[%s225 + $0x18] sm:$0xff] %v3472
      %p3477 = scmp.lt.s32.totalorder %s17, 1
      %s3478 = scalar_select %p3477, %s17, 1
      %s3479 = smul.addr %s3478, 4
      %s3480 = smul.addr %s3479, 8
      %s3481 = scalar_lea.vmem %s5, %s3480
      // Predicated region
      $region41: #{aa_kernel_forward.5} parent=39 // pred_check
        %p3482 = pneg %p145
      $region42: #{aa_kernel_forward.5} parent=39 // pred_check_branch
        %3484 = sbr.rel (%p3482) target = $region44
      $region43: #{aa_kernel_forward.5} parent=39 // pred_region
        _
      $region44: #{aa_kernel_forward.5} parent=39 // pred_fallthru
        _
    $region40: #{aa_kernel_forward.5} parent=5 // pred_fallthru
      _
    %p3485 = scmp.le.s32.totalorder 2, %s12
    // Predicated region
    $region45: #{aa_kernel_forward.5} parent=5 // pred_check
      %p3486 = pneg %p3485
    $region46: #{aa_kernel_forward.5} parent=5 // pred_check_branch
      %3488 = sbr.rel (%p3486) target = $region48
    $region47: #{aa_kernel_forward.5} parent=5 // pred_region
      %s3489 = ssub.s32 %s12, 2
      // Predicated region
      $region49: #{aa_kernel_forward.5} parent=47 // pred_check
        %p3490 = pneg %p151
      $region50: #{aa_kernel_forward.5} parent=47 // pred_check_branch
        %3492 = sbr.rel (%p3490) target = $region52
      $region51: #{aa_kernel_forward.5} parent=47 // pred_region
        %p3493 = scmp.lt.s32.totalorder %s18, 1
        %s3494 = scalar_select %p3493, %s18, 1
        %s3495 = smul.addr %s3494, 4
        %s3496 = smul.addr %s3495, 8
        %s3497 = scalar_lea.vmem %s5, %s3496
      $region52: #{aa_kernel_forward.5} parent=47 // pred_fallthru
        _
    $region48: #{aa_kernel_forward.5} parent=5 // pred_fallthru
      _
  $region6: #{aa_kernel_forward.5} parent=0 // loop_footer
    %s16 = sadd.s32 1, %s12
  $region7: #{aa_kernel_forward.5} parent=0 // loop_footer_branch
    %11 = sbr.rel target = $region3
  $region8: #{aa_kernel_forward.5} parent=0 // loop_exit
    _

</llo_original>
